<compile_context>
chip_gen: v7x
topology: tpu7x:2x2x1
jax: 0.10.0
libtpu: 0.0.40
codegen_flags: <defaults>
</compile_context>

<pallas_src>
import math
import functools

import jax
import jax.numpy as jnp
from jax.experimental import pallas as pl
from jax.experimental.pallas import tpu as pltpu


# ----------------------------- kernel helpers -----------------------------

def _layer_norm(x, gamma, beta, eps=1e-5):
    mu = jnp.mean(x, axis=-1, keepdims=True)
    var = jnp.mean((x - mu) ** 2, axis=-1, keepdims=True)
    return (x - mu) * jax.lax.rsqrt(var + eps) * gamma + beta


def _gelu(x, approximate):
    if approximate:
        # tanh form -> EUP slot; behind a flag since it changes numerics.
        return jax.nn.gelu(x, approximate=True)
    # nn.GELU() default is the exact erf form.
    return 0.5 * x * (1.0 + jax.lax.erf(x * (1.0 / math.sqrt(2.0))))


# ------------------------------- the kernel -------------------------------

def denoising_block_kernel(*refs, num_heads, hidden_dim, ffn_tile, emit_attn,
                           approx_gelu):
    (x_ref, mask_ref, s_ref,
     g_sa_ref, b_sa_ref, wqkv_ref, bqkv_ref, wo_ref, bo_ref,
     g_ca_ref, b_ca_ref, wq_c_ref, bq_c_ref, wkv_c_ref, bkv_c_ref,
     wo_c_ref, bo_c_ref,
     g_ff_ref, b_ff_ref, w1_ref, b1_ref, w2_ref, b2_ref) = refs[:23]
    if emit_attn:
        out_ref, attn_ref, ctx_ref = refs[23], refs[24], refs[25]
    else:
        out_ref, ctx_ref = refs[23], refs[24]
        attn_ref = None

    H, D = num_heads, hidden_dim
    dh = D // H
    f32, bf16 = jnp.float32, jnp.bfloat16

    x = x_ref[0]                                   # (L, D) f32
    L = x.shape[0]
    # Hoisted (1,L)->(L,L) additive key bias; reused by all 2*H softmax calls.
    key_bias = jnp.broadcast_to((1.0 - mask_ref[0]) * -1e9, (L, L))

    def masked_softmax(scores):
        s = scores + key_bias
        m = jnp.max(s, axis=-1, keepdims=True)
        e = jnp.exp(s - m)
        # approx reciprocal -> EUP slot; rows sum to ~1 (not exactly 1).
        return e * pl.reciprocal(jnp.sum(e, axis=-1, keepdims=True), approx=True)

    def attention(q_full, k_full, v_full, wo_r, store_attn):
        # Per-head scores / softmax / P@V into a (L,D) bf16 scratch, then ONE
        # fused (L,D)@(D,D) ctx @ W_o matmul instead of H small-K matmuls.
        for h in range(H):
            lo = h * dh
            sc = jnp.einsum("qd,kd->qk", q_full[:, lo:lo + dh],
                            k_full[:, lo:lo + dh], preferred_element_type=f32)
            p = masked_softmax(sc)
            if store_attn:
                attn_ref[0, h] = p.astype(attn_ref.dtype)
            ctx_ref[:, lo:lo + dh] = jnp.dot(
                p.astype(bf16), v_full[:, lo:lo + dh],
                preferred_element_type=f32).astype(bf16)
        return jnp.dot(ctx_ref[...], wo_r[...], preferred_element_type=f32)

    # ---------------- self-attention (pre-norm + residual) ----------------
    xn = _layer_norm(x, g_sa_ref[...], b_sa_ref[...]).astype(bf16)
    # 1/sqrt(dh) is pre-folded into the Q columns of wqkv / bqkv on the host.
    qkv = jnp.dot(xn, wqkv_ref[...], preferred_element_type=f32) + bqkv_ref[...]
    qkv16 = qkv.astype(bf16)
    x = x + attention(qkv16[:, :D], qkv16[:, D:2 * D], qkv16[:, 2 * D:],
                      wo_ref, False) + bo_ref[...]

    # --------------- cross-attention (pre-norm + residual) ----------------
    sn = s_ref[0]                                  # (Ls, D) bf16 (DMA'd as bf16)
    xn = _layer_norm(x, g_ca_ref[...], b_ca_ref[...]).astype(bf16)
    q = jnp.dot(xn, wq_c_ref[...], preferred_element_type=f32) + bq_c_ref[...]
    kv = jnp.dot(sn, wkv_c_ref[...], preferred_element_type=f32) + bkv_c_ref[...]
    q16, kv16 = q.astype(bf16), kv.astype(bf16)
    x = x + attention(q16, kv16[:, :D], kv16[:, D:], wo_c_ref,
                      emit_attn) + bo_c_ref[...]

    # ------------------------- FFN (pre-norm + residual) ------------------
    # Column-tiled over the 4*D hidden dim: the full (L,4D) activation is
    # never resident; each tile is projected, GELU'd, and folded into y.
    xn = _layer_norm(x, g_ff_ref[...], b_ff_ref[...]).astype(bf16)
    y = jnp.zeros((L, D), f32)
    n_tiles = (4 * D) // ffn_tile
    for t in range(n_tiles):
        lo = t * ffn_tile
        h1 = (jnp.dot(xn, w1_ref[:, lo:lo + ffn_tile], preferred_element_type=f32)
              + b1_ref[:, lo:lo + ffn_tile])
        h1 = _gelu(h1, approx_gelu)
        y = y + jnp.dot(h1.astype(bf16), w2_ref[lo:lo + ffn_tile, :],
                        preferred_element_type=f32)
    out_ref[0] = x + y + b2_ref[...]


# ------------------------------ host wrapper -------------------------------

_WEIGHT_ORDER = ("g_sa", "b_sa", "wqkv", "bqkv", "wo", "bo",
                 "g_ca", "b_ca", "wq_c", "bq_c", "wkv_c", "bkv_c", "wo_c", "bo_c",
                 "g_ff", "b_ff", "w1", "b1", "w2", "b2")
_BF16_WEIGHTS = {"wqkv", "wo", "wq_c", "wkv_c", "wo_c", "w1", "w2"}


def _prepare_weights(params, num_heads):
    """Fold the attention scale into the Q projections; cast matrices to bf16
    (halves weight DMA traffic / VMEM, feeds the MXU at bf16 rate)."""
    D = params["wo"].shape[0]
    dh = D // num_heads
    scale = 1.0 / math.sqrt(dh)
    p = dict(params)
    p["wqkv"] = p["wqkv"].astype(jnp.float32).at[:, :D].multiply(scale)
    p["bqkv"] = p["bqkv"].astype(jnp.float32).at[:, :D].multiply(scale)
    p["wq_c"] = p["wq_c"].astype(jnp.float32) * scale
    p["bq_c"] = p["bq_c"].astype(jnp.float32) * scale
    return [p[k].astype(jnp.bfloat16) if k in _BF16_WEIGHTS else p[k].astype(jnp.float32)
            for k in _WEIGHT_ORDER]


def _pick_ffn_tile(D):
    hidden = 4 * D
    for t in (512, 384, 256, 128):   # lane-aligned tile widths
        if hidden % t == 0:
            return t
    return hidden


def _vmem_limit_bytes(L, Ls, D, H, ffn_tile, emit_attn):
    f32b, bf16b = 4, 2
    weights = 16 * D * D * bf16b + 24 * D * f32b        # single-buffered matrices + f32 vecs
    blocks = 2 * L * D * f32b + Ls * D * bf16b + L * f32b   # x, out (f32), s (bf16), mask
    if emit_attn:
        blocks += H * L * Ls * bf16b
    live = (3 * L * D * (f32b + bf16b)                  # qkv f32 + bf16 copy
            + 2 * L * Ls * f32b                         # scores + exp
            + L * D * (f32b + bf16b)                    # ctx scratch / attn out
            + L * ffn_tile * (f32b + bf16b)             # FFN tile activations
            + 2 * L * D * f32b)                         # residual / y accumulator
    est = weights + 2 * blocks + live                   # sequence blocks double-buffered
    try:
        cap = getattr(pltpu.get_tpu_info(), "vmem_capacity_bytes", 128 * 2 ** 20)
    except Exception:
        cap = 128 * 2 ** 20                             # v5e/v6e physical
    return int(min(max(2 * est, 32 * 2 ** 20), int(0.85 * cap)))


def denoising_block(x, attention_mask, structure_features, params, num_heads,
                    *, return_attn_weights=True, attn_weights_dtype=jnp.bfloat16,
                    approximate_gelu=False):
    """x: (B, L, D) f32; attention_mask: (B, L) {0,1}; structure_features: (B, Ls, D).
    Returns (out, cross_attn_weights); weights are None if return_attn_weights=False.
    Note: attention weights are emitted in bf16 by default and rows sum only
    approximately to 1 (approx EUP reciprocal)."""
    B, L, D = x.shape
    Ls = structure_features.shape[1]
    H = num_heads
    if Ls != L:
        # attention_mask (length L) is applied to structure key positions, which
        # only makes sense when the two sequences are aligned.
        # TODO(synk): accept a separate structure-side mask of length Ls.
        raise ValueError(f"structure length {Ls} must equal sequence length {L}")
    if D % H:
        raise ValueError("hidden_dim must be divisible by num_heads")

    mask3 = attention_mask.astype(jnp.float32).reshape(B, 1, L)
    weights = _prepare_weights(params, H)
    ffn_tile = _pick_ffn_tile(D)

    def batch_spec(shape):
        nd = len(shape)
        return pl.BlockSpec((1,) + tuple(shape[1:]), lambda b: (b,) + (0,) * (nd - 1))

    out_spec_x = pl.BlockSpec((1, L, D), lambda b: (b, 0, 0))
    if return_attn_weights:
        out_shape = (jax.ShapeDtypeStruct((B, L, D), jnp.float32),
                     jax.ShapeDtypeStruct((B, H, L, Ls), attn_weights_dtype))
        out_specs = (out_spec_x, pl.BlockSpec((1, H, L, Ls), lambda b: (b, 0, 0, 0)))
    else:
        out_shape = jax.ShapeDtypeStruct((B, L, D), jnp.float32)
        out_specs = out_spec_x

    kernel = functools.partial(denoising_block_kernel, num_heads=H, hidden_dim=D,
                               ffn_tile=ffn_tile, emit_attn=return_attn_weights,
                               approx_gelu=approximate_gelu)

    def build_call(single_buffer_weights):
        def weight_spec(shape):
            nd = len(shape)

            def idx(b):
                return (0,) * nd

            if single_buffer_weights:
                # Grid-invariant weights: double-buffering is pure VMEM waste.
                return pl.BlockSpec(tuple(shape), idx, pipeline_mode=pl.Buffered(1))
            return pl.BlockSpec(tuple(shape), idx)

        in_specs = ([batch_spec(x.shape), batch_spec(mask3.shape),
                     batch_spec(structure_features.shape)]
                    + [weight_spec(w.shape) for w in weights])
        return pl.pallas_call(
            kernel,
            out_shape=out_shape,
            grid=(B,),
            in_specs=in_specs,
            out_specs=out_specs,
            scratch_shapes=[pltpu.VMEM((L, D), jnp.bfloat16)],   # fused-Wo ctx scratch
            compiler_params=pltpu.CompilerParams(
                dimension_semantics=("parallel",),
                vmem_limit_bytes=_vmem_limit_bytes(L, Ls, D, H, ffn_tile,
                                                   return_attn_weights)),
        )

    args = (x.astype(jnp.float32), mask3,
            structure_features.astype(jnp.bfloat16),   # bf16 DMA (only used in bf16 matmul)
            *weights)

    result = None
    last_err = None
    for single_buffer in (True, False):
        try:
            result = jax.block_until_ready(build_call(single_buffer)(*args))
            break
        except Exception as e:   # pl.Buffered(1) unsupported -> default buffering
            last_err = e
            result = None
    if result is None:
        raise last_err

    if return_attn_weights:
        return result
    return result, None


# --------------------------- parameter creation ----------------------------

def init_params(key, hidden_dim):
    D = hidden_dim
    ks = jax.random.split(key, 10)
    n = lambda k, shape: (0.02 * jax.random.normal(k, shape)).astype(jnp.float32)
    z = lambda shape: jnp.zeros(shape, jnp.float32)
    o = lambda shape: jnp.ones(shape, jnp.float32)
    return dict(
        g_sa=o((1, D)), b_sa=z((1, D)),
        wqkv=n(ks[0], (D, 3 * D)), bqkv=z((1, 3 * D)),
        wo=n(ks[1], (D, D)), bo=z((1, D)),
        g_ca=o((1, D)), b_ca=z((1, D)),
        wq_c=n(ks[2], (D, D)), bq_c=z((1, D)),
        wkv_c=n(ks[3], (D, 2 * D)), bkv_c=z((1, 2 * D)),
        wo_c=n(ks[4], (D, D)), bo_c=z((1, D)),
        g_ff=o((1, D)), b_ff=z((1, D)),
        w1=n(ks[5], (D, 4 * D)), b1=z((1, 4 * D)),
        w2=n(ks[6], (4 * D, D)), b2=z((1, D)),
    )


# -------------------------- pure-JAX f32 reference --------------------------

def reference(x, mask, s, p, H):
    B, L, D = x.shape
    dh = D // H

    def ln(v, g, b):
        mu = v.mean(-1, keepdims=True)
        var = ((v - mu) ** 2).mean(-1, keepdims=True)
        return (v - mu) / jnp.sqrt(var + 1e-5) * g[0] + b[0]

    def split_heads(v):  # (B, L, D) -> (B, H, L, dh)
        return v.reshape(B, -1, H, dh).transpose(0, 2, 1, 3)

    kb = ((1.0 - mask) * -1e9)[:, None, None, :]     # (B,1,1,L)
    scale = 1.0 / math.sqrt(dh)

    # self-attn
    xn = ln(x, p["g_sa"], p["b_sa"])
    qkv = xn @ p["wqkv"] + p["bqkv"][0]
    q, k, v = jnp.split(qkv, 3, axis=-1)
    q, k, v = split_heads(q), split_heads(k), split_heads(v)
    sc = jnp.einsum("bhqd,bhkd->bhqk", q, k) * scale + kb
    pr = jax.nn.softmax(sc, axis=-1)
    ctx = jnp.einsum("bhqk,bhkd->bhqd", pr, v).transpose(0, 2, 1, 3).reshape(B, L, D)
    x = x + ctx @ p["wo"] + p["bo"][0]

    # cross-attn
    xn = ln(x, p["g_ca"], p["b_ca"])
    q = split_heads(xn @ p["wq_c"] + p["bq_c"][0])
    kv = s @ p["wkv_c"] + p["bkv_c"][0]
    k, v = jnp.split(kv, 2, axis=-1)
    k, v = split_heads(k), split_heads(v)
    sc = jnp.einsum("bhqd,bhkd->bhqk", q, k) * scale + kb
    attn = jax.nn.softmax(sc, axis=-1)
    ctx = jnp.einsum("bhqk,bhkd->bhqd", attn, v).transpose(0, 2, 1, 3).reshape(B, L, D)
    x = x + ctx @ p["wo_c"] + p["bo_c"][0]

    # ffn
    xn = ln(x, p["g_ff"], p["b_ff"])
    h1 = xn @ p["w1"] + p["b1"][0]
    h1 = 0.5 * h1 * (1.0 + jax.lax.erf(h1 / math.sqrt(2.0)))
    x = x + h1 @ p["w2"] + p["b2"][0]
    return x, attn


# ---------------------------------- main ------------------------------------

if __name__ == "__main__":
    B, L, D, H = 2, 8, 32, 4
    Ls = L  # structure features aligned with the sequence

    key = jax.random.PRNGKey(0)
    kx, ks, kp = jax.random.split(key, 3)

    x = jax.random.normal(kx, (B, L, D), dtype=jnp.float32)
    structure_features = jax.random.normal(ks, (B, Ls, D), dtype=jnp.float32)
    attention_mask = jnp.ones((B, L), jnp.float32).at[1, -2:].set(0.0)

    params = init_params(kp, D)

    out, attn_w = denoising_block(x, attention_mask, structure_features, params, H)
    out = jax.block_until_ready(out)
    attn_w = jax.block_until_ready(attn_w)

    ref_out, ref_attn = reference(x, attention_mask, structure_features, params, H)
    assert out.shape == (B, L, D) and attn_w.shape == (B, H, L, Ls)
    # bf16 matmul operands + bf16 attn-weight output + EUP approx reciprocal.
    assert jnp.allclose(out, ref_out, atol=3e-2, rtol=3e-2), \
        float(jnp.max(jnp.abs(out - ref_out)))
    attn_f32 = attn_w.astype(jnp.float32)
    assert jnp.allclose(attn_f32, ref_attn, atol=2e-2, rtol=3e-2), \
        float(jnp.max(jnp.abs(attn_f32 - ref_attn)))

    # Attention-weights-free path (skips the largest HBM write stream).
    out2, none_attn = denoising_block(x, attention_mask, structure_features, params, H,
                                      return_attn_weights=False)
    out2 = jax.block_until_ready(out2)
    assert none_attn is None
    assert jnp.allclose(out2, ref_out, atol=3e-2, rtol=3e-2)

    print("KERNEL_OK")
</pallas_src>

<mosaic_0001>
module attributes {stable_mosaic.version = 11 : i64} {
  func.func @denoising_block_kernel(%arg0: i32, %arg1: memref<1x8x32xf32, #tpu.memory_space<vmem>>, %arg2: memref<1x1x8xf32, #tpu.memory_space<vmem>>, %arg3: memref<1x8x32xbf16, #tpu.memory_space<vmem>>, %arg4: memref<1x32xf32, #tpu.memory_space<vmem>>, %arg5: memref<1x32xf32, #tpu.memory_space<vmem>>, %arg6: memref<32x96xbf16, #tpu.memory_space<vmem>>, %arg7: memref<1x96xf32, #tpu.memory_space<vmem>>, %arg8: memref<32x32xbf16, #tpu.memory_space<vmem>>, %arg9: memref<1x32xf32, #tpu.memory_space<vmem>>, %arg10: memref<1x32xf32, #tpu.memory_space<vmem>>, %arg11: memref<1x32xf32, #tpu.memory_space<vmem>>, %arg12: memref<32x32xbf16, #tpu.memory_space<vmem>>, %arg13: memref<1x32xf32, #tpu.memory_space<vmem>>, %arg14: memref<32x64xbf16, #tpu.memory_space<vmem>>, %arg15: memref<1x64xf32, #tpu.memory_space<vmem>>, %arg16: memref<32x32xbf16, #tpu.memory_space<vmem>>, %arg17: memref<1x32xf32, #tpu.memory_space<vmem>>, %arg18: memref<1x32xf32, #tpu.memory_space<vmem>>, %arg19: memref<1x32xf32, #tpu.memory_space<vmem>>, %arg20: memref<32x128xbf16, #tpu.memory_space<vmem>>, %arg21: memref<1x128xf32, #tpu.memory_space<vmem>>, %arg22: memref<128x32xbf16, #tpu.memory_space<vmem>>, %arg23: memref<1x32xf32, #tpu.memory_space<vmem>>, %arg24: memref<1x8x32xf32, #tpu.memory_space<vmem>>, %arg25: memref<1x4x8x8xbf16, #tpu.memory_space<vmem>>, %arg26: memref<8x32xbf16, #tpu.memory_space<vmem>>) attributes {dimension_semantics = [#tpu.dimension_semantics<parallel>], iteration_bounds = array<i64: 2>, scalar_prefetch = 0 : i64, scratch_operands = 1 : i64, tpu.core_type = #tpu.core_type<tc>, window_params = [{transform_indices = @transform_0, window_bounds = array<i64: 1, 8, 32>}, {transform_indices = @transform_1, window_bounds = array<i64: 1, 1, 8>}, {transform_indices = @transform_2, window_bounds = array<i64: 1, 8, 32>}, {pipeline_mode = #tpu.pipeline_mode<synchronous>, transform_indices = @transform_3, window_bounds = array<i64: 1, 32>}, {pipeline_mode = #tpu.pipeline_mode<synchronous>, transform_indices = @transform_4, window_bounds = array<i64: 1, 32>}, {pipeline_mode = #tpu.pipeline_mode<synchronous>, transform_indices = @transform_5, window_bounds = array<i64: 32, 96>}, {pipeline_mode = #tpu.pipeline_mode<synchronous>, transform_indices = @transform_6, window_bounds = array<i64: 1, 96>}, {pipeline_mode = #tpu.pipeline_mode<synchronous>, transform_indices = @transform_7, window_bounds = array<i64: 32, 32>}, {pipeline_mode = #tpu.pipeline_mode<synchronous>, transform_indices = @transform_8, window_bounds = array<i64: 1, 32>}, {pipeline_mode = #tpu.pipeline_mode<synchronous>, transform_indices = @transform_9, window_bounds = array<i64: 1, 32>}, {pipeline_mode = #tpu.pipeline_mode<synchronous>, transform_indices = @transform_10, window_bounds = array<i64: 1, 32>}, {pipeline_mode = #tpu.pipeline_mode<synchronous>, transform_indices = @transform_11, window_bounds = array<i64: 32, 32>}, {pipeline_mode = #tpu.pipeline_mode<synchronous>, transform_indices = @transform_12, window_bounds = array<i64: 1, 32>}, {pipeline_mode = #tpu.pipeline_mode<synchronous>, transform_indices = @transform_13, window_bounds = array<i64: 32, 64>}, {pipeline_mode = #tpu.pipeline_mode<synchronous>, transform_indices = @transform_14, window_bounds = array<i64: 1, 64>}, {pipeline_mode = #tpu.pipeline_mode<synchronous>, transform_indices = @transform_15, window_bounds = array<i64: 32, 32>}, {pipeline_mode = #tpu.pipeline_mode<synchronous>, transform_indices = @transform_16, window_bounds = array<i64: 1, 32>}, {pipeline_mode = #tpu.pipeline_mode<synchronous>, transform_indices = @transform_17, window_bounds = array<i64: 1, 32>}, {pipeline_mode = #tpu.pipeline_mode<synchronous>, transform_indices = @transform_18, window_bounds = array<i64: 1, 32>}, {pipeline_mode = #tpu.pipeline_mode<synchronous>, transform_indices = @transform_19, window_bounds = array<i64: 32, 128>}, {pipeline_mode = #tpu.pipeline_mode<synchronous>, transform_indices = @transform_20, window_bounds = array<i64: 1, 128>}, {pipeline_mode = #tpu.pipeline_mode<synchronous>, transform_indices = @transform_21, window_bounds = array<i64: 128, 32>}, {pipeline_mode = #tpu.pipeline_mode<synchronous>, transform_indices = @transform_22, window_bounds = array<i64: 1, 32>}, {transform_indices = @transform_23, window_bounds = array<i64: 1, 8, 32>}, {transform_indices = @transform_24, window_bounds = array<i64: 1, 4, 8, 8>}]} {
    %c0 = arith.constant 0 : index
    %c0_0 = arith.constant 0 : index
    %c0_1 = arith.constant 0 : index
    %0 = vector.load %arg1[%c0, %c0_0, %c0_1] : memref<1x8x32xf32, #tpu.memory_space<vmem>>, vector<1x8x32xf32>
    %1 = vector.shape_cast %0 : vector<1x8x32xf32> to vector<8x32xf32>
    %c0_2 = arith.constant 0 : index
    %c0_3 = arith.constant 0 : index
    %c0_4 = arith.constant 0 : index
    %2 = vector.load %arg2[%c0_2, %c0_3, %c0_4] : memref<1x1x8xf32, #tpu.memory_space<vmem>>, vector<1x1x8xf32>
    %3 = vector.shape_cast %2 : vector<1x1x8xf32> to vector<1x8xf32>
    %cst = arith.constant 1.000000e+00 : f32
    %4 = vector.broadcast %cst : f32 to vector<1x8xf32>
    %5 = arith.subf %4, %3 : vector<1x8xf32>
    %cst_5 = arith.constant -1.000000e+09 : f32
    %6 = vector.broadcast %cst_5 : f32 to vector<1x8xf32>
    %7 = arith.mulf %5, %6 : vector<1x8xf32>
    %8 = vector.shape_cast %7 : vector<1x8xf32> to vector<1x8xf32>
    %9 = vector.broadcast %8 : vector<1x8xf32> to vector<8x8xf32>
    %c0_6 = arith.constant 0 : index
    %c0_7 = arith.constant 0 : index
    %10 = vector.load %arg4[%c0_6, %c0_7] : memref<1x32xf32, #tpu.memory_space<vmem>>, vector<1x32xf32>
    %c0_8 = arith.constant 0 : index
    %c0_9 = arith.constant 0 : index
    %11 = vector.load %arg5[%c0_8, %c0_9] : memref<1x32xf32, #tpu.memory_space<vmem>>, vector<1x32xf32>
    %cst_10 = arith.constant dense<0.000000e+00> : vector<8xf32>
    %12 = vector.multi_reduction <add>, %1, %cst_10 [1] : vector<8x32xf32> to vector<8xf32>
    %13 = vector.shape_cast %12 : vector<8xf32> to vector<8x1xf32>
    %cst_11 = arith.constant 3.200000e+01 : f32
    %14 = vector.broadcast %cst_11 : f32 to vector<8x1xf32>
    %15 = arith.divf %13, %14 : vector<8x1xf32>
    %16 = vector.broadcast %15 : vector<8x1xf32> to vector<8x32xf32>
    %17 = arith.subf %1, %16 : vector<8x32xf32>
    %18 = arith.mulf %17, %17 : vector<8x32xf32>
    %cst_12 = arith.constant dense<0.000000e+00> : vector<8xf32>
    %19 = vector.multi_reduction <add>, %18, %cst_12 [1] : vector<8x32xf32> to vector<8xf32>
    %20 = vector.shape_cast %19 : vector<8xf32> to vector<8x1xf32>
    %cst_13 = arith.constant 3.200000e+01 : f32
    %21 = vector.broadcast %cst_13 : f32 to vector<8x1xf32>
    %22 = arith.divf %20, %21 : vector<8x1xf32>
    %23 = vector.broadcast %15 : vector<8x1xf32> to vector<8x32xf32>
    %24 = arith.subf %1, %23 : vector<8x32xf32>
    %cst_14 = arith.constant 9.99999974E-6 : f32
    %25 = vector.broadcast %cst_14 : f32 to vector<8x1xf32>
    %26 = arith.addf %22, %25 : vector<8x1xf32>
    %27 = math.rsqrt %26 : vector<8x1xf32>
    %28 = vector.broadcast %27 : vector<8x1xf32> to vector<8x32xf32>
    %29 = arith.mulf %24, %28 : vector<8x32xf32>
    %30 = vector.broadcast %10 : vector<1x32xf32> to vector<8x32xf32>
    %31 = arith.mulf %29, %30 : vector<8x32xf32>
    %32 = vector.broadcast %11 : vector<1x32xf32> to vector<8x32xf32>
    %33 = arith.addf %31, %32 : vector<8x32xf32>
    %34 = arith.truncf %33 : vector<8x32xf32> to vector<8x32xbf16>
    %c0_15 = arith.constant 0 : index
    %c0_16 = arith.constant 0 : index
    %35 = vector.load %arg6[%c0_15, %c0_16] : memref<32x96xbf16, #tpu.memory_space<vmem>>, vector<32x96xbf16>
    %cst_17 = arith.constant dense<0.000000e+00> : vector<8x96xf32>
    %36 = tpu.matmul %34, %35, %cst_17 {dimension_numbers = #tpu.dot_dimension_numbers<[1], [0], [0], [1], [0, 0, 1, 1], [], []>} : vector<8x32xbf16>, vector<32x96xbf16>, vector<8x96xf32> -> vector<8x96xf32>
    %c0_18 = arith.constant 0 : index
    %c0_19 = arith.constant 0 : index
    %37 = vector.load %arg7[%c0_18, %c0_19] : memref<1x96xf32, #tpu.memory_space<vmem>>, vector<1x96xf32>
    %38 = vector.broadcast %37 : vector<1x96xf32> to vector<8x96xf32>
    %39 = arith.addf %36, %38 : vector<8x96xf32>
    %40 = arith.truncf %39 : vector<8x96xf32> to vector<8x96xbf16>
    %41 = vector.extract_strided_slice %40 {offsets = [0, 0], sizes = [8, 32], strides = [1, 1]} : vector<8x96xbf16> to vector<8x32xbf16>
    %42 = vector.extract_strided_slice %40 {offsets = [0, 32], sizes = [8, 32], strides = [1, 1]} : vector<8x96xbf16> to vector<8x32xbf16>
    %43 = vector.extract_strided_slice %40 {offsets = [0, 64], sizes = [8, 32], strides = [1, 1]} : vector<8x96xbf16> to vector<8x32xbf16>
    %44 = vector.extract_strided_slice %41 {offsets = [0, 0], sizes = [8, 8], strides = [1, 1]} : vector<8x32xbf16> to vector<8x8xbf16>
    %45 = vector.extract_strided_slice %42 {offsets = [0, 0], sizes = [8, 8], strides = [1, 1]} : vector<8x32xbf16> to vector<8x8xbf16>
    "tpu.trace_start"() <{level = 10 : i32, message = "qd,kd->qk"}> : () -> ()
    %cst_20 = arith.constant dense<0.000000e+00> : vector<8x8xf32>
    %46 = tpu.matmul %44, %45, %cst_20 {dimension_numbers = #tpu.dot_dimension_numbers<[1], [1], [0], [0], [0, 0, 1, 0], [], []>} : vector<8x8xbf16>, vector<8x8xbf16>, vector<8x8xf32> -> vector<8x8xf32>
    "tpu.trace_stop"() : () -> ()
    %47 = arith.addf %46, %9 : vector<8x8xf32>
    %cst_21 = arith.constant dense<0xFF800000> : vector<8xf32>
    %48 = vector.multi_reduction <maximumf>, %47, %cst_21 [1] : vector<8x8xf32> to vector<8xf32>
    %49 = vector.shape_cast %48 : vector<8xf32> to vector<8x1xf32>
    %50 = vector.broadcast %49 : vector<8x1xf32> to vector<8x8xf32>
    %51 = arith.subf %47, %50 : vector<8x8xf32>
    %52 = math.exp %51 : vector<8x8xf32>
    %cst_22 = arith.constant dense<0.000000e+00> : vector<8xf32>
    %53 = vector.multi_reduction <add>, %52, %cst_22 [1] : vector<8x8xf32> to vector<8xf32>
    %54 = vector.shape_cast %53 : vector<8xf32> to vector<8x1xf32>
    %55 = tpu.reciprocal %54 {approx = true} : vector<8x1xf32> -> vector<8x1xf32>
    %56 = vector.broadcast %55 : vector<8x1xf32> to vector<8x8xf32>
    %57 = arith.mulf %52, %56 : vector<8x8xf32>
    %58 = arith.truncf %57 : vector<8x8xf32> to vector<8x8xbf16>
    %59 = vector.extract_strided_slice %43 {offsets = [0, 0], sizes = [8, 8], strides = [1, 1]} : vector<8x32xbf16> to vector<8x8xbf16>
    %cst_23 = arith.constant dense<0.000000e+00> : vector<8x8xf32>
    %60 = tpu.matmul %58, %59, %cst_23 {dimension_numbers = #tpu.dot_dimension_numbers<[1], [0], [0], [1], [0, 0, 1, 1], [], []>} : vector<8x8xbf16>, vector<8x8xbf16>, vector<8x8xf32> -> vector<8x8xf32>
    %61 = arith.truncf %60 : vector<8x8xf32> to vector<8x8xbf16>
    %c0_24 = arith.constant 0 : index
    %c0_25 = arith.constant 0 : index
    %62 = vector.load %arg26[%c0_24, %c0_25] : memref<8x32xbf16, #tpu.memory_space<vmem>>, vector<8x8xbf16>
    tpu.vector_store %arg26[%c0_24, %c0_25], %61 {strides = array<i32>} : memref<8x32xbf16, #tpu.memory_space<vmem>>, vector<8x8xbf16>,
    %63 = vector.extract_strided_slice %41 {offsets = [0, 8], sizes = [8, 8], strides = [1, 1]} : vector<8x32xbf16> to vector<8x8xbf16>
    %64 = vector.extract_strided_slice %42 {offsets = [0, 8], sizes = [8, 8], strides = [1, 1]} : vector<8x32xbf16> to vector<8x8xbf16>
    "tpu.trace_start"() <{level = 10 : i32, message = "qd,kd->qk"}> : () -> ()
    %cst_26 = arith.constant dense<0.000000e+00> : vector<8x8xf32>
    %65 = tpu.matmul %63, %64, %cst_26 {dimension_numbers = #tpu.dot_dimension_numbers<[1], [1], [0], [0], [0, 0, 1, 0], [], []>} : vector<8x8xbf16>, vector<8x8xbf16>, vector<8x8xf32> -> vector<8x8xf32>
    "tpu.trace_stop"() : () -> ()
    %66 = arith.addf %65, %9 : vector<8x8xf32>
    %cst_27 = arith.constant dense<0xFF800000> : vector<8xf32>
    %67 = vector.multi_reduction <maximumf>, %66, %cst_27 [1] : vector<8x8xf32> to vector<8xf32>
    %68 = vector.shape_cast %67 : vector<8xf32> to vector<8x1xf32>
    %69 = vector.broadcast %68 : vector<8x1xf32> to vector<8x8xf32>
    %70 = arith.subf %66, %69 : vector<8x8xf32>
    %71 = math.exp %70 : vector<8x8xf32>
    %cst_28 = arith.constant dense<0.000000e+00> : vector<8xf32>
    %72 = vector.multi_reduction <add>, %71, %cst_28 [1] : vector<8x8xf32> to vector<8xf32>
    %73 = vector.shape_cast %72 : vector<8xf32> to vector<8x1xf32>
    %74 = tpu.reciprocal %73 {approx = true} : vector<8x1xf32> -> vector<8x1xf32>
    %75 = vector.broadcast %74 : vector<8x1xf32> to vector<8x8xf32>
    %76 = arith.mulf %71, %75 : vector<8x8xf32>
    %77 = arith.truncf %76 : vector<8x8xf32> to vector<8x8xbf16>
    %78 = vector.extract_strided_slice %43 {offsets = [0, 8], sizes = [8, 8], strides = [1, 1]} : vector<8x32xbf16> to vector<8x8xbf16>
    %cst_29 = arith.constant dense<0.000000e+00> : vector<8x8xf32>
    %79 = tpu.matmul %77, %78, %cst_29 {dimension_numbers = #tpu.dot_dimension_numbers<[1], [0], [0], [1], [0, 0, 1, 1], [], []>} : vector<8x8xbf16>, vector<8x8xbf16>, vector<8x8xf32> -> vector<8x8xf32>
    %80 = arith.truncf %79 : vector<8x8xf32> to vector<8x8xbf16>
    %c0_30 = arith.constant 0 : index
    %c8 = arith.constant 8 : index
    %81 = vector.load %arg26[%c0_30, %c8] : memref<8x32xbf16, #tpu.memory_space<vmem>>, vector<8x8xbf16>
    tpu.vector_store %arg26[%c0_30, %c8], %80 {strides = array<i32>} : memref<8x32xbf16, #tpu.memory_space<vmem>>, vector<8x8xbf16>,
    %82 = vector.extract_strided_slice %41 {offsets = [0, 16], sizes = [8, 8], strides = [1, 1]} : vector<8x32xbf16> to vector<8x8xbf16>
    %83 = vector.extract_strided_slice %42 {offsets = [0, 16], sizes = [8, 8], strides = [1, 1]} : vector<8x32xbf16> to vector<8x8xbf16>
    "tpu.trace_start"() <{level = 10 : i32, message = "qd,kd->qk"}> : () -> ()
    %cst_31 = arith.constant dense<0.000000e+00> : vector<8x8xf32>
    %84 = tpu.matmul %82, %83, %cst_31 {dimension_numbers = #tpu.dot_dimension_numbers<[1], [1], [0], [0], [0, 0, 1, 0], [], []>} : vector<8x8xbf16>, vector<8x8xbf16>, vector<8x8xf32> -> vector<8x8xf32>
    "tpu.trace_stop"() : () -> ()
    %85 = arith.addf %84, %9 : vector<8x8xf32>
    %cst_32 = arith.constant dense<0xFF800000> : vector<8xf32>
    %86 = vector.multi_reduction <maximumf>, %85, %cst_32 [1] : vector<8x8xf32> to vector<8xf32>
    %87 = vector.shape_cast %86 : vector<8xf32> to vector<8x1xf32>
    %88 = vector.broadcast %87 : vector<8x1xf32> to vector<8x8xf32>
    %89 = arith.subf %85, %88 : vector<8x8xf32>
    %90 = math.exp %89 : vector<8x8xf32>
    %cst_33 = arith.constant dense<0.000000e+00> : vector<8xf32>
    %91 = vector.multi_reduction <add>, %90, %cst_33 [1] : vector<8x8xf32> to vector<8xf32>
    %92 = vector.shape_cast %91 : vector<8xf32> to vector<8x1xf32>
    %93 = tpu.reciprocal %92 {approx = true} : vector<8x1xf32> -> vector<8x1xf32>
    %94 = vector.broadcast %93 : vector<8x1xf32> to vector<8x8xf32>
    %95 = arith.mulf %90, %94 : vector<8x8xf32>
    %96 = arith.truncf %95 : vector<8x8xf32> to vector<8x8xbf16>
    %97 = vector.extract_strided_slice %43 {offsets = [0, 16], sizes = [8, 8], strides = [1, 1]} : vector<8x32xbf16> to vector<8x8xbf16>
    %cst_34 = arith.constant dense<0.000000e+00> : vector<8x8xf32>
    %98 = tpu.matmul %96, %97, %cst_34 {dimension_numbers = #tpu.dot_dimension_numbers<[1], [0], [0], [1], [0, 0, 1, 1], [], []>} : vector<8x8xbf16>, vector<8x8xbf16>, vector<8x8xf32> -> vector<8x8xf32>
    %99 = arith.truncf %98 : vector<8x8xf32> to vector<8x8xbf16>
    %c0_35 = arith.constant 0 : index
    %c16 = arith.constant 16 : index
    %100 = vector.load %arg26[%c0_35, %c16] : memref<8x32xbf16, #tpu.memory_space<vmem>>, vector<8x8xbf16>
    tpu.vector_store %arg26[%c0_35, %c16], %99 {strides = array<i32>} : memref<8x32xbf16, #tpu.memory_space<vmem>>, vector<8x8xbf16>,
    %101 = vector.extract_strided_slice %41 {offsets = [0, 24], sizes = [8, 8], strides = [1, 1]} : vector<8x32xbf16> to vector<8x8xbf16>
    %102 = vector.extract_strided_slice %42 {offsets = [0, 24], sizes = [8, 8], strides = [1, 1]} : vector<8x32xbf16> to vector<8x8xbf16>
    "tpu.trace_start"() <{level = 10 : i32, message = "qd,kd->qk"}> : () -> ()
    %cst_36 = arith.constant dense<0.000000e+00> : vector<8x8xf32>
    %103 = tpu.matmul %101, %102, %cst_36 {dimension_numbers = #tpu.dot_dimension_numbers<[1], [1], [0], [0], [0, 0, 1, 0], [], []>} : vector<8x8xbf16>, vector<8x8xbf16>, vector<8x8xf32> -> vector<8x8xf32>
    "tpu.trace_stop"() : () -> ()
    %104 = arith.addf %103, %9 : vector<8x8xf32>
    %cst_37 = arith.constant dense<0xFF800000> : vector<8xf32>
    %105 = vector.multi_reduction <maximumf>, %104, %cst_37 [1] : vector<8x8xf32> to vector<8xf32>
    %106 = vector.shape_cast %105 : vector<8xf32> to vector<8x1xf32>
    %107 = vector.broadcast %106 : vector<8x1xf32> to vector<8x8xf32>
    %108 = arith.subf %104, %107 : vector<8x8xf32>
    %109 = math.exp %108 : vector<8x8xf32>
    %cst_38 = arith.constant dense<0.000000e+00> : vector<8xf32>
    %110 = vector.multi_reduction <add>, %109, %cst_38 [1] : vector<8x8xf32> to vector<8xf32>
    %111 = vector.shape_cast %110 : vector<8xf32> to vector<8x1xf32>
    %112 = tpu.reciprocal %111 {approx = true} : vector<8x1xf32> -> vector<8x1xf32>
    %113 = vector.broadcast %112 : vector<8x1xf32> to vector<8x8xf32>
    %114 = arith.mulf %109, %113 : vector<8x8xf32>
    %115 = arith.truncf %114 : vector<8x8xf32> to vector<8x8xbf16>
    %116 = vector.extract_strided_slice %43 {offsets = [0, 24], sizes = [8, 8], strides = [1, 1]} : vector<8x32xbf16> to vector<8x8xbf16>
    %cst_39 = arith.constant dense<0.000000e+00> : vector<8x8xf32>
    %117 = tpu.matmul %115, %116, %cst_39 {dimension_numbers = #tpu.dot_dimension_numbers<[1], [0], [0], [1], [0, 0, 1, 1], [], []>} : vector<8x8xbf16>, vector<8x8xbf16>, vector<8x8xf32> -> vector<8x8xf32>
    %118 = arith.truncf %117 : vector<8x8xf32> to vector<8x8xbf16>
    %c0_40 = arith.constant 0 : index
    %c24 = arith.constant 24 : index
    %119 = vector.load %arg26[%c0_40, %c24] : memref<8x32xbf16, #tpu.memory_space<vmem>>, vector<8x8xbf16>
    tpu.vector_store %arg26[%c0_40, %c24], %118 {strides = array<i32>} : memref<8x32xbf16, #tpu.memory_space<vmem>>, vector<8x8xbf16>,
    %c0_41 = arith.constant 0 : index
    %c0_42 = arith.constant 0 : index
    %120 = vector.load %arg26[%c0_41, %c0_42] : memref<8x32xbf16, #tpu.memory_space<vmem>>, vector<8x32xbf16>
    %c0_43 = arith.constant 0 : index
    %c0_44 = arith.constant 0 : index
    %121 = vector.load %arg8[%c0_43, %c0_44] : memref<32x32xbf16, #tpu.memory_space<vmem>>, vector<32x32xbf16>
    %cst_45 = arith.constant dense<0.000000e+00> : vector<8x32xf32>
    %122 = tpu.matmul %120, %121, %cst_45 {dimension_numbers = #tpu.dot_dimension_numbers<[1], [0], [0], [1], [0, 0, 1, 1], [], []>} : vector<8x32xbf16>, vector<32x32xbf16>, vector<8x32xf32> -> vector<8x32xf32>
    %123 = arith.addf %1, %122 : vector<8x32xf32>
    %c0_46 = arith.constant 0 : index
    %c0_47 = arith.constant 0 : index
    %124 = vector.load %arg9[%c0_46, %c0_47] : memref<1x32xf32, #tpu.memory_space<vmem>>, vector<1x32xf32>
    %125 = vector.broadcast %124 : vector<1x32xf32> to vector<8x32xf32>
    %126 = arith.addf %123, %125 : vector<8x32xf32>
    %c0_48 = arith.constant 0 : index
    %c0_49 = arith.constant 0 : index
    %c0_50 = arith.constant 0 : index
    %127 = vector.load %arg3[%c0_48, %c0_49, %c0_50] : memref<1x8x32xbf16, #tpu.memory_space<vmem>>, vector<1x8x32xbf16>
    %128 = vector.shape_cast %127 : vector<1x8x32xbf16> to vector<8x32xbf16>
    %c0_51 = arith.constant 0 : index
    %c0_52 = arith.constant 0 : index
    %129 = vector.load %arg10[%c0_51, %c0_52] : memref<1x32xf32, #tpu.memory_space<vmem>>, vector<1x32xf32>
    %c0_53 = arith.constant 0 : index
    %c0_54 = arith.constant 0 : index
    %130 = vector.load %arg11[%c0_53, %c0_54] : memref<1x32xf32, #tpu.memory_space<vmem>>, vector<1x32xf32>
    %cst_55 = arith.constant dense<0.000000e+00> : vector<8xf32>
    %131 = vector.multi_reduction <add>, %126, %cst_55 [1] : vector<8x32xf32> to vector<8xf32>
    %132 = vector.shape_cast %131 : vector<8xf32> to vector<8x1xf32>
    %cst_56 = arith.constant 3.200000e+01 : f32
    %133 = vector.broadcast %cst_56 : f32 to vector<8x1xf32>
    %134 = arith.divf %132, %133 : vector<8x1xf32>
    %135 = vector.broadcast %134 : vector<8x1xf32> to vector<8x32xf32>
    %136 = arith.subf %126, %135 : vector<8x32xf32>
    %137 = arith.mulf %136, %136 : vector<8x32xf32>
    %cst_57 = arith.constant dense<0.000000e+00> : vector<8xf32>
    %138 = vector.multi_reduction <add>, %137, %cst_57 [1] : vector<8x32xf32> to vector<8xf32>
    %139 = vector.shape_cast %138 : vector<8xf32> to vector<8x1xf32>
    %cst_58 = arith.constant 3.200000e+01 : f32
    %140 = vector.broadcast %cst_58 : f32 to vector<8x1xf32>
    %141 = arith.divf %139, %140 : vector<8x1xf32>
    %142 = vector.broadcast %134 : vector<8x1xf32> to vector<8x32xf32>
    %143 = arith.subf %126, %142 : vector<8x32xf32>
    %cst_59 = arith.constant 9.99999974E-6 : f32
    %144 = vector.broadcast %cst_59 : f32 to vector<8x1xf32>
    %145 = arith.addf %141, %144 : vector<8x1xf32>
    %146 = math.rsqrt %145 : vector<8x1xf32>
    %147 = vector.broadcast %146 : vector<8x1xf32> to vector<8x32xf32>
    %148 = arith.mulf %143, %147 : vector<8x32xf32>
    %149 = vector.broadcast %129 : vector<1x32xf32> to vector<8x32xf32>
    %150 = arith.mulf %148, %149 : vector<8x32xf32>
    %151 = vector.broadcast %130 : vector<1x32xf32> to vector<8x32xf32>
    %152 = arith.addf %150, %151 : vector<8x32xf32>
    %153 = arith.truncf %152 : vector<8x32xf32> to vector<8x32xbf16>
    %c0_60 = arith.constant 0 : index
    %c0_61 = arith.constant 0 : index
    %154 = vector.load %arg12[%c0_60, %c0_61] : memref<32x32xbf16, #tpu.memory_space<vmem>>, vector<32x32xbf16>
    %cst_62 = arith.constant dense<0.000000e+00> : vector<8x32xf32>
    %155 = tpu.matmul %153, %154, %cst_62 {dimension_numbers = #tpu.dot_dimension_numbers<[1], [0], [0], [1], [0, 0, 1, 1], [], []>} : vector<8x32xbf16>, vector<32x32xbf16>, vector<8x32xf32> -> vector<8x32xf32>
    %c0_63 = arith.constant 0 : index
    %c0_64 = arith.constant 0 : index
    %156 = vector.load %arg13[%c0_63, %c0_64] : memref<1x32xf32, #tpu.memory_space<vmem>>, vector<1x32xf32>
    %157 = vector.broadcast %156 : vector<1x32xf32> to vector<8x32xf32>
    %158 = arith.addf %155, %157 : vector<8x32xf32>
    %c0_65 = arith.constant 0 : index
    %c0_66 = arith.constant 0 : index
    %159 = vector.load %arg14[%c0_65, %c0_66] : memref<32x64xbf16, #tpu.memory_space<vmem>>, vector<32x64xbf16>
    %cst_67 = arith.constant dense<0.000000e+00> : vector<8x64xf32>
    %160 = tpu.matmul %128, %159, %cst_67 {dimension_numbers = #tpu.dot_dimension_numbers<[1], [0], [0], [1], [0, 0, 1, 1], [], []>} : vector<8x32xbf16>, vector<32x64xbf16>, vector<8x64xf32> -> vector<8x64xf32>
    %c0_68 = arith.constant 0 : index
    %c0_69 = arith.constant 0 : index
    %161 = vector.load %arg15[%c0_68, %c0_69] : memref<1x64xf32, #tpu.memory_space<vmem>>, vector<1x64xf32>
    %162 = vector.broadcast %161 : vector<1x64xf32> to vector<8x64xf32>
    %163 = arith.addf %160, %162 : vector<8x64xf32>
    %164 = arith.truncf %158 : vector<8x32xf32> to vector<8x32xbf16>
    %165 = arith.truncf %163 : vector<8x64xf32> to vector<8x64xbf16>
    %166 = vector.extract_strided_slice %165 {offsets = [0, 0], sizes = [8, 32], strides = [1, 1]} : vector<8x64xbf16> to vector<8x32xbf16>
    %167 = vector.extract_strided_slice %165 {offsets = [0, 32], sizes = [8, 32], strides = [1, 1]} : vector<8x64xbf16> to vector<8x32xbf16>
    %168 = vector.extract_strided_slice %164 {offsets = [0, 0], sizes = [8, 8], strides = [1, 1]} : vector<8x32xbf16> to vector<8x8xbf16>
    %169 = vector.extract_strided_slice %166 {offsets = [0, 0], sizes = [8, 8], strides = [1, 1]} : vector<8x32xbf16> to vector<8x8xbf16>
    "tpu.trace_start"() <{level = 10 : i32, message = "qd,kd->qk"}> : () -> ()
    %cst_70 = arith.constant dense<0.000000e+00> : vector<8x8xf32>
    %170 = tpu.matmul %168, %169, %cst_70 {dimension_numbers = #tpu.dot_dimension_numbers<[1], [1], [0], [0], [0, 0, 1, 0], [], []>} : vector<8x8xbf16>, vector<8x8xbf16>, vector<8x8xf32> -> vector<8x8xf32>
    "tpu.trace_stop"() : () -> ()
    %171 = arith.addf %170, %9 : vector<8x8xf32>
    %cst_71 = arith.constant dense<0xFF800000> : vector<8xf32>
    %172 = vector.multi_reduction <maximumf>, %171, %cst_71 [1] : vector<8x8xf32> to vector<8xf32>
    %173 = vector.shape_cast %172 : vector<8xf32> to vector<8x1xf32>
    %174 = vector.broadcast %173 : vector<8x1xf32> to vector<8x8xf32>
    %175 = arith.subf %171, %174 : vector<8x8xf32>
    %176 = math.exp %175 : vector<8x8xf32>
    %cst_72 = arith.constant dense<0.000000e+00> : vector<8xf32>
    %177 = vector.multi_reduction <add>, %176, %cst_72 [1] : vector<8x8xf32> to vector<8xf32>
    %178 = vector.shape_cast %177 : vector<8xf32> to vector<8x1xf32>
    %179 = tpu.reciprocal %178 {approx = true} : vector<8x1xf32> -> vector<8x1xf32>
    %180 = vector.broadcast %179 : vector<8x1xf32> to vector<8x8xf32>
    %181 = arith.mulf %176, %180 : vector<8x8xf32>
    %182 = arith.truncf %181 : vector<8x8xf32> to vector<8x8xbf16>
    %c0_73 = arith.constant 0 : index
    %c0_74 = arith.constant 0 : index
    %c0_75 = arith.constant 0 : index
    %c0_76 = arith.constant 0 : index
    %183 = vector.load %arg25[%c0_73, %c0_74, %c0_75, %c0_76] : memref<1x4x8x8xbf16, #tpu.memory_space<vmem>>, vector<1x1x8x8xbf16>
    %184 = vector.shape_cast %183 : vector<1x1x8x8xbf16> to vector<8x8xbf16>
    %185 = vector.shape_cast %182 : vector<8x8xbf16> to vector<1x1x8x8xbf16>
    tpu.vector_store %arg25[%c0_73, %c0_74, %c0_75, %c0_76], %185 {strides = array<i32>} : memref<1x4x8x8xbf16, #tpu.memory_space<vmem>>, vector<1x1x8x8xbf16>,
    %186 = arith.truncf %181 : vector<8x8xf32> to vector<8x8xbf16>
    %187 = vector.extract_strided_slice %167 {offsets = [0, 0], sizes = [8, 8], strides = [1, 1]} : vector<8x32xbf16> to vector<8x8xbf16>
    %cst_77 = arith.constant dense<0.000000e+00> : vector<8x8xf32>
    %188 = tpu.matmul %186, %187, %cst_77 {dimension_numbers = #tpu.dot_dimension_numbers<[1], [0], [0], [1], [0, 0, 1, 1], [], []>} : vector<8x8xbf16>, vector<8x8xbf16>, vector<8x8xf32> -> vector<8x8xf32>
    %189 = arith.truncf %188 : vector<8x8xf32> to vector<8x8xbf16>
    %c0_78 = arith.constant 0 : index
    %c0_79 = arith.constant 0 : index
    %190 = vector.load %arg26[%c0_78, %c0_79] : memref<8x32xbf16, #tpu.memory_space<vmem>>, vector<8x8xbf16>
    tpu.vector_store %arg26[%c0_78, %c0_79], %189 {strides = array<i32>} : memref<8x32xbf16, #tpu.memory_space<vmem>>, vector<8x8xbf16>,
    %191 = vector.extract_strided_slice %164 {offsets = [0, 8], sizes = [8, 8], strides = [1, 1]} : vector<8x32xbf16> to vector<8x8xbf16>
    %192 = vector.extract_strided_slice %166 {offsets = [0, 8], sizes = [8, 8], strides = [1, 1]} : vector<8x32xbf16> to vector<8x8xbf16>
    "tpu.trace_start"() <{level = 10 : i32, message = "qd,kd->qk"}> : () -> ()
    %cst_80 = arith.constant dense<0.000000e+00> : vector<8x8xf32>
    %193 = tpu.matmul %191, %192, %cst_80 {dimension_numbers = #tpu.dot_dimension_numbers<[1], [1], [0], [0], [0, 0, 1, 0], [], []>} : vector<8x8xbf16>, vector<8x8xbf16>, vector<8x8xf32> -> vector<8x8xf32>
    "tpu.trace_stop"() : () -> ()
    %194 = arith.addf %193, %9 : vector<8x8xf32>
    %cst_81 = arith.constant dense<0xFF800000> : vector<8xf32>
    %195 = vector.multi_reduction <maximumf>, %194, %cst_81 [1] : vector<8x8xf32> to vector<8xf32>
    %196 = vector.shape_cast %195 : vector<8xf32> to vector<8x1xf32>
    %197 = vector.broadcast %196 : vector<8x1xf32> to vector<8x8xf32>
    %198 = arith.subf %194, %197 : vector<8x8xf32>
    %199 = math.exp %198 : vector<8x8xf32>
    %cst_82 = arith.constant dense<0.000000e+00> : vector<8xf32>
    %200 = vector.multi_reduction <add>, %199, %cst_82 [1] : vector<8x8xf32> to vector<8xf32>
    %201 = vector.shape_cast %200 : vector<8xf32> to vector<8x1xf32>
    %202 = tpu.reciprocal %201 {approx = true} : vector<8x1xf32> -> vector<8x1xf32>
    %203 = vector.broadcast %202 : vector<8x1xf32> to vector<8x8xf32>
    %204 = arith.mulf %199, %203 : vector<8x8xf32>
    %205 = arith.truncf %204 : vector<8x8xf32> to vector<8x8xbf16>
    %c0_83 = arith.constant 0 : index
    %c1 = arith.constant 1 : index
    %c0_84 = arith.constant 0 : index
    %c0_85 = arith.constant 0 : index
    %206 = vector.load %arg25[%c0_83, %c1, %c0_84, %c0_85] : memref<1x4x8x8xbf16, #tpu.memory_space<vmem>>, vector<1x1x8x8xbf16>
    %207 = vector.shape_cast %206 : vector<1x1x8x8xbf16> to vector<8x8xbf16>
    %208 = vector.shape_cast %205 : vector<8x8xbf16> to vector<1x1x8x8xbf16>
    tpu.vector_store %arg25[%c0_83, %c1, %c0_84, %c0_85], %208 {strides = array<i32>} : memref<1x4x8x8xbf16, #tpu.memory_space<vmem>>, vector<1x1x8x8xbf16>,
    %209 = arith.truncf %204 : vector<8x8xf32> to vector<8x8xbf16>
    %210 = vector.extract_strided_slice %167 {offsets = [0, 8], sizes = [8, 8], strides = [1, 1]} : vector<8x32xbf16> to vector<8x8xbf16>
    %cst_86 = arith.constant dense<0.000000e+00> : vector<8x8xf32>
    %211 = tpu.matmul %209, %210, %cst_86 {dimension_numbers = #tpu.dot_dimension_numbers<[1], [0], [0], [1], [0, 0, 1, 1], [], []>} : vector<8x8xbf16>, vector<8x8xbf16>, vector<8x8xf32> -> vector<8x8xf32>
    %212 = arith.truncf %211 : vector<8x8xf32> to vector<8x8xbf16>
    %c0_87 = arith.constant 0 : index
    %c8_88 = arith.constant 8 : index
    %213 = vector.load %arg26[%c0_87, %c8_88] : memref<8x32xbf16, #tpu.memory_space<vmem>>, vector<8x8xbf16>
    tpu.vector_store %arg26[%c0_87, %c8_88], %212 {strides = array<i32>} : memref<8x32xbf16, #tpu.memory_space<vmem>>, vector<8x8xbf16>,
    %214 = vector.extract_strided_slice %164 {offsets = [0, 16], sizes = [8, 8], strides = [1, 1]} : vector<8x32xbf16> to vector<8x8xbf16>
    %215 = vector.extract_strided_slice %166 {offsets = [0, 16], sizes = [8, 8], strides = [1, 1]} : vector<8x32xbf16> to vector<8x8xbf16>
    "tpu.trace_start"() <{level = 10 : i32, message = "qd,kd->qk"}> : () -> ()
    %cst_89 = arith.constant dense<0.000000e+00> : vector<8x8xf32>
    %216 = tpu.matmul %214, %215, %cst_89 {dimension_numbers = #tpu.dot_dimension_numbers<[1], [1], [0], [0], [0, 0, 1, 0], [], []>} : vector<8x8xbf16>, vector<8x8xbf16>, vector<8x8xf32> -> vector<8x8xf32>
    "tpu.trace_stop"() : () -> ()
    %217 = arith.addf %216, %9 : vector<8x8xf32>
    %cst_90 = arith.constant dense<0xFF800000> : vector<8xf32>
    %218 = vector.multi_reduction <maximumf>, %217, %cst_90 [1] : vector<8x8xf32> to vector<8xf32>
    %219 = vector.shape_cast %218 : vector<8xf32> to vector<8x1xf32>
    %220 = vector.broadcast %219 : vector<8x1xf32> to vector<8x8xf32>
    %221 = arith.subf %217, %220 : vector<8x8xf32>
    %222 = math.exp %221 : vector<8x8xf32>
    %cst_91 = arith.constant dense<0.000000e+00> : vector<8xf32>
    %223 = vector.multi_reduction <add>, %222, %cst_91 [1] : vector<8x8xf32> to vector<8xf32>
    %224 = vector.shape_cast %223 : vector<8xf32> to vector<8x1xf32>
    %225 = tpu.reciprocal %224 {approx = true} : vector<8x1xf32> -> vector<8x1xf32>
    %226 = vector.broadcast %225 : vector<8x1xf32> to vector<8x8xf32>
    %227 = arith.mulf %222, %226 : vector<8x8xf32>
    %228 = arith.truncf %227 : vector<8x8xf32> to vector<8x8xbf16>
    %c0_92 = arith.constant 0 : index
    %c2 = arith.constant 2 : index
    %c0_93 = arith.constant 0 : index
    %c0_94 = arith.constant 0 : index
    %229 = vector.load %arg25[%c0_92, %c2, %c0_93, %c0_94] : memref<1x4x8x8xbf16, #tpu.memory_space<vmem>>, vector<1x1x8x8xbf16>
    %230 = vector.shape_cast %229 : vector<1x1x8x8xbf16> to vector<8x8xbf16>
    %231 = vector.shape_cast %228 : vector<8x8xbf16> to vector<1x1x8x8xbf16>
    tpu.vector_store %arg25[%c0_92, %c2, %c0_93, %c0_94], %231 {strides = array<i32>} : memref<1x4x8x8xbf16, #tpu.memory_space<vmem>>, vector<1x1x8x8xbf16>,
    %232 = arith.truncf %227 : vector<8x8xf32> to vector<8x8xbf16>
    %233 = vector.extract_strided_slice %167 {offsets = [0, 16], sizes = [8, 8], strides = [1, 1]} : vector<8x32xbf16> to vector<8x8xbf16>
    %cst_95 = arith.constant dense<0.000000e+00> : vector<8x8xf32>
    %234 = tpu.matmul %232, %233, %cst_95 {dimension_numbers = #tpu.dot_dimension_numbers<[1], [0], [0], [1], [0, 0, 1, 1], [], []>} : vector<8x8xbf16>, vector<8x8xbf16>, vector<8x8xf32> -> vector<8x8xf32>
    %235 = arith.truncf %234 : vector<8x8xf32> to vector<8x8xbf16>
    %c0_96 = arith.constant 0 : index
    %c16_97 = arith.constant 16 : index
    %236 = vector.load %arg26[%c0_96, %c16_97] : memref<8x32xbf16, #tpu.memory_space<vmem>>, vector<8x8xbf16>
    tpu.vector_store %arg26[%c0_96, %c16_97], %235 {strides = array<i32>} : memref<8x32xbf16, #tpu.memory_space<vmem>>, vector<8x8xbf16>,
    %237 = vector.extract_strided_slice %164 {offsets = [0, 24], sizes = [8, 8], strides = [1, 1]} : vector<8x32xbf16> to vector<8x8xbf16>
    %238 = vector.extract_strided_slice %166 {offsets = [0, 24], sizes = [8, 8], strides = [1, 1]} : vector<8x32xbf16> to vector<8x8xbf16>
    "tpu.trace_start"() <{level = 10 : i32, message = "qd,kd->qk"}> : () -> ()
    %cst_98 = arith.constant dense<0.000000e+00> : vector<8x8xf32>
    %239 = tpu.matmul %237, %238, %cst_98 {dimension_numbers = #tpu.dot_dimension_numbers<[1], [1], [0], [0], [0, 0, 1, 0], [], []>} : vector<8x8xbf16>, vector<8x8xbf16>, vector<8x8xf32> -> vector<8x8xf32>
    "tpu.trace_stop"() : () -> ()
    %240 = arith.addf %239, %9 : vector<8x8xf32>
    %cst_99 = arith.constant dense<0xFF800000> : vector<8xf32>
    %241 = vector.multi_reduction <maximumf>, %240, %cst_99 [1] : vector<8x8xf32> to vector<8xf32>
    %242 = vector.shape_cast %241 : vector<8xf32> to vector<8x1xf32>
    %243 = vector.broadcast %242 : vector<8x1xf32> to vector<8x8xf32>
    %244 = arith.subf %240, %243 : vector<8x8xf32>
    %245 = math.exp %244 : vector<8x8xf32>
    %cst_100 = arith.constant dense<0.000000e+00> : vector<8xf32>
    %246 = vector.multi_reduction <add>, %245, %cst_100 [1] : vector<8x8xf32> to vector<8xf32>
    %247 = vector.shape_cast %246 : vector<8xf32> to vector<8x1xf32>
    %248 = tpu.reciprocal %247 {approx = true} : vector<8x1xf32> -> vector<8x1xf32>
    %249 = vector.broadcast %248 : vector<8x1xf32> to vector<8x8xf32>
    %250 = arith.mulf %245, %249 : vector<8x8xf32>
    %251 = arith.truncf %250 : vector<8x8xf32> to vector<8x8xbf16>
    %c0_101 = arith.constant 0 : index
    %c3 = arith.constant 3 : index
    %c0_102 = arith.constant 0 : index
    %c0_103 = arith.constant 0 : index
    %252 = vector.load %arg25[%c0_101, %c3, %c0_102, %c0_103] : memref<1x4x8x8xbf16, #tpu.memory_space<vmem>>, vector<1x1x8x8xbf16>
    %253 = vector.shape_cast %252 : vector<1x1x8x8xbf16> to vector<8x8xbf16>
    %254 = vector.shape_cast %251 : vector<8x8xbf16> to vector<1x1x8x8xbf16>
    tpu.vector_store %arg25[%c0_101, %c3, %c0_102, %c0_103], %254 {strides = array<i32>} : memref<1x4x8x8xbf16, #tpu.memory_space<vmem>>, vector<1x1x8x8xbf16>,
    %255 = arith.truncf %250 : vector<8x8xf32> to vector<8x8xbf16>
    %256 = vector.extract_strided_slice %167 {offsets = [0, 24], sizes = [8, 8], strides = [1, 1]} : vector<8x32xbf16> to vector<8x8xbf16>
    %cst_104 = arith.constant dense<0.000000e+00> : vector<8x8xf32>
    %257 = tpu.matmul %255, %256, %cst_104 {dimension_numbers = #tpu.dot_dimension_numbers<[1], [0], [0], [1], [0, 0, 1, 1], [], []>} : vector<8x8xbf16>, vector<8x8xbf16>, vector<8x8xf32> -> vector<8x8xf32>
    %258 = arith.truncf %257 : vector<8x8xf32> to vector<8x8xbf16>
    %c0_105 = arith.constant 0 : index
    %c24_106 = arith.constant 24 : index
    %259 = vector.load %arg26[%c0_105, %c24_106] : memref<8x32xbf16, #tpu.memory_space<vmem>>, vector<8x8xbf16>
    tpu.vector_store %arg26[%c0_105, %c24_106], %258 {strides = array<i32>} : memref<8x32xbf16, #tpu.memory_space<vmem>>, vector<8x8xbf16>,
    %c0_107 = arith.constant 0 : index
    %c0_108 = arith.constant 0 : index
    %260 = vector.load %arg26[%c0_107, %c0_108] : memref<8x32xbf16, #tpu.memory_space<vmem>>, vector<8x32xbf16>
    %c0_109 = arith.constant 0 : index
    %c0_110 = arith.constant 0 : index
    %261 = vector.load %arg16[%c0_109, %c0_110] : memref<32x32xbf16, #tpu.memory_space<vmem>>, vector<32x32xbf16>
    %cst_111 = arith.constant dense<0.000000e+00> : vector<8x32xf32>
    %262 = tpu.matmul %260, %261, %cst_111 {dimension_numbers = #tpu.dot_dimension_numbers<[1], [0], [0], [1], [0, 0, 1, 1], [], []>} : vector<8x32xbf16>, vector<32x32xbf16>, vector<8x32xf32> -> vector<8x32xf32>
    %263 = arith.addf %126, %262 : vector<8x32xf32>
    %c0_112 = arith.constant 0 : index
    %c0_113 = arith.constant 0 : index
    %264 = vector.load %arg17[%c0_112, %c0_113] : memref<1x32xf32, #tpu.memory_space<vmem>>, vector<1x32xf32>
    %265 = vector.broadcast %264 : vector<1x32xf32> to vector<8x32xf32>
    %266 = arith.addf %263, %265 : vector<8x32xf32>
    %c0_114 = arith.constant 0 : index
    %c0_115 = arith.constant 0 : index
    %267 = vector.load %arg18[%c0_114, %c0_115] : memref<1x32xf32, #tpu.memory_space<vmem>>, vector<1x32xf32>
    %c0_116 = arith.constant 0 : index
    %c0_117 = arith.constant 0 : index
    %268 = vector.load %arg19[%c0_116, %c0_117] : memref<1x32xf32, #tpu.memory_space<vmem>>, vector<1x32xf32>
    %cst_118 = arith.constant dense<0.000000e+00> : vector<8xf32>
    %269 = vector.multi_reduction <add>, %266, %cst_118 [1] : vector<8x32xf32> to vector<8xf32>
    %270 = vector.shape_cast %269 : vector<8xf32> to vector<8x1xf32>
    %cst_119 = arith.constant 3.200000e+01 : f32
    %271 = vector.broadcast %cst_119 : f32 to vector<8x1xf32>
    %272 = arith.divf %270, %271 : vector<8x1xf32>
    %273 = vector.broadcast %272 : vector<8x1xf32> to vector<8x32xf32>
    %274 = arith.subf %266, %273 : vector<8x32xf32>
    %275 = arith.mulf %274, %274 : vector<8x32xf32>
    %cst_120 = arith.constant dense<0.000000e+00> : vector<8xf32>
    %276 = vector.multi_reduction <add>, %275, %cst_120 [1] : vector<8x32xf32> to vector<8xf32>
    %277 = vector.shape_cast %276 : vector<8xf32> to vector<8x1xf32>
    %cst_121 = arith.constant 3.200000e+01 : f32
    %278 = vector.broadcast %cst_121 : f32 to vector<8x1xf32>
    %279 = arith.divf %277, %278 : vector<8x1xf32>
    %280 = vector.broadcast %272 : vector<8x1xf32> to vector<8x32xf32>
    %281 = arith.subf %266, %280 : vector<8x32xf32>
    %cst_122 = arith.constant 9.99999974E-6 : f32
    %282 = vector.broadcast %cst_122 : f32 to vector<8x1xf32>
    %283 = arith.addf %279, %282 : vector<8x1xf32>
    %284 = math.rsqrt %283 : vector<8x1xf32>
    %285 = vector.broadcast %284 : vector<8x1xf32> to vector<8x32xf32>
    %286 = arith.mulf %281, %285 : vector<8x32xf32>
    %287 = vector.broadcast %267 : vector<1x32xf32> to vector<8x32xf32>
    %288 = arith.mulf %286, %287 : vector<8x32xf32>
    %289 = vector.broadcast %268 : vector<1x32xf32> to vector<8x32xf32>
    %290 = arith.addf %288, %289 : vector<8x32xf32>
    %291 = arith.truncf %290 : vector<8x32xf32> to vector<8x32xbf16>
    %cst_123 = arith.constant 0.000000e+00 : f32
    %292 = vector.broadcast %cst_123 : f32 to vector<8x32xf32>
    %c0_124 = arith.constant 0 : index
    %c0_125 = arith.constant 0 : index
    %293 = vector.load %arg20[%c0_124, %c0_125] : memref<32x128xbf16, #tpu.memory_space<vmem>>, vector<32x128xbf16>
    %cst_126 = arith.constant dense<0.000000e+00> : vector<8x128xf32>
    %294 = tpu.matmul %291, %293, %cst_126 {dimension_numbers = #tpu.dot_dimension_numbers<[1], [0], [0], [1], [0, 0, 1, 1], [], []>} : vector<8x32xbf16>, vector<32x128xbf16>, vector<8x128xf32> -> vector<8x128xf32>
    %c0_127 = arith.constant 0 : index
    %c0_128 = arith.constant 0 : index
    %295 = vector.load %arg21[%c0_127, %c0_128] : memref<1x128xf32, #tpu.memory_space<vmem>>, vector<1x128xf32>
    %296 = vector.broadcast %295 : vector<1x128xf32> to vector<8x128xf32>
    %297 = arith.addf %294, %296 : vector<8x128xf32>
    %cst_129 = arith.constant 5.000000e-01 : f32
    %298 = vector.broadcast %cst_129 : f32 to vector<8x128xf32>
    %299 = arith.mulf %298, %297 : vector<8x128xf32>
    %cst_130 = arith.constant 0.707106769 : f32
    %300 = vector.broadcast %cst_130 : f32 to vector<8x128xf32>
    %301 = arith.mulf %297, %300 : vector<8x128xf32>
    %302 = math.erf %301 : vector<8x128xf32>
    %cst_131 = arith.constant 1.000000e+00 : f32
    %303 = vector.broadcast %cst_131 : f32 to vector<8x128xf32>
    %304 = arith.addf %303, %302 : vector<8x128xf32>
    %305 = arith.mulf %299, %304 : vector<8x128xf32>
    %306 = arith.truncf %305 : vector<8x128xf32> to vector<8x128xbf16>
    %c0_132 = arith.constant 0 : index
    %c0_133 = arith.constant 0 : index
    %307 = vector.load %arg22[%c0_132, %c0_133] : memref<128x32xbf16, #tpu.memory_space<vmem>>, vector<128x32xbf16>
    %cst_134 = arith.constant dense<0.000000e+00> : vector<8x32xf32>
    %308 = tpu.matmul %306, %307, %cst_134 {dimension_numbers = #tpu.dot_dimension_numbers<[1], [0], [0], [1], [0, 0, 1, 1], [], []>} : vector<8x128xbf16>, vector<128x32xbf16>, vector<8x32xf32> -> vector<8x32xf32>
    %309 = arith.addf %292, %308 : vector<8x32xf32>
    %310 = arith.addf %266, %309 : vector<8x32xf32>
    %c0_135 = arith.constant 0 : index
    %c0_136 = arith.constant 0 : index
    %311 = vector.load %arg23[%c0_135, %c0_136] : memref<1x32xf32, #tpu.memory_space<vmem>>, vector<1x32xf32>
    %312 = vector.broadcast %311 : vector<1x32xf32> to vector<8x32xf32>
    %313 = arith.addf %310, %312 : vector<8x32xf32>
    %c0_137 = arith.constant 0 : index
    %c0_138 = arith.constant 0 : index
    %c0_139 = arith.constant 0 : index
    %314 = vector.load %arg24[%c0_137, %c0_138, %c0_139] : memref<1x8x32xf32, #tpu.memory_space<vmem>>, vector<1x8x32xf32>
    %315 = vector.shape_cast %314 : vector<1x8x32xf32> to vector<8x32xf32>
    %316 = vector.shape_cast %313 : vector<8x32xf32> to vector<1x8x32xf32>
    tpu.vector_store %arg24[%c0_137, %c0_138, %c0_139], %316 {strides = array<i32>} : memref<1x8x32xf32, #tpu.memory_space<vmem>>, vector<1x8x32xf32>,
    return
  }
  func.func @transform_0(%arg0: i32) -> (i32, i32, i32) {
    %c0_i32 = arith.constant 0 : i32
    %c0_i32_0 = arith.constant 0 : i32
    %c0_i32_1 = arith.constant 0 : i32
    return %arg0, %c0_i32, %c0_i32_0 : i32, i32, i32
  }
  func.func @transform_1(%arg0: i32) -> (i32, i32, i32) {
    %c0_i32 = arith.constant 0 : i32
    %c0_i32_0 = arith.constant 0 : i32
    %c0_i32_1 = arith.constant 0 : i32
    return %arg0, %c0_i32, %c0_i32_0 : i32, i32, i32
  }
  func.func @transform_2(%arg0: i32) -> (i32, i32, i32) {
    %c0_i32 = arith.constant 0 : i32
    %c0_i32_0 = arith.constant 0 : i32
    %c0_i32_1 = arith.constant 0 : i32
    return %arg0, %c0_i32, %c0_i32_0 : i32, i32, i32
  }
  func.func @transform_3(%arg0: i32) -> (i32, i32) {
    %c0_i32 = arith.constant 0 : i32
    %c0_i32_0 = arith.constant 0 : i32
    %c0_i32_1 = arith.constant 0 : i32
    return %c0_i32, %c0_i32_0 : i32, i32
  }
  func.func @transform_4(%arg0: i32) -> (i32, i32) {
    %c0_i32 = arith.constant 0 : i32
    %c0_i32_0 = arith.constant 0 : i32
    %c0_i32_1 = arith.constant 0 : i32
    return %c0_i32, %c0_i32_0 : i32, i32
  }
  func.func @transform_5(%arg0: i32) -> (i32, i32) {
    %c0_i32 = arith.constant 0 : i32
    %c0_i32_0 = arith.constant 0 : i32
    %c0_i32_1 = arith.constant 0 : i32
    return %c0_i32, %c0_i32_0 : i32, i32
  }
  func.func @transform_6(%arg0: i32) -> (i32, i32) {
    %c0_i32 = arith.constant 0 : i32
    %c0_i32_0 = arith.constant 0 : i32
    %c0_i32_1 = arith.constant 0 : i32
    return %c0_i32, %c0_i32_0 : i32, i32
  }
  func.func @transform_7(%arg0: i32) -> (i32, i32) {
    %c0_i32 = arith.constant 0 : i32
    %c0_i32_0 = arith.constant 0 : i32
    %c0_i32_1 = arith.constant 0 : i32
    return %c0_i32, %c0_i32_0 : i32, i32
  }
  func.func @transform_8(%arg0: i32) -> (i32, i32) {
    %c0_i32 = arith.constant 0 : i32
    %c0_i32_0 = arith.constant 0 : i32
    %c0_i32_1 = arith.constant 0 : i32
    return %c0_i32, %c0_i32_0 : i32, i32
  }
  func.func @transform_9(%arg0: i32) -> (i32, i32) {
    %c0_i32 = arith.constant 0 : i32
    %c0_i32_0 = arith.constant 0 : i32
    %c0_i32_1 = arith.constant 0 : i32
    return %c0_i32, %c0_i32_0 : i32, i32
  }
  func.func @transform_10(%arg0: i32) -> (i32, i32) {
    %c0_i32 = arith.constant 0 : i32
    %c0_i32_0 = arith.constant 0 : i32
    %c0_i32_1 = arith.constant 0 : i32
    return %c0_i32, %c0_i32_0 : i32, i32
  }
  func.func @transform_11(%arg0: i32) -> (i32, i32) {
    %c0_i32 = arith.constant 0 : i32
    %c0_i32_0 = arith.constant 0 : i32
    %c0_i32_1 = arith.constant 0 : i32
    return %c0_i32, %c0_i32_0 : i32, i32
  }
  func.func @transform_12(%arg0: i32) -> (i32, i32) {
    %c0_i32 = arith.constant 0 : i32
    %c0_i32_0 = arith.constant 0 : i32
    %c0_i32_1 = arith.constant 0 : i32
    return %c0_i32, %c0_i32_0 : i32, i32
  }
  func.func @transform_13(%arg0: i32) -> (i32, i32) {
    %c0_i32 = arith.constant 0 : i32
    %c0_i32_0 = arith.constant 0 : i32
    %c0_i32_1 = arith.constant 0 : i32
    return %c0_i32, %c0_i32_0 : i32, i32
  }
  func.func @transform_14(%arg0: i32) -> (i32, i32) {
    %c0_i32 = arith.constant 0 : i32
    %c0_i32_0 = arith.constant 0 : i32
    %c0_i32_1 = arith.constant 0 : i32
    return %c0_i32, %c0_i32_0 : i32, i32
  }
  func.func @transform_15(%arg0: i32) -> (i32, i32) {
    %c0_i32 = arith.constant 0 : i32
    %c0_i32_0 = arith.constant 0 : i32
    %c0_i32_1 = arith.constant 0 : i32
    return %c0_i32, %c0_i32_0 : i32, i32
  }
  func.func @transform_16(%arg0: i32) -> (i32, i32) {
    %c0_i32 = arith.constant 0 : i32
    %c0_i32_0 = arith.constant 0 : i32
    %c0_i32_1 = arith.constant 0 : i32
    return %c0_i32, %c0_i32_0 : i32, i32
  }
  func.func @transform_17(%arg0: i32) -> (i32, i32) {
    %c0_i32 = arith.constant 0 : i32
    %c0_i32_0 = arith.constant 0 : i32
    %c0_i32_1 = arith.constant 0 : i32
    return %c0_i32, %c0_i32_0 : i32, i32
  }
  func.func @transform_18(%arg0: i32) -> (i32, i32) {
    %c0_i32 = arith.constant 0 : i32
    %c0_i32_0 = arith.constant 0 : i32
    %c0_i32_1 = arith.constant 0 : i32
    return %c0_i32, %c0_i32_0 : i32, i32
  }
  func.func @transform_19(%arg0: i32) -> (i32, i32) {
    %c0_i32 = arith.constant 0 : i32
    %c0_i32_0 = arith.constant 0 : i32
    %c0_i32_1 = arith.constant 0 : i32
    return %c0_i32, %c0_i32_0 : i32, i32
  }
  func.func @transform_20(%arg0: i32) -> (i32, i32) {
    %c0_i32 = arith.constant 0 : i32
    %c0_i32_0 = arith.constant 0 : i32
    %c0_i32_1 = arith.constant 0 : i32
    return %c0_i32, %c0_i32_0 : i32, i32
  }
  func.func @transform_21(%arg0: i32) -> (i32, i32) {
    %c0_i32 = arith.constant 0 : i32
    %c0_i32_0 = arith.constant 0 : i32
    %c0_i32_1 = arith.constant 0 : i32
    return %c0_i32, %c0_i32_0 : i32, i32
  }
  func.func @transform_22(%arg0: i32) -> (i32, i32) {
    %c0_i32 = arith.constant 0 : i32
    %c0_i32_0 = arith.constant 0 : i32
    %c0_i32_1 = arith.constant 0 : i32
    return %c0_i32, %c0_i32_0 : i32, i32
  }
  func.func @transform_23(%arg0: i32) -> (i32, i32, i32) {
    %c0_i32 = arith.constant 0 : i32
    %c0_i32_0 = arith.constant 0 : i32
    %c0_i32_1 = arith.constant 0 : i32
    return %arg0, %c0_i32, %c0_i32_0 : i32, i32, i32
  }
  func.func @transform_24(%arg0: i32) -> (i32, i32, i32, i32) {
    %c0_i32 = arith.constant 0 : i32
    %c0_i32_0 = arith.constant 0 : i32
    %c0_i32_1 = arith.constant 0 : i32
    %c0_i32_2 = arith.constant 0 : i32
    return %arg0, %c0_i32, %c0_i32_0, %c0_i32_1 : i32, i32, i32, i32
  }
}

module attributes {stable_mosaic.version = 11 : i64} {
  func.func @denoising_block_kernel(%arg0: i32, %arg1: memref<1x8x32xf32, #tpu.memory_space<vmem>>, %arg2: memref<1x1x8xf32, #tpu.memory_space<vmem>>, %arg3: memref<1x8x32xbf16, #tpu.memory_space<vmem>>, %arg4: memref<1x32xf32, #tpu.memory_space<vmem>>, %arg5: memref<1x32xf32, #tpu.memory_space<vmem>>, %arg6: memref<32x96xbf16, #tpu.memory_space<vmem>>, %arg7: memref<1x96xf32, #tpu.memory_space<vmem>>, %arg8: memref<32x32xbf16, #tpu.memory_space<vmem>>, %arg9: memref<1x32xf32, #tpu.memory_space<vmem>>, %arg10: memref<1x32xf32, #tpu.memory_space<vmem>>, %arg11: memref<1x32xf32, #tpu.memory_space<vmem>>, %arg12: memref<32x32xbf16, #tpu.memory_space<vmem>>, %arg13: memref<1x32xf32, #tpu.memory_space<vmem>>, %arg14: memref<32x64xbf16, #tpu.memory_space<vmem>>, %arg15: memref<1x64xf32, #tpu.memory_space<vmem>>, %arg16: memref<32x32xbf16, #tpu.memory_space<vmem>>, %arg17: memref<1x32xf32, #tpu.memory_space<vmem>>, %arg18: memref<1x32xf32, #tpu.memory_space<vmem>>, %arg19: memref<1x32xf32, #tpu.memory_space<vmem>>, %arg20: memref<32x128xbf16, #tpu.memory_space<vmem>>, %arg21: memref<1x128xf32, #tpu.memory_space<vmem>>, %arg22: memref<128x32xbf16, #tpu.memory_space<vmem>>, %arg23: memref<1x32xf32, #tpu.memory_space<vmem>>, %arg24: memref<1x8x32xf32, #tpu.memory_space<vmem>>, %arg25: memref<1x4x8x8xbf16, #tpu.memory_space<vmem>>, %arg26: memref<8x32xbf16, #tpu.memory_space<vmem>>) attributes {dimension_semantics = [#tpu.dimension_semantics<parallel>], iteration_bounds = array<i64: 2>, scalar_prefetch = 0 : i64, scratch_operands = 1 : i64, tpu.core_type = #tpu.core_type<tc>, window_params = [{transform_indices = @transform_0, window_bounds = array<i64: 1, 8, 32>}, {transform_indices = @transform_1, window_bounds = array<i64: 1, 1, 8>}, {transform_indices = @transform_2, window_bounds = array<i64: 1, 8, 32>}, {pipeline_mode = #tpu.pipeline_mode<synchronous>, transform_indices = @transform_3, window_bounds = array<i64: 1, 32>}, {pipeline_mode = #tpu.pipeline_mode<synchronous>, transform_indices = @transform_4, window_bounds = array<i64: 1, 32>}, {pipeline_mode = #tpu.pipeline_mode<synchronous>, transform_indices = @transform_5, window_bounds = array<i64: 32, 96>}, {pipeline_mode = #tpu.pipeline_mode<synchronous>, transform_indices = @transform_6, window_bounds = array<i64: 1, 96>}, {pipeline_mode = #tpu.pipeline_mode<synchronous>, transform_indices = @transform_7, window_bounds = array<i64: 32, 32>}, {pipeline_mode = #tpu.pipeline_mode<synchronous>, transform_indices = @transform_8, window_bounds = array<i64: 1, 32>}, {pipeline_mode = #tpu.pipeline_mode<synchronous>, transform_indices = @transform_9, window_bounds = array<i64: 1, 32>}, {pipeline_mode = #tpu.pipeline_mode<synchronous>, transform_indices = @transform_10, window_bounds = array<i64: 1, 32>}, {pipeline_mode = #tpu.pipeline_mode<synchronous>, transform_indices = @transform_11, window_bounds = array<i64: 32, 32>}, {pipeline_mode = #tpu.pipeline_mode<synchronous>, transform_indices = @transform_12, window_bounds = array<i64: 1, 32>}, {pipeline_mode = #tpu.pipeline_mode<synchronous>, transform_indices = @transform_13, window_bounds = array<i64: 32, 64>}, {pipeline_mode = #tpu.pipeline_mode<synchronous>, transform_indices = @transform_14, window_bounds = array<i64: 1, 64>}, {pipeline_mode = #tpu.pipeline_mode<synchronous>, transform_indices = @transform_15, window_bounds = array<i64: 32, 32>}, {pipeline_mode = #tpu.pipeline_mode<synchronous>, transform_indices = @transform_16, window_bounds = array<i64: 1, 32>}, {pipeline_mode = #tpu.pipeline_mode<synchronous>, transform_indices = @transform_17, window_bounds = array<i64: 1, 32>}, {pipeline_mode = #tpu.pipeline_mode<synchronous>, transform_indices = @transform_18, window_bounds = array<i64: 1, 32>}, {pipeline_mode = #tpu.pipeline_mode<synchronous>, transform_indices = @transform_19, window_bounds = array<i64: 32, 128>}, {pipeline_mode = #tpu.pipeline_mode<synchronous>, transform_indices = @transform_20, window_bounds = array<i64: 1, 128>}, {pipeline_mode = #tpu.pipeline_mode<synchronous>, transform_indices = @transform_21, window_bounds = array<i64: 128, 32>}, {pipeline_mode = #tpu.pipeline_mode<synchronous>, transform_indices = @transform_22, window_bounds = array<i64: 1, 32>}, {transform_indices = @transform_23, window_bounds = array<i64: 1, 8, 32>}, {transform_indices = @transform_24, window_bounds = array<i64: 1, 4, 8, 8>}]} {
    %c0 = arith.constant 0 : index
    %c0_0 = arith.constant 0 : index
    %c0_1 = arith.constant 0 : index
    %0 = vector.load %arg1[%c0, %c0_0, %c0_1] : memref<1x8x32xf32, #tpu.memory_space<vmem>>, vector<1x8x32xf32>
    %1 = vector.shape_cast %0 : vector<1x8x32xf32> to vector<8x32xf32>
    %c0_2 = arith.constant 0 : index
    %c0_3 = arith.constant 0 : index
    %c0_4 = arith.constant 0 : index
    %2 = vector.load %arg2[%c0_2, %c0_3, %c0_4] : memref<1x1x8xf32, #tpu.memory_space<vmem>>, vector<1x1x8xf32>
    %3 = vector.shape_cast %2 : vector<1x1x8xf32> to vector<1x8xf32>
    %cst = arith.constant 1.000000e+00 : f32
    %4 = vector.broadcast %cst : f32 to vector<1x8xf32>
    %5 = arith.subf %4, %3 : vector<1x8xf32>
    %cst_5 = arith.constant -1.000000e+09 : f32
    %6 = vector.broadcast %cst_5 : f32 to vector<1x8xf32>
    %7 = arith.mulf %5, %6 : vector<1x8xf32>
    %8 = vector.shape_cast %7 : vector<1x8xf32> to vector<1x8xf32>
    %9 = vector.broadcast %8 : vector<1x8xf32> to vector<8x8xf32>
    %c0_6 = arith.constant 0 : index
    %c0_7 = arith.constant 0 : index
    %10 = vector.load %arg4[%c0_6, %c0_7] : memref<1x32xf32, #tpu.memory_space<vmem>>, vector<1x32xf32>
    %c0_8 = arith.constant 0 : index
    %c0_9 = arith.constant 0 : index
    %11 = vector.load %arg5[%c0_8, %c0_9] : memref<1x32xf32, #tpu.memory_space<vmem>>, vector<1x32xf32>
    %cst_10 = arith.constant dense<0.000000e+00> : vector<8xf32>
    %12 = vector.multi_reduction <add>, %1, %cst_10 [1] : vector<8x32xf32> to vector<8xf32>
    %13 = vector.shape_cast %12 : vector<8xf32> to vector<8x1xf32>
    %cst_11 = arith.constant 3.200000e+01 : f32
    %14 = vector.broadcast %cst_11 : f32 to vector<8x1xf32>
    %15 = arith.divf %13, %14 : vector<8x1xf32>
    %16 = vector.broadcast %15 : vector<8x1xf32> to vector<8x32xf32>
    %17 = arith.subf %1, %16 : vector<8x32xf32>
    %18 = arith.mulf %17, %17 : vector<8x32xf32>
    %cst_12 = arith.constant dense<0.000000e+00> : vector<8xf32>
    %19 = vector.multi_reduction <add>, %18, %cst_12 [1] : vector<8x32xf32> to vector<8xf32>
    %20 = vector.shape_cast %19 : vector<8xf32> to vector<8x1xf32>
    %cst_13 = arith.constant 3.200000e+01 : f32
    %21 = vector.broadcast %cst_13 : f32 to vector<8x1xf32>
    %22 = arith.divf %20, %21 : vector<8x1xf32>
    %23 = vector.broadcast %15 : vector<8x1xf32> to vector<8x32xf32>
    %24 = arith.subf %1, %23 : vector<8x32xf32>
    %cst_14 = arith.constant 9.99999974E-6 : f32
    %25 = vector.broadcast %cst_14 : f32 to vector<8x1xf32>
    %26 = arith.addf %22, %25 : vector<8x1xf32>
    %27 = math.rsqrt %26 : vector<8x1xf32>
    %28 = vector.broadcast %27 : vector<8x1xf32> to vector<8x32xf32>
    %29 = arith.mulf %24, %28 : vector<8x32xf32>
    %30 = vector.broadcast %10 : vector<1x32xf32> to vector<8x32xf32>
    %31 = arith.mulf %29, %30 : vector<8x32xf32>
    %32 = vector.broadcast %11 : vector<1x32xf32> to vector<8x32xf32>
    %33 = arith.addf %31, %32 : vector<8x32xf32>
    %34 = arith.truncf %33 : vector<8x32xf32> to vector<8x32xbf16>
    %c0_15 = arith.constant 0 : index
    %c0_16 = arith.constant 0 : index
    %35 = vector.load %arg6[%c0_15, %c0_16] : memref<32x96xbf16, #tpu.memory_space<vmem>>, vector<32x96xbf16>
    %cst_17 = arith.constant dense<0.000000e+00> : vector<8x96xf32>
    %36 = tpu.matmul %34, %35, %cst_17 {dimension_numbers = #tpu.dot_dimension_numbers<[1], [0], [0], [1], [0, 0, 1, 1], [], []>} : vector<8x32xbf16>, vector<32x96xbf16>, vector<8x96xf32> -> vector<8x96xf32>
    %c0_18 = arith.constant 0 : index
    %c0_19 = arith.constant 0 : index
    %37 = vector.load %arg7[%c0_18, %c0_19] : memref<1x96xf32, #tpu.memory_space<vmem>>, vector<1x96xf32>
    %38 = vector.broadcast %37 : vector<1x96xf32> to vector<8x96xf32>
    %39 = arith.addf %36, %38 : vector<8x96xf32>
    %40 = arith.truncf %39 : vector<8x96xf32> to vector<8x96xbf16>
    %41 = vector.extract_strided_slice %40 {offsets = [0, 0], sizes = [8, 32], strides = [1, 1]} : vector<8x96xbf16> to vector<8x32xbf16>
    %42 = vector.extract_strided_slice %40 {offsets = [0, 32], sizes = [8, 32], strides = [1, 1]} : vector<8x96xbf16> to vector<8x32xbf16>
    %43 = vector.extract_strided_slice %40 {offsets = [0, 64], sizes = [8, 32], strides = [1, 1]} : vector<8x96xbf16> to vector<8x32xbf16>
    %44 = vector.extract_strided_slice %41 {offsets = [0, 0], sizes = [8, 8], strides = [1, 1]} : vector<8x32xbf16> to vector<8x8xbf16>
    %45 = vector.extract_strided_slice %42 {offsets = [0, 0], sizes = [8, 8], strides = [1, 1]} : vector<8x32xbf16> to vector<8x8xbf16>
    "tpu.trace_start"() <{level = 10 : i32, message = "qd,kd->qk"}> : () -> ()
    %cst_20 = arith.constant dense<0.000000e+00> : vector<8x8xf32>
    %46 = tpu.matmul %44, %45, %cst_20 {dimension_numbers = #tpu.dot_dimension_numbers<[1], [1], [0], [0], [0, 0, 1, 0], [], []>} : vector<8x8xbf16>, vector<8x8xbf16>, vector<8x8xf32> -> vector<8x8xf32>
    "tpu.trace_stop"() : () -> ()
    %47 = arith.addf %46, %9 : vector<8x8xf32>
    %cst_21 = arith.constant dense<0xFF800000> : vector<8xf32>
    %48 = vector.multi_reduction <maximumf>, %47, %cst_21 [1] : vector<8x8xf32> to vector<8xf32>
    %49 = vector.shape_cast %48 : vector<8xf32> to vector<8x1xf32>
    %50 = vector.broadcast %49 : vector<8x1xf32> to vector<8x8xf32>
    %51 = arith.subf %47, %50 : vector<8x8xf32>
    %52 = math.exp %51 : vector<8x8xf32>
    %cst_22 = arith.constant dense<0.000000e+00> : vector<8xf32>
    %53 = vector.multi_reduction <add>, %52, %cst_22 [1] : vector<8x8xf32> to vector<8xf32>
    %54 = vector.shape_cast %53 : vector<8xf32> to vector<8x1xf32>
    %55 = tpu.reciprocal %54 {approx = true} : vector<8x1xf32> -> vector<8x1xf32>
    %56 = vector.broadcast %55 : vector<8x1xf32> to vector<8x8xf32>
    %57 = arith.mulf %52, %56 : vector<8x8xf32>
    %58 = arith.truncf %57 : vector<8x8xf32> to vector<8x8xbf16>
    %59 = vector.extract_strided_slice %43 {offsets = [0, 0], sizes = [8, 8], strides = [1, 1]} : vector<8x32xbf16> to vector<8x8xbf16>
    %cst_23 = arith.constant dense<0.000000e+00> : vector<8x8xf32>
    %60 = tpu.matmul %58, %59, %cst_23 {dimension_numbers = #tpu.dot_dimension_numbers<[1], [0], [0], [1], [0, 0, 1, 1], [], []>} : vector<8x8xbf16>, vector<8x8xbf16>, vector<8x8xf32> -> vector<8x8xf32>
    %61 = arith.truncf %60 : vector<8x8xf32> to vector<8x8xbf16>
    %c0_24 = arith.constant 0 : index
    %c0_25 = arith.constant 0 : index
    %62 = vector.load %arg26[%c0_24, %c0_25] : memref<8x32xbf16, #tpu.memory_space<vmem>>, vector<8x8xbf16>
    tpu.vector_store %arg26[%c0_24, %c0_25], %61 {strides = array<i32>} : memref<8x32xbf16, #tpu.memory_space<vmem>>, vector<8x8xbf16>,
    %63 = vector.extract_strided_slice %41 {offsets = [0, 8], sizes = [8, 8], strides = [1, 1]} : vector<8x32xbf16> to vector<8x8xbf16>
    %64 = vector.extract_strided_slice %42 {offsets = [0, 8], sizes = [8, 8], strides = [1, 1]} : vector<8x32xbf16> to vector<8x8xbf16>
    "tpu.trace_start"() <{level = 10 : i32, message = "qd,kd->qk"}> : () -> ()
    %cst_26 = arith.constant dense<0.000000e+00> : vector<8x8xf32>
    %65 = tpu.matmul %63, %64, %cst_26 {dimension_numbers = #tpu.dot_dimension_numbers<[1], [1], [0], [0], [0, 0, 1, 0], [], []>} : vector<8x8xbf16>, vector<8x8xbf16>, vector<8x8xf32> -> vector<8x8xf32>
    "tpu.trace_stop"() : () -> ()
    %66 = arith.addf %65, %9 : vector<8x8xf32>
    %cst_27 = arith.constant dense<0xFF800000> : vector<8xf32>
    %67 = vector.multi_reduction <maximumf>, %66, %cst_27 [1] : vector<8x8xf32> to vector<8xf32>
    %68 = vector.shape_cast %67 : vector<8xf32> to vector<8x1xf32>
    %69 = vector.broadcast %68 : vector<8x1xf32> to vector<8x8xf32>
    %70 = arith.subf %66, %69 : vector<8x8xf32>
    %71 = math.exp %70 : vector<8x8xf32>
    %cst_28 = arith.constant dense<0.000000e+00> : vector<8xf32>
    %72 = vector.multi_reduction <add>, %71, %cst_28 [1] : vector<8x8xf32> to vector<8xf32>
    %73 = vector.shape_cast %72 : vector<8xf32> to vector<8x1xf32>
    %74 = tpu.reciprocal %73 {approx = true} : vector<8x1xf32> -> vector<8x1xf32>
    %75 = vector.broadcast %74 : vector<8x1xf32> to vector<8x8xf32>
    %76 = arith.mulf %71, %75 : vector<8x8xf32>
    %77 = arith.truncf %76 : vector<8x8xf32> to vector<8x8xbf16>
    %78 = vector.extract_strided_slice %43 {offsets = [0, 8], sizes = [8, 8], strides = [1, 1]} : vector<8x32xbf16> to vector<8x8xbf16>
    %cst_29 = arith.constant dense<0.000000e+00> : vector<8x8xf32>
    %79 = tpu.matmul %77, %78, %cst_29 {dimension_numbers = #tpu.dot_dimension_numbers<[1], [0], [0], [1], [0, 0, 1, 1], [], []>} : vector<8x8xbf16>, vector<8x8xbf16>, vector<8x8xf32> -> vector<8x8xf32>
    %80 = arith.truncf %79 : vector<8x8xf32> to vector<8x8xbf16>
    %c0_30 = arith.constant 0 : index
    %c8 = arith.constant 8 : index
    %81 = vector.load %arg26[%c0_30, %c8] : memref<8x32xbf16, #tpu.memory_space<vmem>>, vector<8x8xbf16>
    tpu.vector_store %arg26[%c0_30, %c8], %80 {strides = array<i32>} : memref<8x32xbf16, #tpu.memory_space<vmem>>, vector<8x8xbf16>,
    %82 = vector.extract_strided_slice %41 {offsets = [0, 16], sizes = [8, 8], strides = [1, 1]} : vector<8x32xbf16> to vector<8x8xbf16>
    %83 = vector.extract_strided_slice %42 {offsets = [0, 16], sizes = [8, 8], strides = [1, 1]} : vector<8x32xbf16> to vector<8x8xbf16>
    "tpu.trace_start"() <{level = 10 : i32, message = "qd,kd->qk"}> : () -> ()
    %cst_31 = arith.constant dense<0.000000e+00> : vector<8x8xf32>
    %84 = tpu.matmul %82, %83, %cst_31 {dimension_numbers = #tpu.dot_dimension_numbers<[1], [1], [0], [0], [0, 0, 1, 0], [], []>} : vector<8x8xbf16>, vector<8x8xbf16>, vector<8x8xf32> -> vector<8x8xf32>
    "tpu.trace_stop"() : () -> ()
    %85 = arith.addf %84, %9 : vector<8x8xf32>
    %cst_32 = arith.constant dense<0xFF800000> : vector<8xf32>
    %86 = vector.multi_reduction <maximumf>, %85, %cst_32 [1] : vector<8x8xf32> to vector<8xf32>
    %87 = vector.shape_cast %86 : vector<8xf32> to vector<8x1xf32>
    %88 = vector.broadcast %87 : vector<8x1xf32> to vector<8x8xf32>
    %89 = arith.subf %85, %88 : vector<8x8xf32>
    %90 = math.exp %89 : vector<8x8xf32>
    %cst_33 = arith.constant dense<0.000000e+00> : vector<8xf32>
    %91 = vector.multi_reduction <add>, %90, %cst_33 [1] : vector<8x8xf32> to vector<8xf32>
    %92 = vector.shape_cast %91 : vector<8xf32> to vector<8x1xf32>
    %93 = tpu.reciprocal %92 {approx = true} : vector<8x1xf32> -> vector<8x1xf32>
    %94 = vector.broadcast %93 : vector<8x1xf32> to vector<8x8xf32>
    %95 = arith.mulf %90, %94 : vector<8x8xf32>
    %96 = arith.truncf %95 : vector<8x8xf32> to vector<8x8xbf16>
    %97 = vector.extract_strided_slice %43 {offsets = [0, 16], sizes = [8, 8], strides = [1, 1]} : vector<8x32xbf16> to vector<8x8xbf16>
    %cst_34 = arith.constant dense<0.000000e+00> : vector<8x8xf32>
    %98 = tpu.matmul %96, %97, %cst_34 {dimension_numbers = #tpu.dot_dimension_numbers<[1], [0], [0], [1], [0, 0, 1, 1], [], []>} : vector<8x8xbf16>, vector<8x8xbf16>, vector<8x8xf32> -> vector<8x8xf32>
    %99 = arith.truncf %98 : vector<8x8xf32> to vector<8x8xbf16>
    %c0_35 = arith.constant 0 : index
    %c16 = arith.constant 16 : index
    %100 = vector.load %arg26[%c0_35, %c16] : memref<8x32xbf16, #tpu.memory_space<vmem>>, vector<8x8xbf16>
    tpu.vector_store %arg26[%c0_35, %c16], %99 {strides = array<i32>} : memref<8x32xbf16, #tpu.memory_space<vmem>>, vector<8x8xbf16>,
    %101 = vector.extract_strided_slice %41 {offsets = [0, 24], sizes = [8, 8], strides = [1, 1]} : vector<8x32xbf16> to vector<8x8xbf16>
    %102 = vector.extract_strided_slice %42 {offsets = [0, 24], sizes = [8, 8], strides = [1, 1]} : vector<8x32xbf16> to vector<8x8xbf16>
    "tpu.trace_start"() <{level = 10 : i32, message = "qd,kd->qk"}> : () -> ()
    %cst_36 = arith.constant dense<0.000000e+00> : vector<8x8xf32>
    %103 = tpu.matmul %101, %102, %cst_36 {dimension_numbers = #tpu.dot_dimension_numbers<[1], [1], [0], [0], [0, 0, 1, 0], [], []>} : vector<8x8xbf16>, vector<8x8xbf16>, vector<8x8xf32> -> vector<8x8xf32>
    "tpu.trace_stop"() : () -> ()
    %104 = arith.addf %103, %9 : vector<8x8xf32>
    %cst_37 = arith.constant dense<0xFF800000> : vector<8xf32>
    %105 = vector.multi_reduction <maximumf>, %104, %cst_37 [1] : vector<8x8xf32> to vector<8xf32>
    %106 = vector.shape_cast %105 : vector<8xf32> to vector<8x1xf32>
    %107 = vector.broadcast %106 : vector<8x1xf32> to vector<8x8xf32>
    %108 = arith.subf %104, %107 : vector<8x8xf32>
    %109 = math.exp %108 : vector<8x8xf32>
    %cst_38 = arith.constant dense<0.000000e+00> : vector<8xf32>
    %110 = vector.multi_reduction <add>, %109, %cst_38 [1] : vector<8x8xf32> to vector<8xf32>
    %111 = vector.shape_cast %110 : vector<8xf32> to vector<8x1xf32>
    %112 = tpu.reciprocal %111 {approx = true} : vector<8x1xf32> -> vector<8x1xf32>
    %113 = vector.broadcast %112 : vector<8x1xf32> to vector<8x8xf32>
    %114 = arith.mulf %109, %113 : vector<8x8xf32>
    %115 = arith.truncf %114 : vector<8x8xf32> to vector<8x8xbf16>
    %116 = vector.extract_strided_slice %43 {offsets = [0, 24], sizes = [8, 8], strides = [1, 1]} : vector<8x32xbf16> to vector<8x8xbf16>
    %cst_39 = arith.constant dense<0.000000e+00> : vector<8x8xf32>
    %117 = tpu.matmul %115, %116, %cst_39 {dimension_numbers = #tpu.dot_dimension_numbers<[1], [0], [0], [1], [0, 0, 1, 1], [], []>} : vector<8x8xbf16>, vector<8x8xbf16>, vector<8x8xf32> -> vector<8x8xf32>
    %118 = arith.truncf %117 : vector<8x8xf32> to vector<8x8xbf16>
    %c0_40 = arith.constant 0 : index
    %c24 = arith.constant 24 : index
    %119 = vector.load %arg26[%c0_40, %c24] : memref<8x32xbf16, #tpu.memory_space<vmem>>, vector<8x8xbf16>
    tpu.vector_store %arg26[%c0_40, %c24], %118 {strides = array<i32>} : memref<8x32xbf16, #tpu.memory_space<vmem>>, vector<8x8xbf16>,
    %c0_41 = arith.constant 0 : index
    %c0_42 = arith.constant 0 : index
    %120 = vector.load %arg26[%c0_41, %c0_42] : memref<8x32xbf16, #tpu.memory_space<vmem>>, vector<8x32xbf16>
    %c0_43 = arith.constant 0 : index
    %c0_44 = arith.constant 0 : index
    %121 = vector.load %arg8[%c0_43, %c0_44] : memref<32x32xbf16, #tpu.memory_space<vmem>>, vector<32x32xbf16>
    %cst_45 = arith.constant dense<0.000000e+00> : vector<8x32xf32>
    %122 = tpu.matmul %120, %121, %cst_45 {dimension_numbers = #tpu.dot_dimension_numbers<[1], [0], [0], [1], [0, 0, 1, 1], [], []>} : vector<8x32xbf16>, vector<32x32xbf16>, vector<8x32xf32> -> vector<8x32xf32>
    %123 = arith.addf %1, %122 : vector<8x32xf32>
    %c0_46 = arith.constant 0 : index
    %c0_47 = arith.constant 0 : index
    %124 = vector.load %arg9[%c0_46, %c0_47] : memref<1x32xf32, #tpu.memory_space<vmem>>, vector<1x32xf32>
    %125 = vector.broadcast %124 : vector<1x32xf32> to vector<8x32xf32>
    %126 = arith.addf %123, %125 : vector<8x32xf32>
    %c0_48 = arith.constant 0 : index
    %c0_49 = arith.constant 0 : index
    %c0_50 = arith.constant 0 : index
    %127 = vector.load %arg3[%c0_48, %c0_49, %c0_50] : memref<1x8x32xbf16, #tpu.memory_space<vmem>>, vector<1x8x32xbf16>
    %128 = vector.shape_cast %127 : vector<1x8x32xbf16> to vector<8x32xbf16>
    %c0_51 = arith.constant 0 : index
    %c0_52 = arith.constant 0 : index
    %129 = vector.load %arg10[%c0_51, %c0_52] : memref<1x32xf32, #tpu.memory_space<vmem>>, vector<1x32xf32>
    %c0_53 = arith.constant 0 : index
    %c0_54 = arith.constant 0 : index
    %130 = vector.load %arg11[%c0_53, %c0_54] : memref<1x32xf32, #tpu.memory_space<vmem>>, vector<1x32xf32>
    %cst_55 = arith.constant dense<0.000000e+00> : vector<8xf32>
    %131 = vector.multi_reduction <add>, %126, %cst_55 [1] : vector<8x32xf32> to vector<8xf32>
    %132 = vector.shape_cast %131 : vector<8xf32> to vector<8x1xf32>
    %cst_56 = arith.constant 3.200000e+01 : f32
    %133 = vector.broadcast %cst_56 : f32 to vector<8x1xf32>
    %134 = arith.divf %132, %133 : vector<8x1xf32>
    %135 = vector.broadcast %134 : vector<8x1xf32> to vector<8x32xf32>
    %136 = arith.subf %126, %135 : vector<8x32xf32>
    %137 = arith.mulf %136, %136 : vector<8x32xf32>
    %cst_57 = arith.constant dense<0.000000e+00> : vector<8xf32>
    %138 = vector.multi_reduction <add>, %137, %cst_57 [1] : vector<8x32xf32> to vector<8xf32>
    %139 = vector.shape_cast %138 : vector<8xf32> to vector<8x1xf32>
    %cst_58 = arith.constant 3.200000e+01 : f32
    %140 = vector.broadcast %cst_58 : f32 to vector<8x1xf32>
    %141 = arith.divf %139, %140 : vector<8x1xf32>
    %142 = vector.broadcast %134 : vector<8x1xf32> to vector<8x32xf32>
    %143 = arith.subf %126, %142 : vector<8x32xf32>
    %cst_59 = arith.constant 9.99999974E-6 : f32
    %144 = vector.broadcast %cst_59 : f32 to vector<8x1xf32>
    %145 = arith.addf %141, %144 : vector<8x1xf32>
    %146 = math.rsqrt %145 : vector<8x1xf32>
    %147 = vector.broadcast %146 : vector<8x1xf32> to vector<8x32xf32>
    %148 = arith.mulf %143, %147 : vector<8x32xf32>
    %149 = vector.broadcast %129 : vector<1x32xf32> to vector<8x32xf32>
    %150 = arith.mulf %148, %149 : vector<8x32xf32>
    %151 = vector.broadcast %130 : vector<1x32xf32> to vector<8x32xf32>
    %152 = arith.addf %150, %151 : vector<8x32xf32>
    %153 = arith.truncf %152 : vector<8x32xf32> to vector<8x32xbf16>
    %c0_60 = arith.constant 0 : index
    %c0_61 = arith.constant 0 : index
    %154 = vector.load %arg12[%c0_60, %c0_61] : memref<32x32xbf16, #tpu.memory_space<vmem>>, vector<32x32xbf16>
    %cst_62 = arith.constant dense<0.000000e+00> : vector<8x32xf32>
    %155 = tpu.matmul %153, %154, %cst_62 {dimension_numbers = #tpu.dot_dimension_numbers<[1], [0], [0], [1], [0, 0, 1, 1], [], []>} : vector<8x32xbf16>, vector<32x32xbf16>, vector<8x32xf32> -> vector<8x32xf32>
    %c0_63 = arith.constant 0 : index
    %c0_64 = arith.constant 0 : index
    %156 = vector.load %arg13[%c0_63, %c0_64] : memref<1x32xf32, #tpu.memory_space<vmem>>, vector<1x32xf32>
    %157 = vector.broadcast %156 : vector<1x32xf32> to vector<8x32xf32>
    %158 = arith.addf %155, %157 : vector<8x32xf32>
    %c0_65 = arith.constant 0 : index
    %c0_66 = arith.constant 0 : index
    %159 = vector.load %arg14[%c0_65, %c0_66] : memref<32x64xbf16, #tpu.memory_space<vmem>>, vector<32x64xbf16>
    %cst_67 = arith.constant dense<0.000000e+00> : vector<8x64xf32>
    %160 = tpu.matmul %128, %159, %cst_67 {dimension_numbers = #tpu.dot_dimension_numbers<[1], [0], [0], [1], [0, 0, 1, 1], [], []>} : vector<8x32xbf16>, vector<32x64xbf16>, vector<8x64xf32> -> vector<8x64xf32>
    %c0_68 = arith.constant 0 : index
    %c0_69 = arith.constant 0 : index
    %161 = vector.load %arg15[%c0_68, %c0_69] : memref<1x64xf32, #tpu.memory_space<vmem>>, vector<1x64xf32>
    %162 = vector.broadcast %161 : vector<1x64xf32> to vector<8x64xf32>
    %163 = arith.addf %160, %162 : vector<8x64xf32>
    %164 = arith.truncf %158 : vector<8x32xf32> to vector<8x32xbf16>
    %165 = arith.truncf %163 : vector<8x64xf32> to vector<8x64xbf16>
    %166 = vector.extract_strided_slice %165 {offsets = [0, 0], sizes = [8, 32], strides = [1, 1]} : vector<8x64xbf16> to vector<8x32xbf16>
    %167 = vector.extract_strided_slice %165 {offsets = [0, 32], sizes = [8, 32], strides = [1, 1]} : vector<8x64xbf16> to vector<8x32xbf16>
    %168 = vector.extract_strided_slice %164 {offsets = [0, 0], sizes = [8, 8], strides = [1, 1]} : vector<8x32xbf16> to vector<8x8xbf16>
    %169 = vector.extract_strided_slice %166 {offsets = [0, 0], sizes = [8, 8], strides = [1, 1]} : vector<8x32xbf16> to vector<8x8xbf16>
    "tpu.trace_start"() <{level = 10 : i32, message = "qd,kd->qk"}> : () -> ()
    %cst_70 = arith.constant dense<0.000000e+00> : vector<8x8xf32>
    %170 = tpu.matmul %168, %169, %cst_70 {dimension_numbers = #tpu.dot_dimension_numbers<[1], [1], [0], [0], [0, 0, 1, 0], [], []>} : vector<8x8xbf16>, vector<8x8xbf16>, vector<8x8xf32> -> vector<8x8xf32>
    "tpu.trace_stop"() : () -> ()
    %171 = arith.addf %170, %9 : vector<8x8xf32>
    %cst_71 = arith.constant dense<0xFF800000> : vector<8xf32>
    %172 = vector.multi_reduction <maximumf>, %171, %cst_71 [1] : vector<8x8xf32> to vector<8xf32>
    %173 = vector.shape_cast %172 : vector<8xf32> to vector<8x1xf32>
    %174 = vector.broadcast %173 : vector<8x1xf32> to vector<8x8xf32>
    %175 = arith.subf %171, %174 : vector<8x8xf32>
    %176 = math.exp %175 : vector<8x8xf32>
    %cst_72 = arith.constant dense<0.000000e+00> : vector<8xf32>
    %177 = vector.multi_reduction <add>, %176, %cst_72 [1] : vector<8x8xf32> to vector<8xf32>
    %178 = vector.shape_cast %177 : vector<8xf32> to vector<8x1xf32>
    %179 = tpu.reciprocal %178 {approx = true} : vector<8x1xf32> -> vector<8x1xf32>
    %180 = vector.broadcast %179 : vector<8x1xf32> to vector<8x8xf32>
    %181 = arith.mulf %176, %180 : vector<8x8xf32>
    %182 = arith.truncf %181 : vector<8x8xf32> to vector<8x8xbf16>
    %c0_73 = arith.constant 0 : index
    %c0_74 = arith.constant 0 : index
    %c0_75 = arith.constant 0 : index
    %c0_76 = arith.constant 0 : index
    %183 = vector.load %arg25[%c0_73, %c0_74, %c0_75, %c0_76] : memref<1x4x8x8xbf16, #tpu.memory_space<vmem>>, vector<1x1x8x8xbf16>
    %184 = vector.shape_cast %183 : vector<1x1x8x8xbf16> to vector<8x8xbf16>
    %185 = vector.shape_cast %182 : vector<8x8xbf16> to vector<1x1x8x8xbf16>
    tpu.vector_store %arg25[%c0_73, %c0_74, %c0_75, %c0_76], %185 {strides = array<i32>} : memref<1x4x8x8xbf16, #tpu.memory_space<vmem>>, vector<1x1x8x8xbf16>,
    %186 = arith.truncf %181 : vector<8x8xf32> to vector<8x8xbf16>
    %187 = vector.extract_strided_slice %167 {offsets = [0, 0], sizes = [8, 8], strides = [1, 1]} : vector<8x32xbf16> to vector<8x8xbf16>
    %cst_77 = arith.constant dense<0.000000e+00> : vector<8x8xf32>
    %188 = tpu.matmul %186, %187, %cst_77 {dimension_numbers = #tpu.dot_dimension_numbers<[1], [0], [0], [1], [0, 0, 1, 1], [], []>} : vector<8x8xbf16>, vector<8x8xbf16>, vector<8x8xf32> -> vector<8x8xf32>
    %189 = arith.truncf %188 : vector<8x8xf32> to vector<8x8xbf16>
    %c0_78 = arith.constant 0 : index
    %c0_79 = arith.constant 0 : index
    %190 = vector.load %arg26[%c0_78, %c0_79] : memref<8x32xbf16, #tpu.memory_space<vmem>>, vector<8x8xbf16>
    tpu.vector_store %arg26[%c0_78, %c0_79], %189 {strides = array<i32>} : memref<8x32xbf16, #tpu.memory_space<vmem>>, vector<8x8xbf16>,
    %191 = vector.extract_strided_slice %164 {offsets = [0, 8], sizes = [8, 8], strides = [1, 1]} : vector<8x32xbf16> to vector<8x8xbf16>
    %192 = vector.extract_strided_slice %166 {offsets = [0, 8], sizes = [8, 8], strides = [1, 1]} : vector<8x32xbf16> to vector<8x8xbf16>
    "tpu.trace_start"() <{level = 10 : i32, message = "qd,kd->qk"}> : () -> ()
    %cst_80 = arith.constant dense<0.000000e+00> : vector<8x8xf32>
    %193 = tpu.matmul %191, %192, %cst_80 {dimension_numbers = #tpu.dot_dimension_numbers<[1], [1], [0], [0], [0, 0, 1, 0], [], []>} : vector<8x8xbf16>, vector<8x8xbf16>, vector<8x8xf32> -> vector<8x8xf32>
    "tpu.trace_stop"() : () -> ()
    %194 = arith.addf %193, %9 : vector<8x8xf32>
    %cst_81 = arith.constant dense<0xFF800000> : vector<8xf32>
    %195 = vector.multi_reduction <maximumf>, %194, %cst_81 [1] : vector<8x8xf32> to vector<8xf32>
    %196 = vector.shape_cast %195 : vector<8xf32> to vector<8x1xf32>
    %197 = vector.broadcast %196 : vector<8x1xf32> to vector<8x8xf32>
    %198 = arith.subf %194, %197 : vector<8x8xf32>
    %199 = math.exp %198 : vector<8x8xf32>
    %cst_82 = arith.constant dense<0.000000e+00> : vector<8xf32>
    %200 = vector.multi_reduction <add>, %199, %cst_82 [1] : vector<8x8xf32> to vector<8xf32>
    %201 = vector.shape_cast %200 : vector<8xf32> to vector<8x1xf32>
    %202 = tpu.reciprocal %201 {approx = true} : vector<8x1xf32> -> vector<8x1xf32>
    %203 = vector.broadcast %202 : vector<8x1xf32> to vector<8x8xf32>
    %204 = arith.mulf %199, %203 : vector<8x8xf32>
    %205 = arith.truncf %204 : vector<8x8xf32> to vector<8x8xbf16>
    %c0_83 = arith.constant 0 : index
    %c1 = arith.constant 1 : index
    %c0_84 = arith.constant 0 : index
    %c0_85 = arith.constant 0 : index
    %206 = vector.load %arg25[%c0_83, %c1, %c0_84, %c0_85] : memref<1x4x8x8xbf16, #tpu.memory_space<vmem>>, vector<1x1x8x8xbf16>
    %207 = vector.shape_cast %206 : vector<1x1x8x8xbf16> to vector<8x8xbf16>
    %208 = vector.shape_cast %205 : vector<8x8xbf16> to vector<1x1x8x8xbf16>
    tpu.vector_store %arg25[%c0_83, %c1, %c0_84, %c0_85], %208 {strides = array<i32>} : memref<1x4x8x8xbf16, #tpu.memory_space<vmem>>, vector<1x1x8x8xbf16>,
    %209 = arith.truncf %204 : vector<8x8xf32> to vector<8x8xbf16>
    %210 = vector.extract_strided_slice %167 {offsets = [0, 8], sizes = [8, 8], strides = [1, 1]} : vector<8x32xbf16> to vector<8x8xbf16>
    %cst_86 = arith.constant dense<0.000000e+00> : vector<8x8xf32>
    %211 = tpu.matmul %209, %210, %cst_86 {dimension_numbers = #tpu.dot_dimension_numbers<[1], [0], [0], [1], [0, 0, 1, 1], [], []>} : vector<8x8xbf16>, vector<8x8xbf16>, vector<8x8xf32> -> vector<8x8xf32>
    %212 = arith.truncf %211 : vector<8x8xf32> to vector<8x8xbf16>
    %c0_87 = arith.constant 0 : index
    %c8_88 = arith.constant 8 : index
    %213 = vector.load %arg26[%c0_87, %c8_88] : memref<8x32xbf16, #tpu.memory_space<vmem>>, vector<8x8xbf16>
    tpu.vector_store %arg26[%c0_87, %c8_88], %212 {strides = array<i32>} : memref<8x32xbf16, #tpu.memory_space<vmem>>, vector<8x8xbf16>,
    %214 = vector.extract_strided_slice %164 {offsets = [0, 16], sizes = [8, 8], strides = [1, 1]} : vector<8x32xbf16> to vector<8x8xbf16>
    %215 = vector.extract_strided_slice %166 {offsets = [0, 16], sizes = [8, 8], strides = [1, 1]} : vector<8x32xbf16> to vector<8x8xbf16>
    "tpu.trace_start"() <{level = 10 : i32, message = "qd,kd->qk"}> : () -> ()
    %cst_89 = arith.constant dense<0.000000e+00> : vector<8x8xf32>
    %216 = tpu.matmul %214, %215, %cst_89 {dimension_numbers = #tpu.dot_dimension_numbers<[1], [1], [0], [0], [0, 0, 1, 0], [], []>} : vector<8x8xbf16>, vector<8x8xbf16>, vector<8x8xf32> -> vector<8x8xf32>
    "tpu.trace_stop"() : () -> ()
    %217 = arith.addf %216, %9 : vector<8x8xf32>
    %cst_90 = arith.constant dense<0xFF800000> : vector<8xf32>
    %218 = vector.multi_reduction <maximumf>, %217, %cst_90 [1] : vector<8x8xf32> to vector<8xf32>
    %219 = vector.shape_cast %218 : vector<8xf32> to vector<8x1xf32>
    %220 = vector.broadcast %219 : vector<8x1xf32> to vector<8x8xf32>
    %221 = arith.subf %217, %220 : vector<8x8xf32>
    %222 = math.exp %221 : vector<8x8xf32>
    %cst_91 = arith.constant dense<0.000000e+00> : vector<8xf32>
    %223 = vector.multi_reduction <add>, %222, %cst_91 [1] : vector<8x8xf32> to vector<8xf32>
    %224 = vector.shape_cast %223 : vector<8xf32> to vector<8x1xf32>
    %225 = tpu.reciprocal %224 {approx = true} : vector<8x1xf32> -> vector<8x1xf32>
    %226 = vector.broadcast %225 : vector<8x1xf32> to vector<8x8xf32>
    %227 = arith.mulf %222, %226 : vector<8x8xf32>
    %228 = arith.truncf %227 : vector<8x8xf32> to vector<8x8xbf16>
    %c0_92 = arith.constant 0 : index
    %c2 = arith.constant 2 : index
    %c0_93 = arith.constant 0 : index
    %c0_94 = arith.constant 0 : index
    %229 = vector.load %arg25[%c0_92, %c2, %c0_93, %c0_94] : memref<1x4x8x8xbf16, #tpu.memory_space<vmem>>, vector<1x1x8x8xbf16>
    %230 = vector.shape_cast %229 : vector<1x1x8x8xbf16> to vector<8x8xbf16>
    %231 = vector.shape_cast %228 : vector<8x8xbf16> to vector<1x1x8x8xbf16>
    tpu.vector_store %arg25[%c0_92, %c2, %c0_93, %c0_94], %231 {strides = array<i32>} : memref<1x4x8x8xbf16, #tpu.memory_space<vmem>>, vector<1x1x8x8xbf16>,
    %232 = arith.truncf %227 : vector<8x8xf32> to vector<8x8xbf16>
    %233 = vector.extract_strided_slice %167 {offsets = [0, 16], sizes = [8, 8], strides = [1, 1]} : vector<8x32xbf16> to vector<8x8xbf16>
    %cst_95 = arith.constant dense<0.000000e+00> : vector<8x8xf32>
    %234 = tpu.matmul %232, %233, %cst_95 {dimension_numbers = #tpu.dot_dimension_numbers<[1], [0], [0], [1], [0, 0, 1, 1], [], []>} : vector<8x8xbf16>, vector<8x8xbf16>, vector<8x8xf32> -> vector<8x8xf32>
    %235 = arith.truncf %234 : vector<8x8xf32> to vector<8x8xbf16>
    %c0_96 = arith.constant 0 : index
    %c16_97 = arith.constant 16 : index
    %236 = vector.load %arg26[%c0_96, %c16_97] : memref<8x32xbf16, #tpu.memory_space<vmem>>, vector<8x8xbf16>
    tpu.vector_store %arg26[%c0_96, %c16_97], %235 {strides = array<i32>} : memref<8x32xbf16, #tpu.memory_space<vmem>>, vector<8x8xbf16>,
    %237 = vector.extract_strided_slice %164 {offsets = [0, 24], sizes = [8, 8], strides = [1, 1]} : vector<8x32xbf16> to vector<8x8xbf16>
    %238 = vector.extract_strided_slice %166 {offsets = [0, 24], sizes = [8, 8], strides = [1, 1]} : vector<8x32xbf16> to vector<8x8xbf16>
    "tpu.trace_start"() <{level = 10 : i32, message = "qd,kd->qk"}> : () -> ()
    %cst_98 = arith.constant dense<0.000000e+00> : vector<8x8xf32>
    %239 = tpu.matmul %237, %238, %cst_98 {dimension_numbers = #tpu.dot_dimension_numbers<[1], [1], [0], [0], [0, 0, 1, 0], [], []>} : vector<8x8xbf16>, vector<8x8xbf16>, vector<8x8xf32> -> vector<8x8xf32>
    "tpu.trace_stop"() : () -> ()
    %240 = arith.addf %239, %9 : vector<8x8xf32>
    %cst_99 = arith.constant dense<0xFF800000> : vector<8xf32>
    %241 = vector.multi_reduction <maximumf>, %240, %cst_99 [1] : vector<8x8xf32> to vector<8xf32>
    %242 = vector.shape_cast %241 : vector<8xf32> to vector<8x1xf32>
    %243 = vector.broadcast %242 : vector<8x1xf32> to vector<8x8xf32>
    %244 = arith.subf %240, %243 : vector<8x8xf32>
    %245 = math.exp %244 : vector<8x8xf32>
    %cst_100 = arith.constant dense<0.000000e+00> : vector<8xf32>
    %246 = vector.multi_reduction <add>, %245, %cst_100 [1] : vector<8x8xf32> to vector<8xf32>
    %247 = vector.shape_cast %246 : vector<8xf32> to vector<8x1xf32>
    %248 = tpu.reciprocal %247 {approx = true} : vector<8x1xf32> -> vector<8x1xf32>
    %249 = vector.broadcast %248 : vector<8x1xf32> to vector<8x8xf32>
    %250 = arith.mulf %245, %249 : vector<8x8xf32>
    %251 = arith.truncf %250 : vector<8x8xf32> to vector<8x8xbf16>
    %c0_101 = arith.constant 0 : index
    %c3 = arith.constant 3 : index
    %c0_102 = arith.constant 0 : index
    %c0_103 = arith.constant 0 : index
    %252 = vector.load %arg25[%c0_101, %c3, %c0_102, %c0_103] : memref<1x4x8x8xbf16, #tpu.memory_space<vmem>>, vector<1x1x8x8xbf16>
    %253 = vector.shape_cast %252 : vector<1x1x8x8xbf16> to vector<8x8xbf16>
    %254 = vector.shape_cast %251 : vector<8x8xbf16> to vector<1x1x8x8xbf16>
    tpu.vector_store %arg25[%c0_101, %c3, %c0_102, %c0_103], %254 {strides = array<i32>} : memref<1x4x8x8xbf16, #tpu.memory_space<vmem>>, vector<1x1x8x8xbf16>,
    %255 = arith.truncf %250 : vector<8x8xf32> to vector<8x8xbf16>
    %256 = vector.extract_strided_slice %167 {offsets = [0, 24], sizes = [8, 8], strides = [1, 1]} : vector<8x32xbf16> to vector<8x8xbf16>
    %cst_104 = arith.constant dense<0.000000e+00> : vector<8x8xf32>
    %257 = tpu.matmul %255, %256, %cst_104 {dimension_numbers = #tpu.dot_dimension_numbers<[1], [0], [0], [1], [0, 0, 1, 1], [], []>} : vector<8x8xbf16>, vector<8x8xbf16>, vector<8x8xf32> -> vector<8x8xf32>
    %258 = arith.truncf %257 : vector<8x8xf32> to vector<8x8xbf16>
    %c0_105 = arith.constant 0 : index
    %c24_106 = arith.constant 24 : index
    %259 = vector.load %arg26[%c0_105, %c24_106] : memref<8x32xbf16, #tpu.memory_space<vmem>>, vector<8x8xbf16>
    tpu.vector_store %arg26[%c0_105, %c24_106], %258 {strides = array<i32>} : memref<8x32xbf16, #tpu.memory_space<vmem>>, vector<8x8xbf16>,
    %c0_107 = arith.constant 0 : index
    %c0_108 = arith.constant 0 : index
    %260 = vector.load %arg26[%c0_107, %c0_108] : memref<8x32xbf16, #tpu.memory_space<vmem>>, vector<8x32xbf16>
    %c0_109 = arith.constant 0 : index
    %c0_110 = arith.constant 0 : index
    %261 = vector.load %arg16[%c0_109, %c0_110] : memref<32x32xbf16, #tpu.memory_space<vmem>>, vector<32x32xbf16>
    %cst_111 = arith.constant dense<0.000000e+00> : vector<8x32xf32>
    %262 = tpu.matmul %260, %261, %cst_111 {dimension_numbers = #tpu.dot_dimension_numbers<[1], [0], [0], [1], [0, 0, 1, 1], [], []>} : vector<8x32xbf16>, vector<32x32xbf16>, vector<8x32xf32> -> vector<8x32xf32>
    %263 = arith.addf %126, %262 : vector<8x32xf32>
    %c0_112 = arith.constant 0 : index
    %c0_113 = arith.constant 0 : index
    %264 = vector.load %arg17[%c0_112, %c0_113] : memref<1x32xf32, #tpu.memory_space<vmem>>, vector<1x32xf32>
    %265 = vector.broadcast %264 : vector<1x32xf32> to vector<8x32xf32>
    %266 = arith.addf %263, %265 : vector<8x32xf32>
    %c0_114 = arith.constant 0 : index
    %c0_115 = arith.constant 0 : index
    %267 = vector.load %arg18[%c0_114, %c0_115] : memref<1x32xf32, #tpu.memory_space<vmem>>, vector<1x32xf32>
    %c0_116 = arith.constant 0 : index
    %c0_117 = arith.constant 0 : index
    %268 = vector.load %arg19[%c0_116, %c0_117] : memref<1x32xf32, #tpu.memory_space<vmem>>, vector<1x32xf32>
    %cst_118 = arith.constant dense<0.000000e+00> : vector<8xf32>
    %269 = vector.multi_reduction <add>, %266, %cst_118 [1] : vector<8x32xf32> to vector<8xf32>
    %270 = vector.shape_cast %269 : vector<8xf32> to vector<8x1xf32>
    %cst_119 = arith.constant 3.200000e+01 : f32
    %271 = vector.broadcast %cst_119 : f32 to vector<8x1xf32>
    %272 = arith.divf %270, %271 : vector<8x1xf32>
    %273 = vector.broadcast %272 : vector<8x1xf32> to vector<8x32xf32>
    %274 = arith.subf %266, %273 : vector<8x32xf32>
    %275 = arith.mulf %274, %274 : vector<8x32xf32>
    %cst_120 = arith.constant dense<0.000000e+00> : vector<8xf32>
    %276 = vector.multi_reduction <add>, %275, %cst_120 [1] : vector<8x32xf32> to vector<8xf32>
    %277 = vector.shape_cast %276 : vector<8xf32> to vector<8x1xf32>
    %cst_121 = arith.constant 3.200000e+01 : f32
    %278 = vector.broadcast %cst_121 : f32 to vector<8x1xf32>
    %279 = arith.divf %277, %278 : vector<8x1xf32>
    %280 = vector.broadcast %272 : vector<8x1xf32> to vector<8x32xf32>
    %281 = arith.subf %266, %280 : vector<8x32xf32>
    %cst_122 = arith.constant 9.99999974E-6 : f32
    %282 = vector.broadcast %cst_122 : f32 to vector<8x1xf32>
    %283 = arith.addf %279, %282 : vector<8x1xf32>
    %284 = math.rsqrt %283 : vector<8x1xf32>
    %285 = vector.broadcast %284 : vector<8x1xf32> to vector<8x32xf32>
    %286 = arith.mulf %281, %285 : vector<8x32xf32>
    %287 = vector.broadcast %267 : vector<1x32xf32> to vector<8x32xf32>
    %288 = arith.mulf %286, %287 : vector<8x32xf32>
    %289 = vector.broadcast %268 : vector<1x32xf32> to vector<8x32xf32>
    %290 = arith.addf %288, %289 : vector<8x32xf32>
    %291 = arith.truncf %290 : vector<8x32xf32> to vector<8x32xbf16>
    %cst_123 = arith.constant 0.000000e+00 : f32
    %292 = vector.broadcast %cst_123 : f32 to vector<8x32xf32>
    %c0_124 = arith.constant 0 : index
    %c0_125 = arith.constant 0 : index
    %293 = vector.load %arg20[%c0_124, %c0_125] : memref<32x128xbf16, #tpu.memory_space<vmem>>, vector<32x128xbf16>
    %cst_126 = arith.constant dense<0.000000e+00> : vector<8x128xf32>
    %294 = tpu.matmul %291, %293, %cst_126 {dimension_numbers = #tpu.dot_dimension_numbers<[1], [0], [0], [1], [0, 0, 1, 1], [], []>} : vector<8x32xbf16>, vector<32x128xbf16>, vector<8x128xf32> -> vector<8x128xf32>
    %c0_127 = arith.constant 0 : index
    %c0_128 = arith.constant 0 : index
    %295 = vector.load %arg21[%c0_127, %c0_128] : memref<1x128xf32, #tpu.memory_space<vmem>>, vector<1x128xf32>
    %296 = vector.broadcast %295 : vector<1x128xf32> to vector<8x128xf32>
    %297 = arith.addf %294, %296 : vector<8x128xf32>
    %cst_129 = arith.constant 5.000000e-01 : f32
    %298 = vector.broadcast %cst_129 : f32 to vector<8x128xf32>
    %299 = arith.mulf %298, %297 : vector<8x128xf32>
    %cst_130 = arith.constant 0.707106769 : f32
    %300 = vector.broadcast %cst_130 : f32 to vector<8x128xf32>
    %301 = arith.mulf %297, %300 : vector<8x128xf32>
    %302 = math.erf %301 : vector<8x128xf32>
    %cst_131 = arith.constant 1.000000e+00 : f32
    %303 = vector.broadcast %cst_131 : f32 to vector<8x128xf32>
    %304 = arith.addf %303, %302 : vector<8x128xf32>
    %305 = arith.mulf %299, %304 : vector<8x128xf32>
    %306 = arith.truncf %305 : vector<8x128xf32> to vector<8x128xbf16>
    %c0_132 = arith.constant 0 : index
    %c0_133 = arith.constant 0 : index
    %307 = vector.load %arg22[%c0_132, %c0_133] : memref<128x32xbf16, #tpu.memory_space<vmem>>, vector<128x32xbf16>
    %cst_134 = arith.constant dense<0.000000e+00> : vector<8x32xf32>
    %308 = tpu.matmul %306, %307, %cst_134 {dimension_numbers = #tpu.dot_dimension_numbers<[1], [0], [0], [1], [0, 0, 1, 1], [], []>} : vector<8x128xbf16>, vector<128x32xbf16>, vector<8x32xf32> -> vector<8x32xf32>
    %309 = arith.addf %292, %308 : vector<8x32xf32>
    %310 = arith.addf %266, %309 : vector<8x32xf32>
    %c0_135 = arith.constant 0 : index
    %c0_136 = arith.constant 0 : index
    %311 = vector.load %arg23[%c0_135, %c0_136] : memref<1x32xf32, #tpu.memory_space<vmem>>, vector<1x32xf32>
    %312 = vector.broadcast %311 : vector<1x32xf32> to vector<8x32xf32>
    %313 = arith.addf %310, %312 : vector<8x32xf32>
    %c0_137 = arith.constant 0 : index
    %c0_138 = arith.constant 0 : index
    %c0_139 = arith.constant 0 : index
    %314 = vector.load %arg24[%c0_137, %c0_138, %c0_139] : memref<1x8x32xf32, #tpu.memory_space<vmem>>, vector<1x8x32xf32>
    %315 = vector.shape_cast %314 : vector<1x8x32xf32> to vector<8x32xf32>
    %316 = vector.shape_cast %313 : vector<8x32xf32> to vector<1x8x32xf32>
    tpu.vector_store %arg24[%c0_137, %c0_138, %c0_139], %316 {strides = array<i32>} : memref<1x8x32xf32, #tpu.memory_space<vmem>>, vector<1x8x32xf32>,
    return
  }
  func.func @transform_0(%arg0: i32) -> (i32, i32, i32) {
    %c0_i32 = arith.constant 0 : i32
    %c0_i32_0 = arith.constant 0 : i32
    %c0_i32_1 = arith.constant 0 : i32
    return %arg0, %c0_i32, %c0_i32_0 : i32, i32, i32
  }
  func.func @transform_1(%arg0: i32) -> (i32, i32, i32) {
    %c0_i32 = arith.constant 0 : i32
    %c0_i32_0 = arith.constant 0 : i32
    %c0_i32_1 = arith.constant 0 : i32
    return %arg0, %c0_i32, %c0_i32_0 : i32, i32, i32
  }
  func.func @transform_2(%arg0: i32) -> (i32, i32, i32) {
    %c0_i32 = arith.constant 0 : i32
    %c0_i32_0 = arith.constant 0 : i32
    %c0_i32_1 = arith.constant 0 : i32
    return %arg0, %c0_i32, %c0_i32_0 : i32, i32, i32
  }
  func.func @transform_3(%arg0: i32) -> (i32, i32) {
    %c0_i32 = arith.constant 0 : i32
    %c0_i32_0 = arith.constant 0 : i32
    %c0_i32_1 = arith.constant 0 : i32
    return %c0_i32, %c0_i32_0 : i32, i32
  }
  func.func @transform_4(%arg0: i32) -> (i32, i32) {
    %c0_i32 = arith.constant 0 : i32
    %c0_i32_0 = arith.constant 0 : i32
    %c0_i32_1 = arith.constant 0 : i32
    return %c0_i32, %c0_i32_0 : i32, i32
  }
  func.func @transform_5(%arg0: i32) -> (i32, i32) {
    %c0_i32 = arith.constant 0 : i32
    %c0_i32_0 = arith.constant 0 : i32
    %c0_i32_1 = arith.constant 0 : i32
    return %c0_i32, %c0_i32_0 : i32, i32
  }
  func.func @transform_6(%arg0: i32) -> (i32, i32) {
    %c0_i32 = arith.constant 0 : i32
    %c0_i32_0 = arith.constant 0 : i32
    %c0_i32_1 = arith.constant 0 : i32
    return %c0_i32, %c0_i32_0 : i32, i32
  }
  func.func @transform_7(%arg0: i32) -> (i32, i32) {
    %c0_i32 = arith.constant 0 : i32
    %c0_i32_0 = arith.constant 0 : i32
    %c0_i32_1 = arith.constant 0 : i32
    return %c0_i32, %c0_i32_0 : i32, i32
  }
  func.func @transform_8(%arg0: i32) -> (i32, i32) {
    %c0_i32 = arith.constant 0 : i32
    %c0_i32_0 = arith.constant 0 : i32
    %c0_i32_1 = arith.constant 0 : i32
    return %c0_i32, %c0_i32_0 : i32, i32
  }
  func.func @transform_9(%arg0: i32) -> (i32, i32) {
    %c0_i32 = arith.constant 0 : i32
    %c0_i32_0 = arith.constant 0 : i32
    %c0_i32_1 = arith.constant 0 : i32
    return %c0_i32, %c0_i32_0 : i32, i32
  }
  func.func @transform_10(%arg0: i32) -> (i32, i32) {
    %c0_i32 = arith.constant 0 : i32
    %c0_i32_0 = arith.constant 0 : i32
    %c0_i32_1 = arith.constant 0 : i32
    return %c0_i32, %c0_i32_0 : i32, i32
  }
  func.func @transform_11(%arg0: i32) -> (i32, i32) {
    %c0_i32 = arith.constant 0 : i32
    %c0_i32_0 = arith.constant 0 : i32
    %c0_i32_1 = arith.constant 0 : i32
    return %c0_i32, %c0_i32_0 : i32, i32
  }
  func.func @transform_12(%arg0: i32) -> (i32, i32) {
    %c0_i32 = arith.constant 0 : i32
    %c0_i32_0 = arith.constant 0 : i32
    %c0_i32_1 = arith.constant 0 : i32
    return %c0_i32, %c0_i32_0 : i32, i32
  }
  func.func @transform_13(%arg0: i32) -> (i32, i32) {
    %c0_i32 = arith.constant 0 : i32
    %c0_i32_0 = arith.constant 0 : i32
    %c0_i32_1 = arith.constant 0 : i32
    return %c0_i32, %c0_i32_0 : i32, i32
  }
  func.func @transform_14(%arg0: i32) -> (i32, i32) {
    %c0_i32 = arith.constant 0 : i32
    %c0_i32_0 = arith.constant 0 : i32
    %c0_i32_1 = arith.constant 0 : i32
    return %c0_i32, %c0_i32_0 : i32, i32
  }
  func.func @transform_15(%arg0: i32) -> (i32, i32) {
    %c0_i32 = arith.constant 0 : i32
    %c0_i32_0 = arith.constant 0 : i32
    %c0_i32_1 = arith.constant 0 : i32
    return %c0_i32, %c0_i32_0 : i32, i32
  }
  func.func @transform_16(%arg0: i32) -> (i32, i32) {
    %c0_i32 = arith.constant 0 : i32
    %c0_i32_0 = arith.constant 0 : i32
    %c0_i32_1 = arith.constant 0 : i32
    return %c0_i32, %c0_i32_0 : i32, i32
  }
  func.func @transform_17(%arg0: i32) -> (i32, i32) {
    %c0_i32 = arith.constant 0 : i32
    %c0_i32_0 = arith.constant 0 : i32
    %c0_i32_1 = arith.constant 0 : i32
    return %c0_i32, %c0_i32_0 : i32, i32
  }
  func.func @transform_18(%arg0: i32) -> (i32, i32) {
    %c0_i32 = arith.constant 0 : i32
    %c0_i32_0 = arith.constant 0 : i32
    %c0_i32_1 = arith.constant 0 : i32
    return %c0_i32, %c0_i32_0 : i32, i32
  }
  func.func @transform_19(%arg0: i32) -> (i32, i32) {
    %c0_i32 = arith.constant 0 : i32
    %c0_i32_0 = arith.constant 0 : i32
    %c0_i32_1 = arith.constant 0 : i32
    return %c0_i32, %c0_i32_0 : i32, i32
  }
  func.func @transform_20(%arg0: i32) -> (i32, i32) {
    %c0_i32 = arith.constant 0 : i32
    %c0_i32_0 = arith.constant 0 : i32
    %c0_i32_1 = arith.constant 0 : i32
    return %c0_i32, %c0_i32_0 : i32, i32
  }
  func.func @transform_21(%arg0: i32) -> (i32, i32) {
    %c0_i32 = arith.constant 0 : i32
    %c0_i32_0 = arith.constant 0 : i32
    %c0_i32_1 = arith.constant 0 : i32
    return %c0_i32, %c0_i32_0 : i32, i32
  }
  func.func @transform_22(%arg0: i32) -> (i32, i32) {
    %c0_i32 = arith.constant 0 : i32
    %c0_i32_0 = arith.constant 0 : i32
    %c0_i32_1 = arith.constant 0 : i32
    return %c0_i32, %c0_i32_0 : i32, i32
  }
  func.func @transform_23(%arg0: i32) -> (i32, i32, i32) {
    %c0_i32 = arith.constant 0 : i32
    %c0_i32_0 = arith.constant 0 : i32
    %c0_i32_1 = arith.constant 0 : i32
    return %arg0, %c0_i32, %c0_i32_0 : i32, i32, i32
  }
  func.func @transform_24(%arg0: i32) -> (i32, i32, i32, i32) {
    %c0_i32 = arith.constant 0 : i32
    %c0_i32_0 = arith.constant 0 : i32
    %c0_i32_1 = arith.constant 0 : i32
    %c0_i32_2 = arith.constant 0 : i32
    return %arg0, %c0_i32, %c0_i32_0, %c0_i32_1 : i32, i32, i32, i32
  }
}

</mosaic_0001>

<llo_original>
// kernel: tpu_custom_call.1
$region0: #{tpu_custom_call.1}
  #allocation0 [shape = 'u32[]', space=smem, size = 0x4, offset = 0x4, fixed_abs, tag = 'smem constant byte address 0x4 - core index']
  #allocation1 [shape = 'u32[144,128]{1,0:T(1,128)}', space=vmem, size = 0x12000, scoped, tag = 'internal scratch']
  #allocation2 [shape = 'bf16[8,32]{1,0:T(8,128)(2,1)}', space=vmem, size = 0x800, scoped, tag = 'scratch operand']
  %s0 = inlined_call_operand.vmem [shape: f32[2,8,32], index: 0, kind: input, shape index: {}]
  %s1 = inlined_call_operand.hbm [shape: f32[2,1,8], index: 1, kind: input, shape index: {}]
  %s2 = inlined_call_operand.hbm [shape: bf16[2,8,32], index: 2, kind: input, shape index: {}]
  %s3 = inlined_call_operand.vmem [shape: f32[1,32], index: 3, kind: input, shape index: {}]
  %s4 = inlined_call_operand.hbm [shape: f32[1,32], index: 4, kind: input, shape index: {}]
  %s5 = inlined_call_operand.vmem [shape: bf16[32,96], index: 5, kind: input, shape index: {}]
  %s6 = inlined_call_operand.hbm [shape: f32[1,96], index: 6, kind: input, shape index: {}]
  %s7 = inlined_call_operand.vmem [shape: bf16[32,32], index: 7, kind: input, shape index: {}]
  %s8 = inlined_call_operand.hbm [shape: f32[1,32], index: 8, kind: input, shape index: {}]
  %s9 = inlined_call_operand.hbm [shape: f32[1,32], index: 9, kind: input, shape index: {}]
  %s10 = inlined_call_operand.hbm [shape: f32[1,32], index: 10, kind: input, shape index: {}]
  %s11 = inlined_call_operand.vmem [shape: bf16[32,32], index: 11, kind: input, shape index: {}]
  %s12 = inlined_call_operand.hbm [shape: f32[1,32], index: 12, kind: input, shape index: {}]
  %s13 = inlined_call_operand.vmem [shape: bf16[32,64], index: 13, kind: input, shape index: {}]
  %s14 = inlined_call_operand.vmem [shape: f32[1,64], index: 14, kind: input, shape index: {}]
  %s15 = inlined_call_operand.vmem [shape: bf16[32,32], index: 15, kind: input, shape index: {}]
  %s16 = inlined_call_operand.vmem [shape: f32[1,32], index: 16, kind: input, shape index: {}]
  %s17 = inlined_call_operand.vmem [shape: f32[1,32], index: 17, kind: input, shape index: {}]
  %s18 = inlined_call_operand.vmem [shape: f32[1,32], index: 18, kind: input, shape index: {}]
  %s19 = inlined_call_operand.vmem [shape: bf16[32,128], index: 19, kind: input, shape index: {}]
  %s20 = inlined_call_operand.vmem [shape: f32[1,128], index: 20, kind: input, shape index: {}]
  %s21 = inlined_call_operand.vmem [shape: bf16[128,32], index: 21, kind: input, shape index: {}]
  %s22 = inlined_call_operand.vmem [shape: f32[1,32], index: 22, kind: input, shape index: {}]
  %s23 = inlined_call_operand.hbm [shape: f32[2,8,32], index: 23, kind: output, shape index: {0}]
  %s24 = inlined_call_operand.hbm [shape: bf16[2,4,8,8], index: 24, kind: output, shape index: {1}]
  %25 = xla_tuple %s23, %s24
  %s26 = sld [smem:[#allocation0]]
  $region165: #{tpu_custom_call.1} parent=0
    _
  %s28 = ssub.s32 1, %s26
  %s29 = scalar_select 0, %s28, %s26
  $region1: #{tpu_custom_call.1} parent=0
    #allocation3 [shape = 'u8[1024]{0}', space=vmem, size = 0x400, scoped, tag = 'input window, operand 1']
    #allocation4 [shape = 's32[2]{0}', space=sflag, size = 0x8, scoped, tag = 'scoped memory for tpu_custom_call.1']
    #allocation5 [shape = 's32[2]{0}', space=sflag, size = 0x8, scoped, tag = 'scoped memory for tpu_custom_call.1']
    #allocation6 [shape = 'u8[4096]{0}', space=vmem, size = 0x1000, scoped, tag = 'input window, operand 2']
    #allocation7 [shape = 's32[2]{0}', space=sflag, size = 0x8, scoped, tag = 'scoped memory for tpu_custom_call.1']
    #allocation8 [shape = 'u8[512]{0}', space=vmem, size = 0x400, scoped, tag = 'input window, operand 4, single buffered']
    #allocation9 [shape = 'u8[512]{0}', space=vmem, size = 0x400, scoped, tag = 'input window, operand 6, single buffered']
    #allocation10 [shape = 's32[1]{0}', space=sflag, size = 0x4, scoped, tag = 'scoped memory for tpu_custom_call.1']
    #allocation11 [shape = 'u8[512]{0}', space=vmem, size = 0x400, scoped, tag = 'input window, operand 8, single buffered']
    #allocation12 [shape = 'u8[512]{0}', space=vmem, size = 0x400, scoped, tag = 'input window, operand 9, single buffered']
    #allocation13 [shape = 's32[1]{0}', space=sflag, size = 0x4, scoped, tag = 'scoped memory for tpu_custom_call.1']
    #allocation14 [shape = 'u8[512]{0}', space=vmem, size = 0x400, scoped, tag = 'input window, operand 10, single buffered']
    #allocation15 [shape = 'u8[512]{0}', space=vmem, size = 0x400, scoped, tag = 'input window, operand 12, single buffered']
    #allocation16 [shape = 's32[1]{0}', space=sflag, size = 0x4, scoped, tag = 'scoped memory for tpu_custom_call.1']
    #allocation17 [shape = 'u8[8192]{0}', space=vmem, size = 0x2000, scoped, tag = 'output window, operand 0']
    #allocation18 [shape = 'u8[16384]{0}', space=vmem, size = 0x4000, scoped, tag = 'output window, operand 1']
    #allocation19 [shape = 's32[2]{0}', space=sflag, size = 0x8, scoped, tag = 'scoped memory for tpu_custom_call.1']
    %30 = vsyncpa [#allocation4], 0
    %s31 = scalar_lea.sflag [#allocation4], 1
    %32 = vsyncpa %s31, 0
    %33 = vsyncpa [#allocation7], 0
    %s34 = scalar_lea.sflag [#allocation7], 1
    %35 = vsyncpa %s34, 0
    %36 = vsyncpa [#allocation10], 0
    %37 = vsyncpa [#allocation13], 0
    %38 = vsyncpa [#allocation16], 0
    %39 = vsyncpa [#allocation5], 0
    %s40 = scalar_lea.sflag [#allocation5], 1
    %41 = vsyncpa %s40, 0
    %42 = vsyncpa [#allocation19], 0
    %s43 = scalar_lea.sflag [#allocation19], 1
    %44 = vsyncpa %s43, 0
    loop: start=0, step=1, limit=4
    $region2: #{tpu_custom_call.1} parent=1 // loop_pre_header
      _
    $region3: #{tpu_custom_call.1} parent=1 // loop_header
      %s46 = sphi 0, %s50
      %p47 = scmp.ge.s32.totalorder %s46, 4
      %s56 = sphi 0, %s58
      %s59 = sphi 0, %s56
      %s60 = sphi 0, %s59
      %s76 = sphi 0, %s60
      %s82 = sphi 0, %s84
      %s85 = sphi 0, %s82
      %s86 = sphi 0, %s85
      %s102 = sphi 0, %s86
      %s108 = sphi 0, %s110
      %s111 = sphi 0, %s108
      %s112 = sphi 0, %s111
      %s128 = sphi 0, %s112
      %s132 = sphi 0, %s132
      %s134 = sphi 0, %s132
      %s135 = sphi 0, %s134
      %s149 = sphi 0, %s135
      %s153 = sphi 0, %s153
      %s155 = sphi 0, %s153
      %s156 = sphi 0, %s155
      %s170 = sphi 0, %s156
      %s174 = sphi 0, %s174
      %s176 = sphi 0, %s174
      %s177 = sphi 0, %s176
      %s191 = sphi 0, %s177
      %s195 = sphi 0, %s195
      %s197 = sphi 0, %s195
      %s198 = sphi 0, %s197
      %s212 = sphi 0, %s198
      %s216 = sphi 0, %s216
      %s218 = sphi 0, %s216
      %s219 = sphi 0, %s218
      %s233 = sphi 0, %s219
      %s237 = sphi 0, %s237
      %s239 = sphi 0, %s237
      %s240 = sphi 0, %s239
      %s254 = sphi 0, %s240
      %s258 = sphi 0, %s258
      %s260 = sphi 0, %s258
      %s261 = sphi 0, %s260
      %s275 = sphi 0, %s261
      %s279 = sphi 0, %s279
      %s281 = sphi 0, %s279
      %s282 = sphi 0, %s281
      %s296 = sphi 0, %s282
      %s300 = sphi 0, %s300
      %s302 = sphi 0, %s300
      %s303 = sphi 0, %s302
      %s317 = sphi 0, %s303
      %s321 = sphi 0, %s321
      %s323 = sphi 0, %s321
      %s324 = sphi 0, %s323
      %s338 = sphi 0, %s324
      %s342 = sphi 0, %s342
      %s344 = sphi 0, %s342
      %s345 = sphi 0, %s344
      %s359 = sphi 0, %s345
      %s363 = sphi 0, %s363
      %s365 = sphi 0, %s363
      %s366 = sphi 0, %s365
      %s380 = sphi 0, %s366
      %s384 = sphi 0, %s384
      %s386 = sphi 0, %s384
      %s387 = sphi 0, %s386
      %s401 = sphi 0, %s387
      %s405 = sphi 0, %s405
      %s407 = sphi 0, %s405
      %s408 = sphi 0, %s407
      %s422 = sphi 0, %s408
      %s426 = sphi 0, %s426
      %s428 = sphi 0, %s426
      %s429 = sphi 0, %s428
      %s443 = sphi 0, %s429
      %s447 = sphi 0, %s447
      %s449 = sphi 0, %s447
      %s450 = sphi 0, %s449
      %s464 = sphi 0, %s450
      %s468 = sphi 0, %s468
      %s470 = sphi 0, %s468
      %s471 = sphi 0, %s470
      %s485 = sphi 0, %s471
      %s489 = sphi 0, %s489
      %s491 = sphi 0, %s489
      %s492 = sphi 0, %s491
      %s506 = sphi 0, %s492
      %s510 = sphi 0, %s510
      %s512 = sphi 0, %s510
      %s513 = sphi 0, %s512
      %s527 = sphi 0, %s513
      %s531 = sphi 0, %s531
      %s533 = sphi 0, %s531
      %s534 = sphi 0, %s533
      %s548 = sphi 0, %s534
      %s554 = sphi 0, %s556
      %s557 = sphi 0, %s554
      %s558 = sphi 0, %s557
      %s574 = sphi 0, %s558
      %s580 = sphi 0, %s582
      %s583 = sphi 0, %s580
      %s584 = sphi 0, %s583
      %s600 = sphi 0, %s584
    $region4: #{tpu_custom_call.1} parent=1 // loop_header_branch
      %49 = sbr.rel (%p47) target = $region8
    $region5: #{tpu_custom_call.1} parent=1 // loop_body
      %s51 = ssub.s32 %s46, 1
      %s52 = ssub.s32 %s46, 2
      %s53 = sadd.s32 %s46, 1
      %s54 = ssub.s32 %s46, %s53
      %p55 = scmp.eq.s32.totalorder %s54, 0
      %s57 = sadd.s32 %s56, 1
      %s58 = scalar_select %p55, %s56, %s57
      %p61 = pneg %p55
      %p62 = scmp.eq.s32.totalorder %s46, 1
      %p63 = por %p61, %p62
      %p64 = scmp.ne.s32.totalorder %s56, %s59
      %p65 = scmp.eq.s32.totalorder %s46, 0
      %p66 = por %p64, %p65
      %p67 = scmp.ne.s32.totalorder %s56, %s59
      %p68 = scmp.eq.s32.totalorder %s51, 1
      %p69 = por %p67, %p68
      %p70 = scmp.ne.s32.totalorder %s59, %s60
      %p71 = scmp.eq.s32.totalorder %s51, 0
      %p72 = por %p70, %p71
      %p73 = scmp.ne.s32.totalorder %s59, %s60
      %p74 = scmp.eq.s32.totalorder %s52, 1
      %p75 = por %p73, %p74
      %p77 = scmp.ne.s32.totalorder %s60, %s76
      %p78 = scmp.eq.s32.totalorder %s52, 0
      %p79 = por %p77, %p78
      %s80 = ssub.s32 %s46, %s53
      %p81 = scmp.eq.s32.totalorder %s80, 0
      %s83 = sadd.s32 %s82, 1
      %s84 = scalar_select %p81, %s82, %s83
      %p87 = pneg %p81
      %p88 = scmp.eq.s32.totalorder %s46, 1
      %p89 = por %p87, %p88
      %p90 = scmp.ne.s32.totalorder %s82, %s85
      %p91 = scmp.eq.s32.totalorder %s46, 0
      %p92 = por %p90, %p91
      %p93 = scmp.ne.s32.totalorder %s82, %s85
      %p94 = scmp.eq.s32.totalorder %s51, 1
      %p95 = por %p93, %p94
      %p96 = scmp.ne.s32.totalorder %s85, %s86
      %p97 = scmp.eq.s32.totalorder %s51, 0
      %p98 = por %p96, %p97
      %p99 = scmp.ne.s32.totalorder %s85, %s86
      %p100 = scmp.eq.s32.totalorder %s52, 1
      %p101 = por %p99, %p100
      %p103 = scmp.ne.s32.totalorder %s86, %s102
      %p104 = scmp.eq.s32.totalorder %s52, 0
      %p105 = por %p103, %p104
      %s106 = ssub.s32 %s46, %s53
      %p107 = scmp.eq.s32.totalorder %s106, 0
      %s109 = sadd.s32 %s108, 1
      %s110 = scalar_select %p107, %s108, %s109
      %p113 = pneg %p107
      %p114 = scmp.eq.s32.totalorder %s46, 1
      %p115 = por %p113, %p114
      %p116 = scmp.ne.s32.totalorder %s108, %s111
      %p117 = scmp.eq.s32.totalorder %s46, 0
      %p118 = por %p116, %p117
      %p119 = scmp.ne.s32.totalorder %s108, %s111
      %p120 = scmp.eq.s32.totalorder %s51, 1
      %p121 = por %p119, %p120
      %p122 = scmp.ne.s32.totalorder %s111, %s112
      %p123 = scmp.eq.s32.totalorder %s51, 0
      %p124 = por %p122, %p123
      %p125 = scmp.ne.s32.totalorder %s111, %s112
      %p126 = scmp.eq.s32.totalorder %s52, 1
      %p127 = por %p125, %p126
      %p129 = scmp.ne.s32.totalorder %s112, %s128
      %p130 = scmp.eq.s32.totalorder %s52, 0
      %p131 = por %p129, %p130
      %s133 = sadd.s32 %s132, 1
      %p136 = scmp.eq.s32.totalorder %s46, 1
      %p137 = scmp.ne.s32.totalorder %s132, %s134
      %p138 = scmp.eq.s32.totalorder %s46, 0
      %p139 = por %p137, %p138
      %p140 = scmp.ne.s32.totalorder %s132, %s134
      %p141 = scmp.eq.s32.totalorder %s51, 1
      %p142 = por %p140, %p141
      %p143 = scmp.ne.s32.totalorder %s134, %s135
      %p144 = scmp.eq.s32.totalorder %s51, 0
      %p145 = por %p143, %p144
      %p146 = scmp.ne.s32.totalorder %s134, %s135
      %p147 = scmp.eq.s32.totalorder %s52, 1
      %p148 = por %p146, %p147
      %p150 = scmp.ne.s32.totalorder %s135, %s149
      %p151 = scmp.eq.s32.totalorder %s52, 0
      %p152 = por %p150, %p151
      %s154 = sadd.s32 %s153, 1
      %p157 = scmp.eq.s32.totalorder %s46, 1
      %p158 = scmp.ne.s32.totalorder %s153, %s155
      %p159 = scmp.eq.s32.totalorder %s46, 0
      %p160 = por %p158, %p159
      %p161 = scmp.ne.s32.totalorder %s153, %s155
      %p162 = scmp.eq.s32.totalorder %s51, 1
      %p163 = por %p161, %p162
      %p164 = scmp.ne.s32.totalorder %s155, %s156
      %p165 = scmp.eq.s32.totalorder %s51, 0
      %p166 = por %p164, %p165
      %p167 = scmp.ne.s32.totalorder %s155, %s156
      %p168 = scmp.eq.s32.totalorder %s52, 1
      %p169 = por %p167, %p168
      %p171 = scmp.ne.s32.totalorder %s156, %s170
      %p172 = scmp.eq.s32.totalorder %s52, 0
      %p173 = por %p171, %p172
      %s175 = sadd.s32 %s174, 1
      %p178 = scmp.eq.s32.totalorder %s46, 1
      %p179 = scmp.ne.s32.totalorder %s174, %s176
      %p180 = scmp.eq.s32.totalorder %s46, 0
      %p181 = por %p179, %p180
      %p182 = scmp.ne.s32.totalorder %s174, %s176
      %p183 = scmp.eq.s32.totalorder %s51, 1
      %p184 = por %p182, %p183
      %p185 = scmp.ne.s32.totalorder %s176, %s177
      %p186 = scmp.eq.s32.totalorder %s51, 0
      %p187 = por %p185, %p186
      %p188 = scmp.ne.s32.totalorder %s176, %s177
      %p189 = scmp.eq.s32.totalorder %s52, 1
      %p190 = por %p188, %p189
      %p192 = scmp.ne.s32.totalorder %s177, %s191
      %p193 = scmp.eq.s32.totalorder %s52, 0
      %p194 = por %p192, %p193
      %s196 = sadd.s32 %s195, 1
      %p199 = scmp.eq.s32.totalorder %s46, 1
      %p200 = scmp.ne.s32.totalorder %s195, %s197
      %p201 = scmp.eq.s32.totalorder %s46, 0
      %p202 = por %p200, %p201
      %p203 = scmp.ne.s32.totalorder %s195, %s197
      %p204 = scmp.eq.s32.totalorder %s51, 1
      %p205 = por %p203, %p204
      %p206 = scmp.ne.s32.totalorder %s197, %s198
      %p207 = scmp.eq.s32.totalorder %s51, 0
      %p208 = por %p206, %p207
      %p209 = scmp.ne.s32.totalorder %s197, %s198
      %p210 = scmp.eq.s32.totalorder %s52, 1
      %p211 = por %p209, %p210
      %p213 = scmp.ne.s32.totalorder %s198, %s212
      %p214 = scmp.eq.s32.totalorder %s52, 0
      %p215 = por %p213, %p214
      %s217 = sadd.s32 %s216, 1
      %p220 = scmp.eq.s32.totalorder %s46, 1
      %p221 = scmp.ne.s32.totalorder %s216, %s218
      %p222 = scmp.eq.s32.totalorder %s46, 0
      %p223 = por %p221, %p222
      %p224 = scmp.ne.s32.totalorder %s216, %s218
      %p225 = scmp.eq.s32.totalorder %s51, 1
      %p226 = por %p224, %p225
      %p227 = scmp.ne.s32.totalorder %s218, %s219
      %p228 = scmp.eq.s32.totalorder %s51, 0
      %p229 = por %p227, %p228
      %p230 = scmp.ne.s32.totalorder %s218, %s219
      %p231 = scmp.eq.s32.totalorder %s52, 1
      %p232 = por %p230, %p231
      %p234 = scmp.ne.s32.totalorder %s219, %s233
      %p235 = scmp.eq.s32.totalorder %s52, 0
      %p236 = por %p234, %p235
      %s238 = sadd.s32 %s237, 1
      %p241 = scmp.eq.s32.totalorder %s46, 1
      %p242 = scmp.ne.s32.totalorder %s237, %s239
      %p243 = scmp.eq.s32.totalorder %s46, 0
      %p244 = por %p242, %p243
      %p245 = scmp.ne.s32.totalorder %s237, %s239
      %p246 = scmp.eq.s32.totalorder %s51, 1
      %p247 = por %p245, %p246
      %p248 = scmp.ne.s32.totalorder %s239, %s240
      %p249 = scmp.eq.s32.totalorder %s51, 0
      %p250 = por %p248, %p249
      %p251 = scmp.ne.s32.totalorder %s239, %s240
      %p252 = scmp.eq.s32.totalorder %s52, 1
      %p253 = por %p251, %p252
      %p255 = scmp.ne.s32.totalorder %s240, %s254
      %p256 = scmp.eq.s32.totalorder %s52, 0
      %p257 = por %p255, %p256
      %s259 = sadd.s32 %s258, 1
      %p262 = scmp.eq.s32.totalorder %s46, 1
      %p263 = scmp.ne.s32.totalorder %s258, %s260
      %p264 = scmp.eq.s32.totalorder %s46, 0
      %p265 = por %p263, %p264
      %p266 = scmp.ne.s32.totalorder %s258, %s260
      %p267 = scmp.eq.s32.totalorder %s51, 1
      %p268 = por %p266, %p267
      %p269 = scmp.ne.s32.totalorder %s260, %s261
      %p270 = scmp.eq.s32.totalorder %s51, 0
      %p271 = por %p269, %p270
      %p272 = scmp.ne.s32.totalorder %s260, %s261
      %p273 = scmp.eq.s32.totalorder %s52, 1
      %p274 = por %p272, %p273
      %p276 = scmp.ne.s32.totalorder %s261, %s275
      %p277 = scmp.eq.s32.totalorder %s52, 0
      %p278 = por %p276, %p277
      %s280 = sadd.s32 %s279, 1
      %p283 = scmp.eq.s32.totalorder %s46, 1
      %p284 = scmp.ne.s32.totalorder %s279, %s281
      %p285 = scmp.eq.s32.totalorder %s46, 0
      %p286 = por %p284, %p285
      %p287 = scmp.ne.s32.totalorder %s279, %s281
      %p288 = scmp.eq.s32.totalorder %s51, 1
      %p289 = por %p287, %p288
      %p290 = scmp.ne.s32.totalorder %s281, %s282
      %p291 = scmp.eq.s32.totalorder %s51, 0
      %p292 = por %p290, %p291
      %p293 = scmp.ne.s32.totalorder %s281, %s282
      %p294 = scmp.eq.s32.totalorder %s52, 1
      %p295 = por %p293, %p294
      %p297 = scmp.ne.s32.totalorder %s282, %s296
      %p298 = scmp.eq.s32.totalorder %s52, 0
      %p299 = por %p297, %p298
      %s301 = sadd.s32 %s300, 1
      %p304 = scmp.eq.s32.totalorder %s46, 1
      %p305 = scmp.ne.s32.totalorder %s300, %s302
      %p306 = scmp.eq.s32.totalorder %s46, 0
      %p307 = por %p305, %p306
      %p308 = scmp.ne.s32.totalorder %s300, %s302
      %p309 = scmp.eq.s32.totalorder %s51, 1
      %p310 = por %p308, %p309
      %p311 = scmp.ne.s32.totalorder %s302, %s303
      %p312 = scmp.eq.s32.totalorder %s51, 0
      %p313 = por %p311, %p312
      %p314 = scmp.ne.s32.totalorder %s302, %s303
      %p315 = scmp.eq.s32.totalorder %s52, 1
      %p316 = por %p314, %p315
      %p318 = scmp.ne.s32.totalorder %s303, %s317
      %p319 = scmp.eq.s32.totalorder %s52, 0
      %p320 = por %p318, %p319
      %s322 = sadd.s32 %s321, 1
      %p325 = scmp.eq.s32.totalorder %s46, 1
      %p326 = scmp.ne.s32.totalorder %s321, %s323
      %p327 = scmp.eq.s32.totalorder %s46, 0
      %p328 = por %p326, %p327
      %p329 = scmp.ne.s32.totalorder %s321, %s323
      %p330 = scmp.eq.s32.totalorder %s51, 1
      %p331 = por %p329, %p330
      %p332 = scmp.ne.s32.totalorder %s323, %s324
      %p333 = scmp.eq.s32.totalorder %s51, 0
      %p334 = por %p332, %p333
      %p335 = scmp.ne.s32.totalorder %s323, %s324
      %p336 = scmp.eq.s32.totalorder %s52, 1
      %p337 = por %p335, %p336
      %p339 = scmp.ne.s32.totalorder %s324, %s338
      %p340 = scmp.eq.s32.totalorder %s52, 0
      %p341 = por %p339, %p340
      %s343 = sadd.s32 %s342, 1
      %p346 = scmp.eq.s32.totalorder %s46, 1
      %p347 = scmp.ne.s32.totalorder %s342, %s344
      %p348 = scmp.eq.s32.totalorder %s46, 0
      %p349 = por %p347, %p348
      %p350 = scmp.ne.s32.totalorder %s342, %s344
      %p351 = scmp.eq.s32.totalorder %s51, 1
      %p352 = por %p350, %p351
      %p353 = scmp.ne.s32.totalorder %s344, %s345
      %p354 = scmp.eq.s32.totalorder %s51, 0
      %p355 = por %p353, %p354
      %p356 = scmp.ne.s32.totalorder %s344, %s345
      %p357 = scmp.eq.s32.totalorder %s52, 1
      %p358 = por %p356, %p357
      %p360 = scmp.ne.s32.totalorder %s345, %s359
      %p361 = scmp.eq.s32.totalorder %s52, 0
      %p362 = por %p360, %p361
      %s364 = sadd.s32 %s363, 1
      %p367 = scmp.eq.s32.totalorder %s46, 1
      %p368 = scmp.ne.s32.totalorder %s363, %s365
      %p369 = scmp.eq.s32.totalorder %s46, 0
      %p370 = por %p368, %p369
      %p371 = scmp.ne.s32.totalorder %s363, %s365
      %p372 = scmp.eq.s32.totalorder %s51, 1
      %p373 = por %p371, %p372
      %p374 = scmp.ne.s32.totalorder %s365, %s366
      %p375 = scmp.eq.s32.totalorder %s51, 0
      %p376 = por %p374, %p375
      %p377 = scmp.ne.s32.totalorder %s365, %s366
      %p378 = scmp.eq.s32.totalorder %s52, 1
      %p379 = por %p377, %p378
      %p381 = scmp.ne.s32.totalorder %s366, %s380
      %p382 = scmp.eq.s32.totalorder %s52, 0
      %p383 = por %p381, %p382
      %s385 = sadd.s32 %s384, 1
      %p388 = scmp.eq.s32.totalorder %s46, 1
      %p389 = scmp.ne.s32.totalorder %s384, %s386
      %p390 = scmp.eq.s32.totalorder %s46, 0
      %p391 = por %p389, %p390
      %p392 = scmp.ne.s32.totalorder %s384, %s386
      %p393 = scmp.eq.s32.totalorder %s51, 1
      %p394 = por %p392, %p393
      %p395 = scmp.ne.s32.totalorder %s386, %s387
      %p396 = scmp.eq.s32.totalorder %s51, 0
      %p397 = por %p395, %p396
      %p398 = scmp.ne.s32.totalorder %s386, %s387
      %p399 = scmp.eq.s32.totalorder %s52, 1
      %p400 = por %p398, %p399
      %p402 = scmp.ne.s32.totalorder %s387, %s401
      %p403 = scmp.eq.s32.totalorder %s52, 0
      %p404 = por %p402, %p403
      %s406 = sadd.s32 %s405, 1
      %p409 = scmp.eq.s32.totalorder %s46, 1
      %p410 = scmp.ne.s32.totalorder %s405, %s407
      %p411 = scmp.eq.s32.totalorder %s46, 0
      %p412 = por %p410, %p411
      %p413 = scmp.ne.s32.totalorder %s405, %s407
      %p414 = scmp.eq.s32.totalorder %s51, 1
      %p415 = por %p413, %p414
      %p416 = scmp.ne.s32.totalorder %s407, %s408
      %p417 = scmp.eq.s32.totalorder %s51, 0
      %p418 = por %p416, %p417
      %p419 = scmp.ne.s32.totalorder %s407, %s408
      %p420 = scmp.eq.s32.totalorder %s52, 1
      %p421 = por %p419, %p420
      %p423 = scmp.ne.s32.totalorder %s408, %s422
      %p424 = scmp.eq.s32.totalorder %s52, 0
      %p425 = por %p423, %p424
      %s427 = sadd.s32 %s426, 1
      %p430 = scmp.eq.s32.totalorder %s46, 1
      %p431 = scmp.ne.s32.totalorder %s426, %s428
      %p432 = scmp.eq.s32.totalorder %s46, 0
      %p433 = por %p431, %p432
      %p434 = scmp.ne.s32.totalorder %s426, %s428
      %p435 = scmp.eq.s32.totalorder %s51, 1
      %p436 = por %p434, %p435
      %p437 = scmp.ne.s32.totalorder %s428, %s429
      %p438 = scmp.eq.s32.totalorder %s51, 0
      %p439 = por %p437, %p438
      %p440 = scmp.ne.s32.totalorder %s428, %s429
      %p441 = scmp.eq.s32.totalorder %s52, 1
      %p442 = por %p440, %p441
      %p444 = scmp.ne.s32.totalorder %s429, %s443
      %p445 = scmp.eq.s32.totalorder %s52, 0
      %p446 = por %p444, %p445
      %s448 = sadd.s32 %s447, 1
      %p451 = scmp.eq.s32.totalorder %s46, 1
      %p452 = scmp.ne.s32.totalorder %s447, %s449
      %p453 = scmp.eq.s32.totalorder %s46, 0
      %p454 = por %p452, %p453
      %p455 = scmp.ne.s32.totalorder %s447, %s449
      %p456 = scmp.eq.s32.totalorder %s51, 1
      %p457 = por %p455, %p456
      %p458 = scmp.ne.s32.totalorder %s449, %s450
      %p459 = scmp.eq.s32.totalorder %s51, 0
      %p460 = por %p458, %p459
      %p461 = scmp.ne.s32.totalorder %s449, %s450
      %p462 = scmp.eq.s32.totalorder %s52, 1
      %p463 = por %p461, %p462
      %p465 = scmp.ne.s32.totalorder %s450, %s464
      %p466 = scmp.eq.s32.totalorder %s52, 0
      %p467 = por %p465, %p466
      %s469 = sadd.s32 %s468, 1
      %p472 = scmp.eq.s32.totalorder %s46, 1
      %p473 = scmp.ne.s32.totalorder %s468, %s470
      %p474 = scmp.eq.s32.totalorder %s46, 0
      %p475 = por %p473, %p474
      %p476 = scmp.ne.s32.totalorder %s468, %s470
      %p477 = scmp.eq.s32.totalorder %s51, 1
      %p478 = por %p476, %p477
      %p479 = scmp.ne.s32.totalorder %s470, %s471
      %p480 = scmp.eq.s32.totalorder %s51, 0
      %p481 = por %p479, %p480
      %p482 = scmp.ne.s32.totalorder %s470, %s471
      %p483 = scmp.eq.s32.totalorder %s52, 1
      %p484 = por %p482, %p483
      %p486 = scmp.ne.s32.totalorder %s471, %s485
      %p487 = scmp.eq.s32.totalorder %s52, 0
      %p488 = por %p486, %p487
      %s490 = sadd.s32 %s489, 1
      %p493 = scmp.eq.s32.totalorder %s46, 1
      %p494 = scmp.ne.s32.totalorder %s489, %s491
      %p495 = scmp.eq.s32.totalorder %s46, 0
      %p496 = por %p494, %p495
      %p497 = scmp.ne.s32.totalorder %s489, %s491
      %p498 = scmp.eq.s32.totalorder %s51, 1
      %p499 = por %p497, %p498
      %p500 = scmp.ne.s32.totalorder %s491, %s492
      %p501 = scmp.eq.s32.totalorder %s51, 0
      %p502 = por %p500, %p501
      %p503 = scmp.ne.s32.totalorder %s491, %s492
      %p504 = scmp.eq.s32.totalorder %s52, 1
      %p505 = por %p503, %p504
      %p507 = scmp.ne.s32.totalorder %s492, %s506
      %p508 = scmp.eq.s32.totalorder %s52, 0
      %p509 = por %p507, %p508
      %s511 = sadd.s32 %s510, 1
      %p514 = scmp.eq.s32.totalorder %s46, 1
      %p515 = scmp.ne.s32.totalorder %s510, %s512
      %p516 = scmp.eq.s32.totalorder %s46, 0
      %p517 = por %p515, %p516
      %p518 = scmp.ne.s32.totalorder %s510, %s512
      %p519 = scmp.eq.s32.totalorder %s51, 1
      %p520 = por %p518, %p519
      %p521 = scmp.ne.s32.totalorder %s512, %s513
      %p522 = scmp.eq.s32.totalorder %s51, 0
      %p523 = por %p521, %p522
      %p524 = scmp.ne.s32.totalorder %s512, %s513
      %p525 = scmp.eq.s32.totalorder %s52, 1
      %p526 = por %p524, %p525
      %p528 = scmp.ne.s32.totalorder %s513, %s527
      %p529 = scmp.eq.s32.totalorder %s52, 0
      %p530 = por %p528, %p529
      %s532 = sadd.s32 %s531, 1
      %p535 = scmp.eq.s32.totalorder %s46, 1
      %p536 = scmp.ne.s32.totalorder %s531, %s533
      %p537 = scmp.eq.s32.totalorder %s46, 0
      %p538 = por %p536, %p537
      %p539 = scmp.ne.s32.totalorder %s531, %s533
      %p540 = scmp.eq.s32.totalorder %s51, 1
      %p541 = por %p539, %p540
      %p542 = scmp.ne.s32.totalorder %s533, %s534
      %p543 = scmp.eq.s32.totalorder %s51, 0
      %p544 = por %p542, %p543
      %p545 = scmp.ne.s32.totalorder %s533, %s534
      %p546 = scmp.eq.s32.totalorder %s52, 1
      %p547 = por %p545, %p546
      %p549 = scmp.ne.s32.totalorder %s534, %s548
      %p550 = scmp.eq.s32.totalorder %s52, 0
      %p551 = por %p549, %p550
      %s552 = ssub.s32 %s46, %s53
      %p553 = scmp.eq.s32.totalorder %s552, 0
      %s555 = sadd.s32 %s554, 1
      %s556 = scalar_select %p553, %s554, %s555
      %p559 = pneg %p553
      %p560 = scmp.eq.s32.totalorder %s46, 1
      %p561 = por %p559, %p560
      %p562 = scmp.ne.s32.totalorder %s554, %s557
      %p563 = scmp.eq.s32.totalorder %s46, 0
      %p564 = por %p562, %p563
      %p565 = scmp.ne.s32.totalorder %s554, %s557
      %p566 = scmp.eq.s32.totalorder %s51, 1
      %p567 = por %p565, %p566
      %p568 = scmp.ne.s32.totalorder %s557, %s558
      %p569 = scmp.eq.s32.totalorder %s51, 0
      %p570 = por %p568, %p569
      %p571 = scmp.ne.s32.totalorder %s557, %s558
      %p572 = scmp.eq.s32.totalorder %s52, 1
      %p573 = por %p571, %p572
      %p575 = scmp.ne.s32.totalorder %s558, %s574
      %p576 = scmp.eq.s32.totalorder %s52, 0
      %p577 = por %p575, %p576
      %s578 = ssub.s32 %s46, %s53
      %p579 = scmp.eq.s32.totalorder %s578, 0
      %s581 = sadd.s32 %s580, 1
      %s582 = scalar_select %p579, %s580, %s581
      %p585 = pneg %p579
      %p586 = scmp.eq.s32.totalorder %s46, 1
      %p587 = por %p585, %p586
      %p588 = scmp.ne.s32.totalorder %s580, %s583
      %p589 = scmp.eq.s32.totalorder %s46, 0
      %p590 = por %p588, %p589
      %p591 = scmp.ne.s32.totalorder %s580, %s583
      %p592 = scmp.eq.s32.totalorder %s51, 1
      %p593 = por %p591, %p592
      %p594 = scmp.ne.s32.totalorder %s583, %s584
      %p595 = scmp.eq.s32.totalorder %s51, 0
      %p596 = por %p594, %p595
      %p597 = scmp.ne.s32.totalorder %s583, %s584
      %p598 = scmp.eq.s32.totalorder %s52, 1
      %p599 = por %p597, %p598
      %p601 = scmp.ne.s32.totalorder %s584, %s600
      %p602 = scmp.eq.s32.totalorder %s52, 0
      %p603 = por %p601, %p602
      %p604 = scmp.le.s32.totalorder 1, %s46
      %p605 = scmp.lt.s32.totalorder %s46, 3
      %p606 = pnand %p604, %p605
      %p607 = pneg %p606
      // Predicated region
      $region9: #{tpu_custom_call.1} parent=5 // pred_check
        _
      $region10: #{tpu_custom_call.1} parent=5 // pred_check_branch
        %609 = sbr.rel (%p606) target = $region12
      $region11: #{tpu_custom_call.1} parent=5 // pred_region
        %s610 = ssub.s32 %s46, 1
        // Predicated region
        $region13: #{tpu_custom_call.1} parent=11 // pred_check
          %p611 = pneg %p145
        $region14: #{tpu_custom_call.1} parent=11 // pred_check_branch
          %613 = sbr.rel (%p611) target = $region16
        $region15: #{tpu_custom_call.1} parent=11 // pred_region
          _
        $region16: #{tpu_custom_call.1} parent=11 // pred_fallthru
          _
        // Predicated region
        $region17: #{tpu_custom_call.1} parent=11 // pred_check
          %p614 = pneg %p166
        $region18: #{tpu_custom_call.1} parent=11 // pred_check_branch
          %616 = sbr.rel (%p614) target = $region20
        $region19: #{tpu_custom_call.1} parent=11 // pred_region
          %s618 = ssub.s32 16, 16
          %619 = vsyncadd [#allocation7], %s618
          %s621 = sshll.u32 [#allocation8], 4
          %s622 = int_to_ptr.vmem [resolvable:$true] %s621
          %624 = dma.hbm_to_vmem [thread:$0]  %s4, 16, %s622, [#allocation7]
        $region20: #{tpu_custom_call.1} parent=11 // pred_fallthru
          _
        // Predicated region
        $region21: #{tpu_custom_call.1} parent=11 // pred_check
          %p625 = pneg %p187
        $region22: #{tpu_custom_call.1} parent=11 // pred_check_branch
          %627 = sbr.rel (%p625) target = $region24
        $region23: #{tpu_custom_call.1} parent=11 // pred_region
          _
        $region24: #{tpu_custom_call.1} parent=11 // pred_fallthru
          _
        // Predicated region
        $region25: #{tpu_custom_call.1} parent=11 // pred_check
          %p628 = pneg %p208
        $region26: #{tpu_custom_call.1} parent=11 // pred_check_branch
          %630 = sbr.rel (%p628) target = $region28
        $region27: #{tpu_custom_call.1} parent=11 // pred_region
          %s632 = ssub.s32 16, 16
          %633 = vsyncadd [#allocation10], %s632
          %s635 = sshll.u32 [#allocation9], 4
          %s636 = int_to_ptr.vmem [resolvable:$true] %s635
          %638 = dma.hbm_to_vmem [thread:$0]  %s6, 16, %s636, [#allocation10]
        $region28: #{tpu_custom_call.1} parent=11 // pred_fallthru
          _
        // Predicated region
        $region29: #{tpu_custom_call.1} parent=11 // pred_check
          %p639 = pneg %p229
        $region30: #{tpu_custom_call.1} parent=11 // pred_check_branch
          %641 = sbr.rel (%p639) target = $region32
        $region31: #{tpu_custom_call.1} parent=11 // pred_region
          _
        $region32: #{tpu_custom_call.1} parent=11 // pred_fallthru
          _
        // Predicated region
        $region33: #{tpu_custom_call.1} parent=11 // pred_check
          %p642 = pneg %p250
        $region34: #{tpu_custom_call.1} parent=11 // pred_check_branch
          %644 = sbr.rel (%p642) target = $region36
        $region35: #{tpu_custom_call.1} parent=11 // pred_region
          %s646 = ssub.s32 16, 16
          %647 = vsyncadd [#allocation10], %s646
          %s649 = sshll.u32 [#allocation11], 4
          %s650 = int_to_ptr.vmem [resolvable:$true] %s649
          %652 = dma.hbm_to_vmem [thread:$0]  %s8, 16, %s650, [#allocation10]
        $region36: #{tpu_custom_call.1} parent=11 // pred_fallthru
          _
        // Predicated region
        $region37: #{tpu_custom_call.1} parent=11 // pred_check
          %p653 = pneg %p271
        $region38: #{tpu_custom_call.1} parent=11 // pred_check_branch
          %655 = sbr.rel (%p653) target = $region40
        $region39: #{tpu_custom_call.1} parent=11 // pred_region
          %s657 = ssub.s32 16, 16
          %658 = vsyncadd [#allocation13], %s657
          %s660 = sshll.u32 [#allocation12], 4
          %s661 = int_to_ptr.vmem [resolvable:$true] %s660
          %663 = dma.hbm_to_vmem [thread:$0]  %s9, 16, %s661, [#allocation13]
        $region40: #{tpu_custom_call.1} parent=11 // pred_fallthru
          _
        // Predicated region
        $region41: #{tpu_custom_call.1} parent=11 // pred_check
          %p664 = pneg %p292
        $region42: #{tpu_custom_call.1} parent=11 // pred_check_branch
          %666 = sbr.rel (%p664) target = $region44
        $region43: #{tpu_custom_call.1} parent=11 // pred_region
          %s668 = ssub.s32 16, 16
          %669 = vsyncadd [#allocation13], %s668
          %s671 = sshll.u32 [#allocation14], 4
          %s672 = int_to_ptr.vmem [resolvable:$true] %s671
          %674 = dma.hbm_to_vmem [thread:$0]  %s10, 16, %s672, [#allocation13]
        $region44: #{tpu_custom_call.1} parent=11 // pred_fallthru
          _
        // Predicated region
        $region45: #{tpu_custom_call.1} parent=11 // pred_check
          %p675 = pneg %p313
        $region46: #{tpu_custom_call.1} parent=11 // pred_check_branch
          %677 = sbr.rel (%p675) target = $region48
        $region47: #{tpu_custom_call.1} parent=11 // pred_region
          _
        $region48: #{tpu_custom_call.1} parent=11 // pred_fallthru
          _
        // Predicated region
        $region49: #{tpu_custom_call.1} parent=11 // pred_check
          %p678 = pneg %p334
        $region50: #{tpu_custom_call.1} parent=11 // pred_check_branch
          %680 = sbr.rel (%p678) target = $region52
        $region51: #{tpu_custom_call.1} parent=11 // pred_region
          %s682 = ssub.s32 16, 16
          %683 = vsyncadd [#allocation16], %s682
          %s685 = sshll.u32 [#allocation15], 4
          %s686 = int_to_ptr.vmem [resolvable:$true] %s685
          %688 = dma.hbm_to_vmem [thread:$0]  %s12, 16, %s686, [#allocation16]
        $region52: #{tpu_custom_call.1} parent=11 // pred_fallthru
          _
        // Predicated region
        $region53: #{tpu_custom_call.1} parent=11 // pred_check
          %p689 = pneg %p355
        $region54: #{tpu_custom_call.1} parent=11 // pred_check_branch
          %691 = sbr.rel (%p689) target = $region56
        $region55: #{tpu_custom_call.1} parent=11 // pred_region
          _
        $region56: #{tpu_custom_call.1} parent=11 // pred_fallthru
          _
        // Predicated region
        $region57: #{tpu_custom_call.1} parent=11 // pred_check
          %p692 = pneg %p376
        $region58: #{tpu_custom_call.1} parent=11 // pred_check_branch
          %694 = sbr.rel (%p692) target = $region60
        $region59: #{tpu_custom_call.1} parent=11 // pred_region
          _
        $region60: #{tpu_custom_call.1} parent=11 // pred_fallthru
          _
        // Predicated region
        $region61: #{tpu_custom_call.1} parent=11 // pred_check
          %p695 = pneg %p397
        $region62: #{tpu_custom_call.1} parent=11 // pred_check_branch
          %697 = sbr.rel (%p695) target = $region64
        $region63: #{tpu_custom_call.1} parent=11 // pred_region
          _
        $region64: #{tpu_custom_call.1} parent=11 // pred_fallthru
          _
        // Predicated region
        $region65: #{tpu_custom_call.1} parent=11 // pred_check
          %p698 = pneg %p418
        $region66: #{tpu_custom_call.1} parent=11 // pred_check_branch
          %700 = sbr.rel (%p698) target = $region68
        $region67: #{tpu_custom_call.1} parent=11 // pred_region
          _
        $region68: #{tpu_custom_call.1} parent=11 // pred_fallthru
          _
        // Predicated region
        $region69: #{tpu_custom_call.1} parent=11 // pred_check
          %p701 = pneg %p439
        $region70: #{tpu_custom_call.1} parent=11 // pred_check_branch
          %703 = sbr.rel (%p701) target = $region72
        $region71: #{tpu_custom_call.1} parent=11 // pred_region
          _
        $region72: #{tpu_custom_call.1} parent=11 // pred_fallthru
          _
        // Predicated region
        $region73: #{tpu_custom_call.1} parent=11 // pred_check
          %p704 = pneg %p460
        $region74: #{tpu_custom_call.1} parent=11 // pred_check_branch
          %706 = sbr.rel (%p704) target = $region76
        $region75: #{tpu_custom_call.1} parent=11 // pred_region
          _
        $region76: #{tpu_custom_call.1} parent=11 // pred_fallthru
          _
        // Predicated region
        $region77: #{tpu_custom_call.1} parent=11 // pred_check
          %p707 = pneg %p481
        $region78: #{tpu_custom_call.1} parent=11 // pred_check_branch
          %709 = sbr.rel (%p707) target = $region80
        $region79: #{tpu_custom_call.1} parent=11 // pred_region
          _
        $region80: #{tpu_custom_call.1} parent=11 // pred_fallthru
          _
        // Predicated region
        $region81: #{tpu_custom_call.1} parent=11 // pred_check
          %p710 = pneg %p502
        $region82: #{tpu_custom_call.1} parent=11 // pred_check_branch
          %712 = sbr.rel (%p710) target = $region84
        $region83: #{tpu_custom_call.1} parent=11 // pred_region
          _
        $region84: #{tpu_custom_call.1} parent=11 // pred_fallthru
          _
        // Predicated region
        $region85: #{tpu_custom_call.1} parent=11 // pred_check
          %p713 = pneg %p523
        $region86: #{tpu_custom_call.1} parent=11 // pred_check_branch
          %715 = sbr.rel (%p713) target = $region88
        $region87: #{tpu_custom_call.1} parent=11 // pred_region
          _
        $region88: #{tpu_custom_call.1} parent=11 // pred_fallthru
          _
        // Predicated region
        $region89: #{tpu_custom_call.1} parent=11 // pred_check
          %p716 = pneg %p544
        $region90: #{tpu_custom_call.1} parent=11 // pred_check_branch
          %718 = sbr.rel (%p716) target = $region92
        $region91: #{tpu_custom_call.1} parent=11 // pred_region
          _
        $region92: #{tpu_custom_call.1} parent=11 // pred_fallthru
          _
      $region12: #{tpu_custom_call.1} parent=5 // pred_fallthru
        _
      %p719 = scmp.lt.s32.totalorder %s46, 2
      // Predicated region
      $region93: #{tpu_custom_call.1} parent=5 // pred_check
        %p720 = pneg %p719
      $region94: #{tpu_custom_call.1} parent=5 // pred_check_branch
        %722 = sbr.rel (%p720) target = $region96
      $region95: #{tpu_custom_call.1} parent=5 // pred_region
        // Predicated region
        $region97: #{tpu_custom_call.1} parent=95 // pred_check
          %p723 = pneg %p66
        $region98: #{tpu_custom_call.1} parent=95 // pred_check_branch
          %725 = sbr.rel (%p723) target = $region100
        $region99: #{tpu_custom_call.1} parent=95 // pred_region
          %p726 = scmp.lt.s32.totalorder %s46, 1
          %s727 = scalar_select %p726, %s46, 1
          %s728 = smul.addr %s727, 8
          %s729 = scalar_lea.vmem %s0, %s728
        $region100: #{tpu_custom_call.1} parent=95 // pred_fallthru
          _
        // Predicated region
        $region101: #{tpu_custom_call.1} parent=95 // pred_check
          %p730 = pneg %p92
        $region102: #{tpu_custom_call.1} parent=95 // pred_check_branch
          %732 = sbr.rel (%p730) target = $region104
        $region103: #{tpu_custom_call.1} parent=95 // pred_region
          %s733 = sand.u32 %s82, 1
          %s734 = scalar_lea.sflag [#allocation4], %s733
          %s735 = sand.u32 %s82, 1
          %s736 = scalar_lea.vmem [#allocation3], %s735
          %s738 = ssub.s32 16, 16
          %739 = vsyncadd %s734, %s738
          %s740 = smul.addr %s46, 16
          %s741 = scalar_lea.hbm %s1, %s740
          %s743 = sshll.u32 %s736, 4
          %s744 = int_to_ptr.vmem [resolvable:$true] %s743
          %746 = dma.hbm_to_vmem [thread:$0]  %s741, 16, %s744, %s734
        $region104: #{tpu_custom_call.1} parent=95 // pred_fallthru
          _
        // Predicated region
        $region105: #{tpu_custom_call.1} parent=95 // pred_check
          %p747 = pneg %p118
        $region106: #{tpu_custom_call.1} parent=95 // pred_check_branch
          %749 = sbr.rel (%p747) target = $region108
        $region107: #{tpu_custom_call.1} parent=95 // pred_region
          %s750 = sand.u32 %s46, 1
          %s751 = scalar_lea.sflag [#allocation7], %s750
          %s752 = sand.u32 %s108, 1
          %s753 = smul.addr %s752, 4
          %s754 = scalar_lea.vmem [#allocation6], %s753
          %s756 = ssub.s32 64, 64
          %757 = vsyncadd %s751, %s756
          %s758 = smul.addr %s46, 64
          %s759 = scalar_lea.hbm %s2, %s758
          %s761 = sshll.u32 %s754, 4
          %s762 = int_to_ptr.vmem [resolvable:$true] %s761
          %764 = dma.hbm_to_vmem [thread:$0]  %s759, 64, %s762, %s751
        $region108: #{tpu_custom_call.1} parent=95 // pred_fallthru
          _
      $region96: #{tpu_custom_call.1} parent=5 // pred_fallthru
        _
      %p765 = scmp.le.s32.totalorder 1, %s46
      %p766 = scmp.lt.s32.totalorder %s46, 3
      %p767 = pnand %p765, %p766
      %p768 = pneg %p767
      // Predicated region
      $region109: #{tpu_custom_call.1} parent=5 // pred_check
        _
      $region110: #{tpu_custom_call.1} parent=5 // pred_check_branch
        %770 = sbr.rel (%p767) target = $region112
      $region111: #{tpu_custom_call.1} parent=5 // pred_region
        %s771 = ssub.s32 %s46, 1
        %s772 = sand.u32 %s85, 1
        %s773 = scalar_lea.sflag [#allocation4], %s772
        %s774 = sand.u32 %s85, 1
        %s775 = scalar_lea.vmem [#allocation3], %s774
        // Predicated region
        $region113: #{tpu_custom_call.1} parent=111 // pred_check
          %p776 = pneg %p98
        $region114: #{tpu_custom_call.1} parent=111 // pred_check_branch
          %778 = sbr.rel (%p776) target = $region116
        $region115: #{tpu_custom_call.1} parent=111 // pred_region
          %779 = dma.done %s773, 16
        $region116: #{tpu_custom_call.1} parent=111 // pred_fallthru
          _
        %s780 = sand.u32 %s51, 1
        %s781 = scalar_lea.sflag [#allocation7], %s780
        %s782 = sand.u32 %s111, 1
        %s783 = smul.addr %s782, 4
        %s784 = scalar_lea.vmem [#allocation6], %s783
        // Predicated region
        $region117: #{tpu_custom_call.1} parent=111 // pred_check
          %p785 = pneg %p124
        $region118: #{tpu_custom_call.1} parent=111 // pred_check_branch
          %787 = sbr.rel (%p785) target = $region120
        $region119: #{tpu_custom_call.1} parent=111 // pred_region
          %788 = dma.done %s781, 64
        $region120: #{tpu_custom_call.1} parent=111 // pred_fallthru
          _
        // Predicated region
        $region121: #{tpu_custom_call.1} parent=111 // pred_check
          %p789 = pneg %p166
        $region122: #{tpu_custom_call.1} parent=111 // pred_check_branch
          %791 = sbr.rel (%p789) target = $region124
        $region123: #{tpu_custom_call.1} parent=111 // pred_region
          %792 = dma.done [#allocation7], 16
        $region124: #{tpu_custom_call.1} parent=111 // pred_fallthru
          _
        // Predicated region
        $region125: #{tpu_custom_call.1} parent=111 // pred_check
          %p793 = pneg %p208
        $region126: #{tpu_custom_call.1} parent=111 // pred_check_branch
          %795 = sbr.rel (%p793) target = $region128
        $region127: #{tpu_custom_call.1} parent=111 // pred_region
          %796 = dma.done [#allocation10], 16
        $region128: #{tpu_custom_call.1} parent=111 // pred_fallthru
          _
        // Predicated region
        $region129: #{tpu_custom_call.1} parent=111 // pred_check
          %p797 = pneg %p250
        $region130: #{tpu_custom_call.1} parent=111 // pred_check_branch
          %799 = sbr.rel (%p797) target = $region132
        $region131: #{tpu_custom_call.1} parent=111 // pred_region
          %800 = dma.done [#allocation10], 16
        $region132: #{tpu_custom_call.1} parent=111 // pred_fallthru
          _
        // Predicated region
        $region133: #{tpu_custom_call.1} parent=111 // pred_check
          %p801 = pneg %p271
        $region134: #{tpu_custom_call.1} parent=111 // pred_check_branch
          %803 = sbr.rel (%p801) target = $region136
        $region135: #{tpu_custom_call.1} parent=111 // pred_region
          %804 = dma.done [#allocation13], 16
        $region136: #{tpu_custom_call.1} parent=111 // pred_fallthru
          _
        // Predicated region
        $region137: #{tpu_custom_call.1} parent=111 // pred_check
          %p805 = pneg %p292
        $region138: #{tpu_custom_call.1} parent=111 // pred_check_branch
          %807 = sbr.rel (%p805) target = $region140
        $region139: #{tpu_custom_call.1} parent=111 // pred_region
          %808 = dma.done [#allocation13], 16
        $region140: #{tpu_custom_call.1} parent=111 // pred_fallthru
          _
        // Predicated region
        $region141: #{tpu_custom_call.1} parent=111 // pred_check
          %p809 = pneg %p334
        $region142: #{tpu_custom_call.1} parent=111 // pred_check_branch
          %811 = sbr.rel (%p809) target = $region144
        $region143: #{tpu_custom_call.1} parent=111 // pred_region
          %812 = dma.done [#allocation16], 16
        $region144: #{tpu_custom_call.1} parent=111 // pred_fallthru
          _
        %p813 = scmp.lt.s32.totalorder %s51, 1
        %s814 = scalar_select %p813, %s51, 1
        %s815 = smul.addr %s814, 8
        %s816 = scalar_lea.vmem %s0, %s815
        %p817 = pneg %p72
        %p818 = pneg %p69
        %s819 = sand.u32 %s85, 1
        %s820 = scalar_lea.sflag [#allocation4], %s819
        %s821 = sand.u32 %s85, 1
        %s822 = scalar_lea.vmem [#allocation3], %s821
        %p823 = pneg %p98
        %p824 = pneg %p95
        %s825 = sand.u32 %s51, 1
        %s826 = scalar_lea.sflag [#allocation7], %s825
        %s827 = sand.u32 %s111, 1
        %s828 = smul.addr %s827, 4
        %s829 = scalar_lea.vmem [#allocation6], %s828
        %p830 = pneg %p124
        %p831 = pneg %p121
        %p832 = pneg %p145
        %p833 = pneg %p142
        %p834 = pneg %p166
        %p835 = pneg %p163
        %p836 = pneg %p187
        %p837 = pneg %p184
        %p838 = pneg %p208
        %p839 = pneg %p205
        %p840 = pneg %p229
        %p841 = pneg %p226
        %p842 = pneg %p250
        %p843 = pneg %p247
        %p844 = pneg %p271
        %p845 = pneg %p268
        %p846 = pneg %p292
        %p847 = pneg %p289
        %p848 = pneg %p313
        %p849 = pneg %p310
        %p850 = pneg %p334
        %p851 = pneg %p331
        %p852 = pneg %p355
        %p853 = pneg %p352
        %p854 = pneg %p376
        %p855 = pneg %p373
        %p856 = pneg %p397
        %p857 = pneg %p394
        %p858 = pneg %p418
        %p859 = pneg %p415
        %p860 = pneg %p439
        %p861 = pneg %p436
        %p862 = pneg %p460
        %p863 = pneg %p457
        %p864 = pneg %p481
        %p865 = pneg %p478
        %p866 = pneg %p502
        %p867 = pneg %p499
        %p868 = pneg %p523
        %p869 = pneg %p520
        %p870 = pneg %p544
        %p871 = pneg %p541
        %p872 = pneg %p570
        %p873 = pneg %p567
        %s874 = sand.u32 %s557, 1
        %s875 = scalar_lea.sflag [#allocation5], %s874
        %s876 = sand.u32 %s557, 1
        %s877 = smul.addr %s876, 8
        %s878 = scalar_lea.vmem [#allocation17], %s877
        %p879 = pneg %p596
        %p880 = pneg %p593
        %s881 = sand.u32 %s583, 1
        %s882 = scalar_lea.sflag [#allocation19], %s881
        %s883 = sand.u32 %s583, 1
        %s884 = smul.addr %s883, 16
        %s885 = scalar_lea.vmem [#allocation18], %s884
        %p886 = scmp.lt.s32.totalorder %s51, 1
        %s887 = scalar_select %p886, %s51, 1
        %s888 = smul.addr %s887, 8
        %s889 = scalar_lea.vmem %s0, %s888
        %v891 = vld [vmem:[%s889] sm:$0xff]
        %v892 = vld [vmem:[%s775] sm:$0x1]
        %v893 = vsub.f32 1.0, %v892
        %v894 = vmul.f32 %v893, -1e+09
        %v896 = vlaneseq
        %v897 = vshrl.u32 %v896, 7
        %v898 = vsub.s32 0, %v897
        %v899 = vrot.slane %v894, %v898
        %v901 = vld [vmem:[%s3] sm:$0x1]
        %v902 = vld [vmem:[#allocation8] sm:$0x1]
        %vm903 = vcmask 261120
        %v904 = vsel %vm903, %v891, 0.0
        %905 = vadd.xlane.f32.xlu0 %v904
        %v906 = vpop.xlane.xlu0 %905
        %v907 = vrcp.pop 32.0
        %v908 = vmul.f32 %v906, %v907
        %v909 = vsub.f32 %v891, %v908
        %v910 = vmul.f32 %v909, %v909
        %v911 = vsel %vm903, %v910, 0.0
        %912 = vadd.xlane.f32.xlu0 %v911
        %v913 = vpop.xlane.xlu0 %912
        %v914 = vmul.f32 %v913, %v907
        %v915 = vadd.f32 %v914, 1e-05
        %v916 = vrsqrt.pop %v915
        %v917 = vmul.f32 %v909, %v916
        %v919 = vlaneseq
        %v920 = vshrl.u32 %v919, 7
        %v921 = vsub.s32 0, %v920
        %v922 = vrot.slane %v901, %v921
        %v924 = vmul.f32 %v917, %v922
        %v926 = vlaneseq
        %v927 = vshrl.u32 %v926, 7
        %v928 = vsub.s32 0, %v927
        %v929 = vrot.slane %v902, %v928
        %v931 = vadd.f32 %v924, %v929
        %v932 = vpack.c.bf16 %v931, %v931
        %v933 = vld [vmem:[%s5] sm:$0xf]
        %v934 = vld [vmem:[%s5 + $0x4] sm:$0xf]
        %v935 = vld [vmem:[%s5 + $0x8] sm:$0xf]
        %v936 = vld [vmem:[%s5 + $0xc] sm:$0xf]
        %v937 = vld [vmem:[#allocation9] sm:$0x1]
        %v939 = vlaneseq
        %v940 = vshrl.u32 %v939, 7
        %v941 = vsub.s32 0, %v940
        %v942 = vrot.slane %v937, %v941
        %v948 = vunpack.c.l.b16 %v933
        %v949 = vunpack.c.l.b16 %v934
        %v950 = vunpack.c.l.b16 %v935
        %v951 = vunpack.c.l.b16 %v936
        %v952 = vpack.c.b16 %v949, %v948
        %v953 = vpack.c.b16 %v951, %v950
        %v957 = vsel %vm903, %v932, 0
        %959 = vmatprep.subr.bf16.mxu0 0
        %960 = vmatpush1.bf16.msra.mxu0 %v952
        %961 = vmatprep.subr.bf16.mxu0 0
        %962 = vmatpush1.bf16.msra.mxu0 %v953
        %963 = vmatprep.subr.bf16.mxu0 0
        %964 = vmatpush1.bf16.msra.mxu0 0
        %965 = vmatprep.subr.bf16.mxu0 0
        %966 = vmatpush1.bf16.msra.mxu0 0
        %967 = vmatprep.subr.bf16.mxu0 0
        %968 = vmatpush1.bf16.msra.mxu0 0
        %969 = vmatprep.subr.bf16.mxu0 0
        %970 = vmatpush1.bf16.msra.mxu0 0
        %971 = vmatprep.subr.bf16.mxu0 0
        %972 = vmatpush1.bf16.msra.mxu0 0
        %973 = vmatprep.subr.bf16.mxu0 0
        %974 = vmatpush1.bf16.msra.mxu0 0
        %975 = vmatprep.subr.bf16.mxu0 0
        %976 = vmatpush1.bf16.msra.mxu0 0
        %977 = vmatprep.subr.bf16.mxu0 0
        %978 = vmatpush1.bf16.msra.mxu0 0
        %979 = vmatprep.subr.bf16.mxu0 0
        %980 = vmatpush1.bf16.msra.mxu0 0
        %981 = vmatprep.subr.bf16.mxu0 0
        %982 = vmatpush1.bf16.msra.mxu0 0
        %983 = vmatprep.subr.bf16.mxu0 0
        %984 = vmatpush1.bf16.msra.mxu0 0
        %985 = vmatprep.subr.bf16.mxu0 0
        %986 = vmatpush1.bf16.msra.mxu0 0
        %987 = vmatprep.subr.bf16.mxu0 0
        %988 = vmatpush1.bf16.msra.mxu0 0
        %989 = vmatprep.subr.bf16.mxu0 0
        %990 = vmatpush1.bf16.msra.mxu0 0
        %991 = vmatprep.mubr.bf16.mxu0 0
        %992 = vmatmul.mubr.bf16.gmra.mrb[0].mxu0 %v957
        %v993 = vpop.f32.mrb[0].mxu0
        %v994 = vadd.f32 %v942, %v993
        %v995 = vpop.f32.mrb[0].mxu0
        %v996 = vpop.f32.mrb[0].mxu0
        %v997 = vpop.f32.mrb[0].mxu0
        %998 = vdwg.mxu0
        %v999 = vpack.c.bf16 %v994, %v994
        %1001 = vrot.lane.b32.xlu0 %v999, 96
        %v1002 = vpop.permute.xlu0 %1001
        %vm1003 = vcmask 64512
        %v1005 = vsel %vm1003, %v999, 0
        %v1008 = vsel %vm1003, %v1002, 0
        %1010 = vmatprep.subr.bf16.mxu0 0
        %1011 = vmatpush1.bf16.xpose.msra.mxu0 %v1008
        %1012 = vmatprep.subr.bf16.mxu0 0
        %1013 = vmatpush1.bf16.xpose.msra.mxu0 0
        %1014 = vmatprep.subr.bf16.mxu0 0
        %1015 = vmatpush1.bf16.xpose.msra.mxu0 0
        %1016 = vmatprep.subr.bf16.mxu0 0
        %1017 = vmatpush1.bf16.xpose.msra.mxu0 0
        %1018 = vmatprep.subr.bf16.mxu0 0
        %1019 = vmatpush1.bf16.xpose.msra.mxu0 0
        %1020 = vmatprep.subr.bf16.mxu0 0
        %1021 = vmatpush1.bf16.xpose.msra.mxu0 0
        %1022 = vmatprep.subr.bf16.mxu0 0
        %1023 = vmatpush1.bf16.xpose.msra.mxu0 0
        %1024 = vmatprep.subr.bf16.mxu0 0
        %1025 = vmatpush1.bf16.xpose.msra.mxu0 0
        %1026 = vmatprep.subr.bf16.mxu0 0
        %1027 = vmatpush1.bf16.xpose.msra.mxu0 0
        %1028 = vmatprep.subr.bf16.mxu0 0
        %1029 = vmatpush1.bf16.xpose.msra.mxu0 0
        %1030 = vmatprep.subr.bf16.mxu0 0
        %1031 = vmatpush1.bf16.xpose.msra.mxu0 0
        %1032 = vmatprep.subr.bf16.mxu0 0
        %1033 = vmatpush1.bf16.xpose.msra.mxu0 0
        %1034 = vmatprep.subr.bf16.mxu0 0
        %1035 = vmatpush1.bf16.xpose.msra.mxu0 0
        %1036 = vmatprep.subr.bf16.mxu0 0
        %1037 = vmatpush1.bf16.xpose.msra.mxu0 0
        %1038 = vmatprep.subr.bf16.mxu0 0
        %1039 = vmatpush1.bf16.xpose.msra.mxu0 0
        %1040 = vmatprep.subr.bf16.mxu0 0
        %1041 = vmatpush1.bf16.xpose.msra.mxu0 0
        %1042 = vmatprep.mubr.bf16.mxu0 0
        %1043 = vmatmul.mubr.bf16.gmra.mrb[0].mxu0 %v1005
        %v1044 = vpop.f32.mrb[0].mxu0
        %v1045 = vadd.f32 %v899, %v1044
        %v1046 = vpop.f32.mrb[0].mxu0
        %v1047 = vpop.f32.mrb[0].mxu0
        %v1048 = vpop.f32.mrb[0].mxu0
        %1049 = vdwg.mxu0
        %v1050 = vsel %vm1003, %v1045, -inf
        %1051 = vmax.xlane.f32.xlu0 %v1050
        %v1052 = vpop.xlane.xlu0 %1051
        %v1053 = vsub.f32 %v1045, %v1052
        %v1054 = vmul.f32 %v1053, 1.442695
        %v1055 = vpow.pop %v1054
        %v1056 = vsel %vm1003, %v1055, 0.0
        %1057 = vadd.xlane.f32.xlu0 %v1056
        %v1058 = vpop.xlane.xlu0 %1057
        %v1059 = vrcp.pop %v1058
        %v1060 = vmul.f32 %v1055, %v1059
        %v1061 = vpack.c.bf16 %v1060, %v1060
        %1062 = vrot.lane.b32.xlu0 %v999, 64
        %v1063 = vpop.permute.xlu0 %1062
        %v1065 = vsel %vm1003, %v1061, 0
        %vm1067 = vcmask 1043456
        %v1069 = vsel %vm1067, %v1063, 0
        %1071 = vmatprep.subr.bf16.mxu0 0
        %1072 = vmatpush1.bf16.msra.mxu0 %v1069
        %1073 = vmatprep.subr.bf16.mxu0 0
        %1074 = vmatpush1.bf16.msra.mxu0 0
        %1075 = vmatprep.subr.bf16.mxu0 0
        %1076 = vmatpush1.bf16.msra.mxu0 0
        %1077 = vmatprep.subr.bf16.mxu0 0
        %1078 = vmatpush1.bf16.msra.mxu0 0
        %1079 = vmatprep.subr.bf16.mxu0 0
        %1080 = vmatpush1.bf16.msra.mxu0 0
        %1081 = vmatprep.subr.bf16.mxu0 0
        %1082 = vmatpush1.bf16.msra.mxu0 0
        %1083 = vmatprep.subr.bf16.mxu0 0
        %1084 = vmatpush1.bf16.msra.mxu0 0
        %1085 = vmatprep.subr.bf16.mxu0 0
        %1086 = vmatpush1.bf16.msra.mxu0 0
        %1087 = vmatprep.subr.bf16.mxu0 0
        %1088 = vmatpush1.bf16.msra.mxu0 0
        %1089 = vmatprep.subr.bf16.mxu0 0
        %1090 = vmatpush1.bf16.msra.mxu0 0
        %1091 = vmatprep.subr.bf16.mxu0 0
        %1092 = vmatpush1.bf16.msra.mxu0 0
        %1093 = vmatprep.subr.bf16.mxu0 0
        %1094 = vmatpush1.bf16.msra.mxu0 0
        %1095 = vmatprep.subr.bf16.mxu0 0
        %1096 = vmatpush1.bf16.msra.mxu0 0
        %1097 = vmatprep.subr.bf16.mxu0 0
        %1098 = vmatpush1.bf16.msra.mxu0 0
        %1099 = vmatprep.subr.bf16.mxu0 0
        %1100 = vmatpush1.bf16.msra.mxu0 0
        %1101 = vmatprep.subr.bf16.mxu0 0
        %1102 = vmatpush1.bf16.msra.mxu0 0
        %1103 = vmatprep.mubr.bf16.mxu0 0
        %1104 = vmatmul.mubr.bf16.gmra.mrb[0].mxu0 %v1065
        %v1105 = vpop.f32.mrb[0].mxu0
        %v1106 = vadd.f32 0.0, %v1105
        %v1107 = vpop.f32.mrb[0].mxu0
        %v1108 = vpop.f32.mrb[0].mxu0
        %v1109 = vpop.f32.mrb[0].mxu0
        %1110 = vdwg.mxu0
        %v1111 = vpack.c.bf16 %v1106, %v1106
        %vm1112 = vcmask 60416
        %1113 = vst.msk [vmem:[#allocation2] sm:$0xf] %vm1112, %v1111
        %1114 = vrot.lane.b32.xlu0 %v999, 120
        %v1115 = vpop.permute.xlu0 %1114
        %1116 = vrot.lane.b32.xlu0 %v999, 88
        %v1117 = vpop.permute.xlu0 %1116
        %v1119 = vsel %vm1003, %v1115, 0
        %v1122 = vsel %vm1003, %v1117, 0
        %1124 = vmatprep.subr.bf16.mxu0 0
        %1125 = vmatpush1.bf16.xpose.msra.mxu0 %v1122
        %1126 = vmatprep.subr.bf16.mxu0 0
        %1127 = vmatpush1.bf16.xpose.msra.mxu0 0
        %1128 = vmatprep.subr.bf16.mxu0 0
        %1129 = vmatpush1.bf16.xpose.msra.mxu0 0
        %1130 = vmatprep.subr.bf16.mxu0 0
        %1131 = vmatpush1.bf16.xpose.msra.mxu0 0
        %1132 = vmatprep.subr.bf16.mxu0 0
        %1133 = vmatpush1.bf16.xpose.msra.mxu0 0
        %1134 = vmatprep.subr.bf16.mxu0 0
        %1135 = vmatpush1.bf16.xpose.msra.mxu0 0
        %1136 = vmatprep.subr.bf16.mxu0 0
        %1137 = vmatpush1.bf16.xpose.msra.mxu0 0
        %1138 = vmatprep.subr.bf16.mxu0 0
        %1139 = vmatpush1.bf16.xpose.msra.mxu0 0
        %1140 = vmatprep.subr.bf16.mxu0 0
        %1141 = vmatpush1.bf16.xpose.msra.mxu0 0
        %1142 = vmatprep.subr.bf16.mxu0 0
        %1143 = vmatpush1.bf16.xpose.msra.mxu0 0
        %1144 = vmatprep.subr.bf16.mxu0 0
        %1145 = vmatpush1.bf16.xpose.msra.mxu0 0
        %1146 = vmatprep.subr.bf16.mxu0 0
        %1147 = vmatpush1.bf16.xpose.msra.mxu0 0
        %1148 = vmatprep.subr.bf16.mxu0 0
        %1149 = vmatpush1.bf16.xpose.msra.mxu0 0
        %1150 = vmatprep.subr.bf16.mxu0 0
        %1151 = vmatpush1.bf16.xpose.msra.mxu0 0
        %1152 = vmatprep.subr.bf16.mxu0 0
        %1153 = vmatpush1.bf16.xpose.msra.mxu0 0
        %1154 = vmatprep.subr.bf16.mxu0 0
        %1155 = vmatpush1.bf16.xpose.msra.mxu0 0
        %1156 = vmatprep.mubr.bf16.mxu0 0
        %1157 = vmatmul.mubr.bf16.gmra.mrb[0].mxu0 %v1119
        %v1158 = vpop.f32.mrb[0].mxu0
        %v1159 = vadd.f32 %v899, %v1158
        %v1160 = vpop.f32.mrb[0].mxu0
        %v1161 = vpop.f32.mrb[0].mxu0
        %v1162 = vpop.f32.mrb[0].mxu0
        %1163 = vdwg.mxu0
        %v1164 = vsel %vm1003, %v1159, -inf
        %1165 = vmax.xlane.f32.xlu0 %v1164
        %v1166 = vpop.xlane.xlu0 %1165
        %v1167 = vsub.f32 %v1159, %v1166
        %v1168 = vmul.f32 %v1167, 1.442695
        %v1169 = vpow.pop %v1168
        %v1170 = vsel %vm1003, %v1169, 0.0
        %1171 = vadd.xlane.f32.xlu0 %v1170
        %v1172 = vpop.xlane.xlu0 %1171
        %v1173 = vrcp.pop %v1172
        %v1174 = vmul.f32 %v1169, %v1173
        %v1175 = vpack.c.bf16 %v1174, %v1174
        %1176 = vrot.lane.b32.xlu0 %v999, 56
        %v1177 = vpop.permute.xlu0 %1176
        %v1179 = vsel %vm1003, %v1175, 0
        %v1182 = vsel %vm1067, %v1177, 0
        %1184 = vmatprep.subr.bf16.mxu0 0
        %1185 = vmatpush1.bf16.msra.mxu0 %v1182
        %1186 = vmatprep.subr.bf16.mxu0 0
        %1187 = vmatpush1.bf16.msra.mxu0 0
        %1188 = vmatprep.subr.bf16.mxu0 0
        %1189 = vmatpush1.bf16.msra.mxu0 0
        %1190 = vmatprep.subr.bf16.mxu0 0
        %1191 = vmatpush1.bf16.msra.mxu0 0
        %1192 = vmatprep.subr.bf16.mxu0 0
        %1193 = vmatpush1.bf16.msra.mxu0 0
        %1194 = vmatprep.subr.bf16.mxu0 0
        %1195 = vmatpush1.bf16.msra.mxu0 0
        %1196 = vmatprep.subr.bf16.mxu0 0
        %1197 = vmatpush1.bf16.msra.mxu0 0
        %1198 = vmatprep.subr.bf16.mxu0 0
        %1199 = vmatpush1.bf16.msra.mxu0 0
        %1200 = vmatprep.subr.bf16.mxu0 0
        %1201 = vmatpush1.bf16.msra.mxu0 0
        %1202 = vmatprep.subr.bf16.mxu0 0
        %1203 = vmatpush1.bf16.msra.mxu0 0
        %1204 = vmatprep.subr.bf16.mxu0 0
        %1205 = vmatpush1.bf16.msra.mxu0 0
        %1206 = vmatprep.subr.bf16.mxu0 0
        %1207 = vmatpush1.bf16.msra.mxu0 0
        %1208 = vmatprep.subr.bf16.mxu0 0
        %1209 = vmatpush1.bf16.msra.mxu0 0
        %1210 = vmatprep.subr.bf16.mxu0 0
        %1211 = vmatpush1.bf16.msra.mxu0 0
        %1212 = vmatprep.subr.bf16.mxu0 0
        %1213 = vmatpush1.bf16.msra.mxu0 0
        %1214 = vmatprep.subr.bf16.mxu0 0
        %1215 = vmatpush1.bf16.msra.mxu0 0
        %1216 = vmatprep.mubr.bf16.mxu0 0
        %1217 = vmatmul.mubr.bf16.gmra.mrb[0].mxu0 %v1179
        %v1218 = vpop.f32.mrb[0].mxu0
        %v1219 = vadd.f32 0.0, %v1218
        %v1220 = vpop.f32.mrb[0].mxu0
        %v1221 = vpop.f32.mrb[0].mxu0
        %v1222 = vpop.f32.mrb[0].mxu0
        %1223 = vdwg.mxu0
        %v1224 = vpack.c.bf16 %v1219, %v1219
        %v1226 = vunpack.c.l.b16 %v1224
        %v1227 = vpack.c.b16 %v1226, %v1226
        %1228 = vrot.lane.b32.xlu0 %v1227, 8
        %v1229 = vpop.permute.xlu0 %1228
        %vm1231 = vcmask 126016
        %1232 = vst.msk [vmem:[#allocation2] sm:$0xf] %vm1231, %v1229
        %1233 = vrot.lane.b32.xlu0 %v999, 112
        %v1234 = vpop.permute.xlu0 %1233
        %1235 = vrot.lane.b32.xlu0 %v999, 80
        %v1236 = vpop.permute.xlu0 %1235
        %v1238 = vsel %vm1003, %v1234, 0
        %v1241 = vsel %vm1003, %v1236, 0
        %1243 = vmatprep.subr.bf16.mxu0 0
        %1244 = vmatpush1.bf16.xpose.msra.mxu0 %v1241
        %1245 = vmatprep.subr.bf16.mxu0 0
        %1246 = vmatpush1.bf16.xpose.msra.mxu0 0
        %1247 = vmatprep.subr.bf16.mxu0 0
        %1248 = vmatpush1.bf16.xpose.msra.mxu0 0
        %1249 = vmatprep.subr.bf16.mxu0 0
        %1250 = vmatpush1.bf16.xpose.msra.mxu0 0
        %1251 = vmatprep.subr.bf16.mxu0 0
        %1252 = vmatpush1.bf16.xpose.msra.mxu0 0
        %1253 = vmatprep.subr.bf16.mxu0 0
        %1254 = vmatpush1.bf16.xpose.msra.mxu0 0
        %1255 = vmatprep.subr.bf16.mxu0 0
        %1256 = vmatpush1.bf16.xpose.msra.mxu0 0
        %1257 = vmatprep.subr.bf16.mxu0 0
        %1258 = vmatpush1.bf16.xpose.msra.mxu0 0
        %1259 = vmatprep.subr.bf16.mxu0 0
        %1260 = vmatpush1.bf16.xpose.msra.mxu0 0
        %1261 = vmatprep.subr.bf16.mxu0 0
        %1262 = vmatpush1.bf16.xpose.msra.mxu0 0
        %1263 = vmatprep.subr.bf16.mxu0 0
        %1264 = vmatpush1.bf16.xpose.msra.mxu0 0
        %1265 = vmatprep.subr.bf16.mxu0 0
        %1266 = vmatpush1.bf16.xpose.msra.mxu0 0
        %1267 = vmatprep.subr.bf16.mxu0 0
        %1268 = vmatpush1.bf16.xpose.msra.mxu0 0
        %1269 = vmatprep.subr.bf16.mxu0 0
        %1270 = vmatpush1.bf16.xpose.msra.mxu0 0
        %1271 = vmatprep.subr.bf16.mxu0 0
        %1272 = vmatpush1.bf16.xpose.msra.mxu0 0
        %1273 = vmatprep.subr.bf16.mxu0 0
        %1274 = vmatpush1.bf16.xpose.msra.mxu0 0
        %1275 = vmatprep.mubr.bf16.mxu0 0
        %1276 = vmatmul.mubr.bf16.gmra.mrb[0].mxu0 %v1238
        %v1277 = vpop.f32.mrb[0].mxu0
        %v1278 = vadd.f32 %v899, %v1277
        %v1279 = vpop.f32.mrb[0].mxu0
        %v1280 = vpop.f32.mrb[0].mxu0
        %v1281 = vpop.f32.mrb[0].mxu0
        %1282 = vdwg.mxu0
        %v1283 = vsel %vm1003, %v1278, -inf
        %1284 = vmax.xlane.f32.xlu0 %v1283
        %v1285 = vpop.xlane.xlu0 %1284
        %v1286 = vsub.f32 %v1278, %v1285
        %v1287 = vmul.f32 %v1286, 1.442695
        %v1288 = vpow.pop %v1287
        %v1289 = vsel %vm1003, %v1288, 0.0
        %1290 = vadd.xlane.f32.xlu0 %v1289
        %v1291 = vpop.xlane.xlu0 %1290
        %v1292 = vrcp.pop %v1291
        %v1293 = vmul.f32 %v1288, %v1292
        %v1294 = vpack.c.bf16 %v1293, %v1293
        %1295 = vrot.lane.b32.xlu0 %v999, 48
        %v1296 = vpop.permute.xlu0 %1295
        %v1298 = vsel %vm1003, %v1294, 0
        %v1301 = vsel %vm1067, %v1296, 0
        %1303 = vmatprep.subr.bf16.mxu0 0
        %1304 = vmatpush1.bf16.msra.mxu0 %v1301
        %1305 = vmatprep.subr.bf16.mxu0 0
        %1306 = vmatpush1.bf16.msra.mxu0 0
        %1307 = vmatprep.subr.bf16.mxu0 0
        %1308 = vmatpush1.bf16.msra.mxu0 0
        %1309 = vmatprep.subr.bf16.mxu0 0
        %1310 = vmatpush1.bf16.msra.mxu0 0
        %1311 = vmatprep.subr.bf16.mxu0 0
        %1312 = vmatpush1.bf16.msra.mxu0 0
        %1313 = vmatprep.subr.bf16.mxu0 0
        %1314 = vmatpush1.bf16.msra.mxu0 0
        %1315 = vmatprep.subr.bf16.mxu0 0
        %1316 = vmatpush1.bf16.msra.mxu0 0
        %1317 = vmatprep.subr.bf16.mxu0 0
        %1318 = vmatpush1.bf16.msra.mxu0 0
        %1319 = vmatprep.subr.bf16.mxu0 0
        %1320 = vmatpush1.bf16.msra.mxu0 0
        %1321 = vmatprep.subr.bf16.mxu0 0
        %1322 = vmatpush1.bf16.msra.mxu0 0
        %1323 = vmatprep.subr.bf16.mxu0 0
        %1324 = vmatpush1.bf16.msra.mxu0 0
        %1325 = vmatprep.subr.bf16.mxu0 0
        %1326 = vmatpush1.bf16.msra.mxu0 0
        %1327 = vmatprep.subr.bf16.mxu0 0
        %1328 = vmatpush1.bf16.msra.mxu0 0
        %1329 = vmatprep.subr.bf16.mxu0 0
        %1330 = vmatpush1.bf16.msra.mxu0 0
        %1331 = vmatprep.subr.bf16.mxu0 0
        %1332 = vmatpush1.bf16.msra.mxu0 0
        %1333 = vmatprep.subr.bf16.mxu0 0
        %1334 = vmatpush1.bf16.msra.mxu0 0
        %1335 = vmatprep.mubr.bf16.mxu0 0
        %1336 = vmatmul.mubr.bf16.gmra.mrb[0].mxu0 %v1298
        %v1337 = vpop.f32.mrb[0].mxu0
        %v1338 = vadd.f32 0.0, %v1337
        %v1339 = vpop.f32.mrb[0].mxu0
        %v1340 = vpop.f32.mrb[0].mxu0
        %v1341 = vpop.f32.mrb[0].mxu0
        %1342 = vdwg.mxu0
        %v1343 = vpack.c.bf16 %v1338, %v1338
        %v1345 = vunpack.c.l.b16 %v1343
        %v1346 = vpack.c.b16 %v1345, %v1345
        %1347 = vrot.lane.b32.xlu0 %v1346, 16
        %v1348 = vpop.permute.xlu0 %1347
        %vm1350 = vcmask 191616
        %1351 = vst.msk [vmem:[#allocation2] sm:$0xf] %vm1350, %v1348
        %1352 = vrot.lane.b32.xlu0 %v999, 104
        %v1353 = vpop.permute.xlu0 %1352
        %1354 = vrot.lane.b32.xlu0 %v999, 72
        %v1355 = vpop.permute.xlu0 %1354
        %v1357 = vsel %vm1003, %v1353, 0
        %v1360 = vsel %vm1003, %v1355, 0
        %1362 = vmatprep.subr.bf16.mxu0 0
        %1363 = vmatpush1.bf16.xpose.msra.mxu0 %v1360
        %1364 = vmatprep.subr.bf16.mxu0 0
        %1365 = vmatpush1.bf16.xpose.msra.mxu0 0
        %1366 = vmatprep.subr.bf16.mxu0 0
        %1367 = vmatpush1.bf16.xpose.msra.mxu0 0
        %1368 = vmatprep.subr.bf16.mxu0 0
        %1369 = vmatpush1.bf16.xpose.msra.mxu0 0
        %1370 = vmatprep.subr.bf16.mxu0 0
        %1371 = vmatpush1.bf16.xpose.msra.mxu0 0
        %1372 = vmatprep.subr.bf16.mxu0 0
        %1373 = vmatpush1.bf16.xpose.msra.mxu0 0
        %1374 = vmatprep.subr.bf16.mxu0 0
        %1375 = vmatpush1.bf16.xpose.msra.mxu0 0
        %1376 = vmatprep.subr.bf16.mxu0 0
        %1377 = vmatpush1.bf16.xpose.msra.mxu0 0
        %1378 = vmatprep.subr.bf16.mxu0 0
        %1379 = vmatpush1.bf16.xpose.msra.mxu0 0
        %1380 = vmatprep.subr.bf16.mxu0 0
        %1381 = vmatpush1.bf16.xpose.msra.mxu0 0
        %1382 = vmatprep.subr.bf16.mxu0 0
        %1383 = vmatpush1.bf16.xpose.msra.mxu0 0
        %1384 = vmatprep.subr.bf16.mxu0 0
        %1385 = vmatpush1.bf16.xpose.msra.mxu0 0
        %1386 = vmatprep.subr.bf16.mxu0 0
        %1387 = vmatpush1.bf16.xpose.msra.mxu0 0
        %1388 = vmatprep.subr.bf16.mxu0 0
        %1389 = vmatpush1.bf16.xpose.msra.mxu0 0
        %1390 = vmatprep.subr.bf16.mxu0 0
        %1391 = vmatpush1.bf16.xpose.msra.mxu0 0
        %1392 = vmatprep.subr.bf16.mxu0 0
        %1393 = vmatpush1.bf16.xpose.msra.mxu0 0
        %1394 = vmatprep.mubr.bf16.mxu0 0
        %1395 = vmatmul.mubr.bf16.gmra.mrb[0].mxu0 %v1357
        %v1396 = vpop.f32.mrb[0].mxu0
        %v1397 = vadd.f32 %v899, %v1396
        %v1398 = vpop.f32.mrb[0].mxu0
        %v1399 = vpop.f32.mrb[0].mxu0
        %v1400 = vpop.f32.mrb[0].mxu0
        %1401 = vdwg.mxu0
        %v1402 = vsel %vm1003, %v1397, -inf
        %1403 = vmax.xlane.f32.xlu0 %v1402
        %v1404 = vpop.xlane.xlu0 %1403
        %v1405 = vsub.f32 %v1397, %v1404
        %v1406 = vmul.f32 %v1405, 1.442695
        %v1407 = vpow.pop %v1406
        %v1408 = vsel %vm1003, %v1407, 0.0
        %1409 = vadd.xlane.f32.xlu0 %v1408
        %v1410 = vpop.xlane.xlu0 %1409
        %v1411 = vrcp.pop %v1410
        %v1412 = vmul.f32 %v1407, %v1411
        %v1413 = vpack.c.bf16 %v1412, %v1412
        %1414 = vrot.lane.b32.xlu0 %v999, 40
        %v1415 = vpop.permute.xlu0 %1414
        %v1417 = vsel %vm1003, %v1413, 0
        %v1420 = vsel %vm1067, %v1415, 0
        %1422 = vmatprep.subr.bf16.mxu0 0
        %1423 = vmatpush1.bf16.msra.mxu0 %v1420
        %1424 = vmatprep.subr.bf16.mxu0 0
        %1425 = vmatpush1.bf16.msra.mxu0 0
        %1426 = vmatprep.subr.bf16.mxu0 0
        %1427 = vmatpush1.bf16.msra.mxu0 0
        %1428 = vmatprep.subr.bf16.mxu0 0
        %1429 = vmatpush1.bf16.msra.mxu0 0
        %1430 = vmatprep.subr.bf16.mxu0 0
        %1431 = vmatpush1.bf16.msra.mxu0 0
        %1432 = vmatprep.subr.bf16.mxu0 0
        %1433 = vmatpush1.bf16.msra.mxu0 0
        %1434 = vmatprep.subr.bf16.mxu0 0
        %1435 = vmatpush1.bf16.msra.mxu0 0
        %1436 = vmatprep.subr.bf16.mxu0 0
        %1437 = vmatpush1.bf16.msra.mxu0 0
        %1438 = vmatprep.subr.bf16.mxu0 0
        %1439 = vmatpush1.bf16.msra.mxu0 0
        %1440 = vmatprep.subr.bf16.mxu0 0
        %1441 = vmatpush1.bf16.msra.mxu0 0
        %1442 = vmatprep.subr.bf16.mxu0 0
        %1443 = vmatpush1.bf16.msra.mxu0 0
        %1444 = vmatprep.subr.bf16.mxu0 0
        %1445 = vmatpush1.bf16.msra.mxu0 0
        %1446 = vmatprep.subr.bf16.mxu0 0
        %1447 = vmatpush1.bf16.msra.mxu0 0
        %1448 = vmatprep.subr.bf16.mxu0 0
        %1449 = vmatpush1.bf16.msra.mxu0 0
        %1450 = vmatprep.subr.bf16.mxu0 0
        %1451 = vmatpush1.bf16.msra.mxu0 0
        %1452 = vmatprep.subr.bf16.mxu0 0
        %1453 = vmatpush1.bf16.msra.mxu0 0
        %1454 = vmatprep.mubr.bf16.mxu0 0
        %1455 = vmatmul.mubr.bf16.gmra.mrb[0].mxu0 %v1417
        %v1456 = vpop.f32.mrb[0].mxu0
        %v1457 = vadd.f32 0.0, %v1456
        %v1458 = vpop.f32.mrb[0].mxu0
        %v1459 = vpop.f32.mrb[0].mxu0
        %v1460 = vpop.f32.mrb[0].mxu0
        %1461 = vdwg.mxu0
        %v1462 = vpack.c.bf16 %v1457, %v1457
        %v1464 = vunpack.c.l.b16 %v1462
        %v1465 = vpack.c.b16 %v1464, %v1464
        %1466 = vrot.lane.b32.xlu0 %v1465, 24
        %v1467 = vpop.permute.xlu0 %1466
        %vm1469 = vcmask 257216
        %1470 = vst.msk [vmem:[#allocation2] sm:$0xf] %vm1469, %v1467
        %v1471 = vld [vmem:[#allocation2] sm:$0xf]
        %v1472 = vld [vmem:[%s7] sm:$0xf]
        %v1473 = vld [vmem:[%s7 + $0x4] sm:$0xf]
        %v1474 = vld [vmem:[%s7 + $0x8] sm:$0xf]
        %v1475 = vld [vmem:[%s7 + $0xc] sm:$0xf]
        %v1480 = vunpack.c.l.b16 %v1472
        %v1481 = vunpack.c.l.b16 %v1473
        %v1482 = vunpack.c.l.b16 %v1474
        %v1483 = vunpack.c.l.b16 %v1475
        %v1484 = vpack.c.b16 %v1481, %v1480
        %v1485 = vpack.c.b16 %v1483, %v1482
        %v1489 = vsel %vm903, %v1471, 0
        %1491 = vmatprep.subr.bf16.mxu0 0
        %1492 = vmatpush1.bf16.msra.mxu0 %v1484
        %1493 = vmatprep.subr.bf16.mxu0 0
        %1494 = vmatpush1.bf16.msra.mxu0 %v1485
        %1495 = vmatprep.subr.bf16.mxu0 0
        %1496 = vmatpush1.bf16.msra.mxu0 0
        %1497 = vmatprep.subr.bf16.mxu0 0
        %1498 = vmatpush1.bf16.msra.mxu0 0
        %1499 = vmatprep.subr.bf16.mxu0 0
        %1500 = vmatpush1.bf16.msra.mxu0 0
        %1501 = vmatprep.subr.bf16.mxu0 0
        %1502 = vmatpush1.bf16.msra.mxu0 0
        %1503 = vmatprep.subr.bf16.mxu0 0
        %1504 = vmatpush1.bf16.msra.mxu0 0
        %1505 = vmatprep.subr.bf16.mxu0 0
        %1506 = vmatpush1.bf16.msra.mxu0 0
        %1507 = vmatprep.subr.bf16.mxu0 0
        %1508 = vmatpush1.bf16.msra.mxu0 0
        %1509 = vmatprep.subr.bf16.mxu0 0
        %1510 = vmatpush1.bf16.msra.mxu0 0
        %1511 = vmatprep.subr.bf16.mxu0 0
        %1512 = vmatpush1.bf16.msra.mxu0 0
        %1513 = vmatprep.subr.bf16.mxu0 0
        %1514 = vmatpush1.bf16.msra.mxu0 0
        %1515 = vmatprep.subr.bf16.mxu0 0
        %1516 = vmatpush1.bf16.msra.mxu0 0
        %1517 = vmatprep.subr.bf16.mxu0 0
        %1518 = vmatpush1.bf16.msra.mxu0 0
        %1519 = vmatprep.subr.bf16.mxu0 0
        %1520 = vmatpush1.bf16.msra.mxu0 0
        %1521 = vmatprep.subr.bf16.mxu0 0
        %1522 = vmatpush1.bf16.msra.mxu0 0
        %1523 = vmatprep.mubr.bf16.mxu0 0
        %1524 = vmatmul.mubr.bf16.gmra.mrb[0].mxu0 %v1489
        %v1525 = vpop.f32.mrb[0].mxu0
        %v1526 = vadd.f32 0.0, %v1525
        %v1527 = vpop.f32.mrb[0].mxu0
        %v1528 = vpop.f32.mrb[0].mxu0
        %v1529 = vpop.f32.mrb[0].mxu0
        %1530 = vdwg.mxu0
        %v1531 = vadd.f32 %v891, %v1526
        %v1532 = vld [vmem:[#allocation11] sm:$0x1]
        %v1534 = vlaneseq
        %v1535 = vshrl.u32 %v1534, 7
        %v1536 = vsub.s32 0, %v1535
        %v1537 = vrot.slane %v1532, %v1536
        %v1539 = vadd.f32 %v1531, %v1537
        %v1540 = vld [vmem:[%s784] sm:$0xf]
        %v1541 = vld [vmem:[#allocation12] sm:$0x1]
        %v1542 = vld [vmem:[#allocation14] sm:$0x1]
        %v1543 = vsel %vm903, %v1539, 0.0
        %1544 = vadd.xlane.f32.xlu0 %v1543
        %v1545 = vpop.xlane.xlu0 %1544
        %v1546 = vmul.f32 %v1545, %v907
        %v1547 = vsub.f32 %v1539, %v1546
        %v1548 = vmul.f32 %v1547, %v1547
        %v1549 = vsel %vm903, %v1548, 0.0
        %1550 = vadd.xlane.f32.xlu0 %v1549
        %v1551 = vpop.xlane.xlu0 %1550
        %v1552 = vmul.f32 %v1551, %v907
        %v1553 = vadd.f32 %v1552, 1e-05
        %v1554 = vrsqrt.pop %v1553
        %v1555 = vmul.f32 %v1547, %v1554
        %v1557 = vlaneseq
        %v1558 = vshrl.u32 %v1557, 7
        %v1559 = vsub.s32 0, %v1558
        %v1560 = vrot.slane %v1541, %v1559
        %v1562 = vmul.f32 %v1555, %v1560
        %v1564 = vlaneseq
        %v1565 = vshrl.u32 %v1564, 7
        %v1566 = vsub.s32 0, %v1565
        %v1567 = vrot.slane %v1542, %v1566
        %v1569 = vadd.f32 %v1562, %v1567
        %v1570 = vpack.c.bf16 %v1569, %v1569
        %v1571 = vld [vmem:[%s11] sm:$0xf]
        %v1572 = vld [vmem:[%s11 + $0x4] sm:$0xf]
        %v1573 = vld [vmem:[%s11 + $0x8] sm:$0xf]
        %v1574 = vld [vmem:[%s11 + $0xc] sm:$0xf]
        %v1575 = vld [vmem:[#allocation15] sm:$0x1]
        %v1577 = vlaneseq
        %v1578 = vshrl.u32 %v1577, 7
        %v1579 = vsub.s32 0, %v1578
        %v1580 = vrot.slane %v1575, %v1579
        %v1586 = vunpack.c.l.b16 %v1571
        %v1587 = vunpack.c.l.b16 %v1572
        %v1588 = vunpack.c.l.b16 %v1573
        %v1589 = vunpack.c.l.b16 %v1574
        %v1590 = vpack.c.b16 %v1587, %v1586
        %v1591 = vpack.c.b16 %v1589, %v1588
        %v1595 = vsel %vm903, %v1570, 0
        %1597 = vmatprep.subr.bf16.mxu0 0
        %1598 = vmatpush1.bf16.msra.mxu0 %v1590
        %1599 = vmatprep.subr.bf16.mxu0 0
        %1600 = vmatpush1.bf16.msra.mxu0 %v1591
        %1601 = vmatprep.subr.bf16.mxu0 0
        %1602 = vmatpush1.bf16.msra.mxu0 0
        %1603 = vmatprep.subr.bf16.mxu0 0
        %1604 = vmatpush1.bf16.msra.mxu0 0
        %1605 = vmatprep.subr.bf16.mxu0 0
        %1606 = vmatpush1.bf16.msra.mxu0 0
        %1607 = vmatprep.subr.bf16.mxu0 0
        %1608 = vmatpush1.bf16.msra.mxu0 0
        %1609 = vmatprep.subr.bf16.mxu0 0
        %1610 = vmatpush1.bf16.msra.mxu0 0
        %1611 = vmatprep.subr.bf16.mxu0 0
        %1612 = vmatpush1.bf16.msra.mxu0 0
        %1613 = vmatprep.subr.bf16.mxu0 0
        %1614 = vmatpush1.bf16.msra.mxu0 0
        %1615 = vmatprep.subr.bf16.mxu0 0
        %1616 = vmatpush1.bf16.msra.mxu0 0
        %1617 = vmatprep.subr.bf16.mxu0 0
        %1618 = vmatpush1.bf16.msra.mxu0 0
        %1619 = vmatprep.subr.bf16.mxu0 0
        %1620 = vmatpush1.bf16.msra.mxu0 0
        %1621 = vmatprep.subr.bf16.mxu0 0
        %1622 = vmatpush1.bf16.msra.mxu0 0
        %1623 = vmatprep.subr.bf16.mxu0 0
        %1624 = vmatpush1.bf16.msra.mxu0 0
        %1625 = vmatprep.subr.bf16.mxu0 0
        %1626 = vmatpush1.bf16.msra.mxu0 0
        %1627 = vmatprep.subr.bf16.mxu0 0
        %1628 = vmatpush1.bf16.msra.mxu0 0
        %1629 = vmatprep.mubr.bf16.mxu0 0
        %1630 = vmatmul.mubr.bf16.gmra.mrb[0].mxu0 %v1595
        %v1631 = vpop.f32.mrb[0].mxu0
        %v1632 = vadd.f32 %v1580, %v1631
        %v1633 = vpop.f32.mrb[0].mxu0
        %v1634 = vpop.f32.mrb[0].mxu0
        %v1635 = vpop.f32.mrb[0].mxu0
        %1636 = vdwg.mxu0
        %v1637 = vld [vmem:[%s13] sm:$0xf]
        %v1638 = vld [vmem:[%s13 + $0x4] sm:$0xf]
        %v1639 = vld [vmem:[%s13 + $0x8] sm:$0xf]
        %v1640 = vld [vmem:[%s13 + $0xc] sm:$0xf]
        %v1641 = vld [vmem:[%s14] sm:$0x1]
        %v1643 = vlaneseq
        %v1644 = vshrl.u32 %v1643, 7
        %v1645 = vsub.s32 0, %v1644
        %v1646 = vrot.slane %v1641, %v1645
        %v1652 = vunpack.c.l.b16 %v1637
        %v1653 = vunpack.c.l.b16 %v1638
        %v1654 = vunpack.c.l.b16 %v1639
        %v1655 = vunpack.c.l.b16 %v1640
        %v1656 = vpack.c.b16 %v1653, %v1652
        %v1657 = vpack.c.b16 %v1655, %v1654
        %v1661 = vsel %vm903, %v1540, 0
        %1663 = vmatprep.subr.bf16.mxu0 0
        %1664 = vmatpush1.bf16.msra.mxu0 %v1656
        %1665 = vmatprep.subr.bf16.mxu0 0
        %1666 = vmatpush1.bf16.msra.mxu0 %v1657
        %1667 = vmatprep.subr.bf16.mxu0 0
        %1668 = vmatpush1.bf16.msra.mxu0 0
        %1669 = vmatprep.subr.bf16.mxu0 0
        %1670 = vmatpush1.bf16.msra.mxu0 0
        %1671 = vmatprep.subr.bf16.mxu0 0
        %1672 = vmatpush1.bf16.msra.mxu0 0
        %1673 = vmatprep.subr.bf16.mxu0 0
        %1674 = vmatpush1.bf16.msra.mxu0 0
        %1675 = vmatprep.subr.bf16.mxu0 0
        %1676 = vmatpush1.bf16.msra.mxu0 0
        %1677 = vmatprep.subr.bf16.mxu0 0
        %1678 = vmatpush1.bf16.msra.mxu0 0
        %1679 = vmatprep.subr.bf16.mxu0 0
        %1680 = vmatpush1.bf16.msra.mxu0 0
        %1681 = vmatprep.subr.bf16.mxu0 0
        %1682 = vmatpush1.bf16.msra.mxu0 0
        %1683 = vmatprep.subr.bf16.mxu0 0
        %1684 = vmatpush1.bf16.msra.mxu0 0
        %1685 = vmatprep.subr.bf16.mxu0 0
        %1686 = vmatpush1.bf16.msra.mxu0 0
        %1687 = vmatprep.subr.bf16.mxu0 0
        %1688 = vmatpush1.bf16.msra.mxu0 0
        %1689 = vmatprep.subr.bf16.mxu0 0
        %1690 = vmatpush1.bf16.msra.mxu0 0
        %1691 = vmatprep.subr.bf16.mxu0 0
        %1692 = vmatpush1.bf16.msra.mxu0 0
        %1693 = vmatprep.subr.bf16.mxu0 0
        %1694 = vmatpush1.bf16.msra.mxu0 0
        %1695 = vmatprep.mubr.bf16.mxu0 0
        %1696 = vmatmul.mubr.bf16.gmra.mrb[0].mxu0 %v1661
        %v1697 = vpop.f32.mrb[0].mxu0
        %v1698 = vadd.f32 %v1646, %v1697
        %v1699 = vpop.f32.mrb[0].mxu0
        %v1700 = vpop.f32.mrb[0].mxu0
        %v1701 = vpop.f32.mrb[0].mxu0
        %1702 = vdwg.mxu0
        %v1703 = vpack.c.bf16 %v1632, %v1632
        %v1704 = vpack.c.bf16 %v1698, %v1698
        %v1706 = vsel %vm1003, %v1703, 0
        %v1709 = vsel %vm1003, %v1704, 0
        %1711 = vmatprep.subr.bf16.mxu0 0
        %1712 = vmatpush1.bf16.xpose.msra.mxu0 %v1709
        %1713 = vmatprep.subr.bf16.mxu0 0
        %1714 = vmatpush1.bf16.xpose.msra.mxu0 0
        %1715 = vmatprep.subr.bf16.mxu0 0
        %1716 = vmatpush1.bf16.xpose.msra.mxu0 0
        %1717 = vmatprep.subr.bf16.mxu0 0
        %1718 = vmatpush1.bf16.xpose.msra.mxu0 0
        %1719 = vmatprep.subr.bf16.mxu0 0
        %1720 = vmatpush1.bf16.xpose.msra.mxu0 0
        %1721 = vmatprep.subr.bf16.mxu0 0
        %1722 = vmatpush1.bf16.xpose.msra.mxu0 0
        %1723 = vmatprep.subr.bf16.mxu0 0
        %1724 = vmatpush1.bf16.xpose.msra.mxu0 0
        %1725 = vmatprep.subr.bf16.mxu0 0
        %1726 = vmatpush1.bf16.xpose.msra.mxu0 0
        %1727 = vmatprep.subr.bf16.mxu0 0
        %1728 = vmatpush1.bf16.xpose.msra.mxu0 0
        %1729 = vmatprep.subr.bf16.mxu0 0
        %1730 = vmatpush1.bf16.xpose.msra.mxu0 0
        %1731 = vmatprep.subr.bf16.mxu0 0
        %1732 = vmatpush1.bf16.xpose.msra.mxu0 0
        %1733 = vmatprep.subr.bf16.mxu0 0
        %1734 = vmatpush1.bf16.xpose.msra.mxu0 0
        %1735 = vmatprep.subr.bf16.mxu0 0
        %1736 = vmatpush1.bf16.xpose.msra.mxu0 0
        %1737 = vmatprep.subr.bf16.mxu0 0
        %1738 = vmatpush1.bf16.xpose.msra.mxu0 0
        %1739 = vmatprep.subr.bf16.mxu0 0
        %1740 = vmatpush1.bf16.xpose.msra.mxu0 0
        %1741 = vmatprep.subr.bf16.mxu0 0
        %1742 = vmatpush1.bf16.xpose.msra.mxu0 0
        %1743 = vmatprep.mubr.bf16.mxu0 0
        %1744 = vmatmul.mubr.bf16.gmra.mrb[0].mxu0 %v1706
        %v1745 = vpop.f32.mrb[0].mxu0
        %v1746 = vadd.f32 %v899, %v1745
        %v1747 = vpop.f32.mrb[0].mxu0
        %v1748 = vpop.f32.mrb[0].mxu0
        %v1749 = vpop.f32.mrb[0].mxu0
        %1750 = vdwg.mxu0
        %v1751 = vsel %vm1003, %v1746, -inf
        %1752 = vmax.xlane.f32.xlu0 %v1751
        %v1753 = vpop.xlane.xlu0 %1752
        %v1754 = vsub.f32 %v1746, %v1753
        %v1755 = vmul.f32 %v1754, 1.442695
        %v1756 = vpow.pop %v1755
        %v1757 = vsel %vm1003, %v1756, 0.0
        %1758 = vadd.xlane.f32.xlu0 %v1757
        %v1759 = vpop.xlane.xlu0 %1758
        %v1760 = vrcp.pop %v1759
        %v1761 = vmul.f32 %v1756, %v1760
        %v1762 = vpack.c.bf16 %v1761, %v1761
        %1763 = vst.msk [vmem:[%s885] sm:$0xf] %vm1112, %v1762
        %1765 = vrot.lane.b32.xlu0 %v1704, 96
        %v1766 = vpop.permute.xlu0 %1765
        %v1768 = vsel %vm1003, %v1762, 0
        %v1771 = vsel %vm1067, %v1766, 0
        %1773 = vmatprep.subr.bf16.mxu0 0
        %1774 = vmatpush1.bf16.msra.mxu0 %v1771
        %1775 = vmatprep.subr.bf16.mxu0 0
        %1776 = vmatpush1.bf16.msra.mxu0 0
        %1777 = vmatprep.subr.bf16.mxu0 0
        %1778 = vmatpush1.bf16.msra.mxu0 0
        %1779 = vmatprep.subr.bf16.mxu0 0
        %1780 = vmatpush1.bf16.msra.mxu0 0
        %1781 = vmatprep.subr.bf16.mxu0 0
        %1782 = vmatpush1.bf16.msra.mxu0 0
        %1783 = vmatprep.subr.bf16.mxu0 0
        %1784 = vmatpush1.bf16.msra.mxu0 0
        %1785 = vmatprep.subr.bf16.mxu0 0
        %1786 = vmatpush1.bf16.msra.mxu0 0
        %1787 = vmatprep.subr.bf16.mxu0 0
        %1788 = vmatpush1.bf16.msra.mxu0 0
        %1789 = vmatprep.subr.bf16.mxu0 0
        %1790 = vmatpush1.bf16.msra.mxu0 0
        %1791 = vmatprep.subr.bf16.mxu0 0
        %1792 = vmatpush1.bf16.msra.mxu0 0
        %1793 = vmatprep.subr.bf16.mxu0 0
        %1794 = vmatpush1.bf16.msra.mxu0 0
        %1795 = vmatprep.subr.bf16.mxu0 0
        %1796 = vmatpush1.bf16.msra.mxu0 0
        %1797 = vmatprep.subr.bf16.mxu0 0
        %1798 = vmatpush1.bf16.msra.mxu0 0
        %1799 = vmatprep.subr.bf16.mxu0 0
        %1800 = vmatpush1.bf16.msra.mxu0 0
        %1801 = vmatprep.subr.bf16.mxu0 0
        %1802 = vmatpush1.bf16.msra.mxu0 0
        %1803 = vmatprep.subr.bf16.mxu0 0
        %1804 = vmatpush1.bf16.msra.mxu0 0
        %1805 = vmatprep.mubr.bf16.mxu0 0
        %1806 = vmatmul.mubr.bf16.gmra.mrb[0].mxu0 %v1768
        %v1807 = vpop.f32.mrb[0].mxu0
        %v1808 = vadd.f32 0.0, %v1807
        %v1809 = vpop.f32.mrb[0].mxu0
        %v1810 = vpop.f32.mrb[0].mxu0
        %v1811 = vpop.f32.mrb[0].mxu0
        %1812 = vdwg.mxu0
        %v1813 = vpack.c.bf16 %v1808, %v1808
        %1814 = vst.msk [vmem:[#allocation2] sm:$0xf] %vm1112, %v1813
        %1816 = vrot.lane.b32.xlu0 %v1703, 120
        %v1817 = vpop.permute.xlu0 %1816
        %1818 = vrot.lane.b32.xlu0 %v1704, 120
        %v1819 = vpop.permute.xlu0 %1818
        %v1821 = vsel %vm1003, %v1817, 0
        %v1824 = vsel %vm1003, %v1819, 0
        %1826 = vmatprep.subr.bf16.mxu0 0
        %1827 = vmatpush1.bf16.xpose.msra.mxu0 %v1824
        %1828 = vmatprep.subr.bf16.mxu0 0
        %1829 = vmatpush1.bf16.xpose.msra.mxu0 0
        %1830 = vmatprep.subr.bf16.mxu0 0
        %1831 = vmatpush1.bf16.xpose.msra.mxu0 0
        %1832 = vmatprep.subr.bf16.mxu0 0
        %1833 = vmatpush1.bf16.xpose.msra.mxu0 0
        %1834 = vmatprep.subr.bf16.mxu0 0
        %1835 = vmatpush1.bf16.xpose.msra.mxu0 0
        %1836 = vmatprep.subr.bf16.mxu0 0
        %1837 = vmatpush1.bf16.xpose.msra.mxu0 0
        %1838 = vmatprep.subr.bf16.mxu0 0
        %1839 = vmatpush1.bf16.xpose.msra.mxu0 0
        %1840 = vmatprep.subr.bf16.mxu0 0
        %1841 = vmatpush1.bf16.xpose.msra.mxu0 0
        %1842 = vmatprep.subr.bf16.mxu0 0
        %1843 = vmatpush1.bf16.xpose.msra.mxu0 0
        %1844 = vmatprep.subr.bf16.mxu0 0
        %1845 = vmatpush1.bf16.xpose.msra.mxu0 0
        %1846 = vmatprep.subr.bf16.mxu0 0
        %1847 = vmatpush1.bf16.xpose.msra.mxu0 0
        %1848 = vmatprep.subr.bf16.mxu0 0
        %1849 = vmatpush1.bf16.xpose.msra.mxu0 0
        %1850 = vmatprep.subr.bf16.mxu0 0
        %1851 = vmatpush1.bf16.xpose.msra.mxu0 0
        %1852 = vmatprep.subr.bf16.mxu0 0
        %1853 = vmatpush1.bf16.xpose.msra.mxu0 0
        %1854 = vmatprep.subr.bf16.mxu0 0
        %1855 = vmatpush1.bf16.xpose.msra.mxu0 0
        %1856 = vmatprep.subr.bf16.mxu0 0
        %1857 = vmatpush1.bf16.xpose.msra.mxu0 0
        %1858 = vmatprep.mubr.bf16.mxu0 0
        %1859 = vmatmul.mubr.bf16.gmra.mrb[0].mxu0 %v1821
        %v1860 = vpop.f32.mrb[0].mxu0
        %v1861 = vadd.f32 %v899, %v1860
        %v1862 = vpop.f32.mrb[0].mxu0
        %v1863 = vpop.f32.mrb[0].mxu0
        %v1864 = vpop.f32.mrb[0].mxu0
        %1865 = vdwg.mxu0
        %v1866 = vsel %vm1003, %v1861, -inf
        %1867 = vmax.xlane.f32.xlu0 %v1866
        %v1868 = vpop.xlane.xlu0 %1867
        %v1869 = vsub.f32 %v1861, %v1868
        %v1870 = vmul.f32 %v1869, 1.442695
        %v1871 = vpow.pop %v1870
        %v1872 = vsel %vm1003, %v1871, 0.0
        %1873 = vadd.xlane.f32.xlu0 %v1872
        %v1874 = vpop.xlane.xlu0 %1873
        %v1875 = vrcp.pop %v1874
        %v1876 = vmul.f32 %v1871, %v1875
        %v1877 = vpack.c.bf16 %v1876, %v1876
        %s1878 = scalar_lea.vmem %s885, 4 [#allocation18]
        %1879 = vst.msk [vmem:[%s1878] sm:$0xf] %vm1112, %v1877
        %1880 = vrot.lane.b32.xlu0 %v1704, 88
        %v1881 = vpop.permute.xlu0 %1880
        %v1883 = vsel %vm1003, %v1877, 0
        %v1886 = vsel %vm1067, %v1881, 0
        %1888 = vmatprep.subr.bf16.mxu0 0
        %1889 = vmatpush1.bf16.msra.mxu0 %v1886
        %1890 = vmatprep.subr.bf16.mxu0 0
        %1891 = vmatpush1.bf16.msra.mxu0 0
        %1892 = vmatprep.subr.bf16.mxu0 0
        %1893 = vmatpush1.bf16.msra.mxu0 0
        %1894 = vmatprep.subr.bf16.mxu0 0
        %1895 = vmatpush1.bf16.msra.mxu0 0
        %1896 = vmatprep.subr.bf16.mxu0 0
        %1897 = vmatpush1.bf16.msra.mxu0 0
        %1898 = vmatprep.subr.bf16.mxu0 0
        %1899 = vmatpush1.bf16.msra.mxu0 0
        %1900 = vmatprep.subr.bf16.mxu0 0
        %1901 = vmatpush1.bf16.msra.mxu0 0
        %1902 = vmatprep.subr.bf16.mxu0 0
        %1903 = vmatpush1.bf16.msra.mxu0 0
        %1904 = vmatprep.subr.bf16.mxu0 0
        %1905 = vmatpush1.bf16.msra.mxu0 0
        %1906 = vmatprep.subr.bf16.mxu0 0
        %1907 = vmatpush1.bf16.msra.mxu0 0
        %1908 = vmatprep.subr.bf16.mxu0 0
        %1909 = vmatpush1.bf16.msra.mxu0 0
        %1910 = vmatprep.subr.bf16.mxu0 0
        %1911 = vmatpush1.bf16.msra.mxu0 0
        %1912 = vmatprep.subr.bf16.mxu0 0
        %1913 = vmatpush1.bf16.msra.mxu0 0
        %1914 = vmatprep.subr.bf16.mxu0 0
        %1915 = vmatpush1.bf16.msra.mxu0 0
        %1916 = vmatprep.subr.bf16.mxu0 0
        %1917 = vmatpush1.bf16.msra.mxu0 0
        %1918 = vmatprep.subr.bf16.mxu0 0
        %1919 = vmatpush1.bf16.msra.mxu0 0
        %1920 = vmatprep.mubr.bf16.mxu0 0
        %1921 = vmatmul.mubr.bf16.gmra.mrb[0].mxu0 %v1883
        %v1922 = vpop.f32.mrb[0].mxu0
        %v1923 = vadd.f32 0.0, %v1922
        %v1924 = vpop.f32.mrb[0].mxu0
        %v1925 = vpop.f32.mrb[0].mxu0
        %v1926 = vpop.f32.mrb[0].mxu0
        %1927 = vdwg.mxu0
        %v1928 = vpack.c.bf16 %v1923, %v1923
        %v1930 = vunpack.c.l.b16 %v1928
        %v1931 = vpack.c.b16 %v1930, %v1930
        %1932 = vrot.lane.b32.xlu0 %v1931, 8
        %v1933 = vpop.permute.xlu0 %1932
        %1935 = vst.msk [vmem:[#allocation2] sm:$0xf] %vm1231, %v1933
        %1936 = vrot.lane.b32.xlu0 %v1703, 112
        %v1937 = vpop.permute.xlu0 %1936
        %1938 = vrot.lane.b32.xlu0 %v1704, 112
        %v1939 = vpop.permute.xlu0 %1938
        %v1941 = vsel %vm1003, %v1937, 0
        %v1944 = vsel %vm1003, %v1939, 0
        %1946 = vmatprep.subr.bf16.mxu0 0
        %1947 = vmatpush1.bf16.xpose.msra.mxu0 %v1944
        %1948 = vmatprep.subr.bf16.mxu0 0
        %1949 = vmatpush1.bf16.xpose.msra.mxu0 0
        %1950 = vmatprep.subr.bf16.mxu0 0
        %1951 = vmatpush1.bf16.xpose.msra.mxu0 0
        %1952 = vmatprep.subr.bf16.mxu0 0
        %1953 = vmatpush1.bf16.xpose.msra.mxu0 0
        %1954 = vmatprep.subr.bf16.mxu0 0
        %1955 = vmatpush1.bf16.xpose.msra.mxu0 0
        %1956 = vmatprep.subr.bf16.mxu0 0
        %1957 = vmatpush1.bf16.xpose.msra.mxu0 0
        %1958 = vmatprep.subr.bf16.mxu0 0
        %1959 = vmatpush1.bf16.xpose.msra.mxu0 0
        %1960 = vmatprep.subr.bf16.mxu0 0
        %1961 = vmatpush1.bf16.xpose.msra.mxu0 0
        %1962 = vmatprep.subr.bf16.mxu0 0
        %1963 = vmatpush1.bf16.xpose.msra.mxu0 0
        %1964 = vmatprep.subr.bf16.mxu0 0
        %1965 = vmatpush1.bf16.xpose.msra.mxu0 0
        %1966 = vmatprep.subr.bf16.mxu0 0
        %1967 = vmatpush1.bf16.xpose.msra.mxu0 0
        %1968 = vmatprep.subr.bf16.mxu0 0
        %1969 = vmatpush1.bf16.xpose.msra.mxu0 0
        %1970 = vmatprep.subr.bf16.mxu0 0
        %1971 = vmatpush1.bf16.xpose.msra.mxu0 0
        %1972 = vmatprep.subr.bf16.mxu0 0
        %1973 = vmatpush1.bf16.xpose.msra.mxu0 0
        %1974 = vmatprep.subr.bf16.mxu0 0
        %1975 = vmatpush1.bf16.xpose.msra.mxu0 0
        %1976 = vmatprep.subr.bf16.mxu0 0
        %1977 = vmatpush1.bf16.xpose.msra.mxu0 0
        %1978 = vmatprep.mubr.bf16.mxu0 0
        %1979 = vmatmul.mubr.bf16.gmra.mrb[0].mxu0 %v1941
        %v1980 = vpop.f32.mrb[0].mxu0
        %v1981 = vadd.f32 %v899, %v1980
        %v1982 = vpop.f32.mrb[0].mxu0
        %v1983 = vpop.f32.mrb[0].mxu0
        %v1984 = vpop.f32.mrb[0].mxu0
        %1985 = vdwg.mxu0
        %v1986 = vsel %vm1003, %v1981, -inf
        %1987 = vmax.xlane.f32.xlu0 %v1986
        %v1988 = vpop.xlane.xlu0 %1987
        %v1989 = vsub.f32 %v1981, %v1988
        %v1990 = vmul.f32 %v1989, 1.442695
        %v1991 = vpow.pop %v1990
        %v1992 = vsel %vm1003, %v1991, 0.0
        %1993 = vadd.xlane.f32.xlu0 %v1992
        %v1994 = vpop.xlane.xlu0 %1993
        %v1995 = vrcp.pop %v1994
        %v1996 = vmul.f32 %v1991, %v1995
        %v1997 = vpack.c.bf16 %v1996, %v1996
        %s1998 = scalar_lea.vmem %s885, 8 [#allocation18]
        %1999 = vst.msk [vmem:[%s1998] sm:$0xf] %vm1112, %v1997
        %2000 = vrot.lane.b32.xlu0 %v1704, 80
        %v2001 = vpop.permute.xlu0 %2000
        %v2003 = vsel %vm1003, %v1997, 0
        %v2006 = vsel %vm1067, %v2001, 0
        %2008 = vmatprep.subr.bf16.mxu0 0
        %2009 = vmatpush1.bf16.msra.mxu0 %v2006
        %2010 = vmatprep.subr.bf16.mxu0 0
        %2011 = vmatpush1.bf16.msra.mxu0 0
        %2012 = vmatprep.subr.bf16.mxu0 0
        %2013 = vmatpush1.bf16.msra.mxu0 0
        %2014 = vmatprep.subr.bf16.mxu0 0
        %2015 = vmatpush1.bf16.msra.mxu0 0
        %2016 = vmatprep.subr.bf16.mxu0 0
        %2017 = vmatpush1.bf16.msra.mxu0 0
        %2018 = vmatprep.subr.bf16.mxu0 0
        %2019 = vmatpush1.bf16.msra.mxu0 0
        %2020 = vmatprep.subr.bf16.mxu0 0
        %2021 = vmatpush1.bf16.msra.mxu0 0
        %2022 = vmatprep.subr.bf16.mxu0 0
        %2023 = vmatpush1.bf16.msra.mxu0 0
        %2024 = vmatprep.subr.bf16.mxu0 0
        %2025 = vmatpush1.bf16.msra.mxu0 0
        %2026 = vmatprep.subr.bf16.mxu0 0
        %2027 = vmatpush1.bf16.msra.mxu0 0
        %2028 = vmatprep.subr.bf16.mxu0 0
        %2029 = vmatpush1.bf16.msra.mxu0 0
        %2030 = vmatprep.subr.bf16.mxu0 0
        %2031 = vmatpush1.bf16.msra.mxu0 0
        %2032 = vmatprep.subr.bf16.mxu0 0
        %2033 = vmatpush1.bf16.msra.mxu0 0
        %2034 = vmatprep.subr.bf16.mxu0 0
        %2035 = vmatpush1.bf16.msra.mxu0 0
        %2036 = vmatprep.subr.bf16.mxu0 0
        %2037 = vmatpush1.bf16.msra.mxu0 0
        %2038 = vmatprep.subr.bf16.mxu0 0
        %2039 = vmatpush1.bf16.msra.mxu0 0
        %2040 = vmatprep.mubr.bf16.mxu0 0
        %2041 = vmatmul.mubr.bf16.gmra.mrb[0].mxu0 %v2003
        %v2042 = vpop.f32.mrb[0].mxu0
        %v2043 = vadd.f32 0.0, %v2042
        %v2044 = vpop.f32.mrb[0].mxu0
        %v2045 = vpop.f32.mrb[0].mxu0
        %v2046 = vpop.f32.mrb[0].mxu0
        %2047 = vdwg.mxu0
        %v2048 = vpack.c.bf16 %v2043, %v2043
        %v2050 = vunpack.c.l.b16 %v2048
        %v2051 = vpack.c.b16 %v2050, %v2050
        %2052 = vrot.lane.b32.xlu0 %v2051, 16
        %v2053 = vpop.permute.xlu0 %2052
        %2055 = vst.msk [vmem:[#allocation2] sm:$0xf] %vm1350, %v2053
        %2056 = vrot.lane.b32.xlu0 %v1703, 104
        %v2057 = vpop.permute.xlu0 %2056
        %2058 = vrot.lane.b32.xlu0 %v1704, 104
        %v2059 = vpop.permute.xlu0 %2058
        %v2061 = vsel %vm1003, %v2057, 0
        %v2064 = vsel %vm1003, %v2059, 0
        %2066 = vmatprep.subr.bf16.mxu0 0
        %2067 = vmatpush1.bf16.xpose.msra.mxu0 %v2064
        %2068 = vmatprep.subr.bf16.mxu0 0
        %2069 = vmatpush1.bf16.xpose.msra.mxu0 0
        %2070 = vmatprep.subr.bf16.mxu0 0
        %2071 = vmatpush1.bf16.xpose.msra.mxu0 0
        %2072 = vmatprep.subr.bf16.mxu0 0
        %2073 = vmatpush1.bf16.xpose.msra.mxu0 0
        %2074 = vmatprep.subr.bf16.mxu0 0
        %2075 = vmatpush1.bf16.xpose.msra.mxu0 0
        %2076 = vmatprep.subr.bf16.mxu0 0
        %2077 = vmatpush1.bf16.xpose.msra.mxu0 0
        %2078 = vmatprep.subr.bf16.mxu0 0
        %2079 = vmatpush1.bf16.xpose.msra.mxu0 0
        %2080 = vmatprep.subr.bf16.mxu0 0
        %2081 = vmatpush1.bf16.xpose.msra.mxu0 0
        %2082 = vmatprep.subr.bf16.mxu0 0
        %2083 = vmatpush1.bf16.xpose.msra.mxu0 0
        %2084 = vmatprep.subr.bf16.mxu0 0
        %2085 = vmatpush1.bf16.xpose.msra.mxu0 0
        %2086 = vmatprep.subr.bf16.mxu0 0
        %2087 = vmatpush1.bf16.xpose.msra.mxu0 0
        %2088 = vmatprep.subr.bf16.mxu0 0
        %2089 = vmatpush1.bf16.xpose.msra.mxu0 0
        %2090 = vmatprep.subr.bf16.mxu0 0
        %2091 = vmatpush1.bf16.xpose.msra.mxu0 0
        %2092 = vmatprep.subr.bf16.mxu0 0
        %2093 = vmatpush1.bf16.xpose.msra.mxu0 0
        %2094 = vmatprep.subr.bf16.mxu0 0
        %2095 = vmatpush1.bf16.xpose.msra.mxu0 0
        %2096 = vmatprep.subr.bf16.mxu0 0
        %2097 = vmatpush1.bf16.xpose.msra.mxu0 0
        %2098 = vmatprep.mubr.bf16.mxu0 0
        %2099 = vmatmul.mubr.bf16.gmra.mrb[0].mxu0 %v2061
        %v2100 = vpop.f32.mrb[0].mxu0
        %v2101 = vadd.f32 %v899, %v2100
        %v2102 = vpop.f32.mrb[0].mxu0
        %v2103 = vpop.f32.mrb[0].mxu0
        %v2104 = vpop.f32.mrb[0].mxu0
        %2105 = vdwg.mxu0
        %v2106 = vsel %vm1003, %v2101, -inf
        %2107 = vmax.xlane.f32.xlu0 %v2106
        %v2108 = vpop.xlane.xlu0 %2107
        %v2109 = vsub.f32 %v2101, %v2108
        %v2110 = vmul.f32 %v2109, 1.442695
        %v2111 = vpow.pop %v2110
        %v2112 = vsel %vm1003, %v2111, 0.0
        %2113 = vadd.xlane.f32.xlu0 %v2112
        %v2114 = vpop.xlane.xlu0 %2113
        %v2115 = vrcp.pop %v2114
        %v2116 = vmul.f32 %v2111, %v2115
        %v2117 = vpack.c.bf16 %v2116, %v2116
        %s2118 = scalar_lea.vmem %s885, 12 [#allocation18]
        %2119 = vst.msk [vmem:[%s2118] sm:$0xf] %vm1112, %v2117
        %2120 = vrot.lane.b32.xlu0 %v1704, 72
        %v2121 = vpop.permute.xlu0 %2120
        %v2123 = vsel %vm1003, %v2117, 0
        %v2126 = vsel %vm1067, %v2121, 0
        %2128 = vmatprep.subr.bf16.mxu0 0
        %2129 = vmatpush1.bf16.msra.mxu0 %v2126
        %2130 = vmatprep.subr.bf16.mxu0 0
        %2131 = vmatpush1.bf16.msra.mxu0 0
        %2132 = vmatprep.subr.bf16.mxu0 0
        %2133 = vmatpush1.bf16.msra.mxu0 0
        %2134 = vmatprep.subr.bf16.mxu0 0
        %2135 = vmatpush1.bf16.msra.mxu0 0
        %2136 = vmatprep.subr.bf16.mxu0 0
        %2137 = vmatpush1.bf16.msra.mxu0 0
        %2138 = vmatprep.subr.bf16.mxu0 0
        %2139 = vmatpush1.bf16.msra.mxu0 0
        %2140 = vmatprep.subr.bf16.mxu0 0
        %2141 = vmatpush1.bf16.msra.mxu0 0
        %2142 = vmatprep.subr.bf16.mxu0 0
        %2143 = vmatpush1.bf16.msra.mxu0 0
        %2144 = vmatprep.subr.bf16.mxu0 0
        %2145 = vmatpush1.bf16.msra.mxu0 0
        %2146 = vmatprep.subr.bf16.mxu0 0
        %2147 = vmatpush1.bf16.msra.mxu0 0
        %2148 = vmatprep.subr.bf16.mxu0 0
        %2149 = vmatpush1.bf16.msra.mxu0 0
        %2150 = vmatprep.subr.bf16.mxu0 0
        %2151 = vmatpush1.bf16.msra.mxu0 0
        %2152 = vmatprep.subr.bf16.mxu0 0
        %2153 = vmatpush1.bf16.msra.mxu0 0
        %2154 = vmatprep.subr.bf16.mxu0 0
        %2155 = vmatpush1.bf16.msra.mxu0 0
        %2156 = vmatprep.subr.bf16.mxu0 0
        %2157 = vmatpush1.bf16.msra.mxu0 0
        %2158 = vmatprep.subr.bf16.mxu0 0
        %2159 = vmatpush1.bf16.msra.mxu0 0
        %2160 = vmatprep.mubr.bf16.mxu0 0
        %2161 = vmatmul.mubr.bf16.gmra.mrb[0].mxu0 %v2123
        %v2162 = vpop.f32.mrb[0].mxu0
        %v2163 = vadd.f32 0.0, %v2162
        %v2164 = vpop.f32.mrb[0].mxu0
        %v2165 = vpop.f32.mrb[0].mxu0
        %v2166 = vpop.f32.mrb[0].mxu0
        %2167 = vdwg.mxu0
        %v2168 = vpack.c.bf16 %v2163, %v2163
        %v2170 = vunpack.c.l.b16 %v2168
        %v2171 = vpack.c.b16 %v2170, %v2170
        %2172 = vrot.lane.b32.xlu0 %v2171, 24
        %v2173 = vpop.permute.xlu0 %2172
        %2175 = vst.msk [vmem:[#allocation2] sm:$0xf] %vm1469, %v2173
        %v2176 = vld [vmem:[#allocation2] sm:$0xf]
        %v2177 = vld [vmem:[%s15] sm:$0xf]
        %v2178 = vld [vmem:[%s15 + $0x4] sm:$0xf]
        %v2179 = vld [vmem:[%s15 + $0x8] sm:$0xf]
        %v2180 = vld [vmem:[%s15 + $0xc] sm:$0xf]
        %v2185 = vunpack.c.l.b16 %v2177
        %v2186 = vunpack.c.l.b16 %v2178
        %v2187 = vunpack.c.l.b16 %v2179
        %v2188 = vunpack.c.l.b16 %v2180
        %v2189 = vpack.c.b16 %v2186, %v2185
        %v2190 = vpack.c.b16 %v2188, %v2187
        %v2194 = vsel %vm903, %v2176, 0
        %2196 = vmatprep.subr.bf16.mxu0 0
        %2197 = vmatpush1.bf16.msra.mxu0 %v2189
        %2198 = vmatprep.subr.bf16.mxu0 0
        %2199 = vmatpush1.bf16.msra.mxu0 %v2190
        %2200 = vmatprep.subr.bf16.mxu0 0
        %2201 = vmatpush1.bf16.msra.mxu0 0
        %2202 = vmatprep.subr.bf16.mxu0 0
        %2203 = vmatpush1.bf16.msra.mxu0 0
        %2204 = vmatprep.subr.bf16.mxu0 0
        %2205 = vmatpush1.bf16.msra.mxu0 0
        %2206 = vmatprep.subr.bf16.mxu0 0
        %2207 = vmatpush1.bf16.msra.mxu0 0
        %2208 = vmatprep.subr.bf16.mxu0 0
        %2209 = vmatpush1.bf16.msra.mxu0 0
        %2210 = vmatprep.subr.bf16.mxu0 0
        %2211 = vmatpush1.bf16.msra.mxu0 0
        %2212 = vmatprep.subr.bf16.mxu0 0
        %2213 = vmatpush1.bf16.msra.mxu0 0
        %2214 = vmatprep.subr.bf16.mxu0 0
        %2215 = vmatpush1.bf16.msra.mxu0 0
        %2216 = vmatprep.subr.bf16.mxu0 0
        %2217 = vmatpush1.bf16.msra.mxu0 0
        %2218 = vmatprep.subr.bf16.mxu0 0
        %2219 = vmatpush1.bf16.msra.mxu0 0
        %2220 = vmatprep.subr.bf16.mxu0 0
        %2221 = vmatpush1.bf16.msra.mxu0 0
        %2222 = vmatprep.subr.bf16.mxu0 0
        %2223 = vmatpush1.bf16.msra.mxu0 0
        %2224 = vmatprep.subr.bf16.mxu0 0
        %2225 = vmatpush1.bf16.msra.mxu0 0
        %2226 = vmatprep.subr.bf16.mxu0 0
        %2227 = vmatpush1.bf16.msra.mxu0 0
        %2228 = vmatprep.mubr.bf16.mxu0 0
        %2229 = vmatmul.mubr.bf16.gmra.mrb[0].mxu0 %v2194
        %v2230 = vpop.f32.mrb[0].mxu0
        %v2231 = vadd.f32 0.0, %v2230
        %v2232 = vpop.f32.mrb[0].mxu0
        %v2233 = vpop.f32.mrb[0].mxu0
        %v2234 = vpop.f32.mrb[0].mxu0
        %2235 = vdwg.mxu0
        %v2236 = vadd.f32 %v1539, %v2231
        %v2237 = vld [vmem:[%s16] sm:$0x1]
        %v2239 = vlaneseq
        %v2240 = vshrl.u32 %v2239, 7
        %v2241 = vsub.s32 0, %v2240
        %v2242 = vrot.slane %v2237, %v2241
        %v2244 = vadd.f32 %v2236, %v2242
        %v2245 = vld [vmem:[%s17] sm:$0x1]
        %v2246 = vld [vmem:[%s18] sm:$0x1]
        %v2247 = vsel %vm903, %v2244, 0.0
        %2248 = vadd.xlane.f32.xlu0 %v2247
        %v2249 = vpop.xlane.xlu0 %2248
        %v2250 = vmul.f32 %v2249, %v907
        %v2251 = vsub.f32 %v2244, %v2250
        %v2252 = vmul.f32 %v2251, %v2251
        %v2253 = vsel %vm903, %v2252, 0.0
        %2254 = vadd.xlane.f32.xlu0 %v2253
        %v2255 = vpop.xlane.xlu0 %2254
        %v2256 = vmul.f32 %v2255, %v907
        %v2257 = vadd.f32 %v2256, 1e-05
        %v2258 = vrsqrt.pop %v2257
        %v2259 = vmul.f32 %v2251, %v2258
        %v2261 = vlaneseq
        %v2262 = vshrl.u32 %v2261, 7
        %v2263 = vsub.s32 0, %v2262
        %v2264 = vrot.slane %v2245, %v2263
        %v2266 = vmul.f32 %v2259, %v2264
        %v2268 = vlaneseq
        %v2269 = vshrl.u32 %v2268, 7
        %v2270 = vsub.s32 0, %v2269
        %v2271 = vrot.slane %v2246, %v2270
        %v2273 = vadd.f32 %v2266, %v2271
        %v2274 = vpack.c.bf16 %v2273, %v2273
        %v2275 = vld [vmem:[%s19] sm:$0xf]
        %v2276 = vld [vmem:[%s19 + $0x4] sm:$0xf]
        %v2277 = vld [vmem:[%s19 + $0x8] sm:$0xf]
        %v2278 = vld [vmem:[%s19 + $0xc] sm:$0xf]
        %v2279 = vld [vmem:[%s20] sm:$0x1]
        %v2281 = vlaneseq
        %v2282 = vshrl.u32 %v2281, 7
        %v2283 = vsub.s32 0, %v2282
        %v2284 = vrot.slane %v2279, %v2283
        %v2290 = vunpack.c.l.b16 %v2275
        %v2291 = vunpack.c.l.b16 %v2276
        %v2292 = vunpack.c.l.b16 %v2277
        %v2293 = vunpack.c.l.b16 %v2278
        %v2294 = vpack.c.b16 %v2291, %v2290
        %v2295 = vpack.c.b16 %v2293, %v2292
        %v2299 = vsel %vm903, %v2274, 0
        %2301 = vmatprep.subr.bf16.mxu0 0
        %2302 = vmatpush1.bf16.msra.mxu0 %v2294
        %2303 = vmatprep.subr.bf16.mxu0 0
        %2304 = vmatpush1.bf16.msra.mxu0 %v2295
        %2305 = vmatprep.subr.bf16.mxu0 0
        %2306 = vmatpush1.bf16.msra.mxu0 0
        %2307 = vmatprep.subr.bf16.mxu0 0
        %2308 = vmatpush1.bf16.msra.mxu0 0
        %2309 = vmatprep.subr.bf16.mxu0 0
        %2310 = vmatpush1.bf16.msra.mxu0 0
        %2311 = vmatprep.subr.bf16.mxu0 0
        %2312 = vmatpush1.bf16.msra.mxu0 0
        %2313 = vmatprep.subr.bf16.mxu0 0
        %2314 = vmatpush1.bf16.msra.mxu0 0
        %2315 = vmatprep.subr.bf16.mxu0 0
        %2316 = vmatpush1.bf16.msra.mxu0 0
        %2317 = vmatprep.subr.bf16.mxu0 0
        %2318 = vmatpush1.bf16.msra.mxu0 0
        %2319 = vmatprep.subr.bf16.mxu0 0
        %2320 = vmatpush1.bf16.msra.mxu0 0
        %2321 = vmatprep.subr.bf16.mxu0 0
        %2322 = vmatpush1.bf16.msra.mxu0 0
        %2323 = vmatprep.subr.bf16.mxu0 0
        %2324 = vmatpush1.bf16.msra.mxu0 0
        %2325 = vmatprep.subr.bf16.mxu0 0
        %2326 = vmatpush1.bf16.msra.mxu0 0
        %2327 = vmatprep.subr.bf16.mxu0 0
        %2328 = vmatpush1.bf16.msra.mxu0 0
        %2329 = vmatprep.subr.bf16.mxu0 0
        %2330 = vmatpush1.bf16.msra.mxu0 0
        %2331 = vmatprep.subr.bf16.mxu0 0
        %2332 = vmatpush1.bf16.msra.mxu0 0
        %2333 = vmatprep.mubr.bf16.mxu0 0
        %2334 = vmatmul.mubr.bf16.gmra.mrb[0].mxu0 %v2299
        %v2335 = vpop.f32.mrb[0].mxu0
        %v2336 = vadd.f32 %v2284, %v2335
        %v2337 = vpop.f32.mrb[0].mxu0
        %v2338 = vpop.f32.mrb[0].mxu0
        %v2339 = vpop.f32.mrb[0].mxu0
        %2340 = vdwg.mxu0
        %v2341 = vmul.f32 %v2336, 0.5
        %v2342 = vmul.f32 %v2336, 0.70710677
        %v2343 = verf.f32.pop %v2342
        %v2344 = vadd.f32 %v2343, 1.0
        %v2345 = vmul.f32 %v2341, %v2344
        %v2346 = vpack.c.bf16 %v2345, %v2345
        %v2347 = vld [vmem:[%s21] sm:$0xf]
        %v2348 = vld [vmem:[%s21 + $0x4] sm:$0xf]
        %v2349 = vld [vmem:[%s21 + $0x8] sm:$0xf]
        %v2350 = vld [vmem:[%s21 + $0xc] sm:$0xf]
        %v2351 = vld [vmem:[%s21 + $0x10] sm:$0xf]
        %v2352 = vld [vmem:[%s21 + $0x14] sm:$0xf]
        %v2353 = vld [vmem:[%s21 + $0x18] sm:$0xf]
        %v2354 = vld [vmem:[%s21 + $0x1c] sm:$0xf]
        %v2355 = vld [vmem:[%s21 + $0x20] sm:$0xf]
        %v2356 = vld [vmem:[%s21 + $0x24] sm:$0xf]
        %v2357 = vld [vmem:[%s21 + $0x28] sm:$0xf]
        %v2358 = vld [vmem:[%s21 + $0x2c] sm:$0xf]
        %v2359 = vld [vmem:[%s21 + $0x30] sm:$0xf]
        %v2360 = vld [vmem:[%s21 + $0x34] sm:$0xf]
        %v2361 = vld [vmem:[%s21 + $0x38] sm:$0xf]
        %v2362 = vld [vmem:[%s21 + $0x3c] sm:$0xf]
        %v2379 = vunpack.c.l.b16 %v2347
        %v2380 = vunpack.c.l.b16 %v2348
        %v2381 = vunpack.c.l.b16 %v2349
        %v2382 = vunpack.c.l.b16 %v2350
        %v2383 = vunpack.c.l.b16 %v2351
        %v2384 = vunpack.c.l.b16 %v2352
        %v2385 = vunpack.c.l.b16 %v2353
        %v2386 = vunpack.c.l.b16 %v2354
        %v2387 = vunpack.c.l.b16 %v2355
        %v2388 = vunpack.c.l.b16 %v2356
        %v2389 = vunpack.c.l.b16 %v2357
        %v2390 = vunpack.c.l.b16 %v2358
        %v2391 = vunpack.c.l.b16 %v2359
        %v2392 = vunpack.c.l.b16 %v2360
        %v2393 = vunpack.c.l.b16 %v2361
        %v2394 = vunpack.c.l.b16 %v2362
        %v2395 = vpack.c.b16 %v2380, %v2379
        %v2396 = vpack.c.b16 %v2382, %v2381
        %v2397 = vpack.c.b16 %v2384, %v2383
        %v2398 = vpack.c.b16 %v2386, %v2385
        %v2399 = vpack.c.b16 %v2388, %v2387
        %v2400 = vpack.c.b16 %v2390, %v2389
        %v2401 = vpack.c.b16 %v2392, %v2391
        %v2402 = vpack.c.b16 %v2394, %v2393
        %2411 = vmatprep.subr.bf16.mxu0 0
        %2412 = vmatpush1.bf16.msra.mxu0 %v2395
        %2413 = vmatprep.subr.bf16.mxu0 0
        %2414 = vmatpush1.bf16.msra.mxu0 %v2396
        %2415 = vmatprep.subr.bf16.mxu0 0
        %2416 = vmatpush1.bf16.msra.mxu0 %v2397
        %2417 = vmatprep.subr.bf16.mxu0 0
        %2418 = vmatpush1.bf16.msra.mxu0 %v2398
        %2419 = vmatprep.subr.bf16.mxu0 0
        %2420 = vmatpush1.bf16.msra.mxu0 %v2399
        %2421 = vmatprep.subr.bf16.mxu0 0
        %2422 = vmatpush1.bf16.msra.mxu0 %v2400
        %2423 = vmatprep.subr.bf16.mxu0 0
        %2424 = vmatpush1.bf16.msra.mxu0 %v2401
        %2425 = vmatprep.subr.bf16.mxu0 0
        %2426 = vmatpush1.bf16.msra.mxu0 %v2402
        %2427 = vmatprep.subr.bf16.mxu0 0
        %2428 = vmatpush1.bf16.msra.mxu0 0
        %2429 = vmatprep.subr.bf16.mxu0 0
        %2430 = vmatpush1.bf16.msra.mxu0 0
        %2431 = vmatprep.subr.bf16.mxu0 0
        %2432 = vmatpush1.bf16.msra.mxu0 0
        %2433 = vmatprep.subr.bf16.mxu0 0
        %2434 = vmatpush1.bf16.msra.mxu0 0
        %2435 = vmatprep.subr.bf16.mxu0 0
        %2436 = vmatpush1.bf16.msra.mxu0 0
        %2437 = vmatprep.subr.bf16.mxu0 0
        %2438 = vmatpush1.bf16.msra.mxu0 0
        %2439 = vmatprep.subr.bf16.mxu0 0
        %2440 = vmatpush1.bf16.msra.mxu0 0
        %2441 = vmatprep.subr.bf16.mxu0 0
        %2442 = vmatpush1.bf16.msra.mxu0 0
        %2443 = vmatprep.mubr.bf16.mxu0 0
        %2444 = vmatmul.mubr.bf16.gmra.mrb[0].mxu0 %v2346
        %v2445 = vpop.f32.mrb[0].mxu0
        %v2446 = vadd.f32 0.0, %v2445
        %v2447 = vpop.f32.mrb[0].mxu0
        %v2448 = vpop.f32.mrb[0].mxu0
        %v2449 = vpop.f32.mrb[0].mxu0
        %2450 = vdwg.mxu0
        %v2451 = vadd.f32 %v2244, %v2446
        %v2452 = vld [vmem:[%s22] sm:$0x1]
        %v2454 = vlaneseq
        %v2455 = vshrl.u32 %v2454, 7
        %v2456 = vsub.s32 0, %v2455
        %v2457 = vrot.slane %v2452, %v2456
        %v2459 = vadd.f32 %v2451, %v2457
        %2460 = vst.msk [vmem:[%s878] sm:$0xff] %vm903, %v2459
        %s2461 = sand.u32 %s557, 1
        %s2462 = scalar_lea.sflag [#allocation5], %s2461
        %s2463 = sand.u32 %s557, 1
        %s2464 = smul.addr %s2463, 8
        %s2465 = scalar_lea.vmem [#allocation17], %s2464
        %s2466 = sand.u32 %s583, 1
        %s2467 = scalar_lea.sflag [#allocation19], %s2466
        %s2468 = sand.u32 %s583, 1
        %s2469 = smul.addr %s2468, 16
        %s2470 = scalar_lea.vmem [#allocation18], %s2469
        // Predicated region
        $region145: #{tpu_custom_call.1} parent=111 // pred_check
          %p2471 = pneg %p567
        $region146: #{tpu_custom_call.1} parent=111 // pred_check_branch
          %2473 = sbr.rel (%p2471) target = $region148
        $region147: #{tpu_custom_call.1} parent=111 // pred_region
          %s2475 = ssub.s32 128, 128
          %2476 = vsyncadd %s2462, %s2475
          %s2477 = smul.addr %s51, 128
          %s2478 = scalar_lea.hbm %s23, %s2477
          %s2480 = sshll.u32 %s2465, 4
          %s2481 = int_to_ptr.vmem [resolvable:$true] %s2480
          %2483 = dma.vmem_to_hbm [thread:$0]  %s2481, 128, %s2478, %s2462
        $region148: #{tpu_custom_call.1} parent=111 // pred_fallthru
          _
        // Predicated region
        $region149: #{tpu_custom_call.1} parent=111 // pred_check
          %p2484 = pneg %p593
        $region150: #{tpu_custom_call.1} parent=111 // pred_check_branch
          %2486 = sbr.rel (%p2484) target = $region152
        $region151: #{tpu_custom_call.1} parent=111 // pred_region
          %s2488 = ssub.s32 256, 256
          %2489 = vsyncadd %s2467, %s2488
          %s2490 = smul.addr %s51, 4
          %s2491 = smul.addr %s2490, 64
          %s2492 = scalar_lea.hbm %s24, %s2491
          %s2493 = sshll.u32 %s2470, 4
          %s2494 = int_to_ptr.vmem [resolvable:$true] %s2493
          %2499 = dma.vmem_to_hbm [thread:$0]  %s2494, 256, %s2492, %s2467, 64, 64, 4
        $region152: #{tpu_custom_call.1} parent=111 // pred_fallthru
          _
      $region112: #{tpu_custom_call.1} parent=5 // pred_fallthru
        _
      %p2500 = scmp.le.s32.totalorder 2, %s46
      // Predicated region
      $region153: #{tpu_custom_call.1} parent=5 // pred_check
        %p2501 = pneg %p2500
      $region154: #{tpu_custom_call.1} parent=5 // pred_check_branch
        %2503 = sbr.rel (%p2501) target = $region156
      $region155: #{tpu_custom_call.1} parent=5 // pred_region
        %s2504 = ssub.s32 %s46, 2
        // Predicated region
        $region157: #{tpu_custom_call.1} parent=155 // pred_check
          %p2505 = pneg %p573
        $region158: #{tpu_custom_call.1} parent=155 // pred_check_branch
          %2507 = sbr.rel (%p2505) target = $region160
        $region159: #{tpu_custom_call.1} parent=155 // pred_region
          %s2508 = sand.u32 %s558, 1
          %s2509 = scalar_lea.sflag [#allocation5], %s2508
          %s2510 = sand.u32 %s558, 1
          %s2511 = smul.addr %s2510, 8
          %s2512 = scalar_lea.vmem [#allocation17], %s2511
          %2513 = dma.done %s2509, 128
        $region160: #{tpu_custom_call.1} parent=155 // pred_fallthru
          _
        // Predicated region
        $region161: #{tpu_custom_call.1} parent=155 // pred_check
          %p2514 = pneg %p599
        $region162: #{tpu_custom_call.1} parent=155 // pred_check_branch
          %2516 = sbr.rel (%p2514) target = $region164
        $region163: #{tpu_custom_call.1} parent=155 // pred_region
          %s2517 = sand.u32 %s584, 1
          %s2518 = scalar_lea.sflag [#allocation19], %s2517
          %s2519 = sand.u32 %s584, 1
          %s2520 = smul.addr %s2519, 16
          %s2521 = scalar_lea.vmem [#allocation18], %s2520
          %2522 = dma.done %s2518, 256
        $region164: #{tpu_custom_call.1} parent=155 // pred_fallthru
          _
      $region156: #{tpu_custom_call.1} parent=5 // pred_fallthru
        _
    $region6: #{tpu_custom_call.1} parent=1 // loop_footer
      %s50 = sadd.s32 1, %s46
    $region7: #{tpu_custom_call.1} parent=1 // loop_footer_branch
      %45 = sbr.rel target = $region3
    $region8: #{tpu_custom_call.1} parent=1 // loop_exit
      _
    %2523 = vsyncpa [#allocation4], 1
    %s2524 = scalar_lea.sflag [#allocation4], 1
    %2525 = vsyncpa %s2524, 1
    %2526 = vsyncpa [#allocation7], 1
    %s2527 = scalar_lea.sflag [#allocation7], 1
    %2528 = vsyncpa %s2527, 1
    %2529 = vsyncpa [#allocation10], 1
    %2530 = vsyncpa [#allocation13], 1
    %2531 = vsyncpa [#allocation16], 1
    %2532 = vsyncpa [#allocation5], 1
    %s2533 = scalar_lea.sflag [#allocation5], 1
    %2534 = vsyncpa %s2533, 1
    %2535 = vsyncpa [#allocation19], 1
    %s2536 = scalar_lea.sflag [#allocation19], 1
    %2537 = vsyncpa %s2536, 1

// kernel: tpu_custom_call.1
$region0: #{tpu_custom_call.1}
  #allocation0 [shape = 'u32[]', space=smem, size = 0x4, offset = 0x4, fixed_abs, tag = 'smem constant byte address 0x4 - core index']
  #allocation1 [shape = 'u32[144,128]{1,0:T(1,128)}', space=vmem, size = 0x12000, scoped, tag = 'internal scratch']
  #allocation2 [shape = 'bf16[8,32]{1,0:T(8,128)(2,1)}', space=vmem, size = 0x800, scoped, tag = 'scratch operand']
  %s0 = inlined_call_operand.vmem [shape: f32[2,8,32], index: 0, kind: input, shape index: {}]
  %s1 = inlined_call_operand.hbm [shape: f32[2,1,8], index: 1, kind: input, shape index: {}]
  %s2 = inlined_call_operand.hbm [shape: bf16[2,8,32], index: 2, kind: input, shape index: {}]
  %s3 = inlined_call_operand.vmem [shape: f32[1,32], index: 3, kind: input, shape index: {}]
  %s4 = inlined_call_operand.hbm [shape: f32[1,32], index: 4, kind: input, shape index: {}]
  %s5 = inlined_call_operand.vmem [shape: bf16[32,96], index: 5, kind: input, shape index: {}]
  %s6 = inlined_call_operand.hbm [shape: f32[1,96], index: 6, kind: input, shape index: {}]
  %s7 = inlined_call_operand.vmem [shape: bf16[32,32], index: 7, kind: input, shape index: {}]
  %s8 = inlined_call_operand.hbm [shape: f32[1,32], index: 8, kind: input, shape index: {}]
  %s9 = inlined_call_operand.hbm [shape: f32[1,32], index: 9, kind: input, shape index: {}]
  %s10 = inlined_call_operand.hbm [shape: f32[1,32], index: 10, kind: input, shape index: {}]
  %s11 = inlined_call_operand.vmem [shape: bf16[32,32], index: 11, kind: input, shape index: {}]
  %s12 = inlined_call_operand.hbm [shape: f32[1,32], index: 12, kind: input, shape index: {}]
  %s13 = inlined_call_operand.vmem [shape: bf16[32,64], index: 13, kind: input, shape index: {}]
  %s14 = inlined_call_operand.vmem [shape: f32[1,64], index: 14, kind: input, shape index: {}]
  %s15 = inlined_call_operand.vmem [shape: bf16[32,32], index: 15, kind: input, shape index: {}]
  %s16 = inlined_call_operand.vmem [shape: f32[1,32], index: 16, kind: input, shape index: {}]
  %s17 = inlined_call_operand.vmem [shape: f32[1,32], index: 17, kind: input, shape index: {}]
  %s18 = inlined_call_operand.vmem [shape: f32[1,32], index: 18, kind: input, shape index: {}]
  %s19 = inlined_call_operand.vmem [shape: bf16[32,128], index: 19, kind: input, shape index: {}]
  %s20 = inlined_call_operand.vmem [shape: f32[1,128], index: 20, kind: input, shape index: {}]
  %s21 = inlined_call_operand.vmem [shape: bf16[128,32], index: 21, kind: input, shape index: {}]
  %s22 = inlined_call_operand.vmem [shape: f32[1,32], index: 22, kind: input, shape index: {}]
  %s23 = inlined_call_operand.hbm [shape: f32[2,8,32], index: 23, kind: output, shape index: {0}]
  %s24 = inlined_call_operand.hbm [shape: bf16[2,4,8,8], index: 24, kind: output, shape index: {1}]
  %25 = xla_tuple %s23, %s24
  %s26 = sld [smem:[#allocation0]]
  $region165: #{tpu_custom_call.1} parent=0
    _
  %s28 = ssub.s32 1, %s26
  %s29 = scalar_select 0, %s28, %s26
  $region1: #{tpu_custom_call.1} parent=0
    #allocation3 [shape = 'u8[1024]{0}', space=vmem, size = 0x400, scoped, tag = 'input window, operand 1']
    #allocation4 [shape = 's32[2]{0}', space=sflag, size = 0x8, scoped, tag = 'scoped memory for tpu_custom_call.1']
    #allocation5 [shape = 's32[2]{0}', space=sflag, size = 0x8, scoped, tag = 'scoped memory for tpu_custom_call.1']
    #allocation6 [shape = 'u8[4096]{0}', space=vmem, size = 0x1000, scoped, tag = 'input window, operand 2']
    #allocation7 [shape = 's32[2]{0}', space=sflag, size = 0x8, scoped, tag = 'scoped memory for tpu_custom_call.1']
    #allocation8 [shape = 'u8[512]{0}', space=vmem, size = 0x400, scoped, tag = 'input window, operand 4, single buffered']
    #allocation9 [shape = 'u8[512]{0}', space=vmem, size = 0x400, scoped, tag = 'input window, operand 6, single buffered']
    #allocation10 [shape = 's32[1]{0}', space=sflag, size = 0x4, scoped, tag = 'scoped memory for tpu_custom_call.1']
    #allocation11 [shape = 'u8[512]{0}', space=vmem, size = 0x400, scoped, tag = 'input window, operand 8, single buffered']
    #allocation12 [shape = 'u8[512]{0}', space=vmem, size = 0x400, scoped, tag = 'input window, operand 9, single buffered']
    #allocation13 [shape = 's32[1]{0}', space=sflag, size = 0x4, scoped, tag = 'scoped memory for tpu_custom_call.1']
    #allocation14 [shape = 'u8[512]{0}', space=vmem, size = 0x400, scoped, tag = 'input window, operand 10, single buffered']
    #allocation15 [shape = 'u8[512]{0}', space=vmem, size = 0x400, scoped, tag = 'input window, operand 12, single buffered']
    #allocation16 [shape = 's32[1]{0}', space=sflag, size = 0x4, scoped, tag = 'scoped memory for tpu_custom_call.1']
    #allocation17 [shape = 'u8[8192]{0}', space=vmem, size = 0x2000, scoped, tag = 'output window, operand 0']
    #allocation18 [shape = 'u8[16384]{0}', space=vmem, size = 0x4000, scoped, tag = 'output window, operand 1']
    #allocation19 [shape = 's32[2]{0}', space=sflag, size = 0x8, scoped, tag = 'scoped memory for tpu_custom_call.1']
    %30 = vsyncpa [#allocation4], 0
    %s31 = scalar_lea.sflag [#allocation4], 1
    %32 = vsyncpa %s31, 0
    %33 = vsyncpa [#allocation7], 0
    %s34 = scalar_lea.sflag [#allocation7], 1
    %35 = vsyncpa %s34, 0
    %36 = vsyncpa [#allocation10], 0
    %37 = vsyncpa [#allocation13], 0
    %38 = vsyncpa [#allocation16], 0
    %39 = vsyncpa [#allocation5], 0
    %s40 = scalar_lea.sflag [#allocation5], 1
    %41 = vsyncpa %s40, 0
    %42 = vsyncpa [#allocation19], 0
    %s43 = scalar_lea.sflag [#allocation19], 1
    %44 = vsyncpa %s43, 0
    loop: start=0, step=1, limit=4
    $region2: #{tpu_custom_call.1} parent=1 // loop_pre_header
      _
    $region3: #{tpu_custom_call.1} parent=1 // loop_header
      %s46 = sphi 0, %s50
      %p47 = scmp.ge.s32.totalorder %s46, 4
      %s56 = sphi 0, %s58
      %s59 = sphi 0, %s56
      %s60 = sphi 0, %s59
      %s76 = sphi 0, %s60
      %s82 = sphi 0, %s84
      %s85 = sphi 0, %s82
      %s86 = sphi 0, %s85
      %s102 = sphi 0, %s86
      %s108 = sphi 0, %s110
      %s111 = sphi 0, %s108
      %s112 = sphi 0, %s111
      %s128 = sphi 0, %s112
      %s132 = sphi 0, %s132
      %s134 = sphi 0, %s132
      %s135 = sphi 0, %s134
      %s149 = sphi 0, %s135
      %s153 = sphi 0, %s153
      %s155 = sphi 0, %s153
      %s156 = sphi 0, %s155
      %s170 = sphi 0, %s156
      %s174 = sphi 0, %s174
      %s176 = sphi 0, %s174
      %s177 = sphi 0, %s176
      %s191 = sphi 0, %s177
      %s195 = sphi 0, %s195
      %s197 = sphi 0, %s195
      %s198 = sphi 0, %s197
      %s212 = sphi 0, %s198
      %s216 = sphi 0, %s216
      %s218 = sphi 0, %s216
      %s219 = sphi 0, %s218
      %s233 = sphi 0, %s219
      %s237 = sphi 0, %s237
      %s239 = sphi 0, %s237
      %s240 = sphi 0, %s239
      %s254 = sphi 0, %s240
      %s258 = sphi 0, %s258
      %s260 = sphi 0, %s258
      %s261 = sphi 0, %s260
      %s275 = sphi 0, %s261
      %s279 = sphi 0, %s279
      %s281 = sphi 0, %s279
      %s282 = sphi 0, %s281
      %s296 = sphi 0, %s282
      %s300 = sphi 0, %s300
      %s302 = sphi 0, %s300
      %s303 = sphi 0, %s302
      %s317 = sphi 0, %s303
      %s321 = sphi 0, %s321
      %s323 = sphi 0, %s321
      %s324 = sphi 0, %s323
      %s338 = sphi 0, %s324
      %s342 = sphi 0, %s342
      %s344 = sphi 0, %s342
      %s345 = sphi 0, %s344
      %s359 = sphi 0, %s345
      %s363 = sphi 0, %s363
      %s365 = sphi 0, %s363
      %s366 = sphi 0, %s365
      %s380 = sphi 0, %s366
      %s384 = sphi 0, %s384
      %s386 = sphi 0, %s384
      %s387 = sphi 0, %s386
      %s401 = sphi 0, %s387
      %s405 = sphi 0, %s405
      %s407 = sphi 0, %s405
      %s408 = sphi 0, %s407
      %s422 = sphi 0, %s408
      %s426 = sphi 0, %s426
      %s428 = sphi 0, %s426
      %s429 = sphi 0, %s428
      %s443 = sphi 0, %s429
      %s447 = sphi 0, %s447
      %s449 = sphi 0, %s447
      %s450 = sphi 0, %s449
      %s464 = sphi 0, %s450
      %s468 = sphi 0, %s468
      %s470 = sphi 0, %s468
      %s471 = sphi 0, %s470
      %s485 = sphi 0, %s471
      %s489 = sphi 0, %s489
      %s491 = sphi 0, %s489
      %s492 = sphi 0, %s491
      %s506 = sphi 0, %s492
      %s510 = sphi 0, %s510
      %s512 = sphi 0, %s510
      %s513 = sphi 0, %s512
      %s527 = sphi 0, %s513
      %s531 = sphi 0, %s531
      %s533 = sphi 0, %s531
      %s534 = sphi 0, %s533
      %s548 = sphi 0, %s534
      %s554 = sphi 0, %s556
      %s557 = sphi 0, %s554
      %s558 = sphi 0, %s557
      %s574 = sphi 0, %s558
      %s580 = sphi 0, %s582
      %s583 = sphi 0, %s580
      %s584 = sphi 0, %s583
      %s600 = sphi 0, %s584
    $region4: #{tpu_custom_call.1} parent=1 // loop_header_branch
      %49 = sbr.rel (%p47) target = $region8
    $region5: #{tpu_custom_call.1} parent=1 // loop_body
      %s51 = ssub.s32 %s46, 1
      %s52 = ssub.s32 %s46, 2
      %s53 = sadd.s32 %s46, 1
      %s54 = ssub.s32 %s46, %s53
      %p55 = scmp.eq.s32.totalorder %s54, 0
      %s57 = sadd.s32 %s56, 1
      %s58 = scalar_select %p55, %s56, %s57
      %p61 = pneg %p55
      %p62 = scmp.eq.s32.totalorder %s46, 1
      %p63 = por %p61, %p62
      %p64 = scmp.ne.s32.totalorder %s56, %s59
      %p65 = scmp.eq.s32.totalorder %s46, 0
      %p66 = por %p64, %p65
      %p67 = scmp.ne.s32.totalorder %s56, %s59
      %p68 = scmp.eq.s32.totalorder %s51, 1
      %p69 = por %p67, %p68
      %p70 = scmp.ne.s32.totalorder %s59, %s60
      %p71 = scmp.eq.s32.totalorder %s51, 0
      %p72 = por %p70, %p71
      %p73 = scmp.ne.s32.totalorder %s59, %s60
      %p74 = scmp.eq.s32.totalorder %s52, 1
      %p75 = por %p73, %p74
      %p77 = scmp.ne.s32.totalorder %s60, %s76
      %p78 = scmp.eq.s32.totalorder %s52, 0
      %p79 = por %p77, %p78
      %s80 = ssub.s32 %s46, %s53
      %p81 = scmp.eq.s32.totalorder %s80, 0
      %s83 = sadd.s32 %s82, 1
      %s84 = scalar_select %p81, %s82, %s83
      %p87 = pneg %p81
      %p88 = scmp.eq.s32.totalorder %s46, 1
      %p89 = por %p87, %p88
      %p90 = scmp.ne.s32.totalorder %s82, %s85
      %p91 = scmp.eq.s32.totalorder %s46, 0
      %p92 = por %p90, %p91
      %p93 = scmp.ne.s32.totalorder %s82, %s85
      %p94 = scmp.eq.s32.totalorder %s51, 1
      %p95 = por %p93, %p94
      %p96 = scmp.ne.s32.totalorder %s85, %s86
      %p97 = scmp.eq.s32.totalorder %s51, 0
      %p98 = por %p96, %p97
      %p99 = scmp.ne.s32.totalorder %s85, %s86
      %p100 = scmp.eq.s32.totalorder %s52, 1
      %p101 = por %p99, %p100
      %p103 = scmp.ne.s32.totalorder %s86, %s102
      %p104 = scmp.eq.s32.totalorder %s52, 0
      %p105 = por %p103, %p104
      %s106 = ssub.s32 %s46, %s53
      %p107 = scmp.eq.s32.totalorder %s106, 0
      %s109 = sadd.s32 %s108, 1
      %s110 = scalar_select %p107, %s108, %s109
      %p113 = pneg %p107
      %p114 = scmp.eq.s32.totalorder %s46, 1
      %p115 = por %p113, %p114
      %p116 = scmp.ne.s32.totalorder %s108, %s111
      %p117 = scmp.eq.s32.totalorder %s46, 0
      %p118 = por %p116, %p117
      %p119 = scmp.ne.s32.totalorder %s108, %s111
      %p120 = scmp.eq.s32.totalorder %s51, 1
      %p121 = por %p119, %p120
      %p122 = scmp.ne.s32.totalorder %s111, %s112
      %p123 = scmp.eq.s32.totalorder %s51, 0
      %p124 = por %p122, %p123
      %p125 = scmp.ne.s32.totalorder %s111, %s112
      %p126 = scmp.eq.s32.totalorder %s52, 1
      %p127 = por %p125, %p126
      %p129 = scmp.ne.s32.totalorder %s112, %s128
      %p130 = scmp.eq.s32.totalorder %s52, 0
      %p131 = por %p129, %p130
      %s133 = sadd.s32 %s132, 1
      %p136 = scmp.eq.s32.totalorder %s46, 1
      %p137 = scmp.ne.s32.totalorder %s132, %s134
      %p138 = scmp.eq.s32.totalorder %s46, 0
      %p139 = por %p137, %p138
      %p140 = scmp.ne.s32.totalorder %s132, %s134
      %p141 = scmp.eq.s32.totalorder %s51, 1
      %p142 = por %p140, %p141
      %p143 = scmp.ne.s32.totalorder %s134, %s135
      %p144 = scmp.eq.s32.totalorder %s51, 0
      %p145 = por %p143, %p144
      %p146 = scmp.ne.s32.totalorder %s134, %s135
      %p147 = scmp.eq.s32.totalorder %s52, 1
      %p148 = por %p146, %p147
      %p150 = scmp.ne.s32.totalorder %s135, %s149
      %p151 = scmp.eq.s32.totalorder %s52, 0
      %p152 = por %p150, %p151
      %s154 = sadd.s32 %s153, 1
      %p157 = scmp.eq.s32.totalorder %s46, 1
      %p158 = scmp.ne.s32.totalorder %s153, %s155
      %p159 = scmp.eq.s32.totalorder %s46, 0
      %p160 = por %p158, %p159
      %p161 = scmp.ne.s32.totalorder %s153, %s155
      %p162 = scmp.eq.s32.totalorder %s51, 1
      %p163 = por %p161, %p162
      %p164 = scmp.ne.s32.totalorder %s155, %s156
      %p165 = scmp.eq.s32.totalorder %s51, 0
      %p166 = por %p164, %p165
      %p167 = scmp.ne.s32.totalorder %s155, %s156
      %p168 = scmp.eq.s32.totalorder %s52, 1
      %p169 = por %p167, %p168
      %p171 = scmp.ne.s32.totalorder %s156, %s170
      %p172 = scmp.eq.s32.totalorder %s52, 0
      %p173 = por %p171, %p172
      %s175 = sadd.s32 %s174, 1
      %p178 = scmp.eq.s32.totalorder %s46, 1
      %p179 = scmp.ne.s32.totalorder %s174, %s176
      %p180 = scmp.eq.s32.totalorder %s46, 0
      %p181 = por %p179, %p180
      %p182 = scmp.ne.s32.totalorder %s174, %s176
      %p183 = scmp.eq.s32.totalorder %s51, 1
      %p184 = por %p182, %p183
      %p185 = scmp.ne.s32.totalorder %s176, %s177
      %p186 = scmp.eq.s32.totalorder %s51, 0
      %p187 = por %p185, %p186
      %p188 = scmp.ne.s32.totalorder %s176, %s177
      %p189 = scmp.eq.s32.totalorder %s52, 1
      %p190 = por %p188, %p189
      %p192 = scmp.ne.s32.totalorder %s177, %s191
      %p193 = scmp.eq.s32.totalorder %s52, 0
      %p194 = por %p192, %p193
      %s196 = sadd.s32 %s195, 1
      %p199 = scmp.eq.s32.totalorder %s46, 1
      %p200 = scmp.ne.s32.totalorder %s195, %s197
      %p201 = scmp.eq.s32.totalorder %s46, 0
      %p202 = por %p200, %p201
      %p203 = scmp.ne.s32.totalorder %s195, %s197
      %p204 = scmp.eq.s32.totalorder %s51, 1
      %p205 = por %p203, %p204
      %p206 = scmp.ne.s32.totalorder %s197, %s198
      %p207 = scmp.eq.s32.totalorder %s51, 0
      %p208 = por %p206, %p207
      %p209 = scmp.ne.s32.totalorder %s197, %s198
      %p210 = scmp.eq.s32.totalorder %s52, 1
      %p211 = por %p209, %p210
      %p213 = scmp.ne.s32.totalorder %s198, %s212
      %p214 = scmp.eq.s32.totalorder %s52, 0
      %p215 = por %p213, %p214
      %s217 = sadd.s32 %s216, 1
      %p220 = scmp.eq.s32.totalorder %s46, 1
      %p221 = scmp.ne.s32.totalorder %s216, %s218
      %p222 = scmp.eq.s32.totalorder %s46, 0
      %p223 = por %p221, %p222
      %p224 = scmp.ne.s32.totalorder %s216, %s218
      %p225 = scmp.eq.s32.totalorder %s51, 1
      %p226 = por %p224, %p225
      %p227 = scmp.ne.s32.totalorder %s218, %s219
      %p228 = scmp.eq.s32.totalorder %s51, 0
      %p229 = por %p227, %p228
      %p230 = scmp.ne.s32.totalorder %s218, %s219
      %p231 = scmp.eq.s32.totalorder %s52, 1
      %p232 = por %p230, %p231
      %p234 = scmp.ne.s32.totalorder %s219, %s233
      %p235 = scmp.eq.s32.totalorder %s52, 0
      %p236 = por %p234, %p235
      %s238 = sadd.s32 %s237, 1
      %p241 = scmp.eq.s32.totalorder %s46, 1
      %p242 = scmp.ne.s32.totalorder %s237, %s239
      %p243 = scmp.eq.s32.totalorder %s46, 0
      %p244 = por %p242, %p243
      %p245 = scmp.ne.s32.totalorder %s237, %s239
      %p246 = scmp.eq.s32.totalorder %s51, 1
      %p247 = por %p245, %p246
      %p248 = scmp.ne.s32.totalorder %s239, %s240
      %p249 = scmp.eq.s32.totalorder %s51, 0
      %p250 = por %p248, %p249
      %p251 = scmp.ne.s32.totalorder %s239, %s240
      %p252 = scmp.eq.s32.totalorder %s52, 1
      %p253 = por %p251, %p252
      %p255 = scmp.ne.s32.totalorder %s240, %s254
      %p256 = scmp.eq.s32.totalorder %s52, 0
      %p257 = por %p255, %p256
      %s259 = sadd.s32 %s258, 1
      %p262 = scmp.eq.s32.totalorder %s46, 1
      %p263 = scmp.ne.s32.totalorder %s258, %s260
      %p264 = scmp.eq.s32.totalorder %s46, 0
      %p265 = por %p263, %p264
      %p266 = scmp.ne.s32.totalorder %s258, %s260
      %p267 = scmp.eq.s32.totalorder %s51, 1
      %p268 = por %p266, %p267
      %p269 = scmp.ne.s32.totalorder %s260, %s261
      %p270 = scmp.eq.s32.totalorder %s51, 0
      %p271 = por %p269, %p270
      %p272 = scmp.ne.s32.totalorder %s260, %s261
      %p273 = scmp.eq.s32.totalorder %s52, 1
      %p274 = por %p272, %p273
      %p276 = scmp.ne.s32.totalorder %s261, %s275
      %p277 = scmp.eq.s32.totalorder %s52, 0
      %p278 = por %p276, %p277
      %s280 = sadd.s32 %s279, 1
      %p283 = scmp.eq.s32.totalorder %s46, 1
      %p284 = scmp.ne.s32.totalorder %s279, %s281
      %p285 = scmp.eq.s32.totalorder %s46, 0
      %p286 = por %p284, %p285
      %p287 = scmp.ne.s32.totalorder %s279, %s281
      %p288 = scmp.eq.s32.totalorder %s51, 1
      %p289 = por %p287, %p288
      %p290 = scmp.ne.s32.totalorder %s281, %s282
      %p291 = scmp.eq.s32.totalorder %s51, 0
      %p292 = por %p290, %p291
      %p293 = scmp.ne.s32.totalorder %s281, %s282
      %p294 = scmp.eq.s32.totalorder %s52, 1
      %p295 = por %p293, %p294
      %p297 = scmp.ne.s32.totalorder %s282, %s296
      %p298 = scmp.eq.s32.totalorder %s52, 0
      %p299 = por %p297, %p298
      %s301 = sadd.s32 %s300, 1
      %p304 = scmp.eq.s32.totalorder %s46, 1
      %p305 = scmp.ne.s32.totalorder %s300, %s302
      %p306 = scmp.eq.s32.totalorder %s46, 0
      %p307 = por %p305, %p306
      %p308 = scmp.ne.s32.totalorder %s300, %s302
      %p309 = scmp.eq.s32.totalorder %s51, 1
      %p310 = por %p308, %p309
      %p311 = scmp.ne.s32.totalorder %s302, %s303
      %p312 = scmp.eq.s32.totalorder %s51, 0
      %p313 = por %p311, %p312
      %p314 = scmp.ne.s32.totalorder %s302, %s303
      %p315 = scmp.eq.s32.totalorder %s52, 1
      %p316 = por %p314, %p315
      %p318 = scmp.ne.s32.totalorder %s303, %s317
      %p319 = scmp.eq.s32.totalorder %s52, 0
      %p320 = por %p318, %p319
      %s322 = sadd.s32 %s321, 1
      %p325 = scmp.eq.s32.totalorder %s46, 1
      %p326 = scmp.ne.s32.totalorder %s321, %s323
      %p327 = scmp.eq.s32.totalorder %s46, 0
      %p328 = por %p326, %p327
      %p329 = scmp.ne.s32.totalorder %s321, %s323
      %p330 = scmp.eq.s32.totalorder %s51, 1
      %p331 = por %p329, %p330
      %p332 = scmp.ne.s32.totalorder %s323, %s324
      %p333 = scmp.eq.s32.totalorder %s51, 0
      %p334 = por %p332, %p333
      %p335 = scmp.ne.s32.totalorder %s323, %s324
      %p336 = scmp.eq.s32.totalorder %s52, 1
      %p337 = por %p335, %p336
      %p339 = scmp.ne.s32.totalorder %s324, %s338
      %p340 = scmp.eq.s32.totalorder %s52, 0
      %p341 = por %p339, %p340
      %s343 = sadd.s32 %s342, 1
      %p346 = scmp.eq.s32.totalorder %s46, 1
      %p347 = scmp.ne.s32.totalorder %s342, %s344
      %p348 = scmp.eq.s32.totalorder %s46, 0
      %p349 = por %p347, %p348
      %p350 = scmp.ne.s32.totalorder %s342, %s344
      %p351 = scmp.eq.s32.totalorder %s51, 1
      %p352 = por %p350, %p351
      %p353 = scmp.ne.s32.totalorder %s344, %s345
      %p354 = scmp.eq.s32.totalorder %s51, 0
      %p355 = por %p353, %p354
      %p356 = scmp.ne.s32.totalorder %s344, %s345
      %p357 = scmp.eq.s32.totalorder %s52, 1
      %p358 = por %p356, %p357
      %p360 = scmp.ne.s32.totalorder %s345, %s359
      %p361 = scmp.eq.s32.totalorder %s52, 0
      %p362 = por %p360, %p361
      %s364 = sadd.s32 %s363, 1
      %p367 = scmp.eq.s32.totalorder %s46, 1
      %p368 = scmp.ne.s32.totalorder %s363, %s365
      %p369 = scmp.eq.s32.totalorder %s46, 0
      %p370 = por %p368, %p369
      %p371 = scmp.ne.s32.totalorder %s363, %s365
      %p372 = scmp.eq.s32.totalorder %s51, 1
      %p373 = por %p371, %p372
      %p374 = scmp.ne.s32.totalorder %s365, %s366
      %p375 = scmp.eq.s32.totalorder %s51, 0
      %p376 = por %p374, %p375
      %p377 = scmp.ne.s32.totalorder %s365, %s366
      %p378 = scmp.eq.s32.totalorder %s52, 1
      %p379 = por %p377, %p378
      %p381 = scmp.ne.s32.totalorder %s366, %s380
      %p382 = scmp.eq.s32.totalorder %s52, 0
      %p383 = por %p381, %p382
      %s385 = sadd.s32 %s384, 1
      %p388 = scmp.eq.s32.totalorder %s46, 1
      %p389 = scmp.ne.s32.totalorder %s384, %s386
      %p390 = scmp.eq.s32.totalorder %s46, 0
      %p391 = por %p389, %p390
      %p392 = scmp.ne.s32.totalorder %s384, %s386
      %p393 = scmp.eq.s32.totalorder %s51, 1
      %p394 = por %p392, %p393
      %p395 = scmp.ne.s32.totalorder %s386, %s387
      %p396 = scmp.eq.s32.totalorder %s51, 0
      %p397 = por %p395, %p396
      %p398 = scmp.ne.s32.totalorder %s386, %s387
      %p399 = scmp.eq.s32.totalorder %s52, 1
      %p400 = por %p398, %p399
      %p402 = scmp.ne.s32.totalorder %s387, %s401
      %p403 = scmp.eq.s32.totalorder %s52, 0
      %p404 = por %p402, %p403
      %s406 = sadd.s32 %s405, 1
      %p409 = scmp.eq.s32.totalorder %s46, 1
      %p410 = scmp.ne.s32.totalorder %s405, %s407
      %p411 = scmp.eq.s32.totalorder %s46, 0
      %p412 = por %p410, %p411
      %p413 = scmp.ne.s32.totalorder %s405, %s407
      %p414 = scmp.eq.s32.totalorder %s51, 1
      %p415 = por %p413, %p414
      %p416 = scmp.ne.s32.totalorder %s407, %s408
      %p417 = scmp.eq.s32.totalorder %s51, 0
      %p418 = por %p416, %p417
      %p419 = scmp.ne.s32.totalorder %s407, %s408
      %p420 = scmp.eq.s32.totalorder %s52, 1
      %p421 = por %p419, %p420
      %p423 = scmp.ne.s32.totalorder %s408, %s422
      %p424 = scmp.eq.s32.totalorder %s52, 0
      %p425 = por %p423, %p424
      %s427 = sadd.s32 %s426, 1
      %p430 = scmp.eq.s32.totalorder %s46, 1
      %p431 = scmp.ne.s32.totalorder %s426, %s428
      %p432 = scmp.eq.s32.totalorder %s46, 0
      %p433 = por %p431, %p432
      %p434 = scmp.ne.s32.totalorder %s426, %s428
      %p435 = scmp.eq.s32.totalorder %s51, 1
      %p436 = por %p434, %p435
      %p437 = scmp.ne.s32.totalorder %s428, %s429
      %p438 = scmp.eq.s32.totalorder %s51, 0
      %p439 = por %p437, %p438
      %p440 = scmp.ne.s32.totalorder %s428, %s429
      %p441 = scmp.eq.s32.totalorder %s52, 1
      %p442 = por %p440, %p441
      %p444 = scmp.ne.s32.totalorder %s429, %s443
      %p445 = scmp.eq.s32.totalorder %s52, 0
      %p446 = por %p444, %p445
      %s448 = sadd.s32 %s447, 1
      %p451 = scmp.eq.s32.totalorder %s46, 1
      %p452 = scmp.ne.s32.totalorder %s447, %s449
      %p453 = scmp.eq.s32.totalorder %s46, 0
      %p454 = por %p452, %p453
      %p455 = scmp.ne.s32.totalorder %s447, %s449
      %p456 = scmp.eq.s32.totalorder %s51, 1
      %p457 = por %p455, %p456
      %p458 = scmp.ne.s32.totalorder %s449, %s450
      %p459 = scmp.eq.s32.totalorder %s51, 0
      %p460 = por %p458, %p459
      %p461 = scmp.ne.s32.totalorder %s449, %s450
      %p462 = scmp.eq.s32.totalorder %s52, 1
      %p463 = por %p461, %p462
      %p465 = scmp.ne.s32.totalorder %s450, %s464
      %p466 = scmp.eq.s32.totalorder %s52, 0
      %p467 = por %p465, %p466
      %s469 = sadd.s32 %s468, 1
      %p472 = scmp.eq.s32.totalorder %s46, 1
      %p473 = scmp.ne.s32.totalorder %s468, %s470
      %p474 = scmp.eq.s32.totalorder %s46, 0
      %p475 = por %p473, %p474
      %p476 = scmp.ne.s32.totalorder %s468, %s470
      %p477 = scmp.eq.s32.totalorder %s51, 1
      %p478 = por %p476, %p477
      %p479 = scmp.ne.s32.totalorder %s470, %s471
      %p480 = scmp.eq.s32.totalorder %s51, 0
      %p481 = por %p479, %p480
      %p482 = scmp.ne.s32.totalorder %s470, %s471
      %p483 = scmp.eq.s32.totalorder %s52, 1
      %p484 = por %p482, %p483
      %p486 = scmp.ne.s32.totalorder %s471, %s485
      %p487 = scmp.eq.s32.totalorder %s52, 0
      %p488 = por %p486, %p487
      %s490 = sadd.s32 %s489, 1
      %p493 = scmp.eq.s32.totalorder %s46, 1
      %p494 = scmp.ne.s32.totalorder %s489, %s491
      %p495 = scmp.eq.s32.totalorder %s46, 0
      %p496 = por %p494, %p495
      %p497 = scmp.ne.s32.totalorder %s489, %s491
      %p498 = scmp.eq.s32.totalorder %s51, 1
      %p499 = por %p497, %p498
      %p500 = scmp.ne.s32.totalorder %s491, %s492
      %p501 = scmp.eq.s32.totalorder %s51, 0
      %p502 = por %p500, %p501
      %p503 = scmp.ne.s32.totalorder %s491, %s492
      %p504 = scmp.eq.s32.totalorder %s52, 1
      %p505 = por %p503, %p504
      %p507 = scmp.ne.s32.totalorder %s492, %s506
      %p508 = scmp.eq.s32.totalorder %s52, 0
      %p509 = por %p507, %p508
      %s511 = sadd.s32 %s510, 1
      %p514 = scmp.eq.s32.totalorder %s46, 1
      %p515 = scmp.ne.s32.totalorder %s510, %s512
      %p516 = scmp.eq.s32.totalorder %s46, 0
      %p517 = por %p515, %p516
      %p518 = scmp.ne.s32.totalorder %s510, %s512
      %p519 = scmp.eq.s32.totalorder %s51, 1
      %p520 = por %p518, %p519
      %p521 = scmp.ne.s32.totalorder %s512, %s513
      %p522 = scmp.eq.s32.totalorder %s51, 0
      %p523 = por %p521, %p522
      %p524 = scmp.ne.s32.totalorder %s512, %s513
      %p525 = scmp.eq.s32.totalorder %s52, 1
      %p526 = por %p524, %p525
      %p528 = scmp.ne.s32.totalorder %s513, %s527
      %p529 = scmp.eq.s32.totalorder %s52, 0
      %p530 = por %p528, %p529
      %s532 = sadd.s32 %s531, 1
      %p535 = scmp.eq.s32.totalorder %s46, 1
      %p536 = scmp.ne.s32.totalorder %s531, %s533
      %p537 = scmp.eq.s32.totalorder %s46, 0
      %p538 = por %p536, %p537
      %p539 = scmp.ne.s32.totalorder %s531, %s533
      %p540 = scmp.eq.s32.totalorder %s51, 1
      %p541 = por %p539, %p540
      %p542 = scmp.ne.s32.totalorder %s533, %s534
      %p543 = scmp.eq.s32.totalorder %s51, 0
      %p544 = por %p542, %p543
      %p545 = scmp.ne.s32.totalorder %s533, %s534
      %p546 = scmp.eq.s32.totalorder %s52, 1
      %p547 = por %p545, %p546
      %p549 = scmp.ne.s32.totalorder %s534, %s548
      %p550 = scmp.eq.s32.totalorder %s52, 0
      %p551 = por %p549, %p550
      %s552 = ssub.s32 %s46, %s53
      %p553 = scmp.eq.s32.totalorder %s552, 0
      %s555 = sadd.s32 %s554, 1
      %s556 = scalar_select %p553, %s554, %s555
      %p559 = pneg %p553
      %p560 = scmp.eq.s32.totalorder %s46, 1
      %p561 = por %p559, %p560
      %p562 = scmp.ne.s32.totalorder %s554, %s557
      %p563 = scmp.eq.s32.totalorder %s46, 0
      %p564 = por %p562, %p563
      %p565 = scmp.ne.s32.totalorder %s554, %s557
      %p566 = scmp.eq.s32.totalorder %s51, 1
      %p567 = por %p565, %p566
      %p568 = scmp.ne.s32.totalorder %s557, %s558
      %p569 = scmp.eq.s32.totalorder %s51, 0
      %p570 = por %p568, %p569
      %p571 = scmp.ne.s32.totalorder %s557, %s558
      %p572 = scmp.eq.s32.totalorder %s52, 1
      %p573 = por %p571, %p572
      %p575 = scmp.ne.s32.totalorder %s558, %s574
      %p576 = scmp.eq.s32.totalorder %s52, 0
      %p577 = por %p575, %p576
      %s578 = ssub.s32 %s46, %s53
      %p579 = scmp.eq.s32.totalorder %s578, 0
      %s581 = sadd.s32 %s580, 1
      %s582 = scalar_select %p579, %s580, %s581
      %p585 = pneg %p579
      %p586 = scmp.eq.s32.totalorder %s46, 1
      %p587 = por %p585, %p586
      %p588 = scmp.ne.s32.totalorder %s580, %s583
      %p589 = scmp.eq.s32.totalorder %s46, 0
      %p590 = por %p588, %p589
      %p591 = scmp.ne.s32.totalorder %s580, %s583
      %p592 = scmp.eq.s32.totalorder %s51, 1
      %p593 = por %p591, %p592
      %p594 = scmp.ne.s32.totalorder %s583, %s584
      %p595 = scmp.eq.s32.totalorder %s51, 0
      %p596 = por %p594, %p595
      %p597 = scmp.ne.s32.totalorder %s583, %s584
      %p598 = scmp.eq.s32.totalorder %s52, 1
      %p599 = por %p597, %p598
      %p601 = scmp.ne.s32.totalorder %s584, %s600
      %p602 = scmp.eq.s32.totalorder %s52, 0
      %p603 = por %p601, %p602
      %p604 = scmp.le.s32.totalorder 1, %s46
      %p605 = scmp.lt.s32.totalorder %s46, 3
      %p606 = pnand %p604, %p605
      %p607 = pneg %p606
      // Predicated region
      $region9: #{tpu_custom_call.1} parent=5 // pred_check
        _
      $region10: #{tpu_custom_call.1} parent=5 // pred_check_branch
        %609 = sbr.rel (%p606) target = $region12
      $region11: #{tpu_custom_call.1} parent=5 // pred_region
        %s610 = ssub.s32 %s46, 1
        // Predicated region
        $region13: #{tpu_custom_call.1} parent=11 // pred_check
          %p611 = pneg %p145
        $region14: #{tpu_custom_call.1} parent=11 // pred_check_branch
          %613 = sbr.rel (%p611) target = $region16
        $region15: #{tpu_custom_call.1} parent=11 // pred_region
          _
        $region16: #{tpu_custom_call.1} parent=11 // pred_fallthru
          _
        // Predicated region
        $region17: #{tpu_custom_call.1} parent=11 // pred_check
          %p614 = pneg %p166
        $region18: #{tpu_custom_call.1} parent=11 // pred_check_branch
          %616 = sbr.rel (%p614) target = $region20
        $region19: #{tpu_custom_call.1} parent=11 // pred_region
          %s618 = ssub.s32 16, 16
          %619 = vsyncadd [#allocation7], %s618
          %s621 = sshll.u32 [#allocation8], 4
          %s622 = int_to_ptr.vmem [resolvable:$true] %s621
          %624 = dma.hbm_to_vmem [thread:$0]  %s4, 16, %s622, [#allocation7]
        $region20: #{tpu_custom_call.1} parent=11 // pred_fallthru
          _
        // Predicated region
        $region21: #{tpu_custom_call.1} parent=11 // pred_check
          %p625 = pneg %p187
        $region22: #{tpu_custom_call.1} parent=11 // pred_check_branch
          %627 = sbr.rel (%p625) target = $region24
        $region23: #{tpu_custom_call.1} parent=11 // pred_region
          _
        $region24: #{tpu_custom_call.1} parent=11 // pred_fallthru
          _
        // Predicated region
        $region25: #{tpu_custom_call.1} parent=11 // pred_check
          %p628 = pneg %p208
        $region26: #{tpu_custom_call.1} parent=11 // pred_check_branch
          %630 = sbr.rel (%p628) target = $region28
        $region27: #{tpu_custom_call.1} parent=11 // pred_region
          %s632 = ssub.s32 16, 16
          %633 = vsyncadd [#allocation10], %s632
          %s635 = sshll.u32 [#allocation9], 4
          %s636 = int_to_ptr.vmem [resolvable:$true] %s635
          %638 = dma.hbm_to_vmem [thread:$0]  %s6, 16, %s636, [#allocation10]
        $region28: #{tpu_custom_call.1} parent=11 // pred_fallthru
          _
        // Predicated region
        $region29: #{tpu_custom_call.1} parent=11 // pred_check
          %p639 = pneg %p229
        $region30: #{tpu_custom_call.1} parent=11 // pred_check_branch
          %641 = sbr.rel (%p639) target = $region32
        $region31: #{tpu_custom_call.1} parent=11 // pred_region
          _
        $region32: #{tpu_custom_call.1} parent=11 // pred_fallthru
          _
        // Predicated region
        $region33: #{tpu_custom_call.1} parent=11 // pred_check
          %p642 = pneg %p250
        $region34: #{tpu_custom_call.1} parent=11 // pred_check_branch
          %644 = sbr.rel (%p642) target = $region36
        $region35: #{tpu_custom_call.1} parent=11 // pred_region
          %s646 = ssub.s32 16, 16
          %647 = vsyncadd [#allocation10], %s646
          %s649 = sshll.u32 [#allocation11], 4
          %s650 = int_to_ptr.vmem [resolvable:$true] %s649
          %652 = dma.hbm_to_vmem [thread:$0]  %s8, 16, %s650, [#allocation10]
        $region36: #{tpu_custom_call.1} parent=11 // pred_fallthru
          _
        // Predicated region
        $region37: #{tpu_custom_call.1} parent=11 // pred_check
          %p653 = pneg %p271
        $region38: #{tpu_custom_call.1} parent=11 // pred_check_branch
          %655 = sbr.rel (%p653) target = $region40
        $region39: #{tpu_custom_call.1} parent=11 // pred_region
          %s657 = ssub.s32 16, 16
          %658 = vsyncadd [#allocation13], %s657
          %s660 = sshll.u32 [#allocation12], 4
          %s661 = int_to_ptr.vmem [resolvable:$true] %s660
          %663 = dma.hbm_to_vmem [thread:$0]  %s9, 16, %s661, [#allocation13]
        $region40: #{tpu_custom_call.1} parent=11 // pred_fallthru
          _
        // Predicated region
        $region41: #{tpu_custom_call.1} parent=11 // pred_check
          %p664 = pneg %p292
        $region42: #{tpu_custom_call.1} parent=11 // pred_check_branch
          %666 = sbr.rel (%p664) target = $region44
        $region43: #{tpu_custom_call.1} parent=11 // pred_region
          %s668 = ssub.s32 16, 16
          %669 = vsyncadd [#allocation13], %s668
          %s671 = sshll.u32 [#allocation14], 4
          %s672 = int_to_ptr.vmem [resolvable:$true] %s671
          %674 = dma.hbm_to_vmem [thread:$0]  %s10, 16, %s672, [#allocation13]
        $region44: #{tpu_custom_call.1} parent=11 // pred_fallthru
          _
        // Predicated region
        $region45: #{tpu_custom_call.1} parent=11 // pred_check
          %p675 = pneg %p313
        $region46: #{tpu_custom_call.1} parent=11 // pred_check_branch
          %677 = sbr.rel (%p675) target = $region48
        $region47: #{tpu_custom_call.1} parent=11 // pred_region
          _
        $region48: #{tpu_custom_call.1} parent=11 // pred_fallthru
          _
        // Predicated region
        $region49: #{tpu_custom_call.1} parent=11 // pred_check
          %p678 = pneg %p334
        $region50: #{tpu_custom_call.1} parent=11 // pred_check_branch
          %680 = sbr.rel (%p678) target = $region52
        $region51: #{tpu_custom_call.1} parent=11 // pred_region
          %s682 = ssub.s32 16, 16
          %683 = vsyncadd [#allocation16], %s682
          %s685 = sshll.u32 [#allocation15], 4
          %s686 = int_to_ptr.vmem [resolvable:$true] %s685
          %688 = dma.hbm_to_vmem [thread:$0]  %s12, 16, %s686, [#allocation16]
        $region52: #{tpu_custom_call.1} parent=11 // pred_fallthru
          _
        // Predicated region
        $region53: #{tpu_custom_call.1} parent=11 // pred_check
          %p689 = pneg %p355
        $region54: #{tpu_custom_call.1} parent=11 // pred_check_branch
          %691 = sbr.rel (%p689) target = $region56
        $region55: #{tpu_custom_call.1} parent=11 // pred_region
          _
        $region56: #{tpu_custom_call.1} parent=11 // pred_fallthru
          _
        // Predicated region
        $region57: #{tpu_custom_call.1} parent=11 // pred_check
          %p692 = pneg %p376
        $region58: #{tpu_custom_call.1} parent=11 // pred_check_branch
          %694 = sbr.rel (%p692) target = $region60
        $region59: #{tpu_custom_call.1} parent=11 // pred_region
          _
        $region60: #{tpu_custom_call.1} parent=11 // pred_fallthru
          _
        // Predicated region
        $region61: #{tpu_custom_call.1} parent=11 // pred_check
          %p695 = pneg %p397
        $region62: #{tpu_custom_call.1} parent=11 // pred_check_branch
          %697 = sbr.rel (%p695) target = $region64
        $region63: #{tpu_custom_call.1} parent=11 // pred_region
          _
        $region64: #{tpu_custom_call.1} parent=11 // pred_fallthru
          _
        // Predicated region
        $region65: #{tpu_custom_call.1} parent=11 // pred_check
          %p698 = pneg %p418
        $region66: #{tpu_custom_call.1} parent=11 // pred_check_branch
          %700 = sbr.rel (%p698) target = $region68
        $region67: #{tpu_custom_call.1} parent=11 // pred_region
          _
        $region68: #{tpu_custom_call.1} parent=11 // pred_fallthru
          _
        // Predicated region
        $region69: #{tpu_custom_call.1} parent=11 // pred_check
          %p701 = pneg %p439
        $region70: #{tpu_custom_call.1} parent=11 // pred_check_branch
          %703 = sbr.rel (%p701) target = $region72
        $region71: #{tpu_custom_call.1} parent=11 // pred_region
          _
        $region72: #{tpu_custom_call.1} parent=11 // pred_fallthru
          _
        // Predicated region
        $region73: #{tpu_custom_call.1} parent=11 // pred_check
          %p704 = pneg %p460
        $region74: #{tpu_custom_call.1} parent=11 // pred_check_branch
          %706 = sbr.rel (%p704) target = $region76
        $region75: #{tpu_custom_call.1} parent=11 // pred_region
          _
        $region76: #{tpu_custom_call.1} parent=11 // pred_fallthru
          _
        // Predicated region
        $region77: #{tpu_custom_call.1} parent=11 // pred_check
          %p707 = pneg %p481
        $region78: #{tpu_custom_call.1} parent=11 // pred_check_branch
          %709 = sbr.rel (%p707) target = $region80
        $region79: #{tpu_custom_call.1} parent=11 // pred_region
          _
        $region80: #{tpu_custom_call.1} parent=11 // pred_fallthru
          _
        // Predicated region
        $region81: #{tpu_custom_call.1} parent=11 // pred_check
          %p710 = pneg %p502
        $region82: #{tpu_custom_call.1} parent=11 // pred_check_branch
          %712 = sbr.rel (%p710) target = $region84
        $region83: #{tpu_custom_call.1} parent=11 // pred_region
          _
        $region84: #{tpu_custom_call.1} parent=11 // pred_fallthru
          _
        // Predicated region
        $region85: #{tpu_custom_call.1} parent=11 // pred_check
          %p713 = pneg %p523
        $region86: #{tpu_custom_call.1} parent=11 // pred_check_branch
          %715 = sbr.rel (%p713) target = $region88
        $region87: #{tpu_custom_call.1} parent=11 // pred_region
          _
        $region88: #{tpu_custom_call.1} parent=11 // pred_fallthru
          _
        // Predicated region
        $region89: #{tpu_custom_call.1} parent=11 // pred_check
          %p716 = pneg %p544
        $region90: #{tpu_custom_call.1} parent=11 // pred_check_branch
          %718 = sbr.rel (%p716) target = $region92
        $region91: #{tpu_custom_call.1} parent=11 // pred_region
          _
        $region92: #{tpu_custom_call.1} parent=11 // pred_fallthru
          _
      $region12: #{tpu_custom_call.1} parent=5 // pred_fallthru
        _
      %p719 = scmp.lt.s32.totalorder %s46, 2
      // Predicated region
      $region93: #{tpu_custom_call.1} parent=5 // pred_check
        %p720 = pneg %p719
      $region94: #{tpu_custom_call.1} parent=5 // pred_check_branch
        %722 = sbr.rel (%p720) target = $region96
      $region95: #{tpu_custom_call.1} parent=5 // pred_region
        // Predicated region
        $region97: #{tpu_custom_call.1} parent=95 // pred_check
          %p723 = pneg %p66
        $region98: #{tpu_custom_call.1} parent=95 // pred_check_branch
          %725 = sbr.rel (%p723) target = $region100
        $region99: #{tpu_custom_call.1} parent=95 // pred_region
          %p726 = scmp.lt.s32.totalorder %s46, 1
          %s727 = scalar_select %p726, %s46, 1
          %s728 = smul.addr %s727, 8
          %s729 = scalar_lea.vmem %s0, %s728
        $region100: #{tpu_custom_call.1} parent=95 // pred_fallthru
          _
        // Predicated region
        $region101: #{tpu_custom_call.1} parent=95 // pred_check
          %p730 = pneg %p92
        $region102: #{tpu_custom_call.1} parent=95 // pred_check_branch
          %732 = sbr.rel (%p730) target = $region104
        $region103: #{tpu_custom_call.1} parent=95 // pred_region
          %s733 = sand.u32 %s82, 1
          %s734 = scalar_lea.sflag [#allocation4], %s733
          %s735 = sand.u32 %s82, 1
          %s736 = scalar_lea.vmem [#allocation3], %s735
          %s738 = ssub.s32 16, 16
          %739 = vsyncadd %s734, %s738
          %s740 = smul.addr %s46, 16
          %s741 = scalar_lea.hbm %s1, %s740
          %s743 = sshll.u32 %s736, 4
          %s744 = int_to_ptr.vmem [resolvable:$true] %s743
          %746 = dma.hbm_to_vmem [thread:$0]  %s741, 16, %s744, %s734
        $region104: #{tpu_custom_call.1} parent=95 // pred_fallthru
          _
        // Predicated region
        $region105: #{tpu_custom_call.1} parent=95 // pred_check
          %p747 = pneg %p118
        $region106: #{tpu_custom_call.1} parent=95 // pred_check_branch
          %749 = sbr.rel (%p747) target = $region108
        $region107: #{tpu_custom_call.1} parent=95 // pred_region
          %s750 = sand.u32 %s46, 1
          %s751 = scalar_lea.sflag [#allocation7], %s750
          %s752 = sand.u32 %s108, 1
          %s753 = smul.addr %s752, 4
          %s754 = scalar_lea.vmem [#allocation6], %s753
          %s756 = ssub.s32 64, 64
          %757 = vsyncadd %s751, %s756
          %s758 = smul.addr %s46, 64
          %s759 = scalar_lea.hbm %s2, %s758
          %s761 = sshll.u32 %s754, 4
          %s762 = int_to_ptr.vmem [resolvable:$true] %s761
          %764 = dma.hbm_to_vmem [thread:$0]  %s759, 64, %s762, %s751
        $region108: #{tpu_custom_call.1} parent=95 // pred_fallthru
          _
      $region96: #{tpu_custom_call.1} parent=5 // pred_fallthru
        _
      %p765 = scmp.le.s32.totalorder 1, %s46
      %p766 = scmp.lt.s32.totalorder %s46, 3
      %p767 = pnand %p765, %p766
      %p768 = pneg %p767
      // Predicated region
      $region109: #{tpu_custom_call.1} parent=5 // pred_check
        _
      $region110: #{tpu_custom_call.1} parent=5 // pred_check_branch
        %770 = sbr.rel (%p767) target = $region112
      $region111: #{tpu_custom_call.1} parent=5 // pred_region
        %s771 = ssub.s32 %s46, 1
        %s772 = sand.u32 %s85, 1
        %s773 = scalar_lea.sflag [#allocation4], %s772
        %s774 = sand.u32 %s85, 1
        %s775 = scalar_lea.vmem [#allocation3], %s774
        // Predicated region
        $region113: #{tpu_custom_call.1} parent=111 // pred_check
          %p776 = pneg %p98
        $region114: #{tpu_custom_call.1} parent=111 // pred_check_branch
          %778 = sbr.rel (%p776) target = $region116
        $region115: #{tpu_custom_call.1} parent=111 // pred_region
          %779 = dma.done %s773, 16
        $region116: #{tpu_custom_call.1} parent=111 // pred_fallthru
          _
        %s780 = sand.u32 %s51, 1
        %s781 = scalar_lea.sflag [#allocation7], %s780
        %s782 = sand.u32 %s111, 1
        %s783 = smul.addr %s782, 4
        %s784 = scalar_lea.vmem [#allocation6], %s783
        // Predicated region
        $region117: #{tpu_custom_call.1} parent=111 // pred_check
          %p785 = pneg %p124
        $region118: #{tpu_custom_call.1} parent=111 // pred_check_branch
          %787 = sbr.rel (%p785) target = $region120
        $region119: #{tpu_custom_call.1} parent=111 // pred_region
          %788 = dma.done %s781, 64
        $region120: #{tpu_custom_call.1} parent=111 // pred_fallthru
          _
        // Predicated region
        $region121: #{tpu_custom_call.1} parent=111 // pred_check
          %p789 = pneg %p166
        $region122: #{tpu_custom_call.1} parent=111 // pred_check_branch
          %791 = sbr.rel (%p789) target = $region124
        $region123: #{tpu_custom_call.1} parent=111 // pred_region
          %792 = dma.done [#allocation7], 16
        $region124: #{tpu_custom_call.1} parent=111 // pred_fallthru
          _
        // Predicated region
        $region125: #{tpu_custom_call.1} parent=111 // pred_check
          %p793 = pneg %p208
        $region126: #{tpu_custom_call.1} parent=111 // pred_check_branch
          %795 = sbr.rel (%p793) target = $region128
        $region127: #{tpu_custom_call.1} parent=111 // pred_region
          %796 = dma.done [#allocation10], 16
        $region128: #{tpu_custom_call.1} parent=111 // pred_fallthru
          _
        // Predicated region
        $region129: #{tpu_custom_call.1} parent=111 // pred_check
          %p797 = pneg %p250
        $region130: #{tpu_custom_call.1} parent=111 // pred_check_branch
          %799 = sbr.rel (%p797) target = $region132
        $region131: #{tpu_custom_call.1} parent=111 // pred_region
          %800 = dma.done [#allocation10], 16
        $region132: #{tpu_custom_call.1} parent=111 // pred_fallthru
          _
        // Predicated region
        $region133: #{tpu_custom_call.1} parent=111 // pred_check
          %p801 = pneg %p271
        $region134: #{tpu_custom_call.1} parent=111 // pred_check_branch
          %803 = sbr.rel (%p801) target = $region136
        $region135: #{tpu_custom_call.1} parent=111 // pred_region
          %804 = dma.done [#allocation13], 16
        $region136: #{tpu_custom_call.1} parent=111 // pred_fallthru
          _
        // Predicated region
        $region137: #{tpu_custom_call.1} parent=111 // pred_check
          %p805 = pneg %p292
        $region138: #{tpu_custom_call.1} parent=111 // pred_check_branch
          %807 = sbr.rel (%p805) target = $region140
        $region139: #{tpu_custom_call.1} parent=111 // pred_region
          %808 = dma.done [#allocation13], 16
        $region140: #{tpu_custom_call.1} parent=111 // pred_fallthru
          _
        // Predicated region
        $region141: #{tpu_custom_call.1} parent=111 // pred_check
          %p809 = pneg %p334
        $region142: #{tpu_custom_call.1} parent=111 // pred_check_branch
          %811 = sbr.rel (%p809) target = $region144
        $region143: #{tpu_custom_call.1} parent=111 // pred_region
          %812 = dma.done [#allocation16], 16
        $region144: #{tpu_custom_call.1} parent=111 // pred_fallthru
          _
        %p813 = scmp.lt.s32.totalorder %s51, 1
        %s814 = scalar_select %p813, %s51, 1
        %s815 = smul.addr %s814, 8
        %s816 = scalar_lea.vmem %s0, %s815
        %p817 = pneg %p72
        %p818 = pneg %p69
        %s819 = sand.u32 %s85, 1
        %s820 = scalar_lea.sflag [#allocation4], %s819
        %s821 = sand.u32 %s85, 1
        %s822 = scalar_lea.vmem [#allocation3], %s821
        %p823 = pneg %p98
        %p824 = pneg %p95
        %s825 = sand.u32 %s51, 1
        %s826 = scalar_lea.sflag [#allocation7], %s825
        %s827 = sand.u32 %s111, 1
        %s828 = smul.addr %s827, 4
        %s829 = scalar_lea.vmem [#allocation6], %s828
        %p830 = pneg %p124
        %p831 = pneg %p121
        %p832 = pneg %p145
        %p833 = pneg %p142
        %p834 = pneg %p166
        %p835 = pneg %p163
        %p836 = pneg %p187
        %p837 = pneg %p184
        %p838 = pneg %p208
        %p839 = pneg %p205
        %p840 = pneg %p229
        %p841 = pneg %p226
        %p842 = pneg %p250
        %p843 = pneg %p247
        %p844 = pneg %p271
        %p845 = pneg %p268
        %p846 = pneg %p292
        %p847 = pneg %p289
        %p848 = pneg %p313
        %p849 = pneg %p310
        %p850 = pneg %p334
        %p851 = pneg %p331
        %p852 = pneg %p355
        %p853 = pneg %p352
        %p854 = pneg %p376
        %p855 = pneg %p373
        %p856 = pneg %p397
        %p857 = pneg %p394
        %p858 = pneg %p418
        %p859 = pneg %p415
        %p860 = pneg %p439
        %p861 = pneg %p436
        %p862 = pneg %p460
        %p863 = pneg %p457
        %p864 = pneg %p481
        %p865 = pneg %p478
        %p866 = pneg %p502
        %p867 = pneg %p499
        %p868 = pneg %p523
        %p869 = pneg %p520
        %p870 = pneg %p544
        %p871 = pneg %p541
        %p872 = pneg %p570
        %p873 = pneg %p567
        %s874 = sand.u32 %s557, 1
        %s875 = scalar_lea.sflag [#allocation5], %s874
        %s876 = sand.u32 %s557, 1
        %s877 = smul.addr %s876, 8
        %s878 = scalar_lea.vmem [#allocation17], %s877
        %p879 = pneg %p596
        %p880 = pneg %p593
        %s881 = sand.u32 %s583, 1
        %s882 = scalar_lea.sflag [#allocation19], %s881
        %s883 = sand.u32 %s583, 1
        %s884 = smul.addr %s883, 16
        %s885 = scalar_lea.vmem [#allocation18], %s884
        %p886 = scmp.lt.s32.totalorder %s51, 1
        %s887 = scalar_select %p886, %s51, 1
        %s888 = smul.addr %s887, 8
        %s889 = scalar_lea.vmem %s0, %s888
        %v891 = vld [vmem:[%s889] sm:$0xff]
        %v892 = vld [vmem:[%s775] sm:$0x1]
        %v893 = vsub.f32 1.0, %v892
        %v894 = vmul.f32 %v893, -1e+09
        %v896 = vlaneseq
        %v897 = vshrl.u32 %v896, 7
        %v898 = vsub.s32 0, %v897
        %v899 = vrot.slane %v894, %v898
        %v901 = vld [vmem:[%s3] sm:$0x1]
        %v902 = vld [vmem:[#allocation8] sm:$0x1]
        %vm903 = vcmask 261120
        %v904 = vsel %vm903, %v891, 0.0
        %905 = vadd.xlane.f32.xlu0 %v904
        %v906 = vpop.xlane.xlu0 %905
        %v907 = vrcp.pop 32.0
        %v908 = vmul.f32 %v906, %v907
        %v909 = vsub.f32 %v891, %v908
        %v910 = vmul.f32 %v909, %v909
        %v911 = vsel %vm903, %v910, 0.0
        %912 = vadd.xlane.f32.xlu0 %v911
        %v913 = vpop.xlane.xlu0 %912
        %v914 = vmul.f32 %v913, %v907
        %v915 = vadd.f32 %v914, 1e-05
        %v916 = vrsqrt.pop %v915
        %v917 = vmul.f32 %v909, %v916
        %v919 = vlaneseq
        %v920 = vshrl.u32 %v919, 7
        %v921 = vsub.s32 0, %v920
        %v922 = vrot.slane %v901, %v921
        %v924 = vmul.f32 %v917, %v922
        %v926 = vlaneseq
        %v927 = vshrl.u32 %v926, 7
        %v928 = vsub.s32 0, %v927
        %v929 = vrot.slane %v902, %v928
        %v931 = vadd.f32 %v924, %v929
        %v932 = vpack.c.bf16 %v931, %v931
        %v933 = vld [vmem:[%s5] sm:$0xf]
        %v934 = vld [vmem:[%s5 + $0x4] sm:$0xf]
        %v935 = vld [vmem:[%s5 + $0x8] sm:$0xf]
        %v936 = vld [vmem:[%s5 + $0xc] sm:$0xf]
        %v937 = vld [vmem:[#allocation9] sm:$0x1]
        %v939 = vlaneseq
        %v940 = vshrl.u32 %v939, 7
        %v941 = vsub.s32 0, %v940
        %v942 = vrot.slane %v937, %v941
        %v948 = vunpack.c.l.b16 %v933
        %v949 = vunpack.c.l.b16 %v934
        %v950 = vunpack.c.l.b16 %v935
        %v951 = vunpack.c.l.b16 %v936
        %v952 = vpack.c.b16 %v949, %v948
        %v953 = vpack.c.b16 %v951, %v950
        %v957 = vsel %vm903, %v932, 0
        %959 = vmatprep.subr.bf16.mxu0 0
        %960 = vmatpush1.bf16.msra.mxu0 %v952
        %961 = vmatprep.subr.bf16.mxu0 0
        %962 = vmatpush1.bf16.msra.mxu0 %v953
        %963 = vmatprep.subr.bf16.mxu0 0
        %964 = vmatpush1.bf16.msra.mxu0 0
        %965 = vmatprep.subr.bf16.mxu0 0
        %966 = vmatpush1.bf16.msra.mxu0 0
        %967 = vmatprep.subr.bf16.mxu0 0
        %968 = vmatpush1.bf16.msra.mxu0 0
        %969 = vmatprep.subr.bf16.mxu0 0
        %970 = vmatpush1.bf16.msra.mxu0 0
        %971 = vmatprep.subr.bf16.mxu0 0
        %972 = vmatpush1.bf16.msra.mxu0 0
        %973 = vmatprep.subr.bf16.mxu0 0
        %974 = vmatpush1.bf16.msra.mxu0 0
        %975 = vmatprep.subr.bf16.mxu0 0
        %976 = vmatpush1.bf16.msra.mxu0 0
        %977 = vmatprep.subr.bf16.mxu0 0
        %978 = vmatpush1.bf16.msra.mxu0 0
        %979 = vmatprep.subr.bf16.mxu0 0
        %980 = vmatpush1.bf16.msra.mxu0 0
        %981 = vmatprep.subr.bf16.mxu0 0
        %982 = vmatpush1.bf16.msra.mxu0 0
        %983 = vmatprep.subr.bf16.mxu0 0
        %984 = vmatpush1.bf16.msra.mxu0 0
        %985 = vmatprep.subr.bf16.mxu0 0
        %986 = vmatpush1.bf16.msra.mxu0 0
        %987 = vmatprep.subr.bf16.mxu0 0
        %988 = vmatpush1.bf16.msra.mxu0 0
        %989 = vmatprep.subr.bf16.mxu0 0
        %990 = vmatpush1.bf16.msra.mxu0 0
        %991 = vmatprep.mubr.bf16.mxu0 0
        %992 = vmatmul.mubr.bf16.gmra.mrb[0].mxu0 %v957
        %v993 = vpop.f32.mrb[0].mxu0
        %v994 = vadd.f32 %v942, %v993
        %v995 = vpop.f32.mrb[0].mxu0
        %v996 = vpop.f32.mrb[0].mxu0
        %v997 = vpop.f32.mrb[0].mxu0
        %998 = vdwg.mxu0
        %v999 = vpack.c.bf16 %v994, %v994
        %1001 = vrot.lane.b32.xlu0 %v999, 96
        %v1002 = vpop.permute.xlu0 %1001
        %vm1003 = vcmask 64512
        %v1005 = vsel %vm1003, %v999, 0
        %v1008 = vsel %vm1003, %v1002, 0
        %1010 = vmatprep.subr.bf16.mxu0 0
        %1011 = vmatpush1.bf16.xpose.msra.mxu0 %v1008
        %1012 = vmatprep.subr.bf16.mxu0 0
        %1013 = vmatpush1.bf16.xpose.msra.mxu0 0
        %1014 = vmatprep.subr.bf16.mxu0 0
        %1015 = vmatpush1.bf16.xpose.msra.mxu0 0
        %1016 = vmatprep.subr.bf16.mxu0 0
        %1017 = vmatpush1.bf16.xpose.msra.mxu0 0
        %1018 = vmatprep.subr.bf16.mxu0 0
        %1019 = vmatpush1.bf16.xpose.msra.mxu0 0
        %1020 = vmatprep.subr.bf16.mxu0 0
        %1021 = vmatpush1.bf16.xpose.msra.mxu0 0
        %1022 = vmatprep.subr.bf16.mxu0 0
        %1023 = vmatpush1.bf16.xpose.msra.mxu0 0
        %1024 = vmatprep.subr.bf16.mxu0 0
        %1025 = vmatpush1.bf16.xpose.msra.mxu0 0
        %1026 = vmatprep.subr.bf16.mxu0 0
        %1027 = vmatpush1.bf16.xpose.msra.mxu0 0
        %1028 = vmatprep.subr.bf16.mxu0 0
        %1029 = vmatpush1.bf16.xpose.msra.mxu0 0
        %1030 = vmatprep.subr.bf16.mxu0 0
        %1031 = vmatpush1.bf16.xpose.msra.mxu0 0
        %1032 = vmatprep.subr.bf16.mxu0 0
        %1033 = vmatpush1.bf16.xpose.msra.mxu0 0
        %1034 = vmatprep.subr.bf16.mxu0 0
        %1035 = vmatpush1.bf16.xpose.msra.mxu0 0
        %1036 = vmatprep.subr.bf16.mxu0 0
        %1037 = vmatpush1.bf16.xpose.msra.mxu0 0
        %1038 = vmatprep.subr.bf16.mxu0 0
        %1039 = vmatpush1.bf16.xpose.msra.mxu0 0
        %1040 = vmatprep.subr.bf16.mxu0 0
        %1041 = vmatpush1.bf16.xpose.msra.mxu0 0
        %1042 = vmatprep.mubr.bf16.mxu0 0
        %1043 = vmatmul.mubr.bf16.gmra.mrb[0].mxu0 %v1005
        %v1044 = vpop.f32.mrb[0].mxu0
        %v1045 = vadd.f32 %v899, %v1044
        %v1046 = vpop.f32.mrb[0].mxu0
        %v1047 = vpop.f32.mrb[0].mxu0
        %v1048 = vpop.f32.mrb[0].mxu0
        %1049 = vdwg.mxu0
        %v1050 = vsel %vm1003, %v1045, -inf
        %1051 = vmax.xlane.f32.xlu0 %v1050
        %v1052 = vpop.xlane.xlu0 %1051
        %v1053 = vsub.f32 %v1045, %v1052
        %v1054 = vmul.f32 %v1053, 1.442695
        %v1055 = vpow.pop %v1054
        %v1056 = vsel %vm1003, %v1055, 0.0
        %1057 = vadd.xlane.f32.xlu0 %v1056
        %v1058 = vpop.xlane.xlu0 %1057
        %v1059 = vrcp.pop %v1058
        %v1060 = vmul.f32 %v1055, %v1059
        %v1061 = vpack.c.bf16 %v1060, %v1060
        %1062 = vrot.lane.b32.xlu0 %v999, 64
        %v1063 = vpop.permute.xlu0 %1062
        %v1065 = vsel %vm1003, %v1061, 0
        %vm1067 = vcmask 1043456
        %v1069 = vsel %vm1067, %v1063, 0
        %1071 = vmatprep.subr.bf16.mxu0 0
        %1072 = vmatpush1.bf16.msra.mxu0 %v1069
        %1073 = vmatprep.subr.bf16.mxu0 0
        %1074 = vmatpush1.bf16.msra.mxu0 0
        %1075 = vmatprep.subr.bf16.mxu0 0
        %1076 = vmatpush1.bf16.msra.mxu0 0
        %1077 = vmatprep.subr.bf16.mxu0 0
        %1078 = vmatpush1.bf16.msra.mxu0 0
        %1079 = vmatprep.subr.bf16.mxu0 0
        %1080 = vmatpush1.bf16.msra.mxu0 0
        %1081 = vmatprep.subr.bf16.mxu0 0
        %1082 = vmatpush1.bf16.msra.mxu0 0
        %1083 = vmatprep.subr.bf16.mxu0 0
        %1084 = vmatpush1.bf16.msra.mxu0 0
        %1085 = vmatprep.subr.bf16.mxu0 0
        %1086 = vmatpush1.bf16.msra.mxu0 0
        %1087 = vmatprep.subr.bf16.mxu0 0
        %1088 = vmatpush1.bf16.msra.mxu0 0
        %1089 = vmatprep.subr.bf16.mxu0 0
        %1090 = vmatpush1.bf16.msra.mxu0 0
        %1091 = vmatprep.subr.bf16.mxu0 0
        %1092 = vmatpush1.bf16.msra.mxu0 0
        %1093 = vmatprep.subr.bf16.mxu0 0
        %1094 = vmatpush1.bf16.msra.mxu0 0
        %1095 = vmatprep.subr.bf16.mxu0 0
        %1096 = vmatpush1.bf16.msra.mxu0 0
        %1097 = vmatprep.subr.bf16.mxu0 0
        %1098 = vmatpush1.bf16.msra.mxu0 0
        %1099 = vmatprep.subr.bf16.mxu0 0
        %1100 = vmatpush1.bf16.msra.mxu0 0
        %1101 = vmatprep.subr.bf16.mxu0 0
        %1102 = vmatpush1.bf16.msra.mxu0 0
        %1103 = vmatprep.mubr.bf16.mxu0 0
        %1104 = vmatmul.mubr.bf16.gmra.mrb[0].mxu0 %v1065
        %v1105 = vpop.f32.mrb[0].mxu0
        %v1106 = vadd.f32 0.0, %v1105
        %v1107 = vpop.f32.mrb[0].mxu0
        %v1108 = vpop.f32.mrb[0].mxu0
        %v1109 = vpop.f32.mrb[0].mxu0
        %1110 = vdwg.mxu0
        %v1111 = vpack.c.bf16 %v1106, %v1106
        %vm1112 = vcmask 60416
        %1113 = vst.msk [vmem:[#allocation2] sm:$0xf] %vm1112, %v1111
        %1114 = vrot.lane.b32.xlu0 %v999, 120
        %v1115 = vpop.permute.xlu0 %1114
        %1116 = vrot.lane.b32.xlu0 %v999, 88
        %v1117 = vpop.permute.xlu0 %1116
        %v1119 = vsel %vm1003, %v1115, 0
        %v1122 = vsel %vm1003, %v1117, 0
        %1124 = vmatprep.subr.bf16.mxu0 0
        %1125 = vmatpush1.bf16.xpose.msra.mxu0 %v1122
        %1126 = vmatprep.subr.bf16.mxu0 0
        %1127 = vmatpush1.bf16.xpose.msra.mxu0 0
        %1128 = vmatprep.subr.bf16.mxu0 0
        %1129 = vmatpush1.bf16.xpose.msra.mxu0 0
        %1130 = vmatprep.subr.bf16.mxu0 0
        %1131 = vmatpush1.bf16.xpose.msra.mxu0 0
        %1132 = vmatprep.subr.bf16.mxu0 0
        %1133 = vmatpush1.bf16.xpose.msra.mxu0 0
        %1134 = vmatprep.subr.bf16.mxu0 0
        %1135 = vmatpush1.bf16.xpose.msra.mxu0 0
        %1136 = vmatprep.subr.bf16.mxu0 0
        %1137 = vmatpush1.bf16.xpose.msra.mxu0 0
        %1138 = vmatprep.subr.bf16.mxu0 0
        %1139 = vmatpush1.bf16.xpose.msra.mxu0 0
        %1140 = vmatprep.subr.bf16.mxu0 0
        %1141 = vmatpush1.bf16.xpose.msra.mxu0 0
        %1142 = vmatprep.subr.bf16.mxu0 0
        %1143 = vmatpush1.bf16.xpose.msra.mxu0 0
        %1144 = vmatprep.subr.bf16.mxu0 0
        %1145 = vmatpush1.bf16.xpose.msra.mxu0 0
        %1146 = vmatprep.subr.bf16.mxu0 0
        %1147 = vmatpush1.bf16.xpose.msra.mxu0 0
        %1148 = vmatprep.subr.bf16.mxu0 0
        %1149 = vmatpush1.bf16.xpose.msra.mxu0 0
        %1150 = vmatprep.subr.bf16.mxu0 0
        %1151 = vmatpush1.bf16.xpose.msra.mxu0 0
        %1152 = vmatprep.subr.bf16.mxu0 0
        %1153 = vmatpush1.bf16.xpose.msra.mxu0 0
        %1154 = vmatprep.subr.bf16.mxu0 0
        %1155 = vmatpush1.bf16.xpose.msra.mxu0 0
        %1156 = vmatprep.mubr.bf16.mxu0 0
        %1157 = vmatmul.mubr.bf16.gmra.mrb[0].mxu0 %v1119
        %v1158 = vpop.f32.mrb[0].mxu0
        %v1159 = vadd.f32 %v899, %v1158
        %v1160 = vpop.f32.mrb[0].mxu0
        %v1161 = vpop.f32.mrb[0].mxu0
        %v1162 = vpop.f32.mrb[0].mxu0
        %1163 = vdwg.mxu0
        %v1164 = vsel %vm1003, %v1159, -inf
        %1165 = vmax.xlane.f32.xlu0 %v1164
        %v1166 = vpop.xlane.xlu0 %1165
        %v1167 = vsub.f32 %v1159, %v1166
        %v1168 = vmul.f32 %v1167, 1.442695
        %v1169 = vpow.pop %v1168
        %v1170 = vsel %vm1003, %v1169, 0.0
        %1171 = vadd.xlane.f32.xlu0 %v1170
        %v1172 = vpop.xlane.xlu0 %1171
        %v1173 = vrcp.pop %v1172
        %v1174 = vmul.f32 %v1169, %v1173
        %v1175 = vpack.c.bf16 %v1174, %v1174
        %1176 = vrot.lane.b32.xlu0 %v999, 56
        %v1177 = vpop.permute.xlu0 %1176
        %v1179 = vsel %vm1003, %v1175, 0
        %v1182 = vsel %vm1067, %v1177, 0
        %1184 = vmatprep.subr.bf16.mxu0 0
        %1185 = vmatpush1.bf16.msra.mxu0 %v1182
        %1186 = vmatprep.subr.bf16.mxu0 0
        %1187 = vmatpush1.bf16.msra.mxu0 0
        %1188 = vmatprep.subr.bf16.mxu0 0
        %1189 = vmatpush1.bf16.msra.mxu0 0
        %1190 = vmatprep.subr.bf16.mxu0 0
        %1191 = vmatpush1.bf16.msra.mxu0 0
        %1192 = vmatprep.subr.bf16.mxu0 0
        %1193 = vmatpush1.bf16.msra.mxu0 0
        %1194 = vmatprep.subr.bf16.mxu0 0
        %1195 = vmatpush1.bf16.msra.mxu0 0
        %1196 = vmatprep.subr.bf16.mxu0 0
        %1197 = vmatpush1.bf16.msra.mxu0 0
        %1198 = vmatprep.subr.bf16.mxu0 0
        %1199 = vmatpush1.bf16.msra.mxu0 0
        %1200 = vmatprep.subr.bf16.mxu0 0
        %1201 = vmatpush1.bf16.msra.mxu0 0
        %1202 = vmatprep.subr.bf16.mxu0 0
        %1203 = vmatpush1.bf16.msra.mxu0 0
        %1204 = vmatprep.subr.bf16.mxu0 0
        %1205 = vmatpush1.bf16.msra.mxu0 0
        %1206 = vmatprep.subr.bf16.mxu0 0
        %1207 = vmatpush1.bf16.msra.mxu0 0
        %1208 = vmatprep.subr.bf16.mxu0 0
        %1209 = vmatpush1.bf16.msra.mxu0 0
        %1210 = vmatprep.subr.bf16.mxu0 0
        %1211 = vmatpush1.bf16.msra.mxu0 0
        %1212 = vmatprep.subr.bf16.mxu0 0
        %1213 = vmatpush1.bf16.msra.mxu0 0
        %1214 = vmatprep.subr.bf16.mxu0 0
        %1215 = vmatpush1.bf16.msra.mxu0 0
        %1216 = vmatprep.mubr.bf16.mxu0 0
        %1217 = vmatmul.mubr.bf16.gmra.mrb[0].mxu0 %v1179
        %v1218 = vpop.f32.mrb[0].mxu0
        %v1219 = vadd.f32 0.0, %v1218
        %v1220 = vpop.f32.mrb[0].mxu0
        %v1221 = vpop.f32.mrb[0].mxu0
        %v1222 = vpop.f32.mrb[0].mxu0
        %1223 = vdwg.mxu0
        %v1224 = vpack.c.bf16 %v1219, %v1219
        %v1226 = vunpack.c.l.b16 %v1224
        %v1227 = vpack.c.b16 %v1226, %v1226
        %1228 = vrot.lane.b32.xlu0 %v1227, 8
        %v1229 = vpop.permute.xlu0 %1228
        %vm1231 = vcmask 126016
        %1232 = vst.msk [vmem:[#allocation2] sm:$0xf] %vm1231, %v1229
        %1233 = vrot.lane.b32.xlu0 %v999, 112
        %v1234 = vpop.permute.xlu0 %1233
        %1235 = vrot.lane.b32.xlu0 %v999, 80
        %v1236 = vpop.permute.xlu0 %1235
        %v1238 = vsel %vm1003, %v1234, 0
        %v1241 = vsel %vm1003, %v1236, 0
        %1243 = vmatprep.subr.bf16.mxu0 0
        %1244 = vmatpush1.bf16.xpose.msra.mxu0 %v1241
        %1245 = vmatprep.subr.bf16.mxu0 0
        %1246 = vmatpush1.bf16.xpose.msra.mxu0 0
        %1247 = vmatprep.subr.bf16.mxu0 0
        %1248 = vmatpush1.bf16.xpose.msra.mxu0 0
        %1249 = vmatprep.subr.bf16.mxu0 0
        %1250 = vmatpush1.bf16.xpose.msra.mxu0 0
        %1251 = vmatprep.subr.bf16.mxu0 0
        %1252 = vmatpush1.bf16.xpose.msra.mxu0 0
        %1253 = vmatprep.subr.bf16.mxu0 0
        %1254 = vmatpush1.bf16.xpose.msra.mxu0 0
        %1255 = vmatprep.subr.bf16.mxu0 0
        %1256 = vmatpush1.bf16.xpose.msra.mxu0 0
        %1257 = vmatprep.subr.bf16.mxu0 0
        %1258 = vmatpush1.bf16.xpose.msra.mxu0 0
        %1259 = vmatprep.subr.bf16.mxu0 0
        %1260 = vmatpush1.bf16.xpose.msra.mxu0 0
        %1261 = vmatprep.subr.bf16.mxu0 0
        %1262 = vmatpush1.bf16.xpose.msra.mxu0 0
        %1263 = vmatprep.subr.bf16.mxu0 0
        %1264 = vmatpush1.bf16.xpose.msra.mxu0 0
        %1265 = vmatprep.subr.bf16.mxu0 0
        %1266 = vmatpush1.bf16.xpose.msra.mxu0 0
        %1267 = vmatprep.subr.bf16.mxu0 0
        %1268 = vmatpush1.bf16.xpose.msra.mxu0 0
        %1269 = vmatprep.subr.bf16.mxu0 0
        %1270 = vmatpush1.bf16.xpose.msra.mxu0 0
        %1271 = vmatprep.subr.bf16.mxu0 0
        %1272 = vmatpush1.bf16.xpose.msra.mxu0 0
        %1273 = vmatprep.subr.bf16.mxu0 0
        %1274 = vmatpush1.bf16.xpose.msra.mxu0 0
        %1275 = vmatprep.mubr.bf16.mxu0 0
        %1276 = vmatmul.mubr.bf16.gmra.mrb[0].mxu0 %v1238
        %v1277 = vpop.f32.mrb[0].mxu0
        %v1278 = vadd.f32 %v899, %v1277
        %v1279 = vpop.f32.mrb[0].mxu0
        %v1280 = vpop.f32.mrb[0].mxu0
        %v1281 = vpop.f32.mrb[0].mxu0
        %1282 = vdwg.mxu0
        %v1283 = vsel %vm1003, %v1278, -inf
        %1284 = vmax.xlane.f32.xlu0 %v1283
        %v1285 = vpop.xlane.xlu0 %1284
        %v1286 = vsub.f32 %v1278, %v1285
        %v1287 = vmul.f32 %v1286, 1.442695
        %v1288 = vpow.pop %v1287
        %v1289 = vsel %vm1003, %v1288, 0.0
        %1290 = vadd.xlane.f32.xlu0 %v1289
        %v1291 = vpop.xlane.xlu0 %1290
        %v1292 = vrcp.pop %v1291
        %v1293 = vmul.f32 %v1288, %v1292
        %v1294 = vpack.c.bf16 %v1293, %v1293
        %1295 = vrot.lane.b32.xlu0 %v999, 48
        %v1296 = vpop.permute.xlu0 %1295
        %v1298 = vsel %vm1003, %v1294, 0
        %v1301 = vsel %vm1067, %v1296, 0
        %1303 = vmatprep.subr.bf16.mxu0 0
        %1304 = vmatpush1.bf16.msra.mxu0 %v1301
        %1305 = vmatprep.subr.bf16.mxu0 0
        %1306 = vmatpush1.bf16.msra.mxu0 0
        %1307 = vmatprep.subr.bf16.mxu0 0
        %1308 = vmatpush1.bf16.msra.mxu0 0
        %1309 = vmatprep.subr.bf16.mxu0 0
        %1310 = vmatpush1.bf16.msra.mxu0 0
        %1311 = vmatprep.subr.bf16.mxu0 0
        %1312 = vmatpush1.bf16.msra.mxu0 0
        %1313 = vmatprep.subr.bf16.mxu0 0
        %1314 = vmatpush1.bf16.msra.mxu0 0
        %1315 = vmatprep.subr.bf16.mxu0 0
        %1316 = vmatpush1.bf16.msra.mxu0 0
        %1317 = vmatprep.subr.bf16.mxu0 0
        %1318 = vmatpush1.bf16.msra.mxu0 0
        %1319 = vmatprep.subr.bf16.mxu0 0
        %1320 = vmatpush1.bf16.msra.mxu0 0
        %1321 = vmatprep.subr.bf16.mxu0 0
        %1322 = vmatpush1.bf16.msra.mxu0 0
        %1323 = vmatprep.subr.bf16.mxu0 0
        %1324 = vmatpush1.bf16.msra.mxu0 0
        %1325 = vmatprep.subr.bf16.mxu0 0
        %1326 = vmatpush1.bf16.msra.mxu0 0
        %1327 = vmatprep.subr.bf16.mxu0 0
        %1328 = vmatpush1.bf16.msra.mxu0 0
        %1329 = vmatprep.subr.bf16.mxu0 0
        %1330 = vmatpush1.bf16.msra.mxu0 0
        %1331 = vmatprep.subr.bf16.mxu0 0
        %1332 = vmatpush1.bf16.msra.mxu0 0
        %1333 = vmatprep.subr.bf16.mxu0 0
        %1334 = vmatpush1.bf16.msra.mxu0 0
        %1335 = vmatprep.mubr.bf16.mxu0 0
        %1336 = vmatmul.mubr.bf16.gmra.mrb[0].mxu0 %v1298
        %v1337 = vpop.f32.mrb[0].mxu0
        %v1338 = vadd.f32 0.0, %v1337
        %v1339 = vpop.f32.mrb[0].mxu0
        %v1340 = vpop.f32.mrb[0].mxu0
        %v1341 = vpop.f32.mrb[0].mxu0
        %1342 = vdwg.mxu0
        %v1343 = vpack.c.bf16 %v1338, %v1338
        %v1345 = vunpack.c.l.b16 %v1343
        %v1346 = vpack.c.b16 %v1345, %v1345
        %1347 = vrot.lane.b32.xlu0 %v1346, 16
        %v1348 = vpop.permute.xlu0 %1347
        %vm1350 = vcmask 191616
        %1351 = vst.msk [vmem:[#allocation2] sm:$0xf] %vm1350, %v1348
        %1352 = vrot.lane.b32.xlu0 %v999, 104
        %v1353 = vpop.permute.xlu0 %1352
        %1354 = vrot.lane.b32.xlu0 %v999, 72
        %v1355 = vpop.permute.xlu0 %1354
        %v1357 = vsel %vm1003, %v1353, 0
        %v1360 = vsel %vm1003, %v1355, 0
        %1362 = vmatprep.subr.bf16.mxu0 0
        %1363 = vmatpush1.bf16.xpose.msra.mxu0 %v1360
        %1364 = vmatprep.subr.bf16.mxu0 0
        %1365 = vmatpush1.bf16.xpose.msra.mxu0 0
        %1366 = vmatprep.subr.bf16.mxu0 0
        %1367 = vmatpush1.bf16.xpose.msra.mxu0 0
        %1368 = vmatprep.subr.bf16.mxu0 0
        %1369 = vmatpush1.bf16.xpose.msra.mxu0 0
        %1370 = vmatprep.subr.bf16.mxu0 0
        %1371 = vmatpush1.bf16.xpose.msra.mxu0 0
        %1372 = vmatprep.subr.bf16.mxu0 0
        %1373 = vmatpush1.bf16.xpose.msra.mxu0 0
        %1374 = vmatprep.subr.bf16.mxu0 0
        %1375 = vmatpush1.bf16.xpose.msra.mxu0 0
        %1376 = vmatprep.subr.bf16.mxu0 0
        %1377 = vmatpush1.bf16.xpose.msra.mxu0 0
        %1378 = vmatprep.subr.bf16.mxu0 0
        %1379 = vmatpush1.bf16.xpose.msra.mxu0 0
        %1380 = vmatprep.subr.bf16.mxu0 0
        %1381 = vmatpush1.bf16.xpose.msra.mxu0 0
        %1382 = vmatprep.subr.bf16.mxu0 0
        %1383 = vmatpush1.bf16.xpose.msra.mxu0 0
        %1384 = vmatprep.subr.bf16.mxu0 0
        %1385 = vmatpush1.bf16.xpose.msra.mxu0 0
        %1386 = vmatprep.subr.bf16.mxu0 0
        %1387 = vmatpush1.bf16.xpose.msra.mxu0 0
        %1388 = vmatprep.subr.bf16.mxu0 0
        %1389 = vmatpush1.bf16.xpose.msra.mxu0 0
        %1390 = vmatprep.subr.bf16.mxu0 0
        %1391 = vmatpush1.bf16.xpose.msra.mxu0 0
        %1392 = vmatprep.subr.bf16.mxu0 0
        %1393 = vmatpush1.bf16.xpose.msra.mxu0 0
        %1394 = vmatprep.mubr.bf16.mxu0 0
        %1395 = vmatmul.mubr.bf16.gmra.mrb[0].mxu0 %v1357
        %v1396 = vpop.f32.mrb[0].mxu0
        %v1397 = vadd.f32 %v899, %v1396
        %v1398 = vpop.f32.mrb[0].mxu0
        %v1399 = vpop.f32.mrb[0].mxu0
        %v1400 = vpop.f32.mrb[0].mxu0
        %1401 = vdwg.mxu0
        %v1402 = vsel %vm1003, %v1397, -inf
        %1403 = vmax.xlane.f32.xlu0 %v1402
        %v1404 = vpop.xlane.xlu0 %1403
        %v1405 = vsub.f32 %v1397, %v1404
        %v1406 = vmul.f32 %v1405, 1.442695
        %v1407 = vpow.pop %v1406
        %v1408 = vsel %vm1003, %v1407, 0.0
        %1409 = vadd.xlane.f32.xlu0 %v1408
        %v1410 = vpop.xlane.xlu0 %1409
        %v1411 = vrcp.pop %v1410
        %v1412 = vmul.f32 %v1407, %v1411
        %v1413 = vpack.c.bf16 %v1412, %v1412
        %1414 = vrot.lane.b32.xlu0 %v999, 40
        %v1415 = vpop.permute.xlu0 %1414
        %v1417 = vsel %vm1003, %v1413, 0
        %v1420 = vsel %vm1067, %v1415, 0
        %1422 = vmatprep.subr.bf16.mxu0 0
        %1423 = vmatpush1.bf16.msra.mxu0 %v1420
        %1424 = vmatprep.subr.bf16.mxu0 0
        %1425 = vmatpush1.bf16.msra.mxu0 0
        %1426 = vmatprep.subr.bf16.mxu0 0
        %1427 = vmatpush1.bf16.msra.mxu0 0
        %1428 = vmatprep.subr.bf16.mxu0 0
        %1429 = vmatpush1.bf16.msra.mxu0 0
        %1430 = vmatprep.subr.bf16.mxu0 0
        %1431 = vmatpush1.bf16.msra.mxu0 0
        %1432 = vmatprep.subr.bf16.mxu0 0
        %1433 = vmatpush1.bf16.msra.mxu0 0
        %1434 = vmatprep.subr.bf16.mxu0 0
        %1435 = vmatpush1.bf16.msra.mxu0 0
        %1436 = vmatprep.subr.bf16.mxu0 0
        %1437 = vmatpush1.bf16.msra.mxu0 0
        %1438 = vmatprep.subr.bf16.mxu0 0
        %1439 = vmatpush1.bf16.msra.mxu0 0
        %1440 = vmatprep.subr.bf16.mxu0 0
        %1441 = vmatpush1.bf16.msra.mxu0 0
        %1442 = vmatprep.subr.bf16.mxu0 0
        %1443 = vmatpush1.bf16.msra.mxu0 0
        %1444 = vmatprep.subr.bf16.mxu0 0
        %1445 = vmatpush1.bf16.msra.mxu0 0
        %1446 = vmatprep.subr.bf16.mxu0 0
        %1447 = vmatpush1.bf16.msra.mxu0 0
        %1448 = vmatprep.subr.bf16.mxu0 0
        %1449 = vmatpush1.bf16.msra.mxu0 0
        %1450 = vmatprep.subr.bf16.mxu0 0
        %1451 = vmatpush1.bf16.msra.mxu0 0
        %1452 = vmatprep.subr.bf16.mxu0 0
        %1453 = vmatpush1.bf16.msra.mxu0 0
        %1454 = vmatprep.mubr.bf16.mxu0 0
        %1455 = vmatmul.mubr.bf16.gmra.mrb[0].mxu0 %v1417
        %v1456 = vpop.f32.mrb[0].mxu0
        %v1457 = vadd.f32 0.0, %v1456
        %v1458 = vpop.f32.mrb[0].mxu0
        %v1459 = vpop.f32.mrb[0].mxu0
        %v1460 = vpop.f32.mrb[0].mxu0
        %1461 = vdwg.mxu0
        %v1462 = vpack.c.bf16 %v1457, %v1457
        %v1464 = vunpack.c.l.b16 %v1462
        %v1465 = vpack.c.b16 %v1464, %v1464
        %1466 = vrot.lane.b32.xlu0 %v1465, 24
        %v1467 = vpop.permute.xlu0 %1466
        %vm1469 = vcmask 257216
        %1470 = vst.msk [vmem:[#allocation2] sm:$0xf] %vm1469, %v1467
        %v1471 = vld [vmem:[#allocation2] sm:$0xf]
        %v1472 = vld [vmem:[%s7] sm:$0xf]
        %v1473 = vld [vmem:[%s7 + $0x4] sm:$0xf]
        %v1474 = vld [vmem:[%s7 + $0x8] sm:$0xf]
        %v1475 = vld [vmem:[%s7 + $0xc] sm:$0xf]
        %v1480 = vunpack.c.l.b16 %v1472
        %v1481 = vunpack.c.l.b16 %v1473
        %v1482 = vunpack.c.l.b16 %v1474
        %v1483 = vunpack.c.l.b16 %v1475
        %v1484 = vpack.c.b16 %v1481, %v1480
        %v1485 = vpack.c.b16 %v1483, %v1482
        %v1489 = vsel %vm903, %v1471, 0
        %1491 = vmatprep.subr.bf16.mxu0 0
        %1492 = vmatpush1.bf16.msra.mxu0 %v1484
        %1493 = vmatprep.subr.bf16.mxu0 0
        %1494 = vmatpush1.bf16.msra.mxu0 %v1485
        %1495 = vmatprep.subr.bf16.mxu0 0
        %1496 = vmatpush1.bf16.msra.mxu0 0
        %1497 = vmatprep.subr.bf16.mxu0 0
        %1498 = vmatpush1.bf16.msra.mxu0 0
        %1499 = vmatprep.subr.bf16.mxu0 0
        %1500 = vmatpush1.bf16.msra.mxu0 0
        %1501 = vmatprep.subr.bf16.mxu0 0
        %1502 = vmatpush1.bf16.msra.mxu0 0
        %1503 = vmatprep.subr.bf16.mxu0 0
        %1504 = vmatpush1.bf16.msra.mxu0 0
        %1505 = vmatprep.subr.bf16.mxu0 0
        %1506 = vmatpush1.bf16.msra.mxu0 0
        %1507 = vmatprep.subr.bf16.mxu0 0
        %1508 = vmatpush1.bf16.msra.mxu0 0
        %1509 = vmatprep.subr.bf16.mxu0 0
        %1510 = vmatpush1.bf16.msra.mxu0 0
        %1511 = vmatprep.subr.bf16.mxu0 0
        %1512 = vmatpush1.bf16.msra.mxu0 0
        %1513 = vmatprep.subr.bf16.mxu0 0
        %1514 = vmatpush1.bf16.msra.mxu0 0
        %1515 = vmatprep.subr.bf16.mxu0 0
        %1516 = vmatpush1.bf16.msra.mxu0 0
        %1517 = vmatprep.subr.bf16.mxu0 0
        %1518 = vmatpush1.bf16.msra.mxu0 0
        %1519 = vmatprep.subr.bf16.mxu0 0
        %1520 = vmatpush1.bf16.msra.mxu0 0
        %1521 = vmatprep.subr.bf16.mxu0 0
        %1522 = vmatpush1.bf16.msra.mxu0 0
        %1523 = vmatprep.mubr.bf16.mxu0 0
        %1524 = vmatmul.mubr.bf16.gmra.mrb[0].mxu0 %v1489
        %v1525 = vpop.f32.mrb[0].mxu0
        %v1526 = vadd.f32 0.0, %v1525
        %v1527 = vpop.f32.mrb[0].mxu0
        %v1528 = vpop.f32.mrb[0].mxu0
        %v1529 = vpop.f32.mrb[0].mxu0
        %1530 = vdwg.mxu0
        %v1531 = vadd.f32 %v891, %v1526
        %v1532 = vld [vmem:[#allocation11] sm:$0x1]
        %v1534 = vlaneseq
        %v1535 = vshrl.u32 %v1534, 7
        %v1536 = vsub.s32 0, %v1535
        %v1537 = vrot.slane %v1532, %v1536
        %v1539 = vadd.f32 %v1531, %v1537
        %v1540 = vld [vmem:[%s784] sm:$0xf]
        %v1541 = vld [vmem:[#allocation12] sm:$0x1]
        %v1542 = vld [vmem:[#allocation14] sm:$0x1]
        %v1543 = vsel %vm903, %v1539, 0.0
        %1544 = vadd.xlane.f32.xlu0 %v1543
        %v1545 = vpop.xlane.xlu0 %1544
        %v1546 = vmul.f32 %v1545, %v907
        %v1547 = vsub.f32 %v1539, %v1546
        %v1548 = vmul.f32 %v1547, %v1547
        %v1549 = vsel %vm903, %v1548, 0.0
        %1550 = vadd.xlane.f32.xlu0 %v1549
        %v1551 = vpop.xlane.xlu0 %1550
        %v1552 = vmul.f32 %v1551, %v907
        %v1553 = vadd.f32 %v1552, 1e-05
        %v1554 = vrsqrt.pop %v1553
        %v1555 = vmul.f32 %v1547, %v1554
        %v1557 = vlaneseq
        %v1558 = vshrl.u32 %v1557, 7
        %v1559 = vsub.s32 0, %v1558
        %v1560 = vrot.slane %v1541, %v1559
        %v1562 = vmul.f32 %v1555, %v1560
        %v1564 = vlaneseq
        %v1565 = vshrl.u32 %v1564, 7
        %v1566 = vsub.s32 0, %v1565
        %v1567 = vrot.slane %v1542, %v1566
        %v1569 = vadd.f32 %v1562, %v1567
        %v1570 = vpack.c.bf16 %v1569, %v1569
        %v1571 = vld [vmem:[%s11] sm:$0xf]
        %v1572 = vld [vmem:[%s11 + $0x4] sm:$0xf]
        %v1573 = vld [vmem:[%s11 + $0x8] sm:$0xf]
        %v1574 = vld [vmem:[%s11 + $0xc] sm:$0xf]
        %v1575 = vld [vmem:[#allocation15] sm:$0x1]
        %v1577 = vlaneseq
        %v1578 = vshrl.u32 %v1577, 7
        %v1579 = vsub.s32 0, %v1578
        %v1580 = vrot.slane %v1575, %v1579
        %v1586 = vunpack.c.l.b16 %v1571
        %v1587 = vunpack.c.l.b16 %v1572
        %v1588 = vunpack.c.l.b16 %v1573
        %v1589 = vunpack.c.l.b16 %v1574
        %v1590 = vpack.c.b16 %v1587, %v1586
        %v1591 = vpack.c.b16 %v1589, %v1588
        %v1595 = vsel %vm903, %v1570, 0
        %1597 = vmatprep.subr.bf16.mxu0 0
        %1598 = vmatpush1.bf16.msra.mxu0 %v1590
        %1599 = vmatprep.subr.bf16.mxu0 0
        %1600 = vmatpush1.bf16.msra.mxu0 %v1591
        %1601 = vmatprep.subr.bf16.mxu0 0
        %1602 = vmatpush1.bf16.msra.mxu0 0
        %1603 = vmatprep.subr.bf16.mxu0 0
        %1604 = vmatpush1.bf16.msra.mxu0 0
        %1605 = vmatprep.subr.bf16.mxu0 0
        %1606 = vmatpush1.bf16.msra.mxu0 0
        %1607 = vmatprep.subr.bf16.mxu0 0
        %1608 = vmatpush1.bf16.msra.mxu0 0
        %1609 = vmatprep.subr.bf16.mxu0 0
        %1610 = vmatpush1.bf16.msra.mxu0 0
        %1611 = vmatprep.subr.bf16.mxu0 0
        %1612 = vmatpush1.bf16.msra.mxu0 0
        %1613 = vmatprep.subr.bf16.mxu0 0
        %1614 = vmatpush1.bf16.msra.mxu0 0
        %1615 = vmatprep.subr.bf16.mxu0 0
        %1616 = vmatpush1.bf16.msra.mxu0 0
        %1617 = vmatprep.subr.bf16.mxu0 0
        %1618 = vmatpush1.bf16.msra.mxu0 0
        %1619 = vmatprep.subr.bf16.mxu0 0
        %1620 = vmatpush1.bf16.msra.mxu0 0
        %1621 = vmatprep.subr.bf16.mxu0 0
        %1622 = vmatpush1.bf16.msra.mxu0 0
        %1623 = vmatprep.subr.bf16.mxu0 0
        %1624 = vmatpush1.bf16.msra.mxu0 0
        %1625 = vmatprep.subr.bf16.mxu0 0
        %1626 = vmatpush1.bf16.msra.mxu0 0
        %1627 = vmatprep.subr.bf16.mxu0 0
        %1628 = vmatpush1.bf16.msra.mxu0 0
        %1629 = vmatprep.mubr.bf16.mxu0 0
        %1630 = vmatmul.mubr.bf16.gmra.mrb[0].mxu0 %v1595
        %v1631 = vpop.f32.mrb[0].mxu0
        %v1632 = vadd.f32 %v1580, %v1631
        %v1633 = vpop.f32.mrb[0].mxu0
        %v1634 = vpop.f32.mrb[0].mxu0
        %v1635 = vpop.f32.mrb[0].mxu0
        %1636 = vdwg.mxu0
        %v1637 = vld [vmem:[%s13] sm:$0xf]
        %v1638 = vld [vmem:[%s13 + $0x4] sm:$0xf]
        %v1639 = vld [vmem:[%s13 + $0x8] sm:$0xf]
        %v1640 = vld [vmem:[%s13 + $0xc] sm:$0xf]
        %v1641 = vld [vmem:[%s14] sm:$0x1]
        %v1643 = vlaneseq
        %v1644 = vshrl.u32 %v1643, 7
        %v1645 = vsub.s32 0, %v1644
        %v1646 = vrot.slane %v1641, %v1645
        %v1652 = vunpack.c.l.b16 %v1637
        %v1653 = vunpack.c.l.b16 %v1638
        %v1654 = vunpack.c.l.b16 %v1639
        %v1655 = vunpack.c.l.b16 %v1640
        %v1656 = vpack.c.b16 %v1653, %v1652
        %v1657 = vpack.c.b16 %v1655, %v1654
        %v1661 = vsel %vm903, %v1540, 0
        %1663 = vmatprep.subr.bf16.mxu0 0
        %1664 = vmatpush1.bf16.msra.mxu0 %v1656
        %1665 = vmatprep.subr.bf16.mxu0 0
        %1666 = vmatpush1.bf16.msra.mxu0 %v1657
        %1667 = vmatprep.subr.bf16.mxu0 0
        %1668 = vmatpush1.bf16.msra.mxu0 0
        %1669 = vmatprep.subr.bf16.mxu0 0
        %1670 = vmatpush1.bf16.msra.mxu0 0
        %1671 = vmatprep.subr.bf16.mxu0 0
        %1672 = vmatpush1.bf16.msra.mxu0 0
        %1673 = vmatprep.subr.bf16.mxu0 0
        %1674 = vmatpush1.bf16.msra.mxu0 0
        %1675 = vmatprep.subr.bf16.mxu0 0
        %1676 = vmatpush1.bf16.msra.mxu0 0
        %1677 = vmatprep.subr.bf16.mxu0 0
        %1678 = vmatpush1.bf16.msra.mxu0 0
        %1679 = vmatprep.subr.bf16.mxu0 0
        %1680 = vmatpush1.bf16.msra.mxu0 0
        %1681 = vmatprep.subr.bf16.mxu0 0
        %1682 = vmatpush1.bf16.msra.mxu0 0
        %1683 = vmatprep.subr.bf16.mxu0 0
        %1684 = vmatpush1.bf16.msra.mxu0 0
        %1685 = vmatprep.subr.bf16.mxu0 0
        %1686 = vmatpush1.bf16.msra.mxu0 0
        %1687 = vmatprep.subr.bf16.mxu0 0
        %1688 = vmatpush1.bf16.msra.mxu0 0
        %1689 = vmatprep.subr.bf16.mxu0 0
        %1690 = vmatpush1.bf16.msra.mxu0 0
        %1691 = vmatprep.subr.bf16.mxu0 0
        %1692 = vmatpush1.bf16.msra.mxu0 0
        %1693 = vmatprep.subr.bf16.mxu0 0
        %1694 = vmatpush1.bf16.msra.mxu0 0
        %1695 = vmatprep.mubr.bf16.mxu0 0
        %1696 = vmatmul.mubr.bf16.gmra.mrb[0].mxu0 %v1661
        %v1697 = vpop.f32.mrb[0].mxu0
        %v1698 = vadd.f32 %v1646, %v1697
        %v1699 = vpop.f32.mrb[0].mxu0
        %v1700 = vpop.f32.mrb[0].mxu0
        %v1701 = vpop.f32.mrb[0].mxu0
        %1702 = vdwg.mxu0
        %v1703 = vpack.c.bf16 %v1632, %v1632
        %v1704 = vpack.c.bf16 %v1698, %v1698
        %v1706 = vsel %vm1003, %v1703, 0
        %v1709 = vsel %vm1003, %v1704, 0
        %1711 = vmatprep.subr.bf16.mxu0 0
        %1712 = vmatpush1.bf16.xpose.msra.mxu0 %v1709
        %1713 = vmatprep.subr.bf16.mxu0 0
        %1714 = vmatpush1.bf16.xpose.msra.mxu0 0
        %1715 = vmatprep.subr.bf16.mxu0 0
        %1716 = vmatpush1.bf16.xpose.msra.mxu0 0
        %1717 = vmatprep.subr.bf16.mxu0 0
        %1718 = vmatpush1.bf16.xpose.msra.mxu0 0
        %1719 = vmatprep.subr.bf16.mxu0 0
        %1720 = vmatpush1.bf16.xpose.msra.mxu0 0
        %1721 = vmatprep.subr.bf16.mxu0 0
        %1722 = vmatpush1.bf16.xpose.msra.mxu0 0
        %1723 = vmatprep.subr.bf16.mxu0 0
        %1724 = vmatpush1.bf16.xpose.msra.mxu0 0
        %1725 = vmatprep.subr.bf16.mxu0 0
        %1726 = vmatpush1.bf16.xpose.msra.mxu0 0
        %1727 = vmatprep.subr.bf16.mxu0 0
        %1728 = vmatpush1.bf16.xpose.msra.mxu0 0
        %1729 = vmatprep.subr.bf16.mxu0 0
        %1730 = vmatpush1.bf16.xpose.msra.mxu0 0
        %1731 = vmatprep.subr.bf16.mxu0 0
        %1732 = vmatpush1.bf16.xpose.msra.mxu0 0
        %1733 = vmatprep.subr.bf16.mxu0 0
        %1734 = vmatpush1.bf16.xpose.msra.mxu0 0
        %1735 = vmatprep.subr.bf16.mxu0 0
        %1736 = vmatpush1.bf16.xpose.msra.mxu0 0
        %1737 = vmatprep.subr.bf16.mxu0 0
        %1738 = vmatpush1.bf16.xpose.msra.mxu0 0
        %1739 = vmatprep.subr.bf16.mxu0 0
        %1740 = vmatpush1.bf16.xpose.msra.mxu0 0
        %1741 = vmatprep.subr.bf16.mxu0 0
        %1742 = vmatpush1.bf16.xpose.msra.mxu0 0
        %1743 = vmatprep.mubr.bf16.mxu0 0
        %1744 = vmatmul.mubr.bf16.gmra.mrb[0].mxu0 %v1706
        %v1745 = vpop.f32.mrb[0].mxu0
        %v1746 = vadd.f32 %v899, %v1745
        %v1747 = vpop.f32.mrb[0].mxu0
        %v1748 = vpop.f32.mrb[0].mxu0
        %v1749 = vpop.f32.mrb[0].mxu0
        %1750 = vdwg.mxu0
        %v1751 = vsel %vm1003, %v1746, -inf
        %1752 = vmax.xlane.f32.xlu0 %v1751
        %v1753 = vpop.xlane.xlu0 %1752
        %v1754 = vsub.f32 %v1746, %v1753
        %v1755 = vmul.f32 %v1754, 1.442695
        %v1756 = vpow.pop %v1755
        %v1757 = vsel %vm1003, %v1756, 0.0
        %1758 = vadd.xlane.f32.xlu0 %v1757
        %v1759 = vpop.xlane.xlu0 %1758
        %v1760 = vrcp.pop %v1759
        %v1761 = vmul.f32 %v1756, %v1760
        %v1762 = vpack.c.bf16 %v1761, %v1761
        %1763 = vst.msk [vmem:[%s885] sm:$0xf] %vm1112, %v1762
        %1765 = vrot.lane.b32.xlu0 %v1704, 96
        %v1766 = vpop.permute.xlu0 %1765
        %v1768 = vsel %vm1003, %v1762, 0
        %v1771 = vsel %vm1067, %v1766, 0
        %1773 = vmatprep.subr.bf16.mxu0 0
        %1774 = vmatpush1.bf16.msra.mxu0 %v1771
        %1775 = vmatprep.subr.bf16.mxu0 0
        %1776 = vmatpush1.bf16.msra.mxu0 0
        %1777 = vmatprep.subr.bf16.mxu0 0
        %1778 = vmatpush1.bf16.msra.mxu0 0
        %1779 = vmatprep.subr.bf16.mxu0 0
        %1780 = vmatpush1.bf16.msra.mxu0 0
        %1781 = vmatprep.subr.bf16.mxu0 0
        %1782 = vmatpush1.bf16.msra.mxu0 0
        %1783 = vmatprep.subr.bf16.mxu0 0
        %1784 = vmatpush1.bf16.msra.mxu0 0
        %1785 = vmatprep.subr.bf16.mxu0 0
        %1786 = vmatpush1.bf16.msra.mxu0 0
        %1787 = vmatprep.subr.bf16.mxu0 0
        %1788 = vmatpush1.bf16.msra.mxu0 0
        %1789 = vmatprep.subr.bf16.mxu0 0
        %1790 = vmatpush1.bf16.msra.mxu0 0
        %1791 = vmatprep.subr.bf16.mxu0 0
        %1792 = vmatpush1.bf16.msra.mxu0 0
        %1793 = vmatprep.subr.bf16.mxu0 0
        %1794 = vmatpush1.bf16.msra.mxu0 0
        %1795 = vmatprep.subr.bf16.mxu0 0
        %1796 = vmatpush1.bf16.msra.mxu0 0
        %1797 = vmatprep.subr.bf16.mxu0 0
        %1798 = vmatpush1.bf16.msra.mxu0 0
        %1799 = vmatprep.subr.bf16.mxu0 0
        %1800 = vmatpush1.bf16.msra.mxu0 0
        %1801 = vmatprep.subr.bf16.mxu0 0
        %1802 = vmatpush1.bf16.msra.mxu0 0
        %1803 = vmatprep.subr.bf16.mxu0 0
        %1804 = vmatpush1.bf16.msra.mxu0 0
        %1805 = vmatprep.mubr.bf16.mxu0 0
        %1806 = vmatmul.mubr.bf16.gmra.mrb[0].mxu0 %v1768
        %v1807 = vpop.f32.mrb[0].mxu0
        %v1808 = vadd.f32 0.0, %v1807
        %v1809 = vpop.f32.mrb[0].mxu0
        %v1810 = vpop.f32.mrb[0].mxu0
        %v1811 = vpop.f32.mrb[0].mxu0
        %1812 = vdwg.mxu0
        %v1813 = vpack.c.bf16 %v1808, %v1808
        %1814 = vst.msk [vmem:[#allocation2] sm:$0xf] %vm1112, %v1813
        %1816 = vrot.lane.b32.xlu0 %v1703, 120
        %v1817 = vpop.permute.xlu0 %1816
        %1818 = vrot.lane.b32.xlu0 %v1704, 120
        %v1819 = vpop.permute.xlu0 %1818
        %v1821 = vsel %vm1003, %v1817, 0
        %v1824 = vsel %vm1003, %v1819, 0
        %1826 = vmatprep.subr.bf16.mxu0 0
        %1827 = vmatpush1.bf16.xpose.msra.mxu0 %v1824
        %1828 = vmatprep.subr.bf16.mxu0 0
        %1829 = vmatpush1.bf16.xpose.msra.mxu0 0
        %1830 = vmatprep.subr.bf16.mxu0 0
        %1831 = vmatpush1.bf16.xpose.msra.mxu0 0
        %1832 = vmatprep.subr.bf16.mxu0 0
        %1833 = vmatpush1.bf16.xpose.msra.mxu0 0
        %1834 = vmatprep.subr.bf16.mxu0 0
        %1835 = vmatpush1.bf16.xpose.msra.mxu0 0
        %1836 = vmatprep.subr.bf16.mxu0 0
        %1837 = vmatpush1.bf16.xpose.msra.mxu0 0
        %1838 = vmatprep.subr.bf16.mxu0 0
        %1839 = vmatpush1.bf16.xpose.msra.mxu0 0
        %1840 = vmatprep.subr.bf16.mxu0 0
        %1841 = vmatpush1.bf16.xpose.msra.mxu0 0
        %1842 = vmatprep.subr.bf16.mxu0 0
        %1843 = vmatpush1.bf16.xpose.msra.mxu0 0
        %1844 = vmatprep.subr.bf16.mxu0 0
        %1845 = vmatpush1.bf16.xpose.msra.mxu0 0
        %1846 = vmatprep.subr.bf16.mxu0 0
        %1847 = vmatpush1.bf16.xpose.msra.mxu0 0
        %1848 = vmatprep.subr.bf16.mxu0 0
        %1849 = vmatpush1.bf16.xpose.msra.mxu0 0
        %1850 = vmatprep.subr.bf16.mxu0 0
        %1851 = vmatpush1.bf16.xpose.msra.mxu0 0
        %1852 = vmatprep.subr.bf16.mxu0 0
        %1853 = vmatpush1.bf16.xpose.msra.mxu0 0
        %1854 = vmatprep.subr.bf16.mxu0 0
        %1855 = vmatpush1.bf16.xpose.msra.mxu0 0
        %1856 = vmatprep.subr.bf16.mxu0 0
        %1857 = vmatpush1.bf16.xpose.msra.mxu0 0
        %1858 = vmatprep.mubr.bf16.mxu0 0
        %1859 = vmatmul.mubr.bf16.gmra.mrb[0].mxu0 %v1821
        %v1860 = vpop.f32.mrb[0].mxu0
        %v1861 = vadd.f32 %v899, %v1860
        %v1862 = vpop.f32.mrb[0].mxu0
        %v1863 = vpop.f32.mrb[0].mxu0
        %v1864 = vpop.f32.mrb[0].mxu0
        %1865 = vdwg.mxu0
        %v1866 = vsel %vm1003, %v1861, -inf
        %1867 = vmax.xlane.f32.xlu0 %v1866
        %v1868 = vpop.xlane.xlu0 %1867
        %v1869 = vsub.f32 %v1861, %v1868
        %v1870 = vmul.f32 %v1869, 1.442695
        %v1871 = vpow.pop %v1870
        %v1872 = vsel %vm1003, %v1871, 0.0
        %1873 = vadd.xlane.f32.xlu0 %v1872
        %v1874 = vpop.xlane.xlu0 %1873
        %v1875 = vrcp.pop %v1874
        %v1876 = vmul.f32 %v1871, %v1875
        %v1877 = vpack.c.bf16 %v1876, %v1876
        %s1878 = scalar_lea.vmem %s885, 4 [#allocation18]
        %1879 = vst.msk [vmem:[%s1878] sm:$0xf] %vm1112, %v1877
        %1880 = vrot.lane.b32.xlu0 %v1704, 88
        %v1881 = vpop.permute.xlu0 %1880
        %v1883 = vsel %vm1003, %v1877, 0
        %v1886 = vsel %vm1067, %v1881, 0
        %1888 = vmatprep.subr.bf16.mxu0 0
        %1889 = vmatpush1.bf16.msra.mxu0 %v1886
        %1890 = vmatprep.subr.bf16.mxu0 0
        %1891 = vmatpush1.bf16.msra.mxu0 0
        %1892 = vmatprep.subr.bf16.mxu0 0
        %1893 = vmatpush1.bf16.msra.mxu0 0
        %1894 = vmatprep.subr.bf16.mxu0 0
        %1895 = vmatpush1.bf16.msra.mxu0 0
        %1896 = vmatprep.subr.bf16.mxu0 0
        %1897 = vmatpush1.bf16.msra.mxu0 0
        %1898 = vmatprep.subr.bf16.mxu0 0
        %1899 = vmatpush1.bf16.msra.mxu0 0
        %1900 = vmatprep.subr.bf16.mxu0 0
        %1901 = vmatpush1.bf16.msra.mxu0 0
        %1902 = vmatprep.subr.bf16.mxu0 0
        %1903 = vmatpush1.bf16.msra.mxu0 0
        %1904 = vmatprep.subr.bf16.mxu0 0
        %1905 = vmatpush1.bf16.msra.mxu0 0
        %1906 = vmatprep.subr.bf16.mxu0 0
        %1907 = vmatpush1.bf16.msra.mxu0 0
        %1908 = vmatprep.subr.bf16.mxu0 0
        %1909 = vmatpush1.bf16.msra.mxu0 0
        %1910 = vmatprep.subr.bf16.mxu0 0
        %1911 = vmatpush1.bf16.msra.mxu0 0
        %1912 = vmatprep.subr.bf16.mxu0 0
        %1913 = vmatpush1.bf16.msra.mxu0 0
        %1914 = vmatprep.subr.bf16.mxu0 0
        %1915 = vmatpush1.bf16.msra.mxu0 0
        %1916 = vmatprep.subr.bf16.mxu0 0
        %1917 = vmatpush1.bf16.msra.mxu0 0
        %1918 = vmatprep.subr.bf16.mxu0 0
        %1919 = vmatpush1.bf16.msra.mxu0 0
        %1920 = vmatprep.mubr.bf16.mxu0 0
        %1921 = vmatmul.mubr.bf16.gmra.mrb[0].mxu0 %v1883
        %v1922 = vpop.f32.mrb[0].mxu0
        %v1923 = vadd.f32 0.0, %v1922
        %v1924 = vpop.f32.mrb[0].mxu0
        %v1925 = vpop.f32.mrb[0].mxu0
        %v1926 = vpop.f32.mrb[0].mxu0
        %1927 = vdwg.mxu0
        %v1928 = vpack.c.bf16 %v1923, %v1923
        %v1930 = vunpack.c.l.b16 %v1928
        %v1931 = vpack.c.b16 %v1930, %v1930
        %1932 = vrot.lane.b32.xlu0 %v1931, 8
        %v1933 = vpop.permute.xlu0 %1932
        %1935 = vst.msk [vmem:[#allocation2] sm:$0xf] %vm1231, %v1933
        %1936 = vrot.lane.b32.xlu0 %v1703, 112
        %v1937 = vpop.permute.xlu0 %1936
        %1938 = vrot.lane.b32.xlu0 %v1704, 112
        %v1939 = vpop.permute.xlu0 %1938
        %v1941 = vsel %vm1003, %v1937, 0
        %v1944 = vsel %vm1003, %v1939, 0
        %1946 = vmatprep.subr.bf16.mxu0 0
        %1947 = vmatpush1.bf16.xpose.msra.mxu0 %v1944
        %1948 = vmatprep.subr.bf16.mxu0 0
        %1949 = vmatpush1.bf16.xpose.msra.mxu0 0
        %1950 = vmatprep.subr.bf16.mxu0 0
        %1951 = vmatpush1.bf16.xpose.msra.mxu0 0
        %1952 = vmatprep.subr.bf16.mxu0 0
        %1953 = vmatpush1.bf16.xpose.msra.mxu0 0
        %1954 = vmatprep.subr.bf16.mxu0 0
        %1955 = vmatpush1.bf16.xpose.msra.mxu0 0
        %1956 = vmatprep.subr.bf16.mxu0 0
        %1957 = vmatpush1.bf16.xpose.msra.mxu0 0
        %1958 = vmatprep.subr.bf16.mxu0 0
        %1959 = vmatpush1.bf16.xpose.msra.mxu0 0
        %1960 = vmatprep.subr.bf16.mxu0 0
        %1961 = vmatpush1.bf16.xpose.msra.mxu0 0
        %1962 = vmatprep.subr.bf16.mxu0 0
        %1963 = vmatpush1.bf16.xpose.msra.mxu0 0
        %1964 = vmatprep.subr.bf16.mxu0 0
        %1965 = vmatpush1.bf16.xpose.msra.mxu0 0
        %1966 = vmatprep.subr.bf16.mxu0 0
        %1967 = vmatpush1.bf16.xpose.msra.mxu0 0
        %1968 = vmatprep.subr.bf16.mxu0 0
        %1969 = vmatpush1.bf16.xpose.msra.mxu0 0
        %1970 = vmatprep.subr.bf16.mxu0 0
        %1971 = vmatpush1.bf16.xpose.msra.mxu0 0
        %1972 = vmatprep.subr.bf16.mxu0 0
        %1973 = vmatpush1.bf16.xpose.msra.mxu0 0
        %1974 = vmatprep.subr.bf16.mxu0 0
        %1975 = vmatpush1.bf16.xpose.msra.mxu0 0
        %1976 = vmatprep.subr.bf16.mxu0 0
        %1977 = vmatpush1.bf16.xpose.msra.mxu0 0
        %1978 = vmatprep.mubr.bf16.mxu0 0
        %1979 = vmatmul.mubr.bf16.gmra.mrb[0].mxu0 %v1941
        %v1980 = vpop.f32.mrb[0].mxu0
        %v1981 = vadd.f32 %v899, %v1980
        %v1982 = vpop.f32.mrb[0].mxu0
        %v1983 = vpop.f32.mrb[0].mxu0
        %v1984 = vpop.f32.mrb[0].mxu0
        %1985 = vdwg.mxu0
        %v1986 = vsel %vm1003, %v1981, -inf
        %1987 = vmax.xlane.f32.xlu0 %v1986
        %v1988 = vpop.xlane.xlu0 %1987
        %v1989 = vsub.f32 %v1981, %v1988
        %v1990 = vmul.f32 %v1989, 1.442695
        %v1991 = vpow.pop %v1990
        %v1992 = vsel %vm1003, %v1991, 0.0
        %1993 = vadd.xlane.f32.xlu0 %v1992
        %v1994 = vpop.xlane.xlu0 %1993
        %v1995 = vrcp.pop %v1994
        %v1996 = vmul.f32 %v1991, %v1995
        %v1997 = vpack.c.bf16 %v1996, %v1996
        %s1998 = scalar_lea.vmem %s885, 8 [#allocation18]
        %1999 = vst.msk [vmem:[%s1998] sm:$0xf] %vm1112, %v1997
        %2000 = vrot.lane.b32.xlu0 %v1704, 80
        %v2001 = vpop.permute.xlu0 %2000
        %v2003 = vsel %vm1003, %v1997, 0
        %v2006 = vsel %vm1067, %v2001, 0
        %2008 = vmatprep.subr.bf16.mxu0 0
        %2009 = vmatpush1.bf16.msra.mxu0 %v2006
        %2010 = vmatprep.subr.bf16.mxu0 0
        %2011 = vmatpush1.bf16.msra.mxu0 0
        %2012 = vmatprep.subr.bf16.mxu0 0
        %2013 = vmatpush1.bf16.msra.mxu0 0
        %2014 = vmatprep.subr.bf16.mxu0 0
        %2015 = vmatpush1.bf16.msra.mxu0 0
        %2016 = vmatprep.subr.bf16.mxu0 0
        %2017 = vmatpush1.bf16.msra.mxu0 0
        %2018 = vmatprep.subr.bf16.mxu0 0
        %2019 = vmatpush1.bf16.msra.mxu0 0
        %2020 = vmatprep.subr.bf16.mxu0 0
        %2021 = vmatpush1.bf16.msra.mxu0 0
        %2022 = vmatprep.subr.bf16.mxu0 0
        %2023 = vmatpush1.bf16.msra.mxu0 0
        %2024 = vmatprep.subr.bf16.mxu0 0
        %2025 = vmatpush1.bf16.msra.mxu0 0
        %2026 = vmatprep.subr.bf16.mxu0 0
        %2027 = vmatpush1.bf16.msra.mxu0 0
        %2028 = vmatprep.subr.bf16.mxu0 0
        %2029 = vmatpush1.bf16.msra.mxu0 0
        %2030 = vmatprep.subr.bf16.mxu0 0
        %2031 = vmatpush1.bf16.msra.mxu0 0
        %2032 = vmatprep.subr.bf16.mxu0 0
        %2033 = vmatpush1.bf16.msra.mxu0 0
        %2034 = vmatprep.subr.bf16.mxu0 0
        %2035 = vmatpush1.bf16.msra.mxu0 0
        %2036 = vmatprep.subr.bf16.mxu0 0
        %2037 = vmatpush1.bf16.msra.mxu0 0
        %2038 = vmatprep.subr.bf16.mxu0 0
        %2039 = vmatpush1.bf16.msra.mxu0 0
        %2040 = vmatprep.mubr.bf16.mxu0 0
        %2041 = vmatmul.mubr.bf16.gmra.mrb[0].mxu0 %v2003
        %v2042 = vpop.f32.mrb[0].mxu0
        %v2043 = vadd.f32 0.0, %v2042
        %v2044 = vpop.f32.mrb[0].mxu0
        %v2045 = vpop.f32.mrb[0].mxu0
        %v2046 = vpop.f32.mrb[0].mxu0
        %2047 = vdwg.mxu0
        %v2048 = vpack.c.bf16 %v2043, %v2043
        %v2050 = vunpack.c.l.b16 %v2048
        %v2051 = vpack.c.b16 %v2050, %v2050
        %2052 = vrot.lane.b32.xlu0 %v2051, 16
        %v2053 = vpop.permute.xlu0 %2052
        %2055 = vst.msk [vmem:[#allocation2] sm:$0xf] %vm1350, %v2053
        %2056 = vrot.lane.b32.xlu0 %v1703, 104
        %v2057 = vpop.permute.xlu0 %2056
        %2058 = vrot.lane.b32.xlu0 %v1704, 104
        %v2059 = vpop.permute.xlu0 %2058
        %v2061 = vsel %vm1003, %v2057, 0
        %v2064 = vsel %vm1003, %v2059, 0
        %2066 = vmatprep.subr.bf16.mxu0 0
        %2067 = vmatpush1.bf16.xpose.msra.mxu0 %v2064
        %2068 = vmatprep.subr.bf16.mxu0 0
        %2069 = vmatpush1.bf16.xpose.msra.mxu0 0
        %2070 = vmatprep.subr.bf16.mxu0 0
        %2071 = vmatpush1.bf16.xpose.msra.mxu0 0
        %2072 = vmatprep.subr.bf16.mxu0 0
        %2073 = vmatpush1.bf16.xpose.msra.mxu0 0
        %2074 = vmatprep.subr.bf16.mxu0 0
        %2075 = vmatpush1.bf16.xpose.msra.mxu0 0
        %2076 = vmatprep.subr.bf16.mxu0 0
        %2077 = vmatpush1.bf16.xpose.msra.mxu0 0
        %2078 = vmatprep.subr.bf16.mxu0 0
        %2079 = vmatpush1.bf16.xpose.msra.mxu0 0
        %2080 = vmatprep.subr.bf16.mxu0 0
        %2081 = vmatpush1.bf16.xpose.msra.mxu0 0
        %2082 = vmatprep.subr.bf16.mxu0 0
        %2083 = vmatpush1.bf16.xpose.msra.mxu0 0
        %2084 = vmatprep.subr.bf16.mxu0 0
        %2085 = vmatpush1.bf16.xpose.msra.mxu0 0
        %2086 = vmatprep.subr.bf16.mxu0 0
        %2087 = vmatpush1.bf16.xpose.msra.mxu0 0
        %2088 = vmatprep.subr.bf16.mxu0 0
        %2089 = vmatpush1.bf16.xpose.msra.mxu0 0
        %2090 = vmatprep.subr.bf16.mxu0 0
        %2091 = vmatpush1.bf16.xpose.msra.mxu0 0
        %2092 = vmatprep.subr.bf16.mxu0 0
        %2093 = vmatpush1.bf16.xpose.msra.mxu0 0
        %2094 = vmatprep.subr.bf16.mxu0 0
        %2095 = vmatpush1.bf16.xpose.msra.mxu0 0
        %2096 = vmatprep.subr.bf16.mxu0 0
        %2097 = vmatpush1.bf16.xpose.msra.mxu0 0
        %2098 = vmatprep.mubr.bf16.mxu0 0
        %2099 = vmatmul.mubr.bf16.gmra.mrb[0].mxu0 %v2061
        %v2100 = vpop.f32.mrb[0].mxu0
        %v2101 = vadd.f32 %v899, %v2100
        %v2102 = vpop.f32.mrb[0].mxu0
        %v2103 = vpop.f32.mrb[0].mxu0
        %v2104 = vpop.f32.mrb[0].mxu0
        %2105 = vdwg.mxu0
        %v2106 = vsel %vm1003, %v2101, -inf
        %2107 = vmax.xlane.f32.xlu0 %v2106
        %v2108 = vpop.xlane.xlu0 %2107
        %v2109 = vsub.f32 %v2101, %v2108
        %v2110 = vmul.f32 %v2109, 1.442695
        %v2111 = vpow.pop %v2110
        %v2112 = vsel %vm1003, %v2111, 0.0
        %2113 = vadd.xlane.f32.xlu0 %v2112
        %v2114 = vpop.xlane.xlu0 %2113
        %v2115 = vrcp.pop %v2114
        %v2116 = vmul.f32 %v2111, %v2115
        %v2117 = vpack.c.bf16 %v2116, %v2116
        %s2118 = scalar_lea.vmem %s885, 12 [#allocation18]
        %2119 = vst.msk [vmem:[%s2118] sm:$0xf] %vm1112, %v2117
        %2120 = vrot.lane.b32.xlu0 %v1704, 72
        %v2121 = vpop.permute.xlu0 %2120
        %v2123 = vsel %vm1003, %v2117, 0
        %v2126 = vsel %vm1067, %v2121, 0
        %2128 = vmatprep.subr.bf16.mxu0 0
        %2129 = vmatpush1.bf16.msra.mxu0 %v2126
        %2130 = vmatprep.subr.bf16.mxu0 0
        %2131 = vmatpush1.bf16.msra.mxu0 0
        %2132 = vmatprep.subr.bf16.mxu0 0
        %2133 = vmatpush1.bf16.msra.mxu0 0
        %2134 = vmatprep.subr.bf16.mxu0 0
        %2135 = vmatpush1.bf16.msra.mxu0 0
        %2136 = vmatprep.subr.bf16.mxu0 0
        %2137 = vmatpush1.bf16.msra.mxu0 0
        %2138 = vmatprep.subr.bf16.mxu0 0
        %2139 = vmatpush1.bf16.msra.mxu0 0
        %2140 = vmatprep.subr.bf16.mxu0 0
        %2141 = vmatpush1.bf16.msra.mxu0 0
        %2142 = vmatprep.subr.bf16.mxu0 0
        %2143 = vmatpush1.bf16.msra.mxu0 0
        %2144 = vmatprep.subr.bf16.mxu0 0
        %2145 = vmatpush1.bf16.msra.mxu0 0
        %2146 = vmatprep.subr.bf16.mxu0 0
        %2147 = vmatpush1.bf16.msra.mxu0 0
        %2148 = vmatprep.subr.bf16.mxu0 0
        %2149 = vmatpush1.bf16.msra.mxu0 0
        %2150 = vmatprep.subr.bf16.mxu0 0
        %2151 = vmatpush1.bf16.msra.mxu0 0
        %2152 = vmatprep.subr.bf16.mxu0 0
        %2153 = vmatpush1.bf16.msra.mxu0 0
        %2154 = vmatprep.subr.bf16.mxu0 0
        %2155 = vmatpush1.bf16.msra.mxu0 0
        %2156 = vmatprep.subr.bf16.mxu0 0
        %2157 = vmatpush1.bf16.msra.mxu0 0
        %2158 = vmatprep.subr.bf16.mxu0 0
        %2159 = vmatpush1.bf16.msra.mxu0 0
        %2160 = vmatprep.mubr.bf16.mxu0 0
        %2161 = vmatmul.mubr.bf16.gmra.mrb[0].mxu0 %v2123
        %v2162 = vpop.f32.mrb[0].mxu0
        %v2163 = vadd.f32 0.0, %v2162
        %v2164 = vpop.f32.mrb[0].mxu0
        %v2165 = vpop.f32.mrb[0].mxu0
        %v2166 = vpop.f32.mrb[0].mxu0
        %2167 = vdwg.mxu0
        %v2168 = vpack.c.bf16 %v2163, %v2163
        %v2170 = vunpack.c.l.b16 %v2168
        %v2171 = vpack.c.b16 %v2170, %v2170
        %2172 = vrot.lane.b32.xlu0 %v2171, 24
        %v2173 = vpop.permute.xlu0 %2172
        %2175 = vst.msk [vmem:[#allocation2] sm:$0xf] %vm1469, %v2173
        %v2176 = vld [vmem:[#allocation2] sm:$0xf]
        %v2177 = vld [vmem:[%s15] sm:$0xf]
        %v2178 = vld [vmem:[%s15 + $0x4] sm:$0xf]
        %v2179 = vld [vmem:[%s15 + $0x8] sm:$0xf]
        %v2180 = vld [vmem:[%s15 + $0xc] sm:$0xf]
        %v2185 = vunpack.c.l.b16 %v2177
        %v2186 = vunpack.c.l.b16 %v2178
        %v2187 = vunpack.c.l.b16 %v2179
        %v2188 = vunpack.c.l.b16 %v2180
        %v2189 = vpack.c.b16 %v2186, %v2185
        %v2190 = vpack.c.b16 %v2188, %v2187
        %v2194 = vsel %vm903, %v2176, 0
        %2196 = vmatprep.subr.bf16.mxu0 0
        %2197 = vmatpush1.bf16.msra.mxu0 %v2189
        %2198 = vmatprep.subr.bf16.mxu0 0
        %2199 = vmatpush1.bf16.msra.mxu0 %v2190
        %2200 = vmatprep.subr.bf16.mxu0 0
        %2201 = vmatpush1.bf16.msra.mxu0 0
        %2202 = vmatprep.subr.bf16.mxu0 0
        %2203 = vmatpush1.bf16.msra.mxu0 0
        %2204 = vmatprep.subr.bf16.mxu0 0
        %2205 = vmatpush1.bf16.msra.mxu0 0
        %2206 = vmatprep.subr.bf16.mxu0 0
        %2207 = vmatpush1.bf16.msra.mxu0 0
        %2208 = vmatprep.subr.bf16.mxu0 0
        %2209 = vmatpush1.bf16.msra.mxu0 0
        %2210 = vmatprep.subr.bf16.mxu0 0
        %2211 = vmatpush1.bf16.msra.mxu0 0
        %2212 = vmatprep.subr.bf16.mxu0 0
        %2213 = vmatpush1.bf16.msra.mxu0 0
        %2214 = vmatprep.subr.bf16.mxu0 0
        %2215 = vmatpush1.bf16.msra.mxu0 0
        %2216 = vmatprep.subr.bf16.mxu0 0
        %2217 = vmatpush1.bf16.msra.mxu0 0
        %2218 = vmatprep.subr.bf16.mxu0 0
        %2219 = vmatpush1.bf16.msra.mxu0 0
        %2220 = vmatprep.subr.bf16.mxu0 0
        %2221 = vmatpush1.bf16.msra.mxu0 0
        %2222 = vmatprep.subr.bf16.mxu0 0
        %2223 = vmatpush1.bf16.msra.mxu0 0
        %2224 = vmatprep.subr.bf16.mxu0 0
        %2225 = vmatpush1.bf16.msra.mxu0 0
        %2226 = vmatprep.subr.bf16.mxu0 0
        %2227 = vmatpush1.bf16.msra.mxu0 0
        %2228 = vmatprep.mubr.bf16.mxu0 0
        %2229 = vmatmul.mubr.bf16.gmra.mrb[0].mxu0 %v2194
        %v2230 = vpop.f32.mrb[0].mxu0
        %v2231 = vadd.f32 0.0, %v2230
        %v2232 = vpop.f32.mrb[0].mxu0
        %v2233 = vpop.f32.mrb[0].mxu0
        %v2234 = vpop.f32.mrb[0].mxu0
        %2235 = vdwg.mxu0
        %v2236 = vadd.f32 %v1539, %v2231
        %v2237 = vld [vmem:[%s16] sm:$0x1]
        %v2239 = vlaneseq
        %v2240 = vshrl.u32 %v2239, 7
        %v2241 = vsub.s32 0, %v2240
        %v2242 = vrot.slane %v2237, %v2241
        %v2244 = vadd.f32 %v2236, %v2242
        %v2245 = vld [vmem:[%s17] sm:$0x1]
        %v2246 = vld [vmem:[%s18] sm:$0x1]
        %v2247 = vsel %vm903, %v2244, 0.0
        %2248 = vadd.xlane.f32.xlu0 %v2247
        %v2249 = vpop.xlane.xlu0 %2248
        %v2250 = vmul.f32 %v2249, %v907
        %v2251 = vsub.f32 %v2244, %v2250
        %v2252 = vmul.f32 %v2251, %v2251
        %v2253 = vsel %vm903, %v2252, 0.0
        %2254 = vadd.xlane.f32.xlu0 %v2253
        %v2255 = vpop.xlane.xlu0 %2254
        %v2256 = vmul.f32 %v2255, %v907
        %v2257 = vadd.f32 %v2256, 1e-05
        %v2258 = vrsqrt.pop %v2257
        %v2259 = vmul.f32 %v2251, %v2258
        %v2261 = vlaneseq
        %v2262 = vshrl.u32 %v2261, 7
        %v2263 = vsub.s32 0, %v2262
        %v2264 = vrot.slane %v2245, %v2263
        %v2266 = vmul.f32 %v2259, %v2264
        %v2268 = vlaneseq
        %v2269 = vshrl.u32 %v2268, 7
        %v2270 = vsub.s32 0, %v2269
        %v2271 = vrot.slane %v2246, %v2270
        %v2273 = vadd.f32 %v2266, %v2271
        %v2274 = vpack.c.bf16 %v2273, %v2273
        %v2275 = vld [vmem:[%s19] sm:$0xf]
        %v2276 = vld [vmem:[%s19 + $0x4] sm:$0xf]
        %v2277 = vld [vmem:[%s19 + $0x8] sm:$0xf]
        %v2278 = vld [vmem:[%s19 + $0xc] sm:$0xf]
        %v2279 = vld [vmem:[%s20] sm:$0x1]
        %v2281 = vlaneseq
        %v2282 = vshrl.u32 %v2281, 7
        %v2283 = vsub.s32 0, %v2282
        %v2284 = vrot.slane %v2279, %v2283
        %v2290 = vunpack.c.l.b16 %v2275
        %v2291 = vunpack.c.l.b16 %v2276
        %v2292 = vunpack.c.l.b16 %v2277
        %v2293 = vunpack.c.l.b16 %v2278
        %v2294 = vpack.c.b16 %v2291, %v2290
        %v2295 = vpack.c.b16 %v2293, %v2292
        %v2299 = vsel %vm903, %v2274, 0
        %2301 = vmatprep.subr.bf16.mxu0 0
        %2302 = vmatpush1.bf16.msra.mxu0 %v2294
        %2303 = vmatprep.subr.bf16.mxu0 0
        %2304 = vmatpush1.bf16.msra.mxu0 %v2295
        %2305 = vmatprep.subr.bf16.mxu0 0
        %2306 = vmatpush1.bf16.msra.mxu0 0
        %2307 = vmatprep.subr.bf16.mxu0 0
        %2308 = vmatpush1.bf16.msra.mxu0 0
        %2309 = vmatprep.subr.bf16.mxu0 0
        %2310 = vmatpush1.bf16.msra.mxu0 0
        %2311 = vmatprep.subr.bf16.mxu0 0
        %2312 = vmatpush1.bf16.msra.mxu0 0
        %2313 = vmatprep.subr.bf16.mxu0 0
        %2314 = vmatpush1.bf16.msra.mxu0 0
        %2315 = vmatprep.subr.bf16.mxu0 0
        %2316 = vmatpush1.bf16.msra.mxu0 0
        %2317 = vmatprep.subr.bf16.mxu0 0
        %2318 = vmatpush1.bf16.msra.mxu0 0
        %2319 = vmatprep.subr.bf16.mxu0 0
        %2320 = vmatpush1.bf16.msra.mxu0 0
        %2321 = vmatprep.subr.bf16.mxu0 0
        %2322 = vmatpush1.bf16.msra.mxu0 0
        %2323 = vmatprep.subr.bf16.mxu0 0
        %2324 = vmatpush1.bf16.msra.mxu0 0
        %2325 = vmatprep.subr.bf16.mxu0 0
        %2326 = vmatpush1.bf16.msra.mxu0 0
        %2327 = vmatprep.subr.bf16.mxu0 0
        %2328 = vmatpush1.bf16.msra.mxu0 0
        %2329 = vmatprep.subr.bf16.mxu0 0
        %2330 = vmatpush1.bf16.msra.mxu0 0
        %2331 = vmatprep.subr.bf16.mxu0 0
        %2332 = vmatpush1.bf16.msra.mxu0 0
        %2333 = vmatprep.mubr.bf16.mxu0 0
        %2334 = vmatmul.mubr.bf16.gmra.mrb[0].mxu0 %v2299
        %v2335 = vpop.f32.mrb[0].mxu0
        %v2336 = vadd.f32 %v2284, %v2335
        %v2337 = vpop.f32.mrb[0].mxu0
        %v2338 = vpop.f32.mrb[0].mxu0
        %v2339 = vpop.f32.mrb[0].mxu0
        %2340 = vdwg.mxu0
        %v2341 = vmul.f32 %v2336, 0.5
        %v2342 = vmul.f32 %v2336, 0.70710677
        %v2343 = verf.f32.pop %v2342
        %v2344 = vadd.f32 %v2343, 1.0
        %v2345 = vmul.f32 %v2341, %v2344
        %v2346 = vpack.c.bf16 %v2345, %v2345
        %v2347 = vld [vmem:[%s21] sm:$0xf]
        %v2348 = vld [vmem:[%s21 + $0x4] sm:$0xf]
        %v2349 = vld [vmem:[%s21 + $0x8] sm:$0xf]
        %v2350 = vld [vmem:[%s21 + $0xc] sm:$0xf]
        %v2351 = vld [vmem:[%s21 + $0x10] sm:$0xf]
        %v2352 = vld [vmem:[%s21 + $0x14] sm:$0xf]
        %v2353 = vld [vmem:[%s21 + $0x18] sm:$0xf]
        %v2354 = vld [vmem:[%s21 + $0x1c] sm:$0xf]
        %v2355 = vld [vmem:[%s21 + $0x20] sm:$0xf]
        %v2356 = vld [vmem:[%s21 + $0x24] sm:$0xf]
        %v2357 = vld [vmem:[%s21 + $0x28] sm:$0xf]
        %v2358 = vld [vmem:[%s21 + $0x2c] sm:$0xf]
        %v2359 = vld [vmem:[%s21 + $0x30] sm:$0xf]
        %v2360 = vld [vmem:[%s21 + $0x34] sm:$0xf]
        %v2361 = vld [vmem:[%s21 + $0x38] sm:$0xf]
        %v2362 = vld [vmem:[%s21 + $0x3c] sm:$0xf]
        %v2379 = vunpack.c.l.b16 %v2347
        %v2380 = vunpack.c.l.b16 %v2348
        %v2381 = vunpack.c.l.b16 %v2349
        %v2382 = vunpack.c.l.b16 %v2350
        %v2383 = vunpack.c.l.b16 %v2351
        %v2384 = vunpack.c.l.b16 %v2352
        %v2385 = vunpack.c.l.b16 %v2353
        %v2386 = vunpack.c.l.b16 %v2354
        %v2387 = vunpack.c.l.b16 %v2355
        %v2388 = vunpack.c.l.b16 %v2356
        %v2389 = vunpack.c.l.b16 %v2357
        %v2390 = vunpack.c.l.b16 %v2358
        %v2391 = vunpack.c.l.b16 %v2359
        %v2392 = vunpack.c.l.b16 %v2360
        %v2393 = vunpack.c.l.b16 %v2361
        %v2394 = vunpack.c.l.b16 %v2362
        %v2395 = vpack.c.b16 %v2380, %v2379
        %v2396 = vpack.c.b16 %v2382, %v2381
        %v2397 = vpack.c.b16 %v2384, %v2383
        %v2398 = vpack.c.b16 %v2386, %v2385
        %v2399 = vpack.c.b16 %v2388, %v2387
        %v2400 = vpack.c.b16 %v2390, %v2389
        %v2401 = vpack.c.b16 %v2392, %v2391
        %v2402 = vpack.c.b16 %v2394, %v2393
        %2411 = vmatprep.subr.bf16.mxu0 0
        %2412 = vmatpush1.bf16.msra.mxu0 %v2395
        %2413 = vmatprep.subr.bf16.mxu0 0
        %2414 = vmatpush1.bf16.msra.mxu0 %v2396
        %2415 = vmatprep.subr.bf16.mxu0 0
        %2416 = vmatpush1.bf16.msra.mxu0 %v2397
        %2417 = vmatprep.subr.bf16.mxu0 0
        %2418 = vmatpush1.bf16.msra.mxu0 %v2398
        %2419 = vmatprep.subr.bf16.mxu0 0
        %2420 = vmatpush1.bf16.msra.mxu0 %v2399
        %2421 = vmatprep.subr.bf16.mxu0 0
        %2422 = vmatpush1.bf16.msra.mxu0 %v2400
        %2423 = vmatprep.subr.bf16.mxu0 0
        %2424 = vmatpush1.bf16.msra.mxu0 %v2401
        %2425 = vmatprep.subr.bf16.mxu0 0
        %2426 = vmatpush1.bf16.msra.mxu0 %v2402
        %2427 = vmatprep.subr.bf16.mxu0 0
        %2428 = vmatpush1.bf16.msra.mxu0 0
        %2429 = vmatprep.subr.bf16.mxu0 0
        %2430 = vmatpush1.bf16.msra.mxu0 0
        %2431 = vmatprep.subr.bf16.mxu0 0
        %2432 = vmatpush1.bf16.msra.mxu0 0
        %2433 = vmatprep.subr.bf16.mxu0 0
        %2434 = vmatpush1.bf16.msra.mxu0 0
        %2435 = vmatprep.subr.bf16.mxu0 0
        %2436 = vmatpush1.bf16.msra.mxu0 0
        %2437 = vmatprep.subr.bf16.mxu0 0
        %2438 = vmatpush1.bf16.msra.mxu0 0
        %2439 = vmatprep.subr.bf16.mxu0 0
        %2440 = vmatpush1.bf16.msra.mxu0 0
        %2441 = vmatprep.subr.bf16.mxu0 0
        %2442 = vmatpush1.bf16.msra.mxu0 0
        %2443 = vmatprep.mubr.bf16.mxu0 0
        %2444 = vmatmul.mubr.bf16.gmra.mrb[0].mxu0 %v2346
        %v2445 = vpop.f32.mrb[0].mxu0
        %v2446 = vadd.f32 0.0, %v2445
        %v2447 = vpop.f32.mrb[0].mxu0
        %v2448 = vpop.f32.mrb[0].mxu0
        %v2449 = vpop.f32.mrb[0].mxu0
        %2450 = vdwg.mxu0
        %v2451 = vadd.f32 %v2244, %v2446
        %v2452 = vld [vmem:[%s22] sm:$0x1]
        %v2454 = vlaneseq
        %v2455 = vshrl.u32 %v2454, 7
        %v2456 = vsub.s32 0, %v2455
        %v2457 = vrot.slane %v2452, %v2456
        %v2459 = vadd.f32 %v2451, %v2457
        %2460 = vst.msk [vmem:[%s878] sm:$0xff] %vm903, %v2459
        %s2461 = sand.u32 %s557, 1
        %s2462 = scalar_lea.sflag [#allocation5], %s2461
        %s2463 = sand.u32 %s557, 1
        %s2464 = smul.addr %s2463, 8
        %s2465 = scalar_lea.vmem [#allocation17], %s2464
        %s2466 = sand.u32 %s583, 1
        %s2467 = scalar_lea.sflag [#allocation19], %s2466
        %s2468 = sand.u32 %s583, 1
        %s2469 = smul.addr %s2468, 16
        %s2470 = scalar_lea.vmem [#allocation18], %s2469
        // Predicated region
        $region145: #{tpu_custom_call.1} parent=111 // pred_check
          %p2471 = pneg %p567
        $region146: #{tpu_custom_call.1} parent=111 // pred_check_branch
          %2473 = sbr.rel (%p2471) target = $region148
        $region147: #{tpu_custom_call.1} parent=111 // pred_region
          %s2475 = ssub.s32 128, 128
          %2476 = vsyncadd %s2462, %s2475
          %s2477 = smul.addr %s51, 128
          %s2478 = scalar_lea.hbm %s23, %s2477
          %s2480 = sshll.u32 %s2465, 4
          %s2481 = int_to_ptr.vmem [resolvable:$true] %s2480
          %2483 = dma.vmem_to_hbm [thread:$0]  %s2481, 128, %s2478, %s2462
        $region148: #{tpu_custom_call.1} parent=111 // pred_fallthru
          _
        // Predicated region
        $region149: #{tpu_custom_call.1} parent=111 // pred_check
          %p2484 = pneg %p593
        $region150: #{tpu_custom_call.1} parent=111 // pred_check_branch
          %2486 = sbr.rel (%p2484) target = $region152
        $region151: #{tpu_custom_call.1} parent=111 // pred_region
          %s2488 = ssub.s32 256, 256
          %2489 = vsyncadd %s2467, %s2488
          %s2490 = smul.addr %s51, 4
          %s2491 = smul.addr %s2490, 64
          %s2492 = scalar_lea.hbm %s24, %s2491
          %s2493 = sshll.u32 %s2470, 4
          %s2494 = int_to_ptr.vmem [resolvable:$true] %s2493
          %2499 = dma.vmem_to_hbm [thread:$0]  %s2494, 256, %s2492, %s2467, 64, 64, 4
        $region152: #{tpu_custom_call.1} parent=111 // pred_fallthru
          _
      $region112: #{tpu_custom_call.1} parent=5 // pred_fallthru
        _
      %p2500 = scmp.le.s32.totalorder 2, %s46
      // Predicated region
      $region153: #{tpu_custom_call.1} parent=5 // pred_check
        %p2501 = pneg %p2500
      $region154: #{tpu_custom_call.1} parent=5 // pred_check_branch
        %2503 = sbr.rel (%p2501) target = $region156
      $region155: #{tpu_custom_call.1} parent=5 // pred_region
        %s2504 = ssub.s32 %s46, 2
        // Predicated region
        $region157: #{tpu_custom_call.1} parent=155 // pred_check
          %p2505 = pneg %p573
        $region158: #{tpu_custom_call.1} parent=155 // pred_check_branch
          %2507 = sbr.rel (%p2505) target = $region160
        $region159: #{tpu_custom_call.1} parent=155 // pred_region
          %s2508 = sand.u32 %s558, 1
          %s2509 = scalar_lea.sflag [#allocation5], %s2508
          %s2510 = sand.u32 %s558, 1
          %s2511 = smul.addr %s2510, 8
          %s2512 = scalar_lea.vmem [#allocation17], %s2511
          %2513 = dma.done %s2509, 128
        $region160: #{tpu_custom_call.1} parent=155 // pred_fallthru
          _
        // Predicated region
        $region161: #{tpu_custom_call.1} parent=155 // pred_check
          %p2514 = pneg %p599
        $region162: #{tpu_custom_call.1} parent=155 // pred_check_branch
          %2516 = sbr.rel (%p2514) target = $region164
        $region163: #{tpu_custom_call.1} parent=155 // pred_region
          %s2517 = sand.u32 %s584, 1
          %s2518 = scalar_lea.sflag [#allocation19], %s2517
          %s2519 = sand.u32 %s584, 1
          %s2520 = smul.addr %s2519, 16
          %s2521 = scalar_lea.vmem [#allocation18], %s2520
          %2522 = dma.done %s2518, 256
        $region164: #{tpu_custom_call.1} parent=155 // pred_fallthru
          _
      $region156: #{tpu_custom_call.1} parent=5 // pred_fallthru
        _
    $region6: #{tpu_custom_call.1} parent=1 // loop_footer
      %s50 = sadd.s32 1, %s46
    $region7: #{tpu_custom_call.1} parent=1 // loop_footer_branch
      %45 = sbr.rel target = $region3
    $region8: #{tpu_custom_call.1} parent=1 // loop_exit
      _
    %2523 = vsyncpa [#allocation4], 1
    %s2524 = scalar_lea.sflag [#allocation4], 1
    %2525 = vsyncpa %s2524, 1
    %2526 = vsyncpa [#allocation7], 1
    %s2527 = scalar_lea.sflag [#allocation7], 1
    %2528 = vsyncpa %s2527, 1
    %2529 = vsyncpa [#allocation10], 1
    %2530 = vsyncpa [#allocation13], 1
    %2531 = vsyncpa [#allocation16], 1
    %2532 = vsyncpa [#allocation5], 1
    %s2533 = scalar_lea.sflag [#allocation5], 1
    %2534 = vsyncpa %s2533, 1
    %2535 = vsyncpa [#allocation19], 1
    %s2536 = scalar_lea.sflag [#allocation19], 1
    %2537 = vsyncpa %s2536, 1

</llo_original>
